<compile_context>
chip_gen: v7x
topology: tpu7x:2x2x1
jax: 0.10.0
libtpu: 0.0.40
codegen_flags: <defaults>
</compile_context>

<pallas_src>
import functools

import jax
import jax.numpy as jnp
from jax.experimental import pallas as pl
from jax.experimental.pallas import tpu as pltpu

_VMEM = pl.BlockSpec(memory_space=pltpu.MemorySpace.VMEM)
_EPS = 1e-5  # nn.BatchNorm2d default eps


# ----------------------------------------------------------------------------
# Fused Pallas kernel: entire FixedCell forward in one call
# ----------------------------------------------------------------------------
def _cell_kernel(s0_ref, s1_ref, p0_ref, p1_ref, hmask_ref, pw_ref, taps_ref, out_ref,
                 *, steps, block_multiplier, n_rows, W, C, ksizes, pad_max, kmax, eps):
    WC = W * C
    count = float(n_rows * W)          # N*H*W samples per channel

    def mxu(a_bf16, b_bf16):
        # MXU matmul: bf16 operands (cast hoisted by callers), f32 accumulation.
        return jnp.dot(a_bf16, b_bf16, preferred_element_type=jnp.float32)

    def channel_allreduce(v):
        # v: [1, WC].  Sum the W lanes that hold the same channel (lane = w*C + c) and
        # broadcast the per-channel total back to all lanes via a log2(W)-step lane
        # roll-and-add tree (XLU/VPU; roll direction is irrelevant for a full-orbit sum).
        r = v
        step = C
        while step < WC:
            r = r + pltpu.roll(r, shift=step, axis=1)
            step *= 2
        return r

    def batch_norm(x):
        # Training-mode BatchNorm2d(affine=False): biased variance over N*H*W,
        # numerically-safe two-pass (x - mean) form.  No MXU work.
        mean = channel_allreduce(jnp.sum(x, axis=0, keepdims=True)) / count
        d = x - mean
        var = channel_allreduce(jnp.sum(d * d, axis=0, keepdims=True)) / count
        return d * jax.lax.rsqrt(var + eps)

    def relu_dw_pw(x, half, ksize):
        # ReLU -> depthwise kxk on VPU/XLU (rolls + boundary masks + per-lane taps)
        #      -> 1x1 pointwise as ONE block-diagonal bf16 MXU matmul (f32 acc).
        pad = ksize // 2
        xr = jnp.maximum(x, 0.0)
        acc = jnp.zeros((n_rows, WC), jnp.float32)
        tap_base = half * kmax * kmax
        for kh in range(ksize):
            dh = kh - pad
            if dh == 0:
                xh = xr
            else:
                # xh[r, :] = xr[r + dh, :], zeroed where (r % H) + dh leaves the image
                # (the mask also kills the cross-image wrap-around rows).
                xh = pltpu.roll(xr, shift=(-dh) % n_rows, axis=0) * hmask_ref[dh + pad_max]
            for kw in range(ksize):
                dw = kw - pad
                # xw[:, l] = xh[:, l + dw*C]; out-of-image w positions are zeroed by the
                # w-validity baked into the tap row host-side.
                xw = xh if dw == 0 else pltpu.roll(xh, shift=(-dw * C) % WC, axis=1)
                tap = taps_ref[pl.ds(tap_base + kh * kmax + kw, 1), :]    # [1, WC] f32
                acc = acc + xw * tap
        return mxu(acc.astype(jnp.bfloat16), pw_ref[half])

    def sep_conv(x, op, ksize):
        # SepConv = (ReLU, dw kxk, 1x1, BN) twice.
        y = batch_norm(relu_dw_pw(x, 2 * op, ksize))
        return batch_norm(relu_dw_pw(y, 2 * op + 1, ksize))

    def preprocess(s_ref, p_ref):
        # ReLUConvBN(1x1): ReLU -> block-diagonal 1x1 matmul -> BN.
        return batch_norm(mxu(jnp.maximum(s_ref[...], 0.0).astype(jnp.bfloat16), p_ref[...]))

    states = [preprocess(s0_ref, p0_ref), preprocess(s1_ref, p1_ref)]
    op = 0
    for i in range(steps):
        s = jnp.zeros((n_rows, WC), jnp.float32)
        for j in range(2 + i):
            s = s + sep_conv(states[j], op, ksizes[op])
            op += 1
        states.append(s)

    # torch.cat(states[-block_multiplier:], dim=1): one lane-dense [NH, WC] slab per state.
    for b in range(block_multiplier):
        out_ref[b] = states[len(states) - block_multiplier + b]


# ----------------------------------------------------------------------------
# Host-side parameter packing (exact-math repackaging of the module's weights)
# ----------------------------------------------------------------------------
def _block_diag_1x1(w, W):
    """1x1-conv weight [Cin, Cout] -> kron(I_W, w): [W*Cin, W*Cout] (lane = w*C + c)."""
    Cin, Cout = w.shape
    eye = jnp.eye(W, dtype=w.dtype)
    return jnp.einsum('ab,cd->acbd', eye, w).reshape(W * Cin, W * Cout)


def _h_boundary_masks(N, H, pad_max):
    """masks[d, r, 0] = 1 iff (r % H) + (d - pad_max) stays inside the image."""
    h = jnp.arange(N * H) % H
    d = jnp.arange(-pad_max, pad_max + 1)
    hd = h[None, :] + d[:, None]                                      # [D, NH]
    return ((hd >= 0) & (hd < H)).astype(jnp.float32)[:, :, None]     # [D, NH, 1]


def _lane_taps(dw, W, C, kmax):
    """Depthwise taps [K,K,C] laid out per lane (lane = w*C + c) with the W-direction
    zero-boundary baked in; zero-padded to a [kmax*kmax, W*C] block (padded rows unread)."""
    K = dw.shape[0]
    pad = K // 2
    wk = jnp.arange(W)[None, :] + jnp.arange(K)[:, None] - pad        # [K, W]: w + kw - pad
    wvalid = ((wk >= 0) & (wk < W)).astype(dw.dtype)                  # [K, W]
    taps = dw[:, :, None, :] * wvalid[None, :, :, None]               # [K, K, W, C]
    full = jnp.zeros((kmax, kmax, W * C), dw.dtype)
    full = full.at[:K, :K, :].set(taps.reshape(K, K, W * C))
    return full.reshape(kmax * kmax, W * C).astype(jnp.float32)


# ----------------------------------------------------------------------------
# Public forward (NCHW in / NCHW out, like the PyTorch module)
# ----------------------------------------------------------------------------
def fixed_cell_forward(s0_nchw, s1_nchw, params, *, steps, block_multiplier):
    N, C0, H, W = s0_nchw.shape
    C1 = s1_nchw.shape[1]
    C = params["pre0"].shape[1]
    n_rows = N * H
    WC = W * C
    # TODO(synk): non-power-of-two W needs a small matmul fallback for the BN lane reduce.
    assert W & (W - 1) == 0, "W must be a power of two for the lane roll-and-add tree"

    # NCHW -> NHWC -> lane-dense [N*H, W*C_in] (channels fastest within the lane axis).
    s0 = jnp.transpose(s0_nchw, (0, 2, 3, 1)).reshape(n_rows, W * C0).astype(jnp.float32)
    s1 = jnp.transpose(s1_nchw, (0, 2, 3, 1)).reshape(n_rows, W * C1).astype(jnp.float32)

    ksizes = tuple(p["dw1"].shape[0] for p in params["ops"])
    kmax = max(ksizes)
    pad_max = kmax // 2

    p0 = _block_diag_1x1(params["pre0"], W).astype(jnp.bfloat16)
    p1 = _block_diag_1x1(params["pre1"], W).astype(jnp.bfloat16)
    hmask = _h_boundary_masks(N, H, pad_max)                          # [D, NH, 1] f32
    pw_list, tap_list = [], []
    for p in params["ops"]:
        for dw_w, pw_w in ((p["dw1"], p["pw1"]), (p["dw2"], p["pw2"])):
            pw_list.append(_block_diag_1x1(pw_w, W).astype(jnp.bfloat16))
            tap_list.append(_lane_taps(dw_w, W, C, kmax))
    pw_all = jnp.stack(pw_list)                                       # [2*n_ops, WC, WC] bf16
    taps_all = jnp.concatenate(tap_list, axis=0)                      # [2*n_ops*kmax^2, WC] f32

    kernel = functools.partial(
        _cell_kernel, steps=steps, block_multiplier=block_multiplier, n_rows=n_rows,
        W=W, C=C, ksizes=ksizes, pad_max=pad_max, kmax=kmax, eps=_EPS)

    out = pl.pallas_call(
        kernel,
        out_shape=jax.ShapeDtypeStruct((block_multiplier, n_rows, WC), jnp.float32),
        in_specs=[_VMEM] * 7,
        out_specs=_VMEM,
        compiler_params=pltpu.CompilerParams(vmem_limit_bytes=32 * 1024 * 1024),
    )(s0, s1, p0, p1, hmask, pw_all, taps_all)

    # [BM, N*H, W*C] -> NCHW [N, BM*C, H, W]; channel order matches torch.cat(dim=1).
    out = out.reshape(block_multiplier, N, H, W, C)
    return jnp.transpose(out, (1, 0, 4, 2, 3)).reshape(N, block_multiplier * C, H, W)


# ----------------------------------------------------------------------------
# Pure-JAX f32 reference (NHWC) for tolerance testing the bf16 MXU path
# ----------------------------------------------------------------------------
def _reference_forward(s0_nchw, s1_nchw, params, *, steps, block_multiplier, eps=_EPS):
    hi = jax.lax.Precision.HIGHEST

    def bn(x):
        mean = jnp.mean(x, axis=(0, 1, 2), keepdims=True)
        var = jnp.mean(jnp.square(x - mean), axis=(0, 1, 2), keepdims=True)
        return (x - mean) * jax.lax.rsqrt(var + eps)

    def conv1x1(x, w):
        return jnp.einsum('nhwc,cd->nhwd', x, w, precision=hi)

    def dwconv(x, w):
        K = w.shape[0]
        pad = K // 2
        Hh, Ww = x.shape[1], x.shape[2]
        xp = jnp.pad(x, ((0, 0), (pad, pad), (pad, pad), (0, 0)))
        out = jnp.zeros_like(x)
        for kh in range(K):
            for kw in range(K):
                out = out + xp[:, kh:kh + Hh, kw:kw + Ww, :] * w[kh, kw, :]
        return out

    def sep_conv(x, p):
        y = bn(conv1x1(dwconv(jnp.maximum(x, 0.0), p["dw1"]), p["pw1"]))
        return bn(conv1x1(dwconv(jnp.maximum(y, 0.0), p["dw2"]), p["pw2"]))

    s0 = jnp.transpose(s0_nchw, (0, 2, 3, 1)).astype(jnp.float32)
    s1 = jnp.transpose(s1_nchw, (0, 2, 3, 1)).astype(jnp.float32)
    s0 = bn(conv1x1(jnp.maximum(s0, 0.0), params["pre0"]))
    s1 = bn(conv1x1(jnp.maximum(s1, 0.0), params["pre1"]))
    states = [s0, s1]
    op = 0
    for i in range(steps):
        s = jnp.zeros_like(s0)
        for j in range(2 + i):
            s = s + sep_conv(states[j], params["ops"][op])
            op += 1
        states.append(s)
    out = jnp.concatenate(states[-block_multiplier:], axis=-1)
    return jnp.transpose(out, (0, 3, 1, 2))


# ----------------------------------------------------------------------------
# Deterministic synthetic parameter init (shapes follow the PyTorch module)
# ----------------------------------------------------------------------------
def _init_sepconv(key, C, ksize):
    k1, k2, k3, k4 = jax.random.split(key, 4)
    s = 0.1
    return {
        "dw1": s * jax.random.normal(k1, (ksize, ksize, C), jnp.float32),  # depthwise [k,k,C]
        "pw1": s * jax.random.normal(k2, (C, C), jnp.float32),             # 1x1 conv [Cin,Cout]
        "dw2": s * jax.random.normal(k3, (ksize, ksize, C), jnp.float32),
        "pw2": s * jax.random.normal(k4, (C, C), jnp.float32),
    }


def init_cell_params(key, C_prev_prev, C_prev, C, steps):
    n_ops = sum(2 + i for i in range(steps))
    keys = jax.random.split(key, 2 + n_ops)
    params = {
        "pre0": 0.1 * jax.random.normal(keys[0], (C_prev_prev, C), jnp.float32),
        "pre1": 0.1 * jax.random.normal(keys[1], (C_prev, C), jnp.float32),
        "ops": [],
    }
    idx = 0
    for i in range(steps):
        for j in range(2 + i):
            ksize = 5 if j == 1 else 3  # non-reduction cell: sep_conv_5x5 for j==1 else 3x3
            params["ops"].append(_init_sepconv(keys[2 + idx], C, ksize))
            idx += 1
    return params


if __name__ == "__main__":
    N, C_prev_prev, C_prev, C = 2, 4, 4, 8
    H = W = 16
    steps, block_multiplier = 2, 2

    key = jax.random.PRNGKey(0)
    k_s0, k_s1, k_p = jax.random.split(key, 3)
    s0 = jax.random.normal(k_s0, (N, C_prev_prev, H, W), jnp.float32)
    s1 = jax.random.normal(k_s1, (N, C_prev, H, W), jnp.float32)
    params = init_cell_params(k_p, C_prev_prev, C_prev, C, steps)

    fwd = jax.jit(functools.partial(fixed_cell_forward, steps=steps,
                                    block_multiplier=block_multiplier))
    out = jax.block_until_ready(fwd(s0, s1, params))

    assert out.shape == (N, block_multiplier * C, H, W), out.shape
    assert bool(jnp.all(jnp.isfinite(out)))

    # Tolerance-test against a pure-JAX f32 reference (kernel feeds MXU in bf16).
    ref = _reference_forward(s0, s1, params, steps=steps, block_multiplier=block_multiplier)
    max_err = float(jnp.max(jnp.abs(out - ref)))
    mean_err = float(jnp.mean(jnp.abs(out - ref)))
    assert max_err < 0.5 and mean_err < 0.06, (max_err, mean_err)

    print("KERNEL_OK")
</pallas_src>

<mosaic_0001>
module attributes {stable_mosaic.version = 11 : i64} {
  func.func @_cell_kernel(%arg0: memref<32x64xf32, #tpu.memory_space<vmem>>, %arg1: memref<32x64xf32, #tpu.memory_space<vmem>>, %arg2: memref<64x128xbf16, #tpu.memory_space<vmem>>, %arg3: memref<64x128xbf16, #tpu.memory_space<vmem>>, %arg4: memref<5x32x1xf32, #tpu.memory_space<vmem>>, %arg5: memref<10x128x128xbf16, #tpu.memory_space<vmem>>, %arg6: memref<250x128xf32, #tpu.memory_space<vmem>>, %arg7: memref<2x32x128xf32, #tpu.memory_space<vmem>>) attributes {dimension_semantics = [], scalar_prefetch = 0 : i64, scratch_operands = 0 : i64, tpu.core_type = #tpu.core_type<tc>} {
    %c0 = arith.constant 0 : index
    %c0_0 = arith.constant 0 : index
    %0 = vector.load %arg0[%c0, %c0_0] : memref<32x64xf32, #tpu.memory_space<vmem>>, vector<32x64xf32>
    %cst = arith.constant 0.000000e+00 : f32
    %1 = vector.broadcast %cst : f32 to vector<32x64xf32>
    %2 = arith.maximumf %0, %1 : vector<32x64xf32>
    %3 = arith.truncf %2 : vector<32x64xf32> to vector<32x64xbf16>
    %c0_1 = arith.constant 0 : index
    %c0_2 = arith.constant 0 : index
    %4 = vector.load %arg2[%c0_1, %c0_2] : memref<64x128xbf16, #tpu.memory_space<vmem>>, vector<64x128xbf16>
    %cst_3 = arith.constant dense<0.000000e+00> : vector<32x128xf32>
    %5 = tpu.matmul %3, %4, %cst_3 {dimension_numbers = #tpu.dot_dimension_numbers<[1], [0], [0], [1], [0, 0, 1, 1], [], []>} : vector<32x64xbf16>, vector<64x128xbf16>, vector<32x128xf32> -> vector<32x128xf32>
    %cst_4 = arith.constant dense<0.000000e+00> : vector<128xf32>
    %6 = vector.multi_reduction <add>, %5, %cst_4 [0] : vector<32x128xf32> to vector<128xf32>
    %7 = vector.shape_cast %6 : vector<128xf32> to vector<1x128xf32>
    %c8_i32 = arith.constant 8 : i32
    %8 = tpu.dynamic_rotate %7 by %c8_i32 dim 1 : vector<1x128xf32>, i32 -> vector<1x128xf32>
    %9 = arith.addf %7, %8 : vector<1x128xf32>
    %c16_i32 = arith.constant 16 : i32
    %10 = tpu.dynamic_rotate %9 by %c16_i32 dim 1 : vector<1x128xf32>, i32 -> vector<1x128xf32>
    %11 = arith.addf %9, %10 : vector<1x128xf32>
    %c32_i32 = arith.constant 32 : i32
    %12 = tpu.dynamic_rotate %11 by %c32_i32 dim 1 : vector<1x128xf32>, i32 -> vector<1x128xf32>
    %13 = arith.addf %11, %12 : vector<1x128xf32>
    %c64_i32 = arith.constant 64 : i32
    %14 = tpu.dynamic_rotate %13 by %c64_i32 dim 1 : vector<1x128xf32>, i32 -> vector<1x128xf32>
    %15 = arith.addf %13, %14 : vector<1x128xf32>
    %cst_5 = arith.constant 5.120000e+02 : f32
    %16 = vector.broadcast %cst_5 : f32 to vector<1x128xf32>
    %17 = arith.divf %15, %16 : vector<1x128xf32>
    %18 = vector.broadcast %17 : vector<1x128xf32> to vector<32x128xf32>
    %19 = arith.subf %5, %18 : vector<32x128xf32>
    %20 = arith.mulf %19, %19 : vector<32x128xf32>
    %cst_6 = arith.constant dense<0.000000e+00> : vector<128xf32>
    %21 = vector.multi_reduction <add>, %20, %cst_6 [0] : vector<32x128xf32> to vector<128xf32>
    %22 = vector.shape_cast %21 : vector<128xf32> to vector<1x128xf32>
    %c8_i32_7 = arith.constant 8 : i32
    %23 = tpu.dynamic_rotate %22 by %c8_i32_7 dim 1 : vector<1x128xf32>, i32 -> vector<1x128xf32>
    %24 = arith.addf %22, %23 : vector<1x128xf32>
    %c16_i32_8 = arith.constant 16 : i32
    %25 = tpu.dynamic_rotate %24 by %c16_i32_8 dim 1 : vector<1x128xf32>, i32 -> vector<1x128xf32>
    %26 = arith.addf %24, %25 : vector<1x128xf32>
    %c32_i32_9 = arith.constant 32 : i32
    %27 = tpu.dynamic_rotate %26 by %c32_i32_9 dim 1 : vector<1x128xf32>, i32 -> vector<1x128xf32>
    %28 = arith.addf %26, %27 : vector<1x128xf32>
    %c64_i32_10 = arith.constant 64 : i32
    %29 = tpu.dynamic_rotate %28 by %c64_i32_10 dim 1 : vector<1x128xf32>, i32 -> vector<1x128xf32>
    %30 = arith.addf %28, %29 : vector<1x128xf32>
    %cst_11 = arith.constant 5.120000e+02 : f32
    %31 = vector.broadcast %cst_11 : f32 to vector<1x128xf32>
    %32 = arith.divf %30, %31 : vector<1x128xf32>
    %cst_12 = arith.constant 9.99999974E-6 : f32
    %33 = vector.broadcast %cst_12 : f32 to vector<1x128xf32>
    %34 = arith.addf %32, %33 : vector<1x128xf32>
    %35 = math.rsqrt %34 : vector<1x128xf32>
    %36 = vector.broadcast %35 : vector<1x128xf32> to vector<32x128xf32>
    %37 = arith.mulf %19, %36 : vector<32x128xf32>
    %c0_13 = arith.constant 0 : index
    %c0_14 = arith.constant 0 : index
    %38 = vector.load %arg1[%c0_13, %c0_14] : memref<32x64xf32, #tpu.memory_space<vmem>>, vector<32x64xf32>
    %cst_15 = arith.constant 0.000000e+00 : f32
    %39 = vector.broadcast %cst_15 : f32 to vector<32x64xf32>
    %40 = arith.maximumf %38, %39 : vector<32x64xf32>
    %41 = arith.truncf %40 : vector<32x64xf32> to vector<32x64xbf16>
    %c0_16 = arith.constant 0 : index
    %c0_17 = arith.constant 0 : index
    %42 = vector.load %arg3[%c0_16, %c0_17] : memref<64x128xbf16, #tpu.memory_space<vmem>>, vector<64x128xbf16>
    %cst_18 = arith.constant dense<0.000000e+00> : vector<32x128xf32>
    %43 = tpu.matmul %41, %42, %cst_18 {dimension_numbers = #tpu.dot_dimension_numbers<[1], [0], [0], [1], [0, 0, 1, 1], [], []>} : vector<32x64xbf16>, vector<64x128xbf16>, vector<32x128xf32> -> vector<32x128xf32>
    %cst_19 = arith.constant dense<0.000000e+00> : vector<128xf32>
    %44 = vector.multi_reduction <add>, %43, %cst_19 [0] : vector<32x128xf32> to vector<128xf32>
    %45 = vector.shape_cast %44 : vector<128xf32> to vector<1x128xf32>
    %c8_i32_20 = arith.constant 8 : i32
    %46 = tpu.dynamic_rotate %45 by %c8_i32_20 dim 1 : vector<1x128xf32>, i32 -> vector<1x128xf32>
    %47 = arith.addf %45, %46 : vector<1x128xf32>
    %c16_i32_21 = arith.constant 16 : i32
    %48 = tpu.dynamic_rotate %47 by %c16_i32_21 dim 1 : vector<1x128xf32>, i32 -> vector<1x128xf32>
    %49 = arith.addf %47, %48 : vector<1x128xf32>
    %c32_i32_22 = arith.constant 32 : i32
    %50 = tpu.dynamic_rotate %49 by %c32_i32_22 dim 1 : vector<1x128xf32>, i32 -> vector<1x128xf32>
    %51 = arith.addf %49, %50 : vector<1x128xf32>
    %c64_i32_23 = arith.constant 64 : i32
    %52 = tpu.dynamic_rotate %51 by %c64_i32_23 dim 1 : vector<1x128xf32>, i32 -> vector<1x128xf32>
    %53 = arith.addf %51, %52 : vector<1x128xf32>
    %cst_24 = arith.constant 5.120000e+02 : f32
    %54 = vector.broadcast %cst_24 : f32 to vector<1x128xf32>
    %55 = arith.divf %53, %54 : vector<1x128xf32>
    %56 = vector.broadcast %55 : vector<1x128xf32> to vector<32x128xf32>
    %57 = arith.subf %43, %56 : vector<32x128xf32>
    %58 = arith.mulf %57, %57 : vector<32x128xf32>
    %cst_25 = arith.constant dense<0.000000e+00> : vector<128xf32>
    %59 = vector.multi_reduction <add>, %58, %cst_25 [0] : vector<32x128xf32> to vector<128xf32>
    %60 = vector.shape_cast %59 : vector<128xf32> to vector<1x128xf32>
    %c8_i32_26 = arith.constant 8 : i32
    %61 = tpu.dynamic_rotate %60 by %c8_i32_26 dim 1 : vector<1x128xf32>, i32 -> vector<1x128xf32>
    %62 = arith.addf %60, %61 : vector<1x128xf32>
    %c16_i32_27 = arith.constant 16 : i32
    %63 = tpu.dynamic_rotate %62 by %c16_i32_27 dim 1 : vector<1x128xf32>, i32 -> vector<1x128xf32>
    %64 = arith.addf %62, %63 : vector<1x128xf32>
    %c32_i32_28 = arith.constant 32 : i32
    %65 = tpu.dynamic_rotate %64 by %c32_i32_28 dim 1 : vector<1x128xf32>, i32 -> vector<1x128xf32>
    %66 = arith.addf %64, %65 : vector<1x128xf32>
    %c64_i32_29 = arith.constant 64 : i32
    %67 = tpu.dynamic_rotate %66 by %c64_i32_29 dim 1 : vector<1x128xf32>, i32 -> vector<1x128xf32>
    %68 = arith.addf %66, %67 : vector<1x128xf32>
    %cst_30 = arith.constant 5.120000e+02 : f32
    %69 = vector.broadcast %cst_30 : f32 to vector<1x128xf32>
    %70 = arith.divf %68, %69 : vector<1x128xf32>
    %cst_31 = arith.constant 9.99999974E-6 : f32
    %71 = vector.broadcast %cst_31 : f32 to vector<1x128xf32>
    %72 = arith.addf %70, %71 : vector<1x128xf32>
    %73 = math.rsqrt %72 : vector<1x128xf32>
    %74 = vector.broadcast %73 : vector<1x128xf32> to vector<32x128xf32>
    %75 = arith.mulf %57, %74 : vector<32x128xf32>
    %cst_32 = arith.constant 0.000000e+00 : f32
    %76 = vector.broadcast %cst_32 : f32 to vector<32x128xf32>
    %cst_33 = arith.constant 0.000000e+00 : f32
    %77 = vector.broadcast %cst_33 : f32 to vector<32x128xf32>
    %78 = arith.maximumf %37, %77 : vector<32x128xf32>
    %cst_34 = arith.constant 0.000000e+00 : f32
    %79 = vector.broadcast %cst_34 : f32 to vector<32x128xf32>
    %c1_i32 = arith.constant 1 : i32
    %80 = tpu.dynamic_rotate %78 by %c1_i32 dim 0 : vector<32x128xf32>, i32 -> vector<32x128xf32>
    %c1 = arith.constant 1 : index
    %c0_35 = arith.constant 0 : index
    %c0_36 = arith.constant 0 : index
    %81 = vector.load %arg4[%c1, %c0_35, %c0_36] : memref<5x32x1xf32, #tpu.memory_space<vmem>>, vector<1x32x1xf32>
    %82 = vector.shape_cast %81 : vector<1x32x1xf32> to vector<32x1xf32>
    %83 = vector.broadcast %82 : vector<32x1xf32> to vector<32x128xf32>
    %84 = arith.mulf %80, %83 : vector<32x128xf32>
    %c8_i32_37 = arith.constant 8 : i32
    %85 = tpu.dynamic_rotate %84 by %c8_i32_37 dim 1 : vector<32x128xf32>, i32 -> vector<32x128xf32>
    %c0_38 = arith.constant 0 : index
    %c0_39 = arith.constant 0 : index
    %86 = vector.load %arg6[%c0_38, %c0_39] : memref<250x128xf32, #tpu.memory_space<vmem>>, vector<1x128xf32>
    %87 = vector.broadcast %86 : vector<1x128xf32> to vector<32x128xf32>
    %88 = arith.mulf %85, %87 : vector<32x128xf32>
    %89 = arith.addf %79, %88 : vector<32x128xf32>
    %c1_40 = arith.constant 1 : index
    %c0_41 = arith.constant 0 : index
    %90 = vector.load %arg6[%c1_40, %c0_41] : memref<250x128xf32, #tpu.memory_space<vmem>>, vector<1x128xf32>
    %91 = vector.broadcast %90 : vector<1x128xf32> to vector<32x128xf32>
    %92 = arith.mulf %84, %91 : vector<32x128xf32>
    %93 = arith.addf %89, %92 : vector<32x128xf32>
    %c120_i32 = arith.constant 120 : i32
    %94 = tpu.dynamic_rotate %84 by %c120_i32 dim 1 : vector<32x128xf32>, i32 -> vector<32x128xf32>
    %c2 = arith.constant 2 : index
    %c0_42 = arith.constant 0 : index
    %95 = vector.load %arg6[%c2, %c0_42] : memref<250x128xf32, #tpu.memory_space<vmem>>, vector<1x128xf32>
    %96 = vector.broadcast %95 : vector<1x128xf32> to vector<32x128xf32>
    %97 = arith.mulf %94, %96 : vector<32x128xf32>
    %98 = arith.addf %93, %97 : vector<32x128xf32>
    %c8_i32_43 = arith.constant 8 : i32
    %99 = tpu.dynamic_rotate %78 by %c8_i32_43 dim 1 : vector<32x128xf32>, i32 -> vector<32x128xf32>
    %c5 = arith.constant 5 : index
    %c0_44 = arith.constant 0 : index
    %100 = vector.load %arg6[%c5, %c0_44] : memref<250x128xf32, #tpu.memory_space<vmem>>, vector<1x128xf32>
    %101 = vector.broadcast %100 : vector<1x128xf32> to vector<32x128xf32>
    %102 = arith.mulf %99, %101 : vector<32x128xf32>
    %103 = arith.addf %98, %102 : vector<32x128xf32>
    %c6 = arith.constant 6 : index
    %c0_45 = arith.constant 0 : index
    %104 = vector.load %arg6[%c6, %c0_45] : memref<250x128xf32, #tpu.memory_space<vmem>>, vector<1x128xf32>
    %105 = vector.broadcast %104 : vector<1x128xf32> to vector<32x128xf32>
    %106 = arith.mulf %78, %105 : vector<32x128xf32>
    %107 = arith.addf %103, %106 : vector<32x128xf32>
    %c120_i32_46 = arith.constant 120 : i32
    %108 = tpu.dynamic_rotate %78 by %c120_i32_46 dim 1 : vector<32x128xf32>, i32 -> vector<32x128xf32>
    %c7 = arith.constant 7 : index
    %c0_47 = arith.constant 0 : index
    %109 = vector.load %arg6[%c7, %c0_47] : memref<250x128xf32, #tpu.memory_space<vmem>>, vector<1x128xf32>
    %110 = vector.broadcast %109 : vector<1x128xf32> to vector<32x128xf32>
    %111 = arith.mulf %108, %110 : vector<32x128xf32>
    %112 = arith.addf %107, %111 : vector<32x128xf32>
    %c31_i32 = arith.constant 31 : i32
    %113 = tpu.dynamic_rotate %78 by %c31_i32 dim 0 : vector<32x128xf32>, i32 -> vector<32x128xf32>
    %c3 = arith.constant 3 : index
    %c0_48 = arith.constant 0 : index
    %c0_49 = arith.constant 0 : index
    %114 = vector.load %arg4[%c3, %c0_48, %c0_49] : memref<5x32x1xf32, #tpu.memory_space<vmem>>, vector<1x32x1xf32>
    %115 = vector.shape_cast %114 : vector<1x32x1xf32> to vector<32x1xf32>
    %116 = vector.broadcast %115 : vector<32x1xf32> to vector<32x128xf32>
    %117 = arith.mulf %113, %116 : vector<32x128xf32>
    %c8_i32_50 = arith.constant 8 : i32
    %118 = tpu.dynamic_rotate %117 by %c8_i32_50 dim 1 : vector<32x128xf32>, i32 -> vector<32x128xf32>
    %c10 = arith.constant 10 : index
    %c0_51 = arith.constant 0 : index
    %119 = vector.load %arg6[%c10, %c0_51] : memref<250x128xf32, #tpu.memory_space<vmem>>, vector<1x128xf32>
    %120 = vector.broadcast %119 : vector<1x128xf32> to vector<32x128xf32>
    %121 = arith.mulf %118, %120 : vector<32x128xf32>
    %122 = arith.addf %112, %121 : vector<32x128xf32>
    %c11 = arith.constant 11 : index
    %c0_52 = arith.constant 0 : index
    %123 = vector.load %arg6[%c11, %c0_52] : memref<250x128xf32, #tpu.memory_space<vmem>>, vector<1x128xf32>
    %124 = vector.broadcast %123 : vector<1x128xf32> to vector<32x128xf32>
    %125 = arith.mulf %117, %124 : vector<32x128xf32>
    %126 = arith.addf %122, %125 : vector<32x128xf32>
    %c120_i32_53 = arith.constant 120 : i32
    %127 = tpu.dynamic_rotate %117 by %c120_i32_53 dim 1 : vector<32x128xf32>, i32 -> vector<32x128xf32>
    %c12 = arith.constant 12 : index
    %c0_54 = arith.constant 0 : index
    %128 = vector.load %arg6[%c12, %c0_54] : memref<250x128xf32, #tpu.memory_space<vmem>>, vector<1x128xf32>
    %129 = vector.broadcast %128 : vector<1x128xf32> to vector<32x128xf32>
    %130 = arith.mulf %127, %129 : vector<32x128xf32>
    %131 = arith.addf %126, %130 : vector<32x128xf32>
    %132 = arith.truncf %131 : vector<32x128xf32> to vector<32x128xbf16>
    %c0_55 = arith.constant 0 : index
    %c0_56 = arith.constant 0 : index
    %c0_57 = arith.constant 0 : index
    %133 = vector.load %arg5[%c0_55, %c0_56, %c0_57] : memref<10x128x128xbf16, #tpu.memory_space<vmem>>, vector<1x128x128xbf16>
    %134 = vector.shape_cast %133 : vector<1x128x128xbf16> to vector<128x128xbf16>
    %cst_58 = arith.constant dense<0.000000e+00> : vector<32x128xf32>
    %135 = tpu.matmul %132, %134, %cst_58 {dimension_numbers = #tpu.dot_dimension_numbers<[1], [0], [0], [1], [0, 0, 1, 1], [], []>} : vector<32x128xbf16>, vector<128x128xbf16>, vector<32x128xf32> -> vector<32x128xf32>
    %cst_59 = arith.constant dense<0.000000e+00> : vector<128xf32>
    %136 = vector.multi_reduction <add>, %135, %cst_59 [0] : vector<32x128xf32> to vector<128xf32>
    %137 = vector.shape_cast %136 : vector<128xf32> to vector<1x128xf32>
    %c8_i32_60 = arith.constant 8 : i32
    %138 = tpu.dynamic_rotate %137 by %c8_i32_60 dim 1 : vector<1x128xf32>, i32 -> vector<1x128xf32>
    %139 = arith.addf %137, %138 : vector<1x128xf32>
    %c16_i32_61 = arith.constant 16 : i32
    %140 = tpu.dynamic_rotate %139 by %c16_i32_61 dim 1 : vector<1x128xf32>, i32 -> vector<1x128xf32>
    %141 = arith.addf %139, %140 : vector<1x128xf32>
    %c32_i32_62 = arith.constant 32 : i32
    %142 = tpu.dynamic_rotate %141 by %c32_i32_62 dim 1 : vector<1x128xf32>, i32 -> vector<1x128xf32>
    %143 = arith.addf %141, %142 : vector<1x128xf32>
    %c64_i32_63 = arith.constant 64 : i32
    %144 = tpu.dynamic_rotate %143 by %c64_i32_63 dim 1 : vector<1x128xf32>, i32 -> vector<1x128xf32>
    %145 = arith.addf %143, %144 : vector<1x128xf32>
    %cst_64 = arith.constant 5.120000e+02 : f32
    %146 = vector.broadcast %cst_64 : f32 to vector<1x128xf32>
    %147 = arith.divf %145, %146 : vector<1x128xf32>
    %148 = vector.broadcast %147 : vector<1x128xf32> to vector<32x128xf32>
    %149 = arith.subf %135, %148 : vector<32x128xf32>
    %150 = arith.mulf %149, %149 : vector<32x128xf32>
    %cst_65 = arith.constant dense<0.000000e+00> : vector<128xf32>
    %151 = vector.multi_reduction <add>, %150, %cst_65 [0] : vector<32x128xf32> to vector<128xf32>
    %152 = vector.shape_cast %151 : vector<128xf32> to vector<1x128xf32>
    %c8_i32_66 = arith.constant 8 : i32
    %153 = tpu.dynamic_rotate %152 by %c8_i32_66 dim 1 : vector<1x128xf32>, i32 -> vector<1x128xf32>
    %154 = arith.addf %152, %153 : vector<1x128xf32>
    %c16_i32_67 = arith.constant 16 : i32
    %155 = tpu.dynamic_rotate %154 by %c16_i32_67 dim 1 : vector<1x128xf32>, i32 -> vector<1x128xf32>
    %156 = arith.addf %154, %155 : vector<1x128xf32>
    %c32_i32_68 = arith.constant 32 : i32
    %157 = tpu.dynamic_rotate %156 by %c32_i32_68 dim 1 : vector<1x128xf32>, i32 -> vector<1x128xf32>
    %158 = arith.addf %156, %157 : vector<1x128xf32>
    %c64_i32_69 = arith.constant 64 : i32
    %159 = tpu.dynamic_rotate %158 by %c64_i32_69 dim 1 : vector<1x128xf32>, i32 -> vector<1x128xf32>
    %160 = arith.addf %158, %159 : vector<1x128xf32>
    %cst_70 = arith.constant 5.120000e+02 : f32
    %161 = vector.broadcast %cst_70 : f32 to vector<1x128xf32>
    %162 = arith.divf %160, %161 : vector<1x128xf32>
    %cst_71 = arith.constant 9.99999974E-6 : f32
    %163 = vector.broadcast %cst_71 : f32 to vector<1x128xf32>
    %164 = arith.addf %162, %163 : vector<1x128xf32>
    %165 = math.rsqrt %164 : vector<1x128xf32>
    %166 = vector.broadcast %165 : vector<1x128xf32> to vector<32x128xf32>
    %167 = arith.mulf %149, %166 : vector<32x128xf32>
    %cst_72 = arith.constant 0.000000e+00 : f32
    %168 = vector.broadcast %cst_72 : f32 to vector<32x128xf32>
    %169 = arith.maximumf %167, %168 : vector<32x128xf32>
    %cst_73 = arith.constant 0.000000e+00 : f32
    %170 = vector.broadcast %cst_73 : f32 to vector<32x128xf32>
    %c1_i32_74 = arith.constant 1 : i32
    %171 = tpu.dynamic_rotate %169 by %c1_i32_74 dim 0 : vector<32x128xf32>, i32 -> vector<32x128xf32>
    %c1_75 = arith.constant 1 : index
    %c0_76 = arith.constant 0 : index
    %c0_77 = arith.constant 0 : index
    %172 = vector.load %arg4[%c1_75, %c0_76, %c0_77] : memref<5x32x1xf32, #tpu.memory_space<vmem>>, vector<1x32x1xf32>
    %173 = vector.shape_cast %172 : vector<1x32x1xf32> to vector<32x1xf32>
    %174 = vector.broadcast %173 : vector<32x1xf32> to vector<32x128xf32>
    %175 = arith.mulf %171, %174 : vector<32x128xf32>
    %c8_i32_78 = arith.constant 8 : i32
    %176 = tpu.dynamic_rotate %175 by %c8_i32_78 dim 1 : vector<32x128xf32>, i32 -> vector<32x128xf32>
    %c25 = arith.constant 25 : index
    %c0_79 = arith.constant 0 : index
    %177 = vector.load %arg6[%c25, %c0_79] : memref<250x128xf32, #tpu.memory_space<vmem>>, vector<1x128xf32>
    %178 = vector.broadcast %177 : vector<1x128xf32> to vector<32x128xf32>
    %179 = arith.mulf %176, %178 : vector<32x128xf32>
    %180 = arith.addf %170, %179 : vector<32x128xf32>
    %c26 = arith.constant 26 : index
    %c0_80 = arith.constant 0 : index
    %181 = vector.load %arg6[%c26, %c0_80] : memref<250x128xf32, #tpu.memory_space<vmem>>, vector<1x128xf32>
    %182 = vector.broadcast %181 : vector<1x128xf32> to vector<32x128xf32>
    %183 = arith.mulf %175, %182 : vector<32x128xf32>
    %184 = arith.addf %180, %183 : vector<32x128xf32>
    %c120_i32_81 = arith.constant 120 : i32
    %185 = tpu.dynamic_rotate %175 by %c120_i32_81 dim 1 : vector<32x128xf32>, i32 -> vector<32x128xf32>
    %c27 = arith.constant 27 : index
    %c0_82 = arith.constant 0 : index
    %186 = vector.load %arg6[%c27, %c0_82] : memref<250x128xf32, #tpu.memory_space<vmem>>, vector<1x128xf32>
    %187 = vector.broadcast %186 : vector<1x128xf32> to vector<32x128xf32>
    %188 = arith.mulf %185, %187 : vector<32x128xf32>
    %189 = arith.addf %184, %188 : vector<32x128xf32>
    %c8_i32_83 = arith.constant 8 : i32
    %190 = tpu.dynamic_rotate %169 by %c8_i32_83 dim 1 : vector<32x128xf32>, i32 -> vector<32x128xf32>
    %c30 = arith.constant 30 : index
    %c0_84 = arith.constant 0 : index
    %191 = vector.load %arg6[%c30, %c0_84] : memref<250x128xf32, #tpu.memory_space<vmem>>, vector<1x128xf32>
    %192 = vector.broadcast %191 : vector<1x128xf32> to vector<32x128xf32>
    %193 = arith.mulf %190, %192 : vector<32x128xf32>
    %194 = arith.addf %189, %193 : vector<32x128xf32>
    %c31 = arith.constant 31 : index
    %c0_85 = arith.constant 0 : index
    %195 = vector.load %arg6[%c31, %c0_85] : memref<250x128xf32, #tpu.memory_space<vmem>>, vector<1x128xf32>
    %196 = vector.broadcast %195 : vector<1x128xf32> to vector<32x128xf32>
    %197 = arith.mulf %169, %196 : vector<32x128xf32>
    %198 = arith.addf %194, %197 : vector<32x128xf32>
    %c120_i32_86 = arith.constant 120 : i32
    %199 = tpu.dynamic_rotate %169 by %c120_i32_86 dim 1 : vector<32x128xf32>, i32 -> vector<32x128xf32>
    %c32 = arith.constant 32 : index
    %c0_87 = arith.constant 0 : index
    %200 = vector.load %arg6[%c32, %c0_87] : memref<250x128xf32, #tpu.memory_space<vmem>>, vector<1x128xf32>
    %201 = vector.broadcast %200 : vector<1x128xf32> to vector<32x128xf32>
    %202 = arith.mulf %199, %201 : vector<32x128xf32>
    %203 = arith.addf %198, %202 : vector<32x128xf32>
    %c31_i32_88 = arith.constant 31 : i32
    %204 = tpu.dynamic_rotate %169 by %c31_i32_88 dim 0 : vector<32x128xf32>, i32 -> vector<32x128xf32>
    %c3_89 = arith.constant 3 : index
    %c0_90 = arith.constant 0 : index
    %c0_91 = arith.constant 0 : index
    %205 = vector.load %arg4[%c3_89, %c0_90, %c0_91] : memref<5x32x1xf32, #tpu.memory_space<vmem>>, vector<1x32x1xf32>
    %206 = vector.shape_cast %205 : vector<1x32x1xf32> to vector<32x1xf32>
    %207 = vector.broadcast %206 : vector<32x1xf32> to vector<32x128xf32>
    %208 = arith.mulf %204, %207 : vector<32x128xf32>
    %c8_i32_92 = arith.constant 8 : i32
    %209 = tpu.dynamic_rotate %208 by %c8_i32_92 dim 1 : vector<32x128xf32>, i32 -> vector<32x128xf32>
    %c35 = arith.constant 35 : index
    %c0_93 = arith.constant 0 : index
    %210 = vector.load %arg6[%c35, %c0_93] : memref<250x128xf32, #tpu.memory_space<vmem>>, vector<1x128xf32>
    %211 = vector.broadcast %210 : vector<1x128xf32> to vector<32x128xf32>
    %212 = arith.mulf %209, %211 : vector<32x128xf32>
    %213 = arith.addf %203, %212 : vector<32x128xf32>
    %c36 = arith.constant 36 : index
    %c0_94 = arith.constant 0 : index
    %214 = vector.load %arg6[%c36, %c0_94] : memref<250x128xf32, #tpu.memory_space<vmem>>, vector<1x128xf32>
    %215 = vector.broadcast %214 : vector<1x128xf32> to vector<32x128xf32>
    %216 = arith.mulf %208, %215 : vector<32x128xf32>
    %217 = arith.addf %213, %216 : vector<32x128xf32>
    %c120_i32_95 = arith.constant 120 : i32
    %218 = tpu.dynamic_rotate %208 by %c120_i32_95 dim 1 : vector<32x128xf32>, i32 -> vector<32x128xf32>
    %c37 = arith.constant 37 : index
    %c0_96 = arith.constant 0 : index
    %219 = vector.load %arg6[%c37, %c0_96] : memref<250x128xf32, #tpu.memory_space<vmem>>, vector<1x128xf32>
    %220 = vector.broadcast %219 : vector<1x128xf32> to vector<32x128xf32>
    %221 = arith.mulf %218, %220 : vector<32x128xf32>
    %222 = arith.addf %217, %221 : vector<32x128xf32>
    %223 = arith.truncf %222 : vector<32x128xf32> to vector<32x128xbf16>
    %c1_97 = arith.constant 1 : index
    %c0_98 = arith.constant 0 : index
    %c0_99 = arith.constant 0 : index
    %224 = vector.load %arg5[%c1_97, %c0_98, %c0_99] : memref<10x128x128xbf16, #tpu.memory_space<vmem>>, vector<1x128x128xbf16>
    %225 = vector.shape_cast %224 : vector<1x128x128xbf16> to vector<128x128xbf16>
    %cst_100 = arith.constant dense<0.000000e+00> : vector<32x128xf32>
    %226 = tpu.matmul %223, %225, %cst_100 {dimension_numbers = #tpu.dot_dimension_numbers<[1], [0], [0], [1], [0, 0, 1, 1], [], []>} : vector<32x128xbf16>, vector<128x128xbf16>, vector<32x128xf32> -> vector<32x128xf32>
    %cst_101 = arith.constant dense<0.000000e+00> : vector<128xf32>
    %227 = vector.multi_reduction <add>, %226, %cst_101 [0] : vector<32x128xf32> to vector<128xf32>
    %228 = vector.shape_cast %227 : vector<128xf32> to vector<1x128xf32>
    %c8_i32_102 = arith.constant 8 : i32
    %229 = tpu.dynamic_rotate %228 by %c8_i32_102 dim 1 : vector<1x128xf32>, i32 -> vector<1x128xf32>
    %230 = arith.addf %228, %229 : vector<1x128xf32>
    %c16_i32_103 = arith.constant 16 : i32
    %231 = tpu.dynamic_rotate %230 by %c16_i32_103 dim 1 : vector<1x128xf32>, i32 -> vector<1x128xf32>
    %232 = arith.addf %230, %231 : vector<1x128xf32>
    %c32_i32_104 = arith.constant 32 : i32
    %233 = tpu.dynamic_rotate %232 by %c32_i32_104 dim 1 : vector<1x128xf32>, i32 -> vector<1x128xf32>
    %234 = arith.addf %232, %233 : vector<1x128xf32>
    %c64_i32_105 = arith.constant 64 : i32
    %235 = tpu.dynamic_rotate %234 by %c64_i32_105 dim 1 : vector<1x128xf32>, i32 -> vector<1x128xf32>
    %236 = arith.addf %234, %235 : vector<1x128xf32>
    %cst_106 = arith.constant 5.120000e+02 : f32
    %237 = vector.broadcast %cst_106 : f32 to vector<1x128xf32>
    %238 = arith.divf %236, %237 : vector<1x128xf32>
    %239 = vector.broadcast %238 : vector<1x128xf32> to vector<32x128xf32>
    %240 = arith.subf %226, %239 : vector<32x128xf32>
    %241 = arith.mulf %240, %240 : vector<32x128xf32>
    %cst_107 = arith.constant dense<0.000000e+00> : vector<128xf32>
    %242 = vector.multi_reduction <add>, %241, %cst_107 [0] : vector<32x128xf32> to vector<128xf32>
    %243 = vector.shape_cast %242 : vector<128xf32> to vector<1x128xf32>
    %c8_i32_108 = arith.constant 8 : i32
    %244 = tpu.dynamic_rotate %243 by %c8_i32_108 dim 1 : vector<1x128xf32>, i32 -> vector<1x128xf32>
    %245 = arith.addf %243, %244 : vector<1x128xf32>
    %c16_i32_109 = arith.constant 16 : i32
    %246 = tpu.dynamic_rotate %245 by %c16_i32_109 dim 1 : vector<1x128xf32>, i32 -> vector<1x128xf32>
    %247 = arith.addf %245, %246 : vector<1x128xf32>
    %c32_i32_110 = arith.constant 32 : i32
    %248 = tpu.dynamic_rotate %247 by %c32_i32_110 dim 1 : vector<1x128xf32>, i32 -> vector<1x128xf32>
    %249 = arith.addf %247, %248 : vector<1x128xf32>
    %c64_i32_111 = arith.constant 64 : i32
    %250 = tpu.dynamic_rotate %249 by %c64_i32_111 dim 1 : vector<1x128xf32>, i32 -> vector<1x128xf32>
    %251 = arith.addf %249, %250 : vector<1x128xf32>
    %cst_112 = arith.constant 5.120000e+02 : f32
    %252 = vector.broadcast %cst_112 : f32 to vector<1x128xf32>
    %253 = arith.divf %251, %252 : vector<1x128xf32>
    %cst_113 = arith.constant 9.99999974E-6 : f32
    %254 = vector.broadcast %cst_113 : f32 to vector<1x128xf32>
    %255 = arith.addf %253, %254 : vector<1x128xf32>
    %256 = math.rsqrt %255 : vector<1x128xf32>
    %257 = vector.broadcast %256 : vector<1x128xf32> to vector<32x128xf32>
    %258 = arith.mulf %240, %257 : vector<32x128xf32>
    %259 = arith.addf %76, %258 : vector<32x128xf32>
    %cst_114 = arith.constant 0.000000e+00 : f32
    %260 = vector.broadcast %cst_114 : f32 to vector<32x128xf32>
    %261 = arith.maximumf %75, %260 : vector<32x128xf32>
    %cst_115 = arith.constant 0.000000e+00 : f32
    %262 = vector.broadcast %cst_115 : f32 to vector<32x128xf32>
    %c2_i32 = arith.constant 2 : i32
    %263 = tpu.dynamic_rotate %261 by %c2_i32 dim 0 : vector<32x128xf32>, i32 -> vector<32x128xf32>
    %c0_116 = arith.constant 0 : index
    %c0_117 = arith.constant 0 : index
    %c0_118 = arith.constant 0 : index
    %264 = vector.load %arg4[%c0_116, %c0_117, %c0_118] : memref<5x32x1xf32, #tpu.memory_space<vmem>>, vector<1x32x1xf32>
    %265 = vector.shape_cast %264 : vector<1x32x1xf32> to vector<32x1xf32>
    %266 = vector.broadcast %265 : vector<32x1xf32> to vector<32x128xf32>
    %267 = arith.mulf %263, %266 : vector<32x128xf32>
    %c16_i32_119 = arith.constant 16 : i32
    %268 = tpu.dynamic_rotate %267 by %c16_i32_119 dim 1 : vector<32x128xf32>, i32 -> vector<32x128xf32>
    %c50 = arith.constant 50 : index
    %c0_120 = arith.constant 0 : index
    %269 = vector.load %arg6[%c50, %c0_120] : memref<250x128xf32, #tpu.memory_space<vmem>>, vector<1x128xf32>
    %270 = vector.broadcast %269 : vector<1x128xf32> to vector<32x128xf32>
    %271 = arith.mulf %268, %270 : vector<32x128xf32>
    %272 = arith.addf %262, %271 : vector<32x128xf32>
    %c8_i32_121 = arith.constant 8 : i32
    %273 = tpu.dynamic_rotate %267 by %c8_i32_121 dim 1 : vector<32x128xf32>, i32 -> vector<32x128xf32>
    %c51 = arith.constant 51 : index
    %c0_122 = arith.constant 0 : index
    %274 = vector.load %arg6[%c51, %c0_122] : memref<250x128xf32, #tpu.memory_space<vmem>>, vector<1x128xf32>
    %275 = vector.broadcast %274 : vector<1x128xf32> to vector<32x128xf32>
    %276 = arith.mulf %273, %275 : vector<32x128xf32>
    %277 = arith.addf %272, %276 : vector<32x128xf32>
    %c52 = arith.constant 52 : index
    %c0_123 = arith.constant 0 : index
    %278 = vector.load %arg6[%c52, %c0_123] : memref<250x128xf32, #tpu.memory_space<vmem>>, vector<1x128xf32>
    %279 = vector.broadcast %278 : vector<1x128xf32> to vector<32x128xf32>
    %280 = arith.mulf %267, %279 : vector<32x128xf32>
    %281 = arith.addf %277, %280 : vector<32x128xf32>
    %c120_i32_124 = arith.constant 120 : i32
    %282 = tpu.dynamic_rotate %267 by %c120_i32_124 dim 1 : vector<32x128xf32>, i32 -> vector<32x128xf32>
    %c53 = arith.constant 53 : index
    %c0_125 = arith.constant 0 : index
    %283 = vector.load %arg6[%c53, %c0_125] : memref<250x128xf32, #tpu.memory_space<vmem>>, vector<1x128xf32>
    %284 = vector.broadcast %283 : vector<1x128xf32> to vector<32x128xf32>
    %285 = arith.mulf %282, %284 : vector<32x128xf32>
    %286 = arith.addf %281, %285 : vector<32x128xf32>
    %c112_i32 = arith.constant 112 : i32
    %287 = tpu.dynamic_rotate %267 by %c112_i32 dim 1 : vector<32x128xf32>, i32 -> vector<32x128xf32>
    %c54 = arith.constant 54 : index
    %c0_126 = arith.constant 0 : index
    %288 = vector.load %arg6[%c54, %c0_126] : memref<250x128xf32, #tpu.memory_space<vmem>>, vector<1x128xf32>
    %289 = vector.broadcast %288 : vector<1x128xf32> to vector<32x128xf32>
    %290 = arith.mulf %287, %289 : vector<32x128xf32>
    %291 = arith.addf %286, %290 : vector<32x128xf32>
    %c1_i32_127 = arith.constant 1 : i32
    %292 = tpu.dynamic_rotate %261 by %c1_i32_127 dim 0 : vector<32x128xf32>, i32 -> vector<32x128xf32>
    %c1_128 = arith.constant 1 : index
    %c0_129 = arith.constant 0 : index
    %c0_130 = arith.constant 0 : index
    %293 = vector.load %arg4[%c1_128, %c0_129, %c0_130] : memref<5x32x1xf32, #tpu.memory_space<vmem>>, vector<1x32x1xf32>
    %294 = vector.shape_cast %293 : vector<1x32x1xf32> to vector<32x1xf32>
    %295 = vector.broadcast %294 : vector<32x1xf32> to vector<32x128xf32>
    %296 = arith.mulf %292, %295 : vector<32x128xf32>
    %c16_i32_131 = arith.constant 16 : i32
    %297 = tpu.dynamic_rotate %296 by %c16_i32_131 dim 1 : vector<32x128xf32>, i32 -> vector<32x128xf32>
    %c55 = arith.constant 55 : index
    %c0_132 = arith.constant 0 : index
    %298 = vector.load %arg6[%c55, %c0_132] : memref<250x128xf32, #tpu.memory_space<vmem>>, vector<1x128xf32>
    %299 = vector.broadcast %298 : vector<1x128xf32> to vector<32x128xf32>
    %300 = arith.mulf %297, %299 : vector<32x128xf32>
    %301 = arith.addf %291, %300 : vector<32x128xf32>
    %c8_i32_133 = arith.constant 8 : i32
    %302 = tpu.dynamic_rotate %296 by %c8_i32_133 dim 1 : vector<32x128xf32>, i32 -> vector<32x128xf32>
    %c56 = arith.constant 56 : index
    %c0_134 = arith.constant 0 : index
    %303 = vector.load %arg6[%c56, %c0_134] : memref<250x128xf32, #tpu.memory_space<vmem>>, vector<1x128xf32>
    %304 = vector.broadcast %303 : vector<1x128xf32> to vector<32x128xf32>
    %305 = arith.mulf %302, %304 : vector<32x128xf32>
    %306 = arith.addf %301, %305 : vector<32x128xf32>
    %c57 = arith.constant 57 : index
    %c0_135 = arith.constant 0 : index
    %307 = vector.load %arg6[%c57, %c0_135] : memref<250x128xf32, #tpu.memory_space<vmem>>, vector<1x128xf32>
    %308 = vector.broadcast %307 : vector<1x128xf32> to vector<32x128xf32>
    %309 = arith.mulf %296, %308 : vector<32x128xf32>
    %310 = arith.addf %306, %309 : vector<32x128xf32>
    %c120_i32_136 = arith.constant 120 : i32
    %311 = tpu.dynamic_rotate %296 by %c120_i32_136 dim 1 : vector<32x128xf32>, i32 -> vector<32x128xf32>
    %c58 = arith.constant 58 : index
    %c0_137 = arith.constant 0 : index
    %312 = vector.load %arg6[%c58, %c0_137] : memref<250x128xf32, #tpu.memory_space<vmem>>, vector<1x128xf32>
    %313 = vector.broadcast %312 : vector<1x128xf32> to vector<32x128xf32>
    %314 = arith.mulf %311, %313 : vector<32x128xf32>
    %315 = arith.addf %310, %314 : vector<32x128xf32>
    %c112_i32_138 = arith.constant 112 : i32
    %316 = tpu.dynamic_rotate %296 by %c112_i32_138 dim 1 : vector<32x128xf32>, i32 -> vector<32x128xf32>
    %c59 = arith.constant 59 : index
    %c0_139 = arith.constant 0 : index
    %317 = vector.load %arg6[%c59, %c0_139] : memref<250x128xf32, #tpu.memory_space<vmem>>, vector<1x128xf32>
    %318 = vector.broadcast %317 : vector<1x128xf32> to vector<32x128xf32>
    %319 = arith.mulf %316, %318 : vector<32x128xf32>
    %320 = arith.addf %315, %319 : vector<32x128xf32>
    %c16_i32_140 = arith.constant 16 : i32
    %321 = tpu.dynamic_rotate %261 by %c16_i32_140 dim 1 : vector<32x128xf32>, i32 -> vector<32x128xf32>
    %c60 = arith.constant 60 : index
    %c0_141 = arith.constant 0 : index
    %322 = vector.load %arg6[%c60, %c0_141] : memref<250x128xf32, #tpu.memory_space<vmem>>, vector<1x128xf32>
    %323 = vector.broadcast %322 : vector<1x128xf32> to vector<32x128xf32>
    %324 = arith.mulf %321, %323 : vector<32x128xf32>
    %325 = arith.addf %320, %324 : vector<32x128xf32>
    %c8_i32_142 = arith.constant 8 : i32
    %326 = tpu.dynamic_rotate %261 by %c8_i32_142 dim 1 : vector<32x128xf32>, i32 -> vector<32x128xf32>
    %c61 = arith.constant 61 : index
    %c0_143 = arith.constant 0 : index
    %327 = vector.load %arg6[%c61, %c0_143] : memref<250x128xf32, #tpu.memory_space<vmem>>, vector<1x128xf32>
    %328 = vector.broadcast %327 : vector<1x128xf32> to vector<32x128xf32>
    %329 = arith.mulf %326, %328 : vector<32x128xf32>
    %330 = arith.addf %325, %329 : vector<32x128xf32>
    %c62 = arith.constant 62 : index
    %c0_144 = arith.constant 0 : index
    %331 = vector.load %arg6[%c62, %c0_144] : memref<250x128xf32, #tpu.memory_space<vmem>>, vector<1x128xf32>
    %332 = vector.broadcast %331 : vector<1x128xf32> to vector<32x128xf32>
    %333 = arith.mulf %261, %332 : vector<32x128xf32>
    %334 = arith.addf %330, %333 : vector<32x128xf32>
    %c120_i32_145 = arith.constant 120 : i32
    %335 = tpu.dynamic_rotate %261 by %c120_i32_145 dim 1 : vector<32x128xf32>, i32 -> vector<32x128xf32>
    %c63 = arith.constant 63 : index
    %c0_146 = arith.constant 0 : index
    %336 = vector.load %arg6[%c63, %c0_146] : memref<250x128xf32, #tpu.memory_space<vmem>>, vector<1x128xf32>
    %337 = vector.broadcast %336 : vector<1x128xf32> to vector<32x128xf32>
    %338 = arith.mulf %335, %337 : vector<32x128xf32>
    %339 = arith.addf %334, %338 : vector<32x128xf32>
    %c112_i32_147 = arith.constant 112 : i32
    %340 = tpu.dynamic_rotate %261 by %c112_i32_147 dim 1 : vector<32x128xf32>, i32 -> vector<32x128xf32>
    %c64 = arith.constant 64 : index
    %c0_148 = arith.constant 0 : index
    %341 = vector.load %arg6[%c64, %c0_148] : memref<250x128xf32, #tpu.memory_space<vmem>>, vector<1x128xf32>
    %342 = vector.broadcast %341 : vector<1x128xf32> to vector<32x128xf32>
    %343 = arith.mulf %340, %342 : vector<32x128xf32>
    %344 = arith.addf %339, %343 : vector<32x128xf32>
    %c31_i32_149 = arith.constant 31 : i32
    %345 = tpu.dynamic_rotate %261 by %c31_i32_149 dim 0 : vector<32x128xf32>, i32 -> vector<32x128xf32>
    %c3_150 = arith.constant 3 : index
    %c0_151 = arith.constant 0 : index
    %c0_152 = arith.constant 0 : index
    %346 = vector.load %arg4[%c3_150, %c0_151, %c0_152] : memref<5x32x1xf32, #tpu.memory_space<vmem>>, vector<1x32x1xf32>
    %347 = vector.shape_cast %346 : vector<1x32x1xf32> to vector<32x1xf32>
    %348 = vector.broadcast %347 : vector<32x1xf32> to vector<32x128xf32>
    %349 = arith.mulf %345, %348 : vector<32x128xf32>
    %c16_i32_153 = arith.constant 16 : i32
    %350 = tpu.dynamic_rotate %349 by %c16_i32_153 dim 1 : vector<32x128xf32>, i32 -> vector<32x128xf32>
    %c65 = arith.constant 65 : index
    %c0_154 = arith.constant 0 : index
    %351 = vector.load %arg6[%c65, %c0_154] : memref<250x128xf32, #tpu.memory_space<vmem>>, vector<1x128xf32>
    %352 = vector.broadcast %351 : vector<1x128xf32> to vector<32x128xf32>
    %353 = arith.mulf %350, %352 : vector<32x128xf32>
    %354 = arith.addf %344, %353 : vector<32x128xf32>
    %c8_i32_155 = arith.constant 8 : i32
    %355 = tpu.dynamic_rotate %349 by %c8_i32_155 dim 1 : vector<32x128xf32>, i32 -> vector<32x128xf32>
    %c66 = arith.constant 66 : index
    %c0_156 = arith.constant 0 : index
    %356 = vector.load %arg6[%c66, %c0_156] : memref<250x128xf32, #tpu.memory_space<vmem>>, vector<1x128xf32>
    %357 = vector.broadcast %356 : vector<1x128xf32> to vector<32x128xf32>
    %358 = arith.mulf %355, %357 : vector<32x128xf32>
    %359 = arith.addf %354, %358 : vector<32x128xf32>
    %c67 = arith.constant 67 : index
    %c0_157 = arith.constant 0 : index
    %360 = vector.load %arg6[%c67, %c0_157] : memref<250x128xf32, #tpu.memory_space<vmem>>, vector<1x128xf32>
    %361 = vector.broadcast %360 : vector<1x128xf32> to vector<32x128xf32>
    %362 = arith.mulf %349, %361 : vector<32x128xf32>
    %363 = arith.addf %359, %362 : vector<32x128xf32>
    %c120_i32_158 = arith.constant 120 : i32
    %364 = tpu.dynamic_rotate %349 by %c120_i32_158 dim 1 : vector<32x128xf32>, i32 -> vector<32x128xf32>
    %c68 = arith.constant 68 : index
    %c0_159 = arith.constant 0 : index
    %365 = vector.load %arg6[%c68, %c0_159] : memref<250x128xf32, #tpu.memory_space<vmem>>, vector<1x128xf32>
    %366 = vector.broadcast %365 : vector<1x128xf32> to vector<32x128xf32>
    %367 = arith.mulf %364, %366 : vector<32x128xf32>
    %368 = arith.addf %363, %367 : vector<32x128xf32>
    %c112_i32_160 = arith.constant 112 : i32
    %369 = tpu.dynamic_rotate %349 by %c112_i32_160 dim 1 : vector<32x128xf32>, i32 -> vector<32x128xf32>
    %c69 = arith.constant 69 : index
    %c0_161 = arith.constant 0 : index
    %370 = vector.load %arg6[%c69, %c0_161] : memref<250x128xf32, #tpu.memory_space<vmem>>, vector<1x128xf32>
    %371 = vector.broadcast %370 : vector<1x128xf32> to vector<32x128xf32>
    %372 = arith.mulf %369, %371 : vector<32x128xf32>
    %373 = arith.addf %368, %372 : vector<32x128xf32>
    %c30_i32 = arith.constant 30 : i32
    %374 = tpu.dynamic_rotate %261 by %c30_i32 dim 0 : vector<32x128xf32>, i32 -> vector<32x128xf32>
    %c4 = arith.constant 4 : index
    %c0_162 = arith.constant 0 : index
    %c0_163 = arith.constant 0 : index
    %375 = vector.load %arg4[%c4, %c0_162, %c0_163] : memref<5x32x1xf32, #tpu.memory_space<vmem>>, vector<1x32x1xf32>
    %376 = vector.shape_cast %375 : vector<1x32x1xf32> to vector<32x1xf32>
    %377 = vector.broadcast %376 : vector<32x1xf32> to vector<32x128xf32>
    %378 = arith.mulf %374, %377 : vector<32x128xf32>
    %c16_i32_164 = arith.constant 16 : i32
    %379 = tpu.dynamic_rotate %378 by %c16_i32_164 dim 1 : vector<32x128xf32>, i32 -> vector<32x128xf32>
    %c70 = arith.constant 70 : index
    %c0_165 = arith.constant 0 : index
    %380 = vector.load %arg6[%c70, %c0_165] : memref<250x128xf32, #tpu.memory_space<vmem>>, vector<1x128xf32>
    %381 = vector.broadcast %380 : vector<1x128xf32> to vector<32x128xf32>
    %382 = arith.mulf %379, %381 : vector<32x128xf32>
    %383 = arith.addf %373, %382 : vector<32x128xf32>
    %c8_i32_166 = arith.constant 8 : i32
    %384 = tpu.dynamic_rotate %378 by %c8_i32_166 dim 1 : vector<32x128xf32>, i32 -> vector<32x128xf32>
    %c71 = arith.constant 71 : index
    %c0_167 = arith.constant 0 : index
    %385 = vector.load %arg6[%c71, %c0_167] : memref<250x128xf32, #tpu.memory_space<vmem>>, vector<1x128xf32>
    %386 = vector.broadcast %385 : vector<1x128xf32> to vector<32x128xf32>
    %387 = arith.mulf %384, %386 : vector<32x128xf32>
    %388 = arith.addf %383, %387 : vector<32x128xf32>
    %c72 = arith.constant 72 : index
    %c0_168 = arith.constant 0 : index
    %389 = vector.load %arg6[%c72, %c0_168] : memref<250x128xf32, #tpu.memory_space<vmem>>, vector<1x128xf32>
    %390 = vector.broadcast %389 : vector<1x128xf32> to vector<32x128xf32>
    %391 = arith.mulf %378, %390 : vector<32x128xf32>
    %392 = arith.addf %388, %391 : vector<32x128xf32>
    %c120_i32_169 = arith.constant 120 : i32
    %393 = tpu.dynamic_rotate %378 by %c120_i32_169 dim 1 : vector<32x128xf32>, i32 -> vector<32x128xf32>
    %c73 = arith.constant 73 : index
    %c0_170 = arith.constant 0 : index
    %394 = vector.load %arg6[%c73, %c0_170] : memref<250x128xf32, #tpu.memory_space<vmem>>, vector<1x128xf32>
    %395 = vector.broadcast %394 : vector<1x128xf32> to vector<32x128xf32>
    %396 = arith.mulf %393, %395 : vector<32x128xf32>
    %397 = arith.addf %392, %396 : vector<32x128xf32>
    %c112_i32_171 = arith.constant 112 : i32
    %398 = tpu.dynamic_rotate %378 by %c112_i32_171 dim 1 : vector<32x128xf32>, i32 -> vector<32x128xf32>
    %c74 = arith.constant 74 : index
    %c0_172 = arith.constant 0 : index
    %399 = vector.load %arg6[%c74, %c0_172] : memref<250x128xf32, #tpu.memory_space<vmem>>, vector<1x128xf32>
    %400 = vector.broadcast %399 : vector<1x128xf32> to vector<32x128xf32>
    %401 = arith.mulf %398, %400 : vector<32x128xf32>
    %402 = arith.addf %397, %401 : vector<32x128xf32>
    %403 = arith.truncf %402 : vector<32x128xf32> to vector<32x128xbf16>
    %c2_173 = arith.constant 2 : index
    %c0_174 = arith.constant 0 : index
    %c0_175 = arith.constant 0 : index
    %404 = vector.load %arg5[%c2_173, %c0_174, %c0_175] : memref<10x128x128xbf16, #tpu.memory_space<vmem>>, vector<1x128x128xbf16>
    %405 = vector.shape_cast %404 : vector<1x128x128xbf16> to vector<128x128xbf16>
    %cst_176 = arith.constant dense<0.000000e+00> : vector<32x128xf32>
    %406 = tpu.matmul %403, %405, %cst_176 {dimension_numbers = #tpu.dot_dimension_numbers<[1], [0], [0], [1], [0, 0, 1, 1], [], []>} : vector<32x128xbf16>, vector<128x128xbf16>, vector<32x128xf32> -> vector<32x128xf32>
    %cst_177 = arith.constant dense<0.000000e+00> : vector<128xf32>
    %407 = vector.multi_reduction <add>, %406, %cst_177 [0] : vector<32x128xf32> to vector<128xf32>
    %408 = vector.shape_cast %407 : vector<128xf32> to vector<1x128xf32>
    %c8_i32_178 = arith.constant 8 : i32
    %409 = tpu.dynamic_rotate %408 by %c8_i32_178 dim 1 : vector<1x128xf32>, i32 -> vector<1x128xf32>
    %410 = arith.addf %408, %409 : vector<1x128xf32>
    %c16_i32_179 = arith.constant 16 : i32
    %411 = tpu.dynamic_rotate %410 by %c16_i32_179 dim 1 : vector<1x128xf32>, i32 -> vector<1x128xf32>
    %412 = arith.addf %410, %411 : vector<1x128xf32>
    %c32_i32_180 = arith.constant 32 : i32
    %413 = tpu.dynamic_rotate %412 by %c32_i32_180 dim 1 : vector<1x128xf32>, i32 -> vector<1x128xf32>
    %414 = arith.addf %412, %413 : vector<1x128xf32>
    %c64_i32_181 = arith.constant 64 : i32
    %415 = tpu.dynamic_rotate %414 by %c64_i32_181 dim 1 : vector<1x128xf32>, i32 -> vector<1x128xf32>
    %416 = arith.addf %414, %415 : vector<1x128xf32>
    %cst_182 = arith.constant 5.120000e+02 : f32
    %417 = vector.broadcast %cst_182 : f32 to vector<1x128xf32>
    %418 = arith.divf %416, %417 : vector<1x128xf32>
    %419 = vector.broadcast %418 : vector<1x128xf32> to vector<32x128xf32>
    %420 = arith.subf %406, %419 : vector<32x128xf32>
    %421 = arith.mulf %420, %420 : vector<32x128xf32>
    %cst_183 = arith.constant dense<0.000000e+00> : vector<128xf32>
    %422 = vector.multi_reduction <add>, %421, %cst_183 [0] : vector<32x128xf32> to vector<128xf32>
    %423 = vector.shape_cast %422 : vector<128xf32> to vector<1x128xf32>
    %c8_i32_184 = arith.constant 8 : i32
    %424 = tpu.dynamic_rotate %423 by %c8_i32_184 dim 1 : vector<1x128xf32>, i32 -> vector<1x128xf32>
    %425 = arith.addf %423, %424 : vector<1x128xf32>
    %c16_i32_185 = arith.constant 16 : i32
    %426 = tpu.dynamic_rotate %425 by %c16_i32_185 dim 1 : vector<1x128xf32>, i32 -> vector<1x128xf32>
    %427 = arith.addf %425, %426 : vector<1x128xf32>
    %c32_i32_186 = arith.constant 32 : i32
    %428 = tpu.dynamic_rotate %427 by %c32_i32_186 dim 1 : vector<1x128xf32>, i32 -> vector<1x128xf32>
    %429 = arith.addf %427, %428 : vector<1x128xf32>
    %c64_i32_187 = arith.constant 64 : i32
    %430 = tpu.dynamic_rotate %429 by %c64_i32_187 dim 1 : vector<1x128xf32>, i32 -> vector<1x128xf32>
    %431 = arith.addf %429, %430 : vector<1x128xf32>
    %cst_188 = arith.constant 5.120000e+02 : f32
    %432 = vector.broadcast %cst_188 : f32 to vector<1x128xf32>
    %433 = arith.divf %431, %432 : vector<1x128xf32>
    %cst_189 = arith.constant 9.99999974E-6 : f32
    %434 = vector.broadcast %cst_189 : f32 to vector<1x128xf32>
    %435 = arith.addf %433, %434 : vector<1x128xf32>
    %436 = math.rsqrt %435 : vector<1x128xf32>
    %437 = vector.broadcast %436 : vector<1x128xf32> to vector<32x128xf32>
    %438 = arith.mulf %420, %437 : vector<32x128xf32>
    %cst_190 = arith.constant 0.000000e+00 : f32
    %439 = vector.broadcast %cst_190 : f32 to vector<32x128xf32>
    %440 = arith.maximumf %438, %439 : vector<32x128xf32>
    %cst_191 = arith.constant 0.000000e+00 : f32
    %441 = vector.broadcast %cst_191 : f32 to vector<32x128xf32>
    %c2_i32_192 = arith.constant 2 : i32
    %442 = tpu.dynamic_rotate %440 by %c2_i32_192 dim 0 : vector<32x128xf32>, i32 -> vector<32x128xf32>
    %c0_193 = arith.constant 0 : index
    %c0_194 = arith.constant 0 : index
    %c0_195 = arith.constant 0 : index
    %443 = vector.load %arg4[%c0_193, %c0_194, %c0_195] : memref<5x32x1xf32, #tpu.memory_space<vmem>>, vector<1x32x1xf32>
    %444 = vector.shape_cast %443 : vector<1x32x1xf32> to vector<32x1xf32>
    %445 = vector.broadcast %444 : vector<32x1xf32> to vector<32x128xf32>
    %446 = arith.mulf %442, %445 : vector<32x128xf32>
    %c16_i32_196 = arith.constant 16 : i32
    %447 = tpu.dynamic_rotate %446 by %c16_i32_196 dim 1 : vector<32x128xf32>, i32 -> vector<32x128xf32>
    %c75 = arith.constant 75 : index
    %c0_197 = arith.constant 0 : index
    %448 = vector.load %arg6[%c75, %c0_197] : memref<250x128xf32, #tpu.memory_space<vmem>>, vector<1x128xf32>
    %449 = vector.broadcast %448 : vector<1x128xf32> to vector<32x128xf32>
    %450 = arith.mulf %447, %449 : vector<32x128xf32>
    %451 = arith.addf %441, %450 : vector<32x128xf32>
    %c8_i32_198 = arith.constant 8 : i32
    %452 = tpu.dynamic_rotate %446 by %c8_i32_198 dim 1 : vector<32x128xf32>, i32 -> vector<32x128xf32>
    %c76 = arith.constant 76 : index
    %c0_199 = arith.constant 0 : index
    %453 = vector.load %arg6[%c76, %c0_199] : memref<250x128xf32, #tpu.memory_space<vmem>>, vector<1x128xf32>
    %454 = vector.broadcast %453 : vector<1x128xf32> to vector<32x128xf32>
    %455 = arith.mulf %452, %454 : vector<32x128xf32>
    %456 = arith.addf %451, %455 : vector<32x128xf32>
    %c77 = arith.constant 77 : index
    %c0_200 = arith.constant 0 : index
    %457 = vector.load %arg6[%c77, %c0_200] : memref<250x128xf32, #tpu.memory_space<vmem>>, vector<1x128xf32>
    %458 = vector.broadcast %457 : vector<1x128xf32> to vector<32x128xf32>
    %459 = arith.mulf %446, %458 : vector<32x128xf32>
    %460 = arith.addf %456, %459 : vector<32x128xf32>
    %c120_i32_201 = arith.constant 120 : i32
    %461 = tpu.dynamic_rotate %446 by %c120_i32_201 dim 1 : vector<32x128xf32>, i32 -> vector<32x128xf32>
    %c78 = arith.constant 78 : index
    %c0_202 = arith.constant 0 : index
    %462 = vector.load %arg6[%c78, %c0_202] : memref<250x128xf32, #tpu.memory_space<vmem>>, vector<1x128xf32>
    %463 = vector.broadcast %462 : vector<1x128xf32> to vector<32x128xf32>
    %464 = arith.mulf %461, %463 : vector<32x128xf32>
    %465 = arith.addf %460, %464 : vector<32x128xf32>
    %c112_i32_203 = arith.constant 112 : i32
    %466 = tpu.dynamic_rotate %446 by %c112_i32_203 dim 1 : vector<32x128xf32>, i32 -> vector<32x128xf32>
    %c79 = arith.constant 79 : index
    %c0_204 = arith.constant 0 : index
    %467 = vector.load %arg6[%c79, %c0_204] : memref<250x128xf32, #tpu.memory_space<vmem>>, vector<1x128xf32>
    %468 = vector.broadcast %467 : vector<1x128xf32> to vector<32x128xf32>
    %469 = arith.mulf %466, %468 : vector<32x128xf32>
    %470 = arith.addf %465, %469 : vector<32x128xf32>
    %c1_i32_205 = arith.constant 1 : i32
    %471 = tpu.dynamic_rotate %440 by %c1_i32_205 dim 0 : vector<32x128xf32>, i32 -> vector<32x128xf32>
    %c1_206 = arith.constant 1 : index
    %c0_207 = arith.constant 0 : index
    %c0_208 = arith.constant 0 : index
    %472 = vector.load %arg4[%c1_206, %c0_207, %c0_208] : memref<5x32x1xf32, #tpu.memory_space<vmem>>, vector<1x32x1xf32>
    %473 = vector.shape_cast %472 : vector<1x32x1xf32> to vector<32x1xf32>
    %474 = vector.broadcast %473 : vector<32x1xf32> to vector<32x128xf32>
    %475 = arith.mulf %471, %474 : vector<32x128xf32>
    %c16_i32_209 = arith.constant 16 : i32
    %476 = tpu.dynamic_rotate %475 by %c16_i32_209 dim 1 : vector<32x128xf32>, i32 -> vector<32x128xf32>
    %c80 = arith.constant 80 : index
    %c0_210 = arith.constant 0 : index
    %477 = vector.load %arg6[%c80, %c0_210] : memref<250x128xf32, #tpu.memory_space<vmem>>, vector<1x128xf32>
    %478 = vector.broadcast %477 : vector<1x128xf32> to vector<32x128xf32>
    %479 = arith.mulf %476, %478 : vector<32x128xf32>
    %480 = arith.addf %470, %479 : vector<32x128xf32>
    %c8_i32_211 = arith.constant 8 : i32
    %481 = tpu.dynamic_rotate %475 by %c8_i32_211 dim 1 : vector<32x128xf32>, i32 -> vector<32x128xf32>
    %c81 = arith.constant 81 : index
    %c0_212 = arith.constant 0 : index
    %482 = vector.load %arg6[%c81, %c0_212] : memref<250x128xf32, #tpu.memory_space<vmem>>, vector<1x128xf32>
    %483 = vector.broadcast %482 : vector<1x128xf32> to vector<32x128xf32>
    %484 = arith.mulf %481, %483 : vector<32x128xf32>
    %485 = arith.addf %480, %484 : vector<32x128xf32>
    %c82 = arith.constant 82 : index
    %c0_213 = arith.constant 0 : index
    %486 = vector.load %arg6[%c82, %c0_213] : memref<250x128xf32, #tpu.memory_space<vmem>>, vector<1x128xf32>
    %487 = vector.broadcast %486 : vector<1x128xf32> to vector<32x128xf32>
    %488 = arith.mulf %475, %487 : vector<32x128xf32>
    %489 = arith.addf %485, %488 : vector<32x128xf32>
    %c120_i32_214 = arith.constant 120 : i32
    %490 = tpu.dynamic_rotate %475 by %c120_i32_214 dim 1 : vector<32x128xf32>, i32 -> vector<32x128xf32>
    %c83 = arith.constant 83 : index
    %c0_215 = arith.constant 0 : index
    %491 = vector.load %arg6[%c83, %c0_215] : memref<250x128xf32, #tpu.memory_space<vmem>>, vector<1x128xf32>
    %492 = vector.broadcast %491 : vector<1x128xf32> to vector<32x128xf32>
    %493 = arith.mulf %490, %492 : vector<32x128xf32>
    %494 = arith.addf %489, %493 : vector<32x128xf32>
    %c112_i32_216 = arith.constant 112 : i32
    %495 = tpu.dynamic_rotate %475 by %c112_i32_216 dim 1 : vector<32x128xf32>, i32 -> vector<32x128xf32>
    %c84 = arith.constant 84 : index
    %c0_217 = arith.constant 0 : index
    %496 = vector.load %arg6[%c84, %c0_217] : memref<250x128xf32, #tpu.memory_space<vmem>>, vector<1x128xf32>
    %497 = vector.broadcast %496 : vector<1x128xf32> to vector<32x128xf32>
    %498 = arith.mulf %495, %497 : vector<32x128xf32>
    %499 = arith.addf %494, %498 : vector<32x128xf32>
    %c16_i32_218 = arith.constant 16 : i32
    %500 = tpu.dynamic_rotate %440 by %c16_i32_218 dim 1 : vector<32x128xf32>, i32 -> vector<32x128xf32>
    %c85 = arith.constant 85 : index
    %c0_219 = arith.constant 0 : index
    %501 = vector.load %arg6[%c85, %c0_219] : memref<250x128xf32, #tpu.memory_space<vmem>>, vector<1x128xf32>
    %502 = vector.broadcast %501 : vector<1x128xf32> to vector<32x128xf32>
    %503 = arith.mulf %500, %502 : vector<32x128xf32>
    %504 = arith.addf %499, %503 : vector<32x128xf32>
    %c8_i32_220 = arith.constant 8 : i32
    %505 = tpu.dynamic_rotate %440 by %c8_i32_220 dim 1 : vector<32x128xf32>, i32 -> vector<32x128xf32>
    %c86 = arith.constant 86 : index
    %c0_221 = arith.constant 0 : index
    %506 = vector.load %arg6[%c86, %c0_221] : memref<250x128xf32, #tpu.memory_space<vmem>>, vector<1x128xf32>
    %507 = vector.broadcast %506 : vector<1x128xf32> to vector<32x128xf32>
    %508 = arith.mulf %505, %507 : vector<32x128xf32>
    %509 = arith.addf %504, %508 : vector<32x128xf32>
    %c87 = arith.constant 87 : index
    %c0_222 = arith.constant 0 : index
    %510 = vector.load %arg6[%c87, %c0_222] : memref<250x128xf32, #tpu.memory_space<vmem>>, vector<1x128xf32>
    %511 = vector.broadcast %510 : vector<1x128xf32> to vector<32x128xf32>
    %512 = arith.mulf %440, %511 : vector<32x128xf32>
    %513 = arith.addf %509, %512 : vector<32x128xf32>
    %c120_i32_223 = arith.constant 120 : i32
    %514 = tpu.dynamic_rotate %440 by %c120_i32_223 dim 1 : vector<32x128xf32>, i32 -> vector<32x128xf32>
    %c88 = arith.constant 88 : index
    %c0_224 = arith.constant 0 : index
    %515 = vector.load %arg6[%c88, %c0_224] : memref<250x128xf32, #tpu.memory_space<vmem>>, vector<1x128xf32>
    %516 = vector.broadcast %515 : vector<1x128xf32> to vector<32x128xf32>
    %517 = arith.mulf %514, %516 : vector<32x128xf32>
    %518 = arith.addf %513, %517 : vector<32x128xf32>
    %c112_i32_225 = arith.constant 112 : i32
    %519 = tpu.dynamic_rotate %440 by %c112_i32_225 dim 1 : vector<32x128xf32>, i32 -> vector<32x128xf32>
    %c89 = arith.constant 89 : index
    %c0_226 = arith.constant 0 : index
    %520 = vector.load %arg6[%c89, %c0_226] : memref<250x128xf32, #tpu.memory_space<vmem>>, vector<1x128xf32>
    %521 = vector.broadcast %520 : vector<1x128xf32> to vector<32x128xf32>
    %522 = arith.mulf %519, %521 : vector<32x128xf32>
    %523 = arith.addf %518, %522 : vector<32x128xf32>
    %c31_i32_227 = arith.constant 31 : i32
    %524 = tpu.dynamic_rotate %440 by %c31_i32_227 dim 0 : vector<32x128xf32>, i32 -> vector<32x128xf32>
    %c3_228 = arith.constant 3 : index
    %c0_229 = arith.constant 0 : index
    %c0_230 = arith.constant 0 : index
    %525 = vector.load %arg4[%c3_228, %c0_229, %c0_230] : memref<5x32x1xf32, #tpu.memory_space<vmem>>, vector<1x32x1xf32>
    %526 = vector.shape_cast %525 : vector<1x32x1xf32> to vector<32x1xf32>
    %527 = vector.broadcast %526 : vector<32x1xf32> to vector<32x128xf32>
    %528 = arith.mulf %524, %527 : vector<32x128xf32>
    %c16_i32_231 = arith.constant 16 : i32
    %529 = tpu.dynamic_rotate %528 by %c16_i32_231 dim 1 : vector<32x128xf32>, i32 -> vector<32x128xf32>
    %c90 = arith.constant 90 : index
    %c0_232 = arith.constant 0 : index
    %530 = vector.load %arg6[%c90, %c0_232] : memref<250x128xf32, #tpu.memory_space<vmem>>, vector<1x128xf32>
    %531 = vector.broadcast %530 : vector<1x128xf32> to vector<32x128xf32>
    %532 = arith.mulf %529, %531 : vector<32x128xf32>
    %533 = arith.addf %523, %532 : vector<32x128xf32>
    %c8_i32_233 = arith.constant 8 : i32
    %534 = tpu.dynamic_rotate %528 by %c8_i32_233 dim 1 : vector<32x128xf32>, i32 -> vector<32x128xf32>
    %c91 = arith.constant 91 : index
    %c0_234 = arith.constant 0 : index
    %535 = vector.load %arg6[%c91, %c0_234] : memref<250x128xf32, #tpu.memory_space<vmem>>, vector<1x128xf32>
    %536 = vector.broadcast %535 : vector<1x128xf32> to vector<32x128xf32>
    %537 = arith.mulf %534, %536 : vector<32x128xf32>
    %538 = arith.addf %533, %537 : vector<32x128xf32>
    %c92 = arith.constant 92 : index
    %c0_235 = arith.constant 0 : index
    %539 = vector.load %arg6[%c92, %c0_235] : memref<250x128xf32, #tpu.memory_space<vmem>>, vector<1x128xf32>
    %540 = vector.broadcast %539 : vector<1x128xf32> to vector<32x128xf32>
    %541 = arith.mulf %528, %540 : vector<32x128xf32>
    %542 = arith.addf %538, %541 : vector<32x128xf32>
    %c120_i32_236 = arith.constant 120 : i32
    %543 = tpu.dynamic_rotate %528 by %c120_i32_236 dim 1 : vector<32x128xf32>, i32 -> vector<32x128xf32>
    %c93 = arith.constant 93 : index
    %c0_237 = arith.constant 0 : index
    %544 = vector.load %arg6[%c93, %c0_237] : memref<250x128xf32, #tpu.memory_space<vmem>>, vector<1x128xf32>
    %545 = vector.broadcast %544 : vector<1x128xf32> to vector<32x128xf32>
    %546 = arith.mulf %543, %545 : vector<32x128xf32>
    %547 = arith.addf %542, %546 : vector<32x128xf32>
    %c112_i32_238 = arith.constant 112 : i32
    %548 = tpu.dynamic_rotate %528 by %c112_i32_238 dim 1 : vector<32x128xf32>, i32 -> vector<32x128xf32>
    %c94 = arith.constant 94 : index
    %c0_239 = arith.constant 0 : index
    %549 = vector.load %arg6[%c94, %c0_239] : memref<250x128xf32, #tpu.memory_space<vmem>>, vector<1x128xf32>
    %550 = vector.broadcast %549 : vector<1x128xf32> to vector<32x128xf32>
    %551 = arith.mulf %548, %550 : vector<32x128xf32>
    %552 = arith.addf %547, %551 : vector<32x128xf32>
    %c30_i32_240 = arith.constant 30 : i32
    %553 = tpu.dynamic_rotate %440 by %c30_i32_240 dim 0 : vector<32x128xf32>, i32 -> vector<32x128xf32>
    %c4_241 = arith.constant 4 : index
    %c0_242 = arith.constant 0 : index
    %c0_243 = arith.constant 0 : index
    %554 = vector.load %arg4[%c4_241, %c0_242, %c0_243] : memref<5x32x1xf32, #tpu.memory_space<vmem>>, vector<1x32x1xf32>
    %555 = vector.shape_cast %554 : vector<1x32x1xf32> to vector<32x1xf32>
    %556 = vector.broadcast %555 : vector<32x1xf32> to vector<32x128xf32>
    %557 = arith.mulf %553, %556 : vector<32x128xf32>
    %c16_i32_244 = arith.constant 16 : i32
    %558 = tpu.dynamic_rotate %557 by %c16_i32_244 dim 1 : vector<32x128xf32>, i32 -> vector<32x128xf32>
    %c95 = arith.constant 95 : index
    %c0_245 = arith.constant 0 : index
    %559 = vector.load %arg6[%c95, %c0_245] : memref<250x128xf32, #tpu.memory_space<vmem>>, vector<1x128xf32>
    %560 = vector.broadcast %559 : vector<1x128xf32> to vector<32x128xf32>
    %561 = arith.mulf %558, %560 : vector<32x128xf32>
    %562 = arith.addf %552, %561 : vector<32x128xf32>
    %c8_i32_246 = arith.constant 8 : i32
    %563 = tpu.dynamic_rotate %557 by %c8_i32_246 dim 1 : vector<32x128xf32>, i32 -> vector<32x128xf32>
    %c96 = arith.constant 96 : index
    %c0_247 = arith.constant 0 : index
    %564 = vector.load %arg6[%c96, %c0_247] : memref<250x128xf32, #tpu.memory_space<vmem>>, vector<1x128xf32>
    %565 = vector.broadcast %564 : vector<1x128xf32> to vector<32x128xf32>
    %566 = arith.mulf %563, %565 : vector<32x128xf32>
    %567 = arith.addf %562, %566 : vector<32x128xf32>
    %c97 = arith.constant 97 : index
    %c0_248 = arith.constant 0 : index
    %568 = vector.load %arg6[%c97, %c0_248] : memref<250x128xf32, #tpu.memory_space<vmem>>, vector<1x128xf32>
    %569 = vector.broadcast %568 : vector<1x128xf32> to vector<32x128xf32>
    %570 = arith.mulf %557, %569 : vector<32x128xf32>
    %571 = arith.addf %567, %570 : vector<32x128xf32>
    %c120_i32_249 = arith.constant 120 : i32
    %572 = tpu.dynamic_rotate %557 by %c120_i32_249 dim 1 : vector<32x128xf32>, i32 -> vector<32x128xf32>
    %c98 = arith.constant 98 : index
    %c0_250 = arith.constant 0 : index
    %573 = vector.load %arg6[%c98, %c0_250] : memref<250x128xf32, #tpu.memory_space<vmem>>, vector<1x128xf32>
    %574 = vector.broadcast %573 : vector<1x128xf32> to vector<32x128xf32>
    %575 = arith.mulf %572, %574 : vector<32x128xf32>
    %576 = arith.addf %571, %575 : vector<32x128xf32>
    %c112_i32_251 = arith.constant 112 : i32
    %577 = tpu.dynamic_rotate %557 by %c112_i32_251 dim 1 : vector<32x128xf32>, i32 -> vector<32x128xf32>
    %c99 = arith.constant 99 : index
    %c0_252 = arith.constant 0 : index
    %578 = vector.load %arg6[%c99, %c0_252] : memref<250x128xf32, #tpu.memory_space<vmem>>, vector<1x128xf32>
    %579 = vector.broadcast %578 : vector<1x128xf32> to vector<32x128xf32>
    %580 = arith.mulf %577, %579 : vector<32x128xf32>
    %581 = arith.addf %576, %580 : vector<32x128xf32>
    %582 = arith.truncf %581 : vector<32x128xf32> to vector<32x128xbf16>
    %c3_253 = arith.constant 3 : index
    %c0_254 = arith.constant 0 : index
    %c0_255 = arith.constant 0 : index
    %583 = vector.load %arg5[%c3_253, %c0_254, %c0_255] : memref<10x128x128xbf16, #tpu.memory_space<vmem>>, vector<1x128x128xbf16>
    %584 = vector.shape_cast %583 : vector<1x128x128xbf16> to vector<128x128xbf16>
    %cst_256 = arith.constant dense<0.000000e+00> : vector<32x128xf32>
    %585 = tpu.matmul %582, %584, %cst_256 {dimension_numbers = #tpu.dot_dimension_numbers<[1], [0], [0], [1], [0, 0, 1, 1], [], []>} : vector<32x128xbf16>, vector<128x128xbf16>, vector<32x128xf32> -> vector<32x128xf32>
    %cst_257 = arith.constant dense<0.000000e+00> : vector<128xf32>
    %586 = vector.multi_reduction <add>, %585, %cst_257 [0] : vector<32x128xf32> to vector<128xf32>
    %587 = vector.shape_cast %586 : vector<128xf32> to vector<1x128xf32>
    %c8_i32_258 = arith.constant 8 : i32
    %588 = tpu.dynamic_rotate %587 by %c8_i32_258 dim 1 : vector<1x128xf32>, i32 -> vector<1x128xf32>
    %589 = arith.addf %587, %588 : vector<1x128xf32>
    %c16_i32_259 = arith.constant 16 : i32
    %590 = tpu.dynamic_rotate %589 by %c16_i32_259 dim 1 : vector<1x128xf32>, i32 -> vector<1x128xf32>
    %591 = arith.addf %589, %590 : vector<1x128xf32>
    %c32_i32_260 = arith.constant 32 : i32
    %592 = tpu.dynamic_rotate %591 by %c32_i32_260 dim 1 : vector<1x128xf32>, i32 -> vector<1x128xf32>
    %593 = arith.addf %591, %592 : vector<1x128xf32>
    %c64_i32_261 = arith.constant 64 : i32
    %594 = tpu.dynamic_rotate %593 by %c64_i32_261 dim 1 : vector<1x128xf32>, i32 -> vector<1x128xf32>
    %595 = arith.addf %593, %594 : vector<1x128xf32>
    %cst_262 = arith.constant 5.120000e+02 : f32
    %596 = vector.broadcast %cst_262 : f32 to vector<1x128xf32>
    %597 = arith.divf %595, %596 : vector<1x128xf32>
    %598 = vector.broadcast %597 : vector<1x128xf32> to vector<32x128xf32>
    %599 = arith.subf %585, %598 : vector<32x128xf32>
    %600 = arith.mulf %599, %599 : vector<32x128xf32>
    %cst_263 = arith.constant dense<0.000000e+00> : vector<128xf32>
    %601 = vector.multi_reduction <add>, %600, %cst_263 [0] : vector<32x128xf32> to vector<128xf32>
    %602 = vector.shape_cast %601 : vector<128xf32> to vector<1x128xf32>
    %c8_i32_264 = arith.constant 8 : i32
    %603 = tpu.dynamic_rotate %602 by %c8_i32_264 dim 1 : vector<1x128xf32>, i32 -> vector<1x128xf32>
    %604 = arith.addf %602, %603 : vector<1x128xf32>
    %c16_i32_265 = arith.constant 16 : i32
    %605 = tpu.dynamic_rotate %604 by %c16_i32_265 dim 1 : vector<1x128xf32>, i32 -> vector<1x128xf32>
    %606 = arith.addf %604, %605 : vector<1x128xf32>
    %c32_i32_266 = arith.constant 32 : i32
    %607 = tpu.dynamic_rotate %606 by %c32_i32_266 dim 1 : vector<1x128xf32>, i32 -> vector<1x128xf32>
    %608 = arith.addf %606, %607 : vector<1x128xf32>
    %c64_i32_267 = arith.constant 64 : i32
    %609 = tpu.dynamic_rotate %608 by %c64_i32_267 dim 1 : vector<1x128xf32>, i32 -> vector<1x128xf32>
    %610 = arith.addf %608, %609 : vector<1x128xf32>
    %cst_268 = arith.constant 5.120000e+02 : f32
    %611 = vector.broadcast %cst_268 : f32 to vector<1x128xf32>
    %612 = arith.divf %610, %611 : vector<1x128xf32>
    %cst_269 = arith.constant 9.99999974E-6 : f32
    %613 = vector.broadcast %cst_269 : f32 to vector<1x128xf32>
    %614 = arith.addf %612, %613 : vector<1x128xf32>
    %615 = math.rsqrt %614 : vector<1x128xf32>
    %616 = vector.broadcast %615 : vector<1x128xf32> to vector<32x128xf32>
    %617 = arith.mulf %599, %616 : vector<32x128xf32>
    %618 = arith.addf %259, %617 : vector<32x128xf32>
    %cst_270 = arith.constant 0.000000e+00 : f32
    %619 = vector.broadcast %cst_270 : f32 to vector<32x128xf32>
    %cst_271 = arith.constant 0.000000e+00 : f32
    %620 = vector.broadcast %cst_271 : f32 to vector<32x128xf32>
    %621 = arith.maximumf %37, %620 : vector<32x128xf32>
    %cst_272 = arith.constant 0.000000e+00 : f32
    %622 = vector.broadcast %cst_272 : f32 to vector<32x128xf32>
    %c1_i32_273 = arith.constant 1 : i32
    %623 = tpu.dynamic_rotate %621 by %c1_i32_273 dim 0 : vector<32x128xf32>, i32 -> vector<32x128xf32>
    %c1_274 = arith.constant 1 : index
    %c0_275 = arith.constant 0 : index
    %c0_276 = arith.constant 0 : index
    %624 = vector.load %arg4[%c1_274, %c0_275, %c0_276] : memref<5x32x1xf32, #tpu.memory_space<vmem>>, vector<1x32x1xf32>
    %625 = vector.shape_cast %624 : vector<1x32x1xf32> to vector<32x1xf32>
    %626 = vector.broadcast %625 : vector<32x1xf32> to vector<32x128xf32>
    %627 = arith.mulf %623, %626 : vector<32x128xf32>
    %c8_i32_277 = arith.constant 8 : i32
    %628 = tpu.dynamic_rotate %627 by %c8_i32_277 dim 1 : vector<32x128xf32>, i32 -> vector<32x128xf32>
    %c100 = arith.constant 100 : index
    %c0_278 = arith.constant 0 : index
    %629 = vector.load %arg6[%c100, %c0_278] : memref<250x128xf32, #tpu.memory_space<vmem>>, vector<1x128xf32>
    %630 = vector.broadcast %629 : vector<1x128xf32> to vector<32x128xf32>
    %631 = arith.mulf %628, %630 : vector<32x128xf32>
    %632 = arith.addf %622, %631 : vector<32x128xf32>
    %c101 = arith.constant 101 : index
    %c0_279 = arith.constant 0 : index
    %633 = vector.load %arg6[%c101, %c0_279] : memref<250x128xf32, #tpu.memory_space<vmem>>, vector<1x128xf32>
    %634 = vector.broadcast %633 : vector<1x128xf32> to vector<32x128xf32>
    %635 = arith.mulf %627, %634 : vector<32x128xf32>
    %636 = arith.addf %632, %635 : vector<32x128xf32>
    %c120_i32_280 = arith.constant 120 : i32
    %637 = tpu.dynamic_rotate %627 by %c120_i32_280 dim 1 : vector<32x128xf32>, i32 -> vector<32x128xf32>
    %c102 = arith.constant 102 : index
    %c0_281 = arith.constant 0 : index
    %638 = vector.load %arg6[%c102, %c0_281] : memref<250x128xf32, #tpu.memory_space<vmem>>, vector<1x128xf32>
    %639 = vector.broadcast %638 : vector<1x128xf32> to vector<32x128xf32>
    %640 = arith.mulf %637, %639 : vector<32x128xf32>
    %641 = arith.addf %636, %640 : vector<32x128xf32>
    %c8_i32_282 = arith.constant 8 : i32
    %642 = tpu.dynamic_rotate %621 by %c8_i32_282 dim 1 : vector<32x128xf32>, i32 -> vector<32x128xf32>
    %c105 = arith.constant 105 : index
    %c0_283 = arith.constant 0 : index
    %643 = vector.load %arg6[%c105, %c0_283] : memref<250x128xf32, #tpu.memory_space<vmem>>, vector<1x128xf32>
    %644 = vector.broadcast %643 : vector<1x128xf32> to vector<32x128xf32>
    %645 = arith.mulf %642, %644 : vector<32x128xf32>
    %646 = arith.addf %641, %645 : vector<32x128xf32>
    %c106 = arith.constant 106 : index
    %c0_284 = arith.constant 0 : index
    %647 = vector.load %arg6[%c106, %c0_284] : memref<250x128xf32, #tpu.memory_space<vmem>>, vector<1x128xf32>
    %648 = vector.broadcast %647 : vector<1x128xf32> to vector<32x128xf32>
    %649 = arith.mulf %621, %648 : vector<32x128xf32>
    %650 = arith.addf %646, %649 : vector<32x128xf32>
    %c120_i32_285 = arith.constant 120 : i32
    %651 = tpu.dynamic_rotate %621 by %c120_i32_285 dim 1 : vector<32x128xf32>, i32 -> vector<32x128xf32>
    %c107 = arith.constant 107 : index
    %c0_286 = arith.constant 0 : index
    %652 = vector.load %arg6[%c107, %c0_286] : memref<250x128xf32, #tpu.memory_space<vmem>>, vector<1x128xf32>
    %653 = vector.broadcast %652 : vector<1x128xf32> to vector<32x128xf32>
    %654 = arith.mulf %651, %653 : vector<32x128xf32>
    %655 = arith.addf %650, %654 : vector<32x128xf32>
    %c31_i32_287 = arith.constant 31 : i32
    %656 = tpu.dynamic_rotate %621 by %c31_i32_287 dim 0 : vector<32x128xf32>, i32 -> vector<32x128xf32>
    %c3_288 = arith.constant 3 : index
    %c0_289 = arith.constant 0 : index
    %c0_290 = arith.constant 0 : index
    %657 = vector.load %arg4[%c3_288, %c0_289, %c0_290] : memref<5x32x1xf32, #tpu.memory_space<vmem>>, vector<1x32x1xf32>
    %658 = vector.shape_cast %657 : vector<1x32x1xf32> to vector<32x1xf32>
    %659 = vector.broadcast %658 : vector<32x1xf32> to vector<32x128xf32>
    %660 = arith.mulf %656, %659 : vector<32x128xf32>
    %c8_i32_291 = arith.constant 8 : i32
    %661 = tpu.dynamic_rotate %660 by %c8_i32_291 dim 1 : vector<32x128xf32>, i32 -> vector<32x128xf32>
    %c110 = arith.constant 110 : index
    %c0_292 = arith.constant 0 : index
    %662 = vector.load %arg6[%c110, %c0_292] : memref<250x128xf32, #tpu.memory_space<vmem>>, vector<1x128xf32>
    %663 = vector.broadcast %662 : vector<1x128xf32> to vector<32x128xf32>
    %664 = arith.mulf %661, %663 : vector<32x128xf32>
    %665 = arith.addf %655, %664 : vector<32x128xf32>
    %c111 = arith.constant 111 : index
    %c0_293 = arith.constant 0 : index
    %666 = vector.load %arg6[%c111, %c0_293] : memref<250x128xf32, #tpu.memory_space<vmem>>, vector<1x128xf32>
    %667 = vector.broadcast %666 : vector<1x128xf32> to vector<32x128xf32>
    %668 = arith.mulf %660, %667 : vector<32x128xf32>
    %669 = arith.addf %665, %668 : vector<32x128xf32>
    %c120_i32_294 = arith.constant 120 : i32
    %670 = tpu.dynamic_rotate %660 by %c120_i32_294 dim 1 : vector<32x128xf32>, i32 -> vector<32x128xf32>
    %c112 = arith.constant 112 : index
    %c0_295 = arith.constant 0 : index
    %671 = vector.load %arg6[%c112, %c0_295] : memref<250x128xf32, #tpu.memory_space<vmem>>, vector<1x128xf32>
    %672 = vector.broadcast %671 : vector<1x128xf32> to vector<32x128xf32>
    %673 = arith.mulf %670, %672 : vector<32x128xf32>
    %674 = arith.addf %669, %673 : vector<32x128xf32>
    %675 = arith.truncf %674 : vector<32x128xf32> to vector<32x128xbf16>
    %c4_296 = arith.constant 4 : index
    %c0_297 = arith.constant 0 : index
    %c0_298 = arith.constant 0 : index
    %676 = vector.load %arg5[%c4_296, %c0_297, %c0_298] : memref<10x128x128xbf16, #tpu.memory_space<vmem>>, vector<1x128x128xbf16>
    %677 = vector.shape_cast %676 : vector<1x128x128xbf16> to vector<128x128xbf16>
    %cst_299 = arith.constant dense<0.000000e+00> : vector<32x128xf32>
    %678 = tpu.matmul %675, %677, %cst_299 {dimension_numbers = #tpu.dot_dimension_numbers<[1], [0], [0], [1], [0, 0, 1, 1], [], []>} : vector<32x128xbf16>, vector<128x128xbf16>, vector<32x128xf32> -> vector<32x128xf32>
    %cst_300 = arith.constant dense<0.000000e+00> : vector<128xf32>
    %679 = vector.multi_reduction <add>, %678, %cst_300 [0] : vector<32x128xf32> to vector<128xf32>
    %680 = vector.shape_cast %679 : vector<128xf32> to vector<1x128xf32>
    %c8_i32_301 = arith.constant 8 : i32
    %681 = tpu.dynamic_rotate %680 by %c8_i32_301 dim 1 : vector<1x128xf32>, i32 -> vector<1x128xf32>
    %682 = arith.addf %680, %681 : vector<1x128xf32>
    %c16_i32_302 = arith.constant 16 : i32
    %683 = tpu.dynamic_rotate %682 by %c16_i32_302 dim 1 : vector<1x128xf32>, i32 -> vector<1x128xf32>
    %684 = arith.addf %682, %683 : vector<1x128xf32>
    %c32_i32_303 = arith.constant 32 : i32
    %685 = tpu.dynamic_rotate %684 by %c32_i32_303 dim 1 : vector<1x128xf32>, i32 -> vector<1x128xf32>
    %686 = arith.addf %684, %685 : vector<1x128xf32>
    %c64_i32_304 = arith.constant 64 : i32
    %687 = tpu.dynamic_rotate %686 by %c64_i32_304 dim 1 : vector<1x128xf32>, i32 -> vector<1x128xf32>
    %688 = arith.addf %686, %687 : vector<1x128xf32>
    %cst_305 = arith.constant 5.120000e+02 : f32
    %689 = vector.broadcast %cst_305 : f32 to vector<1x128xf32>
    %690 = arith.divf %688, %689 : vector<1x128xf32>
    %691 = vector.broadcast %690 : vector<1x128xf32> to vector<32x128xf32>
    %692 = arith.subf %678, %691 : vector<32x128xf32>
    %693 = arith.mulf %692, %692 : vector<32x128xf32>
    %cst_306 = arith.constant dense<0.000000e+00> : vector<128xf32>
    %694 = vector.multi_reduction <add>, %693, %cst_306 [0] : vector<32x128xf32> to vector<128xf32>
    %695 = vector.shape_cast %694 : vector<128xf32> to vector<1x128xf32>
    %c8_i32_307 = arith.constant 8 : i32
    %696 = tpu.dynamic_rotate %695 by %c8_i32_307 dim 1 : vector<1x128xf32>, i32 -> vector<1x128xf32>
    %697 = arith.addf %695, %696 : vector<1x128xf32>
    %c16_i32_308 = arith.constant 16 : i32
    %698 = tpu.dynamic_rotate %697 by %c16_i32_308 dim 1 : vector<1x128xf32>, i32 -> vector<1x128xf32>
    %699 = arith.addf %697, %698 : vector<1x128xf32>
    %c32_i32_309 = arith.constant 32 : i32
    %700 = tpu.dynamic_rotate %699 by %c32_i32_309 dim 1 : vector<1x128xf32>, i32 -> vector<1x128xf32>
    %701 = arith.addf %699, %700 : vector<1x128xf32>
    %c64_i32_310 = arith.constant 64 : i32
    %702 = tpu.dynamic_rotate %701 by %c64_i32_310 dim 1 : vector<1x128xf32>, i32 -> vector<1x128xf32>
    %703 = arith.addf %701, %702 : vector<1x128xf32>
    %cst_311 = arith.constant 5.120000e+02 : f32
    %704 = vector.broadcast %cst_311 : f32 to vector<1x128xf32>
    %705 = arith.divf %703, %704 : vector<1x128xf32>
    %cst_312 = arith.constant 9.99999974E-6 : f32
    %706 = vector.broadcast %cst_312 : f32 to vector<1x128xf32>
    %707 = arith.addf %705, %706 : vector<1x128xf32>
    %708 = math.rsqrt %707 : vector<1x128xf32>
    %709 = vector.broadcast %708 : vector<1x128xf32> to vector<32x128xf32>
    %710 = arith.mulf %692, %709 : vector<32x128xf32>
    %cst_313 = arith.constant 0.000000e+00 : f32
    %711 = vector.broadcast %cst_313 : f32 to vector<32x128xf32>
    %712 = arith.maximumf %710, %711 : vector<32x128xf32>
    %cst_314 = arith.constant 0.000000e+00 : f32
    %713 = vector.broadcast %cst_314 : f32 to vector<32x128xf32>
    %c1_i32_315 = arith.constant 1 : i32
    %714 = tpu.dynamic_rotate %712 by %c1_i32_315 dim 0 : vector<32x128xf32>, i32 -> vector<32x128xf32>
    %c1_316 = arith.constant 1 : index
    %c0_317 = arith.constant 0 : index
    %c0_318 = arith.constant 0 : index
    %715 = vector.load %arg4[%c1_316, %c0_317, %c0_318] : memref<5x32x1xf32, #tpu.memory_space<vmem>>, vector<1x32x1xf32>
    %716 = vector.shape_cast %715 : vector<1x32x1xf32> to vector<32x1xf32>
    %717 = vector.broadcast %716 : vector<32x1xf32> to vector<32x128xf32>
    %718 = arith.mulf %714, %717 : vector<32x128xf32>
    %c8_i32_319 = arith.constant 8 : i32
    %719 = tpu.dynamic_rotate %718 by %c8_i32_319 dim 1 : vector<32x128xf32>, i32 -> vector<32x128xf32>
    %c125 = arith.constant 125 : index
    %c0_320 = arith.constant 0 : index
    %720 = vector.load %arg6[%c125, %c0_320] : memref<250x128xf32, #tpu.memory_space<vmem>>, vector<1x128xf32>
    %721 = vector.broadcast %720 : vector<1x128xf32> to vector<32x128xf32>
    %722 = arith.mulf %719, %721 : vector<32x128xf32>
    %723 = arith.addf %713, %722 : vector<32x128xf32>
    %c126 = arith.constant 126 : index
    %c0_321 = arith.constant 0 : index
    %724 = vector.load %arg6[%c126, %c0_321] : memref<250x128xf32, #tpu.memory_space<vmem>>, vector<1x128xf32>
    %725 = vector.broadcast %724 : vector<1x128xf32> to vector<32x128xf32>
    %726 = arith.mulf %718, %725 : vector<32x128xf32>
    %727 = arith.addf %723, %726 : vector<32x128xf32>
    %c120_i32_322 = arith.constant 120 : i32
    %728 = tpu.dynamic_rotate %718 by %c120_i32_322 dim 1 : vector<32x128xf32>, i32 -> vector<32x128xf32>
    %c127 = arith.constant 127 : index
    %c0_323 = arith.constant 0 : index
    %729 = vector.load %arg6[%c127, %c0_323] : memref<250x128xf32, #tpu.memory_space<vmem>>, vector<1x128xf32>
    %730 = vector.broadcast %729 : vector<1x128xf32> to vector<32x128xf32>
    %731 = arith.mulf %728, %730 : vector<32x128xf32>
    %732 = arith.addf %727, %731 : vector<32x128xf32>
    %c8_i32_324 = arith.constant 8 : i32
    %733 = tpu.dynamic_rotate %712 by %c8_i32_324 dim 1 : vector<32x128xf32>, i32 -> vector<32x128xf32>
    %c130 = arith.constant 130 : index
    %c0_325 = arith.constant 0 : index
    %734 = vector.load %arg6[%c130, %c0_325] : memref<250x128xf32, #tpu.memory_space<vmem>>, vector<1x128xf32>
    %735 = vector.broadcast %734 : vector<1x128xf32> to vector<32x128xf32>
    %736 = arith.mulf %733, %735 : vector<32x128xf32>
    %737 = arith.addf %732, %736 : vector<32x128xf32>
    %c131 = arith.constant 131 : index
    %c0_326 = arith.constant 0 : index
    %738 = vector.load %arg6[%c131, %c0_326] : memref<250x128xf32, #tpu.memory_space<vmem>>, vector<1x128xf32>
    %739 = vector.broadcast %738 : vector<1x128xf32> to vector<32x128xf32>
    %740 = arith.mulf %712, %739 : vector<32x128xf32>
    %741 = arith.addf %737, %740 : vector<32x128xf32>
    %c120_i32_327 = arith.constant 120 : i32
    %742 = tpu.dynamic_rotate %712 by %c120_i32_327 dim 1 : vector<32x128xf32>, i32 -> vector<32x128xf32>
    %c132 = arith.constant 132 : index
    %c0_328 = arith.constant 0 : index
    %743 = vector.load %arg6[%c132, %c0_328] : memref<250x128xf32, #tpu.memory_space<vmem>>, vector<1x128xf32>
    %744 = vector.broadcast %743 : vector<1x128xf32> to vector<32x128xf32>
    %745 = arith.mulf %742, %744 : vector<32x128xf32>
    %746 = arith.addf %741, %745 : vector<32x128xf32>
    %c31_i32_329 = arith.constant 31 : i32
    %747 = tpu.dynamic_rotate %712 by %c31_i32_329 dim 0 : vector<32x128xf32>, i32 -> vector<32x128xf32>
    %c3_330 = arith.constant 3 : index
    %c0_331 = arith.constant 0 : index
    %c0_332 = arith.constant 0 : index
    %748 = vector.load %arg4[%c3_330, %c0_331, %c0_332] : memref<5x32x1xf32, #tpu.memory_space<vmem>>, vector<1x32x1xf32>
    %749 = vector.shape_cast %748 : vector<1x32x1xf32> to vector<32x1xf32>
    %750 = vector.broadcast %749 : vector<32x1xf32> to vector<32x128xf32>
    %751 = arith.mulf %747, %750 : vector<32x128xf32>
    %c8_i32_333 = arith.constant 8 : i32
    %752 = tpu.dynamic_rotate %751 by %c8_i32_333 dim 1 : vector<32x128xf32>, i32 -> vector<32x128xf32>
    %c135 = arith.constant 135 : index
    %c0_334 = arith.constant 0 : index
    %753 = vector.load %arg6[%c135, %c0_334] : memref<250x128xf32, #tpu.memory_space<vmem>>, vector<1x128xf32>
    %754 = vector.broadcast %753 : vector<1x128xf32> to vector<32x128xf32>
    %755 = arith.mulf %752, %754 : vector<32x128xf32>
    %756 = arith.addf %746, %755 : vector<32x128xf32>
    %c136 = arith.constant 136 : index
    %c0_335 = arith.constant 0 : index
    %757 = vector.load %arg6[%c136, %c0_335] : memref<250x128xf32, #tpu.memory_space<vmem>>, vector<1x128xf32>
    %758 = vector.broadcast %757 : vector<1x128xf32> to vector<32x128xf32>
    %759 = arith.mulf %751, %758 : vector<32x128xf32>
    %760 = arith.addf %756, %759 : vector<32x128xf32>
    %c120_i32_336 = arith.constant 120 : i32
    %761 = tpu.dynamic_rotate %751 by %c120_i32_336 dim 1 : vector<32x128xf32>, i32 -> vector<32x128xf32>
    %c137 = arith.constant 137 : index
    %c0_337 = arith.constant 0 : index
    %762 = vector.load %arg6[%c137, %c0_337] : memref<250x128xf32, #tpu.memory_space<vmem>>, vector<1x128xf32>
    %763 = vector.broadcast %762 : vector<1x128xf32> to vector<32x128xf32>
    %764 = arith.mulf %761, %763 : vector<32x128xf32>
    %765 = arith.addf %760, %764 : vector<32x128xf32>
    %766 = arith.truncf %765 : vector<32x128xf32> to vector<32x128xbf16>
    %c5_338 = arith.constant 5 : index
    %c0_339 = arith.constant 0 : index
    %c0_340 = arith.constant 0 : index
    %767 = vector.load %arg5[%c5_338, %c0_339, %c0_340] : memref<10x128x128xbf16, #tpu.memory_space<vmem>>, vector<1x128x128xbf16>
    %768 = vector.shape_cast %767 : vector<1x128x128xbf16> to vector<128x128xbf16>
    %cst_341 = arith.constant dense<0.000000e+00> : vector<32x128xf32>
    %769 = tpu.matmul %766, %768, %cst_341 {dimension_numbers = #tpu.dot_dimension_numbers<[1], [0], [0], [1], [0, 0, 1, 1], [], []>} : vector<32x128xbf16>, vector<128x128xbf16>, vector<32x128xf32> -> vector<32x128xf32>
    %cst_342 = arith.constant dense<0.000000e+00> : vector<128xf32>
    %770 = vector.multi_reduction <add>, %769, %cst_342 [0] : vector<32x128xf32> to vector<128xf32>
    %771 = vector.shape_cast %770 : vector<128xf32> to vector<1x128xf32>
    %c8_i32_343 = arith.constant 8 : i32
    %772 = tpu.dynamic_rotate %771 by %c8_i32_343 dim 1 : vector<1x128xf32>, i32 -> vector<1x128xf32>
    %773 = arith.addf %771, %772 : vector<1x128xf32>
    %c16_i32_344 = arith.constant 16 : i32
    %774 = tpu.dynamic_rotate %773 by %c16_i32_344 dim 1 : vector<1x128xf32>, i32 -> vector<1x128xf32>
    %775 = arith.addf %773, %774 : vector<1x128xf32>
    %c32_i32_345 = arith.constant 32 : i32
    %776 = tpu.dynamic_rotate %775 by %c32_i32_345 dim 1 : vector<1x128xf32>, i32 -> vector<1x128xf32>
    %777 = arith.addf %775, %776 : vector<1x128xf32>
    %c64_i32_346 = arith.constant 64 : i32
    %778 = tpu.dynamic_rotate %777 by %c64_i32_346 dim 1 : vector<1x128xf32>, i32 -> vector<1x128xf32>
    %779 = arith.addf %777, %778 : vector<1x128xf32>
    %cst_347 = arith.constant 5.120000e+02 : f32
    %780 = vector.broadcast %cst_347 : f32 to vector<1x128xf32>
    %781 = arith.divf %779, %780 : vector<1x128xf32>
    %782 = vector.broadcast %781 : vector<1x128xf32> to vector<32x128xf32>
    %783 = arith.subf %769, %782 : vector<32x128xf32>
    %784 = arith.mulf %783, %783 : vector<32x128xf32>
    %cst_348 = arith.constant dense<0.000000e+00> : vector<128xf32>
    %785 = vector.multi_reduction <add>, %784, %cst_348 [0] : vector<32x128xf32> to vector<128xf32>
    %786 = vector.shape_cast %785 : vector<128xf32> to vector<1x128xf32>
    %c8_i32_349 = arith.constant 8 : i32
    %787 = tpu.dynamic_rotate %786 by %c8_i32_349 dim 1 : vector<1x128xf32>, i32 -> vector<1x128xf32>
    %788 = arith.addf %786, %787 : vector<1x128xf32>
    %c16_i32_350 = arith.constant 16 : i32
    %789 = tpu.dynamic_rotate %788 by %c16_i32_350 dim 1 : vector<1x128xf32>, i32 -> vector<1x128xf32>
    %790 = arith.addf %788, %789 : vector<1x128xf32>
    %c32_i32_351 = arith.constant 32 : i32
    %791 = tpu.dynamic_rotate %790 by %c32_i32_351 dim 1 : vector<1x128xf32>, i32 -> vector<1x128xf32>
    %792 = arith.addf %790, %791 : vector<1x128xf32>
    %c64_i32_352 = arith.constant 64 : i32
    %793 = tpu.dynamic_rotate %792 by %c64_i32_352 dim 1 : vector<1x128xf32>, i32 -> vector<1x128xf32>
    %794 = arith.addf %792, %793 : vector<1x128xf32>
    %cst_353 = arith.constant 5.120000e+02 : f32
    %795 = vector.broadcast %cst_353 : f32 to vector<1x128xf32>
    %796 = arith.divf %794, %795 : vector<1x128xf32>
    %cst_354 = arith.constant 9.99999974E-6 : f32
    %797 = vector.broadcast %cst_354 : f32 to vector<1x128xf32>
    %798 = arith.addf %796, %797 : vector<1x128xf32>
    %799 = math.rsqrt %798 : vector<1x128xf32>
    %800 = vector.broadcast %799 : vector<1x128xf32> to vector<32x128xf32>
    %801 = arith.mulf %783, %800 : vector<32x128xf32>
    %802 = arith.addf %619, %801 : vector<32x128xf32>
    %cst_355 = arith.constant 0.000000e+00 : f32
    %803 = vector.broadcast %cst_355 : f32 to vector<32x128xf32>
    %804 = arith.maximumf %75, %803 : vector<32x128xf32>
    %cst_356 = arith.constant 0.000000e+00 : f32
    %805 = vector.broadcast %cst_356 : f32 to vector<32x128xf32>
    %c2_i32_357 = arith.constant 2 : i32
    %806 = tpu.dynamic_rotate %804 by %c2_i32_357 dim 0 : vector<32x128xf32>, i32 -> vector<32x128xf32>
    %c0_358 = arith.constant 0 : index
    %c0_359 = arith.constant 0 : index
    %c0_360 = arith.constant 0 : index
    %807 = vector.load %arg4[%c0_358, %c0_359, %c0_360] : memref<5x32x1xf32, #tpu.memory_space<vmem>>, vector<1x32x1xf32>
    %808 = vector.shape_cast %807 : vector<1x32x1xf32> to vector<32x1xf32>
    %809 = vector.broadcast %808 : vector<32x1xf32> to vector<32x128xf32>
    %810 = arith.mulf %806, %809 : vector<32x128xf32>
    %c16_i32_361 = arith.constant 16 : i32
    %811 = tpu.dynamic_rotate %810 by %c16_i32_361 dim 1 : vector<32x128xf32>, i32 -> vector<32x128xf32>
    %c150 = arith.constant 150 : index
    %c0_362 = arith.constant 0 : index
    %812 = vector.load %arg6[%c150, %c0_362] : memref<250x128xf32, #tpu.memory_space<vmem>>, vector<1x128xf32>
    %813 = vector.broadcast %812 : vector<1x128xf32> to vector<32x128xf32>
    %814 = arith.mulf %811, %813 : vector<32x128xf32>
    %815 = arith.addf %805, %814 : vector<32x128xf32>
    %c8_i32_363 = arith.constant 8 : i32
    %816 = tpu.dynamic_rotate %810 by %c8_i32_363 dim 1 : vector<32x128xf32>, i32 -> vector<32x128xf32>
    %c151 = arith.constant 151 : index
    %c0_364 = arith.constant 0 : index
    %817 = vector.load %arg6[%c151, %c0_364] : memref<250x128xf32, #tpu.memory_space<vmem>>, vector<1x128xf32>
    %818 = vector.broadcast %817 : vector<1x128xf32> to vector<32x128xf32>
    %819 = arith.mulf %816, %818 : vector<32x128xf32>
    %820 = arith.addf %815, %819 : vector<32x128xf32>
    %c152 = arith.constant 152 : index
    %c0_365 = arith.constant 0 : index
    %821 = vector.load %arg6[%c152, %c0_365] : memref<250x128xf32, #tpu.memory_space<vmem>>, vector<1x128xf32>
    %822 = vector.broadcast %821 : vector<1x128xf32> to vector<32x128xf32>
    %823 = arith.mulf %810, %822 : vector<32x128xf32>
    %824 = arith.addf %820, %823 : vector<32x128xf32>
    %c120_i32_366 = arith.constant 120 : i32
    %825 = tpu.dynamic_rotate %810 by %c120_i32_366 dim 1 : vector<32x128xf32>, i32 -> vector<32x128xf32>
    %c153 = arith.constant 153 : index
    %c0_367 = arith.constant 0 : index
    %826 = vector.load %arg6[%c153, %c0_367] : memref<250x128xf32, #tpu.memory_space<vmem>>, vector<1x128xf32>
    %827 = vector.broadcast %826 : vector<1x128xf32> to vector<32x128xf32>
    %828 = arith.mulf %825, %827 : vector<32x128xf32>
    %829 = arith.addf %824, %828 : vector<32x128xf32>
    %c112_i32_368 = arith.constant 112 : i32
    %830 = tpu.dynamic_rotate %810 by %c112_i32_368 dim 1 : vector<32x128xf32>, i32 -> vector<32x128xf32>
    %c154 = arith.constant 154 : index
    %c0_369 = arith.constant 0 : index
    %831 = vector.load %arg6[%c154, %c0_369] : memref<250x128xf32, #tpu.memory_space<vmem>>, vector<1x128xf32>
    %832 = vector.broadcast %831 : vector<1x128xf32> to vector<32x128xf32>
    %833 = arith.mulf %830, %832 : vector<32x128xf32>
    %834 = arith.addf %829, %833 : vector<32x128xf32>
    %c1_i32_370 = arith.constant 1 : i32
    %835 = tpu.dynamic_rotate %804 by %c1_i32_370 dim 0 : vector<32x128xf32>, i32 -> vector<32x128xf32>
    %c1_371 = arith.constant 1 : index
    %c0_372 = arith.constant 0 : index
    %c0_373 = arith.constant 0 : index
    %836 = vector.load %arg4[%c1_371, %c0_372, %c0_373] : memref<5x32x1xf32, #tpu.memory_space<vmem>>, vector<1x32x1xf32>
    %837 = vector.shape_cast %836 : vector<1x32x1xf32> to vector<32x1xf32>
    %838 = vector.broadcast %837 : vector<32x1xf32> to vector<32x128xf32>
    %839 = arith.mulf %835, %838 : vector<32x128xf32>
    %c16_i32_374 = arith.constant 16 : i32
    %840 = tpu.dynamic_rotate %839 by %c16_i32_374 dim 1 : vector<32x128xf32>, i32 -> vector<32x128xf32>
    %c155 = arith.constant 155 : index
    %c0_375 = arith.constant 0 : index
    %841 = vector.load %arg6[%c155, %c0_375] : memref<250x128xf32, #tpu.memory_space<vmem>>, vector<1x128xf32>
    %842 = vector.broadcast %841 : vector<1x128xf32> to vector<32x128xf32>
    %843 = arith.mulf %840, %842 : vector<32x128xf32>
    %844 = arith.addf %834, %843 : vector<32x128xf32>
    %c8_i32_376 = arith.constant 8 : i32
    %845 = tpu.dynamic_rotate %839 by %c8_i32_376 dim 1 : vector<32x128xf32>, i32 -> vector<32x128xf32>
    %c156 = arith.constant 156 : index
    %c0_377 = arith.constant 0 : index
    %846 = vector.load %arg6[%c156, %c0_377] : memref<250x128xf32, #tpu.memory_space<vmem>>, vector<1x128xf32>
    %847 = vector.broadcast %846 : vector<1x128xf32> to vector<32x128xf32>
    %848 = arith.mulf %845, %847 : vector<32x128xf32>
    %849 = arith.addf %844, %848 : vector<32x128xf32>
    %c157 = arith.constant 157 : index
    %c0_378 = arith.constant 0 : index
    %850 = vector.load %arg6[%c157, %c0_378] : memref<250x128xf32, #tpu.memory_space<vmem>>, vector<1x128xf32>
    %851 = vector.broadcast %850 : vector<1x128xf32> to vector<32x128xf32>
    %852 = arith.mulf %839, %851 : vector<32x128xf32>
    %853 = arith.addf %849, %852 : vector<32x128xf32>
    %c120_i32_379 = arith.constant 120 : i32
    %854 = tpu.dynamic_rotate %839 by %c120_i32_379 dim 1 : vector<32x128xf32>, i32 -> vector<32x128xf32>
    %c158 = arith.constant 158 : index
    %c0_380 = arith.constant 0 : index
    %855 = vector.load %arg6[%c158, %c0_380] : memref<250x128xf32, #tpu.memory_space<vmem>>, vector<1x128xf32>
    %856 = vector.broadcast %855 : vector<1x128xf32> to vector<32x128xf32>
    %857 = arith.mulf %854, %856 : vector<32x128xf32>
    %858 = arith.addf %853, %857 : vector<32x128xf32>
    %c112_i32_381 = arith.constant 112 : i32
    %859 = tpu.dynamic_rotate %839 by %c112_i32_381 dim 1 : vector<32x128xf32>, i32 -> vector<32x128xf32>
    %c159 = arith.constant 159 : index
    %c0_382 = arith.constant 0 : index
    %860 = vector.load %arg6[%c159, %c0_382] : memref<250x128xf32, #tpu.memory_space<vmem>>, vector<1x128xf32>
    %861 = vector.broadcast %860 : vector<1x128xf32> to vector<32x128xf32>
    %862 = arith.mulf %859, %861 : vector<32x128xf32>
    %863 = arith.addf %858, %862 : vector<32x128xf32>
    %c16_i32_383 = arith.constant 16 : i32
    %864 = tpu.dynamic_rotate %804 by %c16_i32_383 dim 1 : vector<32x128xf32>, i32 -> vector<32x128xf32>
    %c160 = arith.constant 160 : index
    %c0_384 = arith.constant 0 : index
    %865 = vector.load %arg6[%c160, %c0_384] : memref<250x128xf32, #tpu.memory_space<vmem>>, vector<1x128xf32>
    %866 = vector.broadcast %865 : vector<1x128xf32> to vector<32x128xf32>
    %867 = arith.mulf %864, %866 : vector<32x128xf32>
    %868 = arith.addf %863, %867 : vector<32x128xf32>
    %c8_i32_385 = arith.constant 8 : i32
    %869 = tpu.dynamic_rotate %804 by %c8_i32_385 dim 1 : vector<32x128xf32>, i32 -> vector<32x128xf32>
    %c161 = arith.constant 161 : index
    %c0_386 = arith.constant 0 : index
    %870 = vector.load %arg6[%c161, %c0_386] : memref<250x128xf32, #tpu.memory_space<vmem>>, vector<1x128xf32>
    %871 = vector.broadcast %870 : vector<1x128xf32> to vector<32x128xf32>
    %872 = arith.mulf %869, %871 : vector<32x128xf32>
    %873 = arith.addf %868, %872 : vector<32x128xf32>
    %c162 = arith.constant 162 : index
    %c0_387 = arith.constant 0 : index
    %874 = vector.load %arg6[%c162, %c0_387] : memref<250x128xf32, #tpu.memory_space<vmem>>, vector<1x128xf32>
    %875 = vector.broadcast %874 : vector<1x128xf32> to vector<32x128xf32>
    %876 = arith.mulf %804, %875 : vector<32x128xf32>
    %877 = arith.addf %873, %876 : vector<32x128xf32>
    %c120_i32_388 = arith.constant 120 : i32
    %878 = tpu.dynamic_rotate %804 by %c120_i32_388 dim 1 : vector<32x128xf32>, i32 -> vector<32x128xf32>
    %c163 = arith.constant 163 : index
    %c0_389 = arith.constant 0 : index
    %879 = vector.load %arg6[%c163, %c0_389] : memref<250x128xf32, #tpu.memory_space<vmem>>, vector<1x128xf32>
    %880 = vector.broadcast %879 : vector<1x128xf32> to vector<32x128xf32>
    %881 = arith.mulf %878, %880 : vector<32x128xf32>
    %882 = arith.addf %877, %881 : vector<32x128xf32>
    %c112_i32_390 = arith.constant 112 : i32
    %883 = tpu.dynamic_rotate %804 by %c112_i32_390 dim 1 : vector<32x128xf32>, i32 -> vector<32x128xf32>
    %c164 = arith.constant 164 : index
    %c0_391 = arith.constant 0 : index
    %884 = vector.load %arg6[%c164, %c0_391] : memref<250x128xf32, #tpu.memory_space<vmem>>, vector<1x128xf32>
    %885 = vector.broadcast %884 : vector<1x128xf32> to vector<32x128xf32>
    %886 = arith.mulf %883, %885 : vector<32x128xf32>
    %887 = arith.addf %882, %886 : vector<32x128xf32>
    %c31_i32_392 = arith.constant 31 : i32
    %888 = tpu.dynamic_rotate %804 by %c31_i32_392 dim 0 : vector<32x128xf32>, i32 -> vector<32x128xf32>
    %c3_393 = arith.constant 3 : index
    %c0_394 = arith.constant 0 : index
    %c0_395 = arith.constant 0 : index
    %889 = vector.load %arg4[%c3_393, %c0_394, %c0_395] : memref<5x32x1xf32, #tpu.memory_space<vmem>>, vector<1x32x1xf32>
    %890 = vector.shape_cast %889 : vector<1x32x1xf32> to vector<32x1xf32>
    %891 = vector.broadcast %890 : vector<32x1xf32> to vector<32x128xf32>
    %892 = arith.mulf %888, %891 : vector<32x128xf32>
    %c16_i32_396 = arith.constant 16 : i32
    %893 = tpu.dynamic_rotate %892 by %c16_i32_396 dim 1 : vector<32x128xf32>, i32 -> vector<32x128xf32>
    %c165 = arith.constant 165 : index
    %c0_397 = arith.constant 0 : index
    %894 = vector.load %arg6[%c165, %c0_397] : memref<250x128xf32, #tpu.memory_space<vmem>>, vector<1x128xf32>
    %895 = vector.broadcast %894 : vector<1x128xf32> to vector<32x128xf32>
    %896 = arith.mulf %893, %895 : vector<32x128xf32>
    %897 = arith.addf %887, %896 : vector<32x128xf32>
    %c8_i32_398 = arith.constant 8 : i32
    %898 = tpu.dynamic_rotate %892 by %c8_i32_398 dim 1 : vector<32x128xf32>, i32 -> vector<32x128xf32>
    %c166 = arith.constant 166 : index
    %c0_399 = arith.constant 0 : index
    %899 = vector.load %arg6[%c166, %c0_399] : memref<250x128xf32, #tpu.memory_space<vmem>>, vector<1x128xf32>
    %900 = vector.broadcast %899 : vector<1x128xf32> to vector<32x128xf32>
    %901 = arith.mulf %898, %900 : vector<32x128xf32>
    %902 = arith.addf %897, %901 : vector<32x128xf32>
    %c167 = arith.constant 167 : index
    %c0_400 = arith.constant 0 : index
    %903 = vector.load %arg6[%c167, %c0_400] : memref<250x128xf32, #tpu.memory_space<vmem>>, vector<1x128xf32>
    %904 = vector.broadcast %903 : vector<1x128xf32> to vector<32x128xf32>
    %905 = arith.mulf %892, %904 : vector<32x128xf32>
    %906 = arith.addf %902, %905 : vector<32x128xf32>
    %c120_i32_401 = arith.constant 120 : i32
    %907 = tpu.dynamic_rotate %892 by %c120_i32_401 dim 1 : vector<32x128xf32>, i32 -> vector<32x128xf32>
    %c168 = arith.constant 168 : index
    %c0_402 = arith.constant 0 : index
    %908 = vector.load %arg6[%c168, %c0_402] : memref<250x128xf32, #tpu.memory_space<vmem>>, vector<1x128xf32>
    %909 = vector.broadcast %908 : vector<1x128xf32> to vector<32x128xf32>
    %910 = arith.mulf %907, %909 : vector<32x128xf32>
    %911 = arith.addf %906, %910 : vector<32x128xf32>
    %c112_i32_403 = arith.constant 112 : i32
    %912 = tpu.dynamic_rotate %892 by %c112_i32_403 dim 1 : vector<32x128xf32>, i32 -> vector<32x128xf32>
    %c169 = arith.constant 169 : index
    %c0_404 = arith.constant 0 : index
    %913 = vector.load %arg6[%c169, %c0_404] : memref<250x128xf32, #tpu.memory_space<vmem>>, vector<1x128xf32>
    %914 = vector.broadcast %913 : vector<1x128xf32> to vector<32x128xf32>
    %915 = arith.mulf %912, %914 : vector<32x128xf32>
    %916 = arith.addf %911, %915 : vector<32x128xf32>
    %c30_i32_405 = arith.constant 30 : i32
    %917 = tpu.dynamic_rotate %804 by %c30_i32_405 dim 0 : vector<32x128xf32>, i32 -> vector<32x128xf32>
    %c4_406 = arith.constant 4 : index
    %c0_407 = arith.constant 0 : index
    %c0_408 = arith.constant 0 : index
    %918 = vector.load %arg4[%c4_406, %c0_407, %c0_408] : memref<5x32x1xf32, #tpu.memory_space<vmem>>, vector<1x32x1xf32>
    %919 = vector.shape_cast %918 : vector<1x32x1xf32> to vector<32x1xf32>
    %920 = vector.broadcast %919 : vector<32x1xf32> to vector<32x128xf32>
    %921 = arith.mulf %917, %920 : vector<32x128xf32>
    %c16_i32_409 = arith.constant 16 : i32
    %922 = tpu.dynamic_rotate %921 by %c16_i32_409 dim 1 : vector<32x128xf32>, i32 -> vector<32x128xf32>
    %c170 = arith.constant 170 : index
    %c0_410 = arith.constant 0 : index
    %923 = vector.load %arg6[%c170, %c0_410] : memref<250x128xf32, #tpu.memory_space<vmem>>, vector<1x128xf32>
    %924 = vector.broadcast %923 : vector<1x128xf32> to vector<32x128xf32>
    %925 = arith.mulf %922, %924 : vector<32x128xf32>
    %926 = arith.addf %916, %925 : vector<32x128xf32>
    %c8_i32_411 = arith.constant 8 : i32
    %927 = tpu.dynamic_rotate %921 by %c8_i32_411 dim 1 : vector<32x128xf32>, i32 -> vector<32x128xf32>
    %c171 = arith.constant 171 : index
    %c0_412 = arith.constant 0 : index
    %928 = vector.load %arg6[%c171, %c0_412] : memref<250x128xf32, #tpu.memory_space<vmem>>, vector<1x128xf32>
    %929 = vector.broadcast %928 : vector<1x128xf32> to vector<32x128xf32>
    %930 = arith.mulf %927, %929 : vector<32x128xf32>
    %931 = arith.addf %926, %930 : vector<32x128xf32>
    %c172 = arith.constant 172 : index
    %c0_413 = arith.constant 0 : index
    %932 = vector.load %arg6[%c172, %c0_413] : memref<250x128xf32, #tpu.memory_space<vmem>>, vector<1x128xf32>
    %933 = vector.broadcast %932 : vector<1x128xf32> to vector<32x128xf32>
    %934 = arith.mulf %921, %933 : vector<32x128xf32>
    %935 = arith.addf %931, %934 : vector<32x128xf32>
    %c120_i32_414 = arith.constant 120 : i32
    %936 = tpu.dynamic_rotate %921 by %c120_i32_414 dim 1 : vector<32x128xf32>, i32 -> vector<32x128xf32>
    %c173 = arith.constant 173 : index
    %c0_415 = arith.constant 0 : index
    %937 = vector.load %arg6[%c173, %c0_415] : memref<250x128xf32, #tpu.memory_space<vmem>>, vector<1x128xf32>
    %938 = vector.broadcast %937 : vector<1x128xf32> to vector<32x128xf32>
    %939 = arith.mulf %936, %938 : vector<32x128xf32>
    %940 = arith.addf %935, %939 : vector<32x128xf32>
    %c112_i32_416 = arith.constant 112 : i32
    %941 = tpu.dynamic_rotate %921 by %c112_i32_416 dim 1 : vector<32x128xf32>, i32 -> vector<32x128xf32>
    %c174 = arith.constant 174 : index
    %c0_417 = arith.constant 0 : index
    %942 = vector.load %arg6[%c174, %c0_417] : memref<250x128xf32, #tpu.memory_space<vmem>>, vector<1x128xf32>
    %943 = vector.broadcast %942 : vector<1x128xf32> to vector<32x128xf32>
    %944 = arith.mulf %941, %943 : vector<32x128xf32>
    %945 = arith.addf %940, %944 : vector<32x128xf32>
    %946 = arith.truncf %945 : vector<32x128xf32> to vector<32x128xbf16>
    %c6_418 = arith.constant 6 : index
    %c0_419 = arith.constant 0 : index
    %c0_420 = arith.constant 0 : index
    %947 = vector.load %arg5[%c6_418, %c0_419, %c0_420] : memref<10x128x128xbf16, #tpu.memory_space<vmem>>, vector<1x128x128xbf16>
    %948 = vector.shape_cast %947 : vector<1x128x128xbf16> to vector<128x128xbf16>
    %cst_421 = arith.constant dense<0.000000e+00> : vector<32x128xf32>
    %949 = tpu.matmul %946, %948, %cst_421 {dimension_numbers = #tpu.dot_dimension_numbers<[1], [0], [0], [1], [0, 0, 1, 1], [], []>} : vector<32x128xbf16>, vector<128x128xbf16>, vector<32x128xf32> -> vector<32x128xf32>
    %cst_422 = arith.constant dense<0.000000e+00> : vector<128xf32>
    %950 = vector.multi_reduction <add>, %949, %cst_422 [0] : vector<32x128xf32> to vector<128xf32>
    %951 = vector.shape_cast %950 : vector<128xf32> to vector<1x128xf32>
    %c8_i32_423 = arith.constant 8 : i32
    %952 = tpu.dynamic_rotate %951 by %c8_i32_423 dim 1 : vector<1x128xf32>, i32 -> vector<1x128xf32>
    %953 = arith.addf %951, %952 : vector<1x128xf32>
    %c16_i32_424 = arith.constant 16 : i32
    %954 = tpu.dynamic_rotate %953 by %c16_i32_424 dim 1 : vector<1x128xf32>, i32 -> vector<1x128xf32>
    %955 = arith.addf %953, %954 : vector<1x128xf32>
    %c32_i32_425 = arith.constant 32 : i32
    %956 = tpu.dynamic_rotate %955 by %c32_i32_425 dim 1 : vector<1x128xf32>, i32 -> vector<1x128xf32>
    %957 = arith.addf %955, %956 : vector<1x128xf32>
    %c64_i32_426 = arith.constant 64 : i32
    %958 = tpu.dynamic_rotate %957 by %c64_i32_426 dim 1 : vector<1x128xf32>, i32 -> vector<1x128xf32>
    %959 = arith.addf %957, %958 : vector<1x128xf32>
    %cst_427 = arith.constant 5.120000e+02 : f32
    %960 = vector.broadcast %cst_427 : f32 to vector<1x128xf32>
    %961 = arith.divf %959, %960 : vector<1x128xf32>
    %962 = vector.broadcast %961 : vector<1x128xf32> to vector<32x128xf32>
    %963 = arith.subf %949, %962 : vector<32x128xf32>
    %964 = arith.mulf %963, %963 : vector<32x128xf32>
    %cst_428 = arith.constant dense<0.000000e+00> : vector<128xf32>
    %965 = vector.multi_reduction <add>, %964, %cst_428 [0] : vector<32x128xf32> to vector<128xf32>
    %966 = vector.shape_cast %965 : vector<128xf32> to vector<1x128xf32>
    %c8_i32_429 = arith.constant 8 : i32
    %967 = tpu.dynamic_rotate %966 by %c8_i32_429 dim 1 : vector<1x128xf32>, i32 -> vector<1x128xf32>
    %968 = arith.addf %966, %967 : vector<1x128xf32>
    %c16_i32_430 = arith.constant 16 : i32
    %969 = tpu.dynamic_rotate %968 by %c16_i32_430 dim 1 : vector<1x128xf32>, i32 -> vector<1x128xf32>
    %970 = arith.addf %968, %969 : vector<1x128xf32>
    %c32_i32_431 = arith.constant 32 : i32
    %971 = tpu.dynamic_rotate %970 by %c32_i32_431 dim 1 : vector<1x128xf32>, i32 -> vector<1x128xf32>
    %972 = arith.addf %970, %971 : vector<1x128xf32>
    %c64_i32_432 = arith.constant 64 : i32
    %973 = tpu.dynamic_rotate %972 by %c64_i32_432 dim 1 : vector<1x128xf32>, i32 -> vector<1x128xf32>
    %974 = arith.addf %972, %973 : vector<1x128xf32>
    %cst_433 = arith.constant 5.120000e+02 : f32
    %975 = vector.broadcast %cst_433 : f32 to vector<1x128xf32>
    %976 = arith.divf %974, %975 : vector<1x128xf32>
    %cst_434 = arith.constant 9.99999974E-6 : f32
    %977 = vector.broadcast %cst_434 : f32 to vector<1x128xf32>
    %978 = arith.addf %976, %977 : vector<1x128xf32>
    %979 = math.rsqrt %978 : vector<1x128xf32>
    %980 = vector.broadcast %979 : vector<1x128xf32> to vector<32x128xf32>
    %981 = arith.mulf %963, %980 : vector<32x128xf32>
    %cst_435 = arith.constant 0.000000e+00 : f32
    %982 = vector.broadcast %cst_435 : f32 to vector<32x128xf32>
    %983 = arith.maximumf %981, %982 : vector<32x128xf32>
    %cst_436 = arith.constant 0.000000e+00 : f32
    %984 = vector.broadcast %cst_436 : f32 to vector<32x128xf32>
    %c2_i32_437 = arith.constant 2 : i32
    %985 = tpu.dynamic_rotate %983 by %c2_i32_437 dim 0 : vector<32x128xf32>, i32 -> vector<32x128xf32>
    %c0_438 = arith.constant 0 : index
    %c0_439 = arith.constant 0 : index
    %c0_440 = arith.constant 0 : index
    %986 = vector.load %arg4[%c0_438, %c0_439, %c0_440] : memref<5x32x1xf32, #tpu.memory_space<vmem>>, vector<1x32x1xf32>
    %987 = vector.shape_cast %986 : vector<1x32x1xf32> to vector<32x1xf32>
    %988 = vector.broadcast %987 : vector<32x1xf32> to vector<32x128xf32>
    %989 = arith.mulf %985, %988 : vector<32x128xf32>
    %c16_i32_441 = arith.constant 16 : i32
    %990 = tpu.dynamic_rotate %989 by %c16_i32_441 dim 1 : vector<32x128xf32>, i32 -> vector<32x128xf32>
    %c175 = arith.constant 175 : index
    %c0_442 = arith.constant 0 : index
    %991 = vector.load %arg6[%c175, %c0_442] : memref<250x128xf32, #tpu.memory_space<vmem>>, vector<1x128xf32>
    %992 = vector.broadcast %991 : vector<1x128xf32> to vector<32x128xf32>
    %993 = arith.mulf %990, %992 : vector<32x128xf32>
    %994 = arith.addf %984, %993 : vector<32x128xf32>
    %c8_i32_443 = arith.constant 8 : i32
    %995 = tpu.dynamic_rotate %989 by %c8_i32_443 dim 1 : vector<32x128xf32>, i32 -> vector<32x128xf32>
    %c176 = arith.constant 176 : index
    %c0_444 = arith.constant 0 : index
    %996 = vector.load %arg6[%c176, %c0_444] : memref<250x128xf32, #tpu.memory_space<vmem>>, vector<1x128xf32>
    %997 = vector.broadcast %996 : vector<1x128xf32> to vector<32x128xf32>
    %998 = arith.mulf %995, %997 : vector<32x128xf32>
    %999 = arith.addf %994, %998 : vector<32x128xf32>
    %c177 = arith.constant 177 : index
    %c0_445 = arith.constant 0 : index
    %1000 = vector.load %arg6[%c177, %c0_445] : memref<250x128xf32, #tpu.memory_space<vmem>>, vector<1x128xf32>
    %1001 = vector.broadcast %1000 : vector<1x128xf32> to vector<32x128xf32>
    %1002 = arith.mulf %989, %1001 : vector<32x128xf32>
    %1003 = arith.addf %999, %1002 : vector<32x128xf32>
    %c120_i32_446 = arith.constant 120 : i32
    %1004 = tpu.dynamic_rotate %989 by %c120_i32_446 dim 1 : vector<32x128xf32>, i32 -> vector<32x128xf32>
    %c178 = arith.constant 178 : index
    %c0_447 = arith.constant 0 : index
    %1005 = vector.load %arg6[%c178, %c0_447] : memref<250x128xf32, #tpu.memory_space<vmem>>, vector<1x128xf32>
    %1006 = vector.broadcast %1005 : vector<1x128xf32> to vector<32x128xf32>
    %1007 = arith.mulf %1004, %1006 : vector<32x128xf32>
    %1008 = arith.addf %1003, %1007 : vector<32x128xf32>
    %c112_i32_448 = arith.constant 112 : i32
    %1009 = tpu.dynamic_rotate %989 by %c112_i32_448 dim 1 : vector<32x128xf32>, i32 -> vector<32x128xf32>
    %c179 = arith.constant 179 : index
    %c0_449 = arith.constant 0 : index
    %1010 = vector.load %arg6[%c179, %c0_449] : memref<250x128xf32, #tpu.memory_space<vmem>>, vector<1x128xf32>
    %1011 = vector.broadcast %1010 : vector<1x128xf32> to vector<32x128xf32>
    %1012 = arith.mulf %1009, %1011 : vector<32x128xf32>
    %1013 = arith.addf %1008, %1012 : vector<32x128xf32>
    %c1_i32_450 = arith.constant 1 : i32
    %1014 = tpu.dynamic_rotate %983 by %c1_i32_450 dim 0 : vector<32x128xf32>, i32 -> vector<32x128xf32>
    %c1_451 = arith.constant 1 : index
    %c0_452 = arith.constant 0 : index
    %c0_453 = arith.constant 0 : index
    %1015 = vector.load %arg4[%c1_451, %c0_452, %c0_453] : memref<5x32x1xf32, #tpu.memory_space<vmem>>, vector<1x32x1xf32>
    %1016 = vector.shape_cast %1015 : vector<1x32x1xf32> to vector<32x1xf32>
    %1017 = vector.broadcast %1016 : vector<32x1xf32> to vector<32x128xf32>
    %1018 = arith.mulf %1014, %1017 : vector<32x128xf32>
    %c16_i32_454 = arith.constant 16 : i32
    %1019 = tpu.dynamic_rotate %1018 by %c16_i32_454 dim 1 : vector<32x128xf32>, i32 -> vector<32x128xf32>
    %c180 = arith.constant 180 : index
    %c0_455 = arith.constant 0 : index
    %1020 = vector.load %arg6[%c180, %c0_455] : memref<250x128xf32, #tpu.memory_space<vmem>>, vector<1x128xf32>
    %1021 = vector.broadcast %1020 : vector<1x128xf32> to vector<32x128xf32>
    %1022 = arith.mulf %1019, %1021 : vector<32x128xf32>
    %1023 = arith.addf %1013, %1022 : vector<32x128xf32>
    %c8_i32_456 = arith.constant 8 : i32
    %1024 = tpu.dynamic_rotate %1018 by %c8_i32_456 dim 1 : vector<32x128xf32>, i32 -> vector<32x128xf32>
    %c181 = arith.constant 181 : index
    %c0_457 = arith.constant 0 : index
    %1025 = vector.load %arg6[%c181, %c0_457] : memref<250x128xf32, #tpu.memory_space<vmem>>, vector<1x128xf32>
    %1026 = vector.broadcast %1025 : vector<1x128xf32> to vector<32x128xf32>
    %1027 = arith.mulf %1024, %1026 : vector<32x128xf32>
    %1028 = arith.addf %1023, %1027 : vector<32x128xf32>
    %c182 = arith.constant 182 : index
    %c0_458 = arith.constant 0 : index
    %1029 = vector.load %arg6[%c182, %c0_458] : memref<250x128xf32, #tpu.memory_space<vmem>>, vector<1x128xf32>
    %1030 = vector.broadcast %1029 : vector<1x128xf32> to vector<32x128xf32>
    %1031 = arith.mulf %1018, %1030 : vector<32x128xf32>
    %1032 = arith.addf %1028, %1031 : vector<32x128xf32>
    %c120_i32_459 = arith.constant 120 : i32
    %1033 = tpu.dynamic_rotate %1018 by %c120_i32_459 dim 1 : vector<32x128xf32>, i32 -> vector<32x128xf32>
    %c183 = arith.constant 183 : index
    %c0_460 = arith.constant 0 : index
    %1034 = vector.load %arg6[%c183, %c0_460] : memref<250x128xf32, #tpu.memory_space<vmem>>, vector<1x128xf32>
    %1035 = vector.broadcast %1034 : vector<1x128xf32> to vector<32x128xf32>
    %1036 = arith.mulf %1033, %1035 : vector<32x128xf32>
    %1037 = arith.addf %1032, %1036 : vector<32x128xf32>
    %c112_i32_461 = arith.constant 112 : i32
    %1038 = tpu.dynamic_rotate %1018 by %c112_i32_461 dim 1 : vector<32x128xf32>, i32 -> vector<32x128xf32>
    %c184 = arith.constant 184 : index
    %c0_462 = arith.constant 0 : index
    %1039 = vector.load %arg6[%c184, %c0_462] : memref<250x128xf32, #tpu.memory_space<vmem>>, vector<1x128xf32>
    %1040 = vector.broadcast %1039 : vector<1x128xf32> to vector<32x128xf32>
    %1041 = arith.mulf %1038, %1040 : vector<32x128xf32>
    %1042 = arith.addf %1037, %1041 : vector<32x128xf32>
    %c16_i32_463 = arith.constant 16 : i32
    %1043 = tpu.dynamic_rotate %983 by %c16_i32_463 dim 1 : vector<32x128xf32>, i32 -> vector<32x128xf32>
    %c185 = arith.constant 185 : index
    %c0_464 = arith.constant 0 : index
    %1044 = vector.load %arg6[%c185, %c0_464] : memref<250x128xf32, #tpu.memory_space<vmem>>, vector<1x128xf32>
    %1045 = vector.broadcast %1044 : vector<1x128xf32> to vector<32x128xf32>
    %1046 = arith.mulf %1043, %1045 : vector<32x128xf32>
    %1047 = arith.addf %1042, %1046 : vector<32x128xf32>
    %c8_i32_465 = arith.constant 8 : i32
    %1048 = tpu.dynamic_rotate %983 by %c8_i32_465 dim 1 : vector<32x128xf32>, i32 -> vector<32x128xf32>
    %c186 = arith.constant 186 : index
    %c0_466 = arith.constant 0 : index
    %1049 = vector.load %arg6[%c186, %c0_466] : memref<250x128xf32, #tpu.memory_space<vmem>>, vector<1x128xf32>
    %1050 = vector.broadcast %1049 : vector<1x128xf32> to vector<32x128xf32>
    %1051 = arith.mulf %1048, %1050 : vector<32x128xf32>
    %1052 = arith.addf %1047, %1051 : vector<32x128xf32>
    %c187 = arith.constant 187 : index
    %c0_467 = arith.constant 0 : index
    %1053 = vector.load %arg6[%c187, %c0_467] : memref<250x128xf32, #tpu.memory_space<vmem>>, vector<1x128xf32>
    %1054 = vector.broadcast %1053 : vector<1x128xf32> to vector<32x128xf32>
    %1055 = arith.mulf %983, %1054 : vector<32x128xf32>
    %1056 = arith.addf %1052, %1055 : vector<32x128xf32>
    %c120_i32_468 = arith.constant 120 : i32
    %1057 = tpu.dynamic_rotate %983 by %c120_i32_468 dim 1 : vector<32x128xf32>, i32 -> vector<32x128xf32>
    %c188 = arith.constant 188 : index
    %c0_469 = arith.constant 0 : index
    %1058 = vector.load %arg6[%c188, %c0_469] : memref<250x128xf32, #tpu.memory_space<vmem>>, vector<1x128xf32>
    %1059 = vector.broadcast %1058 : vector<1x128xf32> to vector<32x128xf32>
    %1060 = arith.mulf %1057, %1059 : vector<32x128xf32>
    %1061 = arith.addf %1056, %1060 : vector<32x128xf32>
    %c112_i32_470 = arith.constant 112 : i32
    %1062 = tpu.dynamic_rotate %983 by %c112_i32_470 dim 1 : vector<32x128xf32>, i32 -> vector<32x128xf32>
    %c189 = arith.constant 189 : index
    %c0_471 = arith.constant 0 : index
    %1063 = vector.load %arg6[%c189, %c0_471] : memref<250x128xf32, #tpu.memory_space<vmem>>, vector<1x128xf32>
    %1064 = vector.broadcast %1063 : vector<1x128xf32> to vector<32x128xf32>
    %1065 = arith.mulf %1062, %1064 : vector<32x128xf32>
    %1066 = arith.addf %1061, %1065 : vector<32x128xf32>
    %c31_i32_472 = arith.constant 31 : i32
    %1067 = tpu.dynamic_rotate %983 by %c31_i32_472 dim 0 : vector<32x128xf32>, i32 -> vector<32x128xf32>
    %c3_473 = arith.constant 3 : index
    %c0_474 = arith.constant 0 : index
    %c0_475 = arith.constant 0 : index
    %1068 = vector.load %arg4[%c3_473, %c0_474, %c0_475] : memref<5x32x1xf32, #tpu.memory_space<vmem>>, vector<1x32x1xf32>
    %1069 = vector.shape_cast %1068 : vector<1x32x1xf32> to vector<32x1xf32>
    %1070 = vector.broadcast %1069 : vector<32x1xf32> to vector<32x128xf32>
    %1071 = arith.mulf %1067, %1070 : vector<32x128xf32>
    %c16_i32_476 = arith.constant 16 : i32
    %1072 = tpu.dynamic_rotate %1071 by %c16_i32_476 dim 1 : vector<32x128xf32>, i32 -> vector<32x128xf32>
    %c190 = arith.constant 190 : index
    %c0_477 = arith.constant 0 : index
    %1073 = vector.load %arg6[%c190, %c0_477] : memref<250x128xf32, #tpu.memory_space<vmem>>, vector<1x128xf32>
    %1074 = vector.broadcast %1073 : vector<1x128xf32> to vector<32x128xf32>
    %1075 = arith.mulf %1072, %1074 : vector<32x128xf32>
    %1076 = arith.addf %1066, %1075 : vector<32x128xf32>
    %c8_i32_478 = arith.constant 8 : i32
    %1077 = tpu.dynamic_rotate %1071 by %c8_i32_478 dim 1 : vector<32x128xf32>, i32 -> vector<32x128xf32>
    %c191 = arith.constant 191 : index
    %c0_479 = arith.constant 0 : index
    %1078 = vector.load %arg6[%c191, %c0_479] : memref<250x128xf32, #tpu.memory_space<vmem>>, vector<1x128xf32>
    %1079 = vector.broadcast %1078 : vector<1x128xf32> to vector<32x128xf32>
    %1080 = arith.mulf %1077, %1079 : vector<32x128xf32>
    %1081 = arith.addf %1076, %1080 : vector<32x128xf32>
    %c192 = arith.constant 192 : index
    %c0_480 = arith.constant 0 : index
    %1082 = vector.load %arg6[%c192, %c0_480] : memref<250x128xf32, #tpu.memory_space<vmem>>, vector<1x128xf32>
    %1083 = vector.broadcast %1082 : vector<1x128xf32> to vector<32x128xf32>
    %1084 = arith.mulf %1071, %1083 : vector<32x128xf32>
    %1085 = arith.addf %1081, %1084 : vector<32x128xf32>
    %c120_i32_481 = arith.constant 120 : i32
    %1086 = tpu.dynamic_rotate %1071 by %c120_i32_481 dim 1 : vector<32x128xf32>, i32 -> vector<32x128xf32>
    %c193 = arith.constant 193 : index
    %c0_482 = arith.constant 0 : index
    %1087 = vector.load %arg6[%c193, %c0_482] : memref<250x128xf32, #tpu.memory_space<vmem>>, vector<1x128xf32>
    %1088 = vector.broadcast %1087 : vector<1x128xf32> to vector<32x128xf32>
    %1089 = arith.mulf %1086, %1088 : vector<32x128xf32>
    %1090 = arith.addf %1085, %1089 : vector<32x128xf32>
    %c112_i32_483 = arith.constant 112 : i32
    %1091 = tpu.dynamic_rotate %1071 by %c112_i32_483 dim 1 : vector<32x128xf32>, i32 -> vector<32x128xf32>
    %c194 = arith.constant 194 : index
    %c0_484 = arith.constant 0 : index
    %1092 = vector.load %arg6[%c194, %c0_484] : memref<250x128xf32, #tpu.memory_space<vmem>>, vector<1x128xf32>
    %1093 = vector.broadcast %1092 : vector<1x128xf32> to vector<32x128xf32>
    %1094 = arith.mulf %1091, %1093 : vector<32x128xf32>
    %1095 = arith.addf %1090, %1094 : vector<32x128xf32>
    %c30_i32_485 = arith.constant 30 : i32
    %1096 = tpu.dynamic_rotate %983 by %c30_i32_485 dim 0 : vector<32x128xf32>, i32 -> vector<32x128xf32>
    %c4_486 = arith.constant 4 : index
    %c0_487 = arith.constant 0 : index
    %c0_488 = arith.constant 0 : index
    %1097 = vector.load %arg4[%c4_486, %c0_487, %c0_488] : memref<5x32x1xf32, #tpu.memory_space<vmem>>, vector<1x32x1xf32>
    %1098 = vector.shape_cast %1097 : vector<1x32x1xf32> to vector<32x1xf32>
    %1099 = vector.broadcast %1098 : vector<32x1xf32> to vector<32x128xf32>
    %1100 = arith.mulf %1096, %1099 : vector<32x128xf32>
    %c16_i32_489 = arith.constant 16 : i32
    %1101 = tpu.dynamic_rotate %1100 by %c16_i32_489 dim 1 : vector<32x128xf32>, i32 -> vector<32x128xf32>
    %c195 = arith.constant 195 : index
    %c0_490 = arith.constant 0 : index
    %1102 = vector.load %arg6[%c195, %c0_490] : memref<250x128xf32, #tpu.memory_space<vmem>>, vector<1x128xf32>
    %1103 = vector.broadcast %1102 : vector<1x128xf32> to vector<32x128xf32>
    %1104 = arith.mulf %1101, %1103 : vector<32x128xf32>
    %1105 = arith.addf %1095, %1104 : vector<32x128xf32>
    %c8_i32_491 = arith.constant 8 : i32
    %1106 = tpu.dynamic_rotate %1100 by %c8_i32_491 dim 1 : vector<32x128xf32>, i32 -> vector<32x128xf32>
    %c196 = arith.constant 196 : index
    %c0_492 = arith.constant 0 : index
    %1107 = vector.load %arg6[%c196, %c0_492] : memref<250x128xf32, #tpu.memory_space<vmem>>, vector<1x128xf32>
    %1108 = vector.broadcast %1107 : vector<1x128xf32> to vector<32x128xf32>
    %1109 = arith.mulf %1106, %1108 : vector<32x128xf32>
    %1110 = arith.addf %1105, %1109 : vector<32x128xf32>
    %c197 = arith.constant 197 : index
    %c0_493 = arith.constant 0 : index
    %1111 = vector.load %arg6[%c197, %c0_493] : memref<250x128xf32, #tpu.memory_space<vmem>>, vector<1x128xf32>
    %1112 = vector.broadcast %1111 : vector<1x128xf32> to vector<32x128xf32>
    %1113 = arith.mulf %1100, %1112 : vector<32x128xf32>
    %1114 = arith.addf %1110, %1113 : vector<32x128xf32>
    %c120_i32_494 = arith.constant 120 : i32
    %1115 = tpu.dynamic_rotate %1100 by %c120_i32_494 dim 1 : vector<32x128xf32>, i32 -> vector<32x128xf32>
    %c198 = arith.constant 198 : index
    %c0_495 = arith.constant 0 : index
    %1116 = vector.load %arg6[%c198, %c0_495] : memref<250x128xf32, #tpu.memory_space<vmem>>, vector<1x128xf32>
    %1117 = vector.broadcast %1116 : vector<1x128xf32> to vector<32x128xf32>
    %1118 = arith.mulf %1115, %1117 : vector<32x128xf32>
    %1119 = arith.addf %1114, %1118 : vector<32x128xf32>
    %c112_i32_496 = arith.constant 112 : i32
    %1120 = tpu.dynamic_rotate %1100 by %c112_i32_496 dim 1 : vector<32x128xf32>, i32 -> vector<32x128xf32>
    %c199 = arith.constant 199 : index
    %c0_497 = arith.constant 0 : index
    %1121 = vector.load %arg6[%c199, %c0_497] : memref<250x128xf32, #tpu.memory_space<vmem>>, vector<1x128xf32>
    %1122 = vector.broadcast %1121 : vector<1x128xf32> to vector<32x128xf32>
    %1123 = arith.mulf %1120, %1122 : vector<32x128xf32>
    %1124 = arith.addf %1119, %1123 : vector<32x128xf32>
    %1125 = arith.truncf %1124 : vector<32x128xf32> to vector<32x128xbf16>
    %c7_498 = arith.constant 7 : index
    %c0_499 = arith.constant 0 : index
    %c0_500 = arith.constant 0 : index
    %1126 = vector.load %arg5[%c7_498, %c0_499, %c0_500] : memref<10x128x128xbf16, #tpu.memory_space<vmem>>, vector<1x128x128xbf16>
    %1127 = vector.shape_cast %1126 : vector<1x128x128xbf16> to vector<128x128xbf16>
    %cst_501 = arith.constant dense<0.000000e+00> : vector<32x128xf32>
    %1128 = tpu.matmul %1125, %1127, %cst_501 {dimension_numbers = #tpu.dot_dimension_numbers<[1], [0], [0], [1], [0, 0, 1, 1], [], []>} : vector<32x128xbf16>, vector<128x128xbf16>, vector<32x128xf32> -> vector<32x128xf32>
    %cst_502 = arith.constant dense<0.000000e+00> : vector<128xf32>
    %1129 = vector.multi_reduction <add>, %1128, %cst_502 [0] : vector<32x128xf32> to vector<128xf32>
    %1130 = vector.shape_cast %1129 : vector<128xf32> to vector<1x128xf32>
    %c8_i32_503 = arith.constant 8 : i32
    %1131 = tpu.dynamic_rotate %1130 by %c8_i32_503 dim 1 : vector<1x128xf32>, i32 -> vector<1x128xf32>
    %1132 = arith.addf %1130, %1131 : vector<1x128xf32>
    %c16_i32_504 = arith.constant 16 : i32
    %1133 = tpu.dynamic_rotate %1132 by %c16_i32_504 dim 1 : vector<1x128xf32>, i32 -> vector<1x128xf32>
    %1134 = arith.addf %1132, %1133 : vector<1x128xf32>
    %c32_i32_505 = arith.constant 32 : i32
    %1135 = tpu.dynamic_rotate %1134 by %c32_i32_505 dim 1 : vector<1x128xf32>, i32 -> vector<1x128xf32>
    %1136 = arith.addf %1134, %1135 : vector<1x128xf32>
    %c64_i32_506 = arith.constant 64 : i32
    %1137 = tpu.dynamic_rotate %1136 by %c64_i32_506 dim 1 : vector<1x128xf32>, i32 -> vector<1x128xf32>
    %1138 = arith.addf %1136, %1137 : vector<1x128xf32>
    %cst_507 = arith.constant 5.120000e+02 : f32
    %1139 = vector.broadcast %cst_507 : f32 to vector<1x128xf32>
    %1140 = arith.divf %1138, %1139 : vector<1x128xf32>
    %1141 = vector.broadcast %1140 : vector<1x128xf32> to vector<32x128xf32>
    %1142 = arith.subf %1128, %1141 : vector<32x128xf32>
    %1143 = arith.mulf %1142, %1142 : vector<32x128xf32>
    %cst_508 = arith.constant dense<0.000000e+00> : vector<128xf32>
    %1144 = vector.multi_reduction <add>, %1143, %cst_508 [0] : vector<32x128xf32> to vector<128xf32>
    %1145 = vector.shape_cast %1144 : vector<128xf32> to vector<1x128xf32>
    %c8_i32_509 = arith.constant 8 : i32
    %1146 = tpu.dynamic_rotate %1145 by %c8_i32_509 dim 1 : vector<1x128xf32>, i32 -> vector<1x128xf32>
    %1147 = arith.addf %1145, %1146 : vector<1x128xf32>
    %c16_i32_510 = arith.constant 16 : i32
    %1148 = tpu.dynamic_rotate %1147 by %c16_i32_510 dim 1 : vector<1x128xf32>, i32 -> vector<1x128xf32>
    %1149 = arith.addf %1147, %1148 : vector<1x128xf32>
    %c32_i32_511 = arith.constant 32 : i32
    %1150 = tpu.dynamic_rotate %1149 by %c32_i32_511 dim 1 : vector<1x128xf32>, i32 -> vector<1x128xf32>
    %1151 = arith.addf %1149, %1150 : vector<1x128xf32>
    %c64_i32_512 = arith.constant 64 : i32
    %1152 = tpu.dynamic_rotate %1151 by %c64_i32_512 dim 1 : vector<1x128xf32>, i32 -> vector<1x128xf32>
    %1153 = arith.addf %1151, %1152 : vector<1x128xf32>
    %cst_513 = arith.constant 5.120000e+02 : f32
    %1154 = vector.broadcast %cst_513 : f32 to vector<1x128xf32>
    %1155 = arith.divf %1153, %1154 : vector<1x128xf32>
    %cst_514 = arith.constant 9.99999974E-6 : f32
    %1156 = vector.broadcast %cst_514 : f32 to vector<1x128xf32>
    %1157 = arith.addf %1155, %1156 : vector<1x128xf32>
    %1158 = math.rsqrt %1157 : vector<1x128xf32>
    %1159 = vector.broadcast %1158 : vector<1x128xf32> to vector<32x128xf32>
    %1160 = arith.mulf %1142, %1159 : vector<32x128xf32>
    %1161 = arith.addf %802, %1160 : vector<32x128xf32>
    %cst_515 = arith.constant 0.000000e+00 : f32
    %1162 = vector.broadcast %cst_515 : f32 to vector<32x128xf32>
    %1163 = arith.maximumf %618, %1162 : vector<32x128xf32>
    %cst_516 = arith.constant 0.000000e+00 : f32
    %1164 = vector.broadcast %cst_516 : f32 to vector<32x128xf32>
    %c1_i32_517 = arith.constant 1 : i32
    %1165 = tpu.dynamic_rotate %1163 by %c1_i32_517 dim 0 : vector<32x128xf32>, i32 -> vector<32x128xf32>
    %c1_518 = arith.constant 1 : index
    %c0_519 = arith.constant 0 : index
    %c0_520 = arith.constant 0 : index
    %1166 = vector.load %arg4[%c1_518, %c0_519, %c0_520] : memref<5x32x1xf32, #tpu.memory_space<vmem>>, vector<1x32x1xf32>
    %1167 = vector.shape_cast %1166 : vector<1x32x1xf32> to vector<32x1xf32>
    %1168 = vector.broadcast %1167 : vector<32x1xf32> to vector<32x128xf32>
    %1169 = arith.mulf %1165, %1168 : vector<32x128xf32>
    %c8_i32_521 = arith.constant 8 : i32
    %1170 = tpu.dynamic_rotate %1169 by %c8_i32_521 dim 1 : vector<32x128xf32>, i32 -> vector<32x128xf32>
    %c200 = arith.constant 200 : index
    %c0_522 = arith.constant 0 : index
    %1171 = vector.load %arg6[%c200, %c0_522] : memref<250x128xf32, #tpu.memory_space<vmem>>, vector<1x128xf32>
    %1172 = vector.broadcast %1171 : vector<1x128xf32> to vector<32x128xf32>
    %1173 = arith.mulf %1170, %1172 : vector<32x128xf32>
    %1174 = arith.addf %1164, %1173 : vector<32x128xf32>
    %c201 = arith.constant 201 : index
    %c0_523 = arith.constant 0 : index
    %1175 = vector.load %arg6[%c201, %c0_523] : memref<250x128xf32, #tpu.memory_space<vmem>>, vector<1x128xf32>
    %1176 = vector.broadcast %1175 : vector<1x128xf32> to vector<32x128xf32>
    %1177 = arith.mulf %1169, %1176 : vector<32x128xf32>
    %1178 = arith.addf %1174, %1177 : vector<32x128xf32>
    %c120_i32_524 = arith.constant 120 : i32
    %1179 = tpu.dynamic_rotate %1169 by %c120_i32_524 dim 1 : vector<32x128xf32>, i32 -> vector<32x128xf32>
    %c202 = arith.constant 202 : index
    %c0_525 = arith.constant 0 : index
    %1180 = vector.load %arg6[%c202, %c0_525] : memref<250x128xf32, #tpu.memory_space<vmem>>, vector<1x128xf32>
    %1181 = vector.broadcast %1180 : vector<1x128xf32> to vector<32x128xf32>
    %1182 = arith.mulf %1179, %1181 : vector<32x128xf32>
    %1183 = arith.addf %1178, %1182 : vector<32x128xf32>
    %c8_i32_526 = arith.constant 8 : i32
    %1184 = tpu.dynamic_rotate %1163 by %c8_i32_526 dim 1 : vector<32x128xf32>, i32 -> vector<32x128xf32>
    %c205 = arith.constant 205 : index
    %c0_527 = arith.constant 0 : index
    %1185 = vector.load %arg6[%c205, %c0_527] : memref<250x128xf32, #tpu.memory_space<vmem>>, vector<1x128xf32>
    %1186 = vector.broadcast %1185 : vector<1x128xf32> to vector<32x128xf32>
    %1187 = arith.mulf %1184, %1186 : vector<32x128xf32>
    %1188 = arith.addf %1183, %1187 : vector<32x128xf32>
    %c206 = arith.constant 206 : index
    %c0_528 = arith.constant 0 : index
    %1189 = vector.load %arg6[%c206, %c0_528] : memref<250x128xf32, #tpu.memory_space<vmem>>, vector<1x128xf32>
    %1190 = vector.broadcast %1189 : vector<1x128xf32> to vector<32x128xf32>
    %1191 = arith.mulf %1163, %1190 : vector<32x128xf32>
    %1192 = arith.addf %1188, %1191 : vector<32x128xf32>
    %c120_i32_529 = arith.constant 120 : i32
    %1193 = tpu.dynamic_rotate %1163 by %c120_i32_529 dim 1 : vector<32x128xf32>, i32 -> vector<32x128xf32>
    %c207 = arith.constant 207 : index
    %c0_530 = arith.constant 0 : index
    %1194 = vector.load %arg6[%c207, %c0_530] : memref<250x128xf32, #tpu.memory_space<vmem>>, vector<1x128xf32>
    %1195 = vector.broadcast %1194 : vector<1x128xf32> to vector<32x128xf32>
    %1196 = arith.mulf %1193, %1195 : vector<32x128xf32>
    %1197 = arith.addf %1192, %1196 : vector<32x128xf32>
    %c31_i32_531 = arith.constant 31 : i32
    %1198 = tpu.dynamic_rotate %1163 by %c31_i32_531 dim 0 : vector<32x128xf32>, i32 -> vector<32x128xf32>
    %c3_532 = arith.constant 3 : index
    %c0_533 = arith.constant 0 : index
    %c0_534 = arith.constant 0 : index
    %1199 = vector.load %arg4[%c3_532, %c0_533, %c0_534] : memref<5x32x1xf32, #tpu.memory_space<vmem>>, vector<1x32x1xf32>
    %1200 = vector.shape_cast %1199 : vector<1x32x1xf32> to vector<32x1xf32>
    %1201 = vector.broadcast %1200 : vector<32x1xf32> to vector<32x128xf32>
    %1202 = arith.mulf %1198, %1201 : vector<32x128xf32>
    %c8_i32_535 = arith.constant 8 : i32
    %1203 = tpu.dynamic_rotate %1202 by %c8_i32_535 dim 1 : vector<32x128xf32>, i32 -> vector<32x128xf32>
    %c210 = arith.constant 210 : index
    %c0_536 = arith.constant 0 : index
    %1204 = vector.load %arg6[%c210, %c0_536] : memref<250x128xf32, #tpu.memory_space<vmem>>, vector<1x128xf32>
    %1205 = vector.broadcast %1204 : vector<1x128xf32> to vector<32x128xf32>
    %1206 = arith.mulf %1203, %1205 : vector<32x128xf32>
    %1207 = arith.addf %1197, %1206 : vector<32x128xf32>
    %c211 = arith.constant 211 : index
    %c0_537 = arith.constant 0 : index
    %1208 = vector.load %arg6[%c211, %c0_537] : memref<250x128xf32, #tpu.memory_space<vmem>>, vector<1x128xf32>
    %1209 = vector.broadcast %1208 : vector<1x128xf32> to vector<32x128xf32>
    %1210 = arith.mulf %1202, %1209 : vector<32x128xf32>
    %1211 = arith.addf %1207, %1210 : vector<32x128xf32>
    %c120_i32_538 = arith.constant 120 : i32
    %1212 = tpu.dynamic_rotate %1202 by %c120_i32_538 dim 1 : vector<32x128xf32>, i32 -> vector<32x128xf32>
    %c212 = arith.constant 212 : index
    %c0_539 = arith.constant 0 : index
    %1213 = vector.load %arg6[%c212, %c0_539] : memref<250x128xf32, #tpu.memory_space<vmem>>, vector<1x128xf32>
    %1214 = vector.broadcast %1213 : vector<1x128xf32> to vector<32x128xf32>
    %1215 = arith.mulf %1212, %1214 : vector<32x128xf32>
    %1216 = arith.addf %1211, %1215 : vector<32x128xf32>
    %1217 = arith.truncf %1216 : vector<32x128xf32> to vector<32x128xbf16>
    %c8 = arith.constant 8 : index
    %c0_540 = arith.constant 0 : index
    %c0_541 = arith.constant 0 : index
    %1218 = vector.load %arg5[%c8, %c0_540, %c0_541] : memref<10x128x128xbf16, #tpu.memory_space<vmem>>, vector<1x128x128xbf16>
    %1219 = vector.shape_cast %1218 : vector<1x128x128xbf16> to vector<128x128xbf16>
    %cst_542 = arith.constant dense<0.000000e+00> : vector<32x128xf32>
    %1220 = tpu.matmul %1217, %1219, %cst_542 {dimension_numbers = #tpu.dot_dimension_numbers<[1], [0], [0], [1], [0, 0, 1, 1], [], []>} : vector<32x128xbf16>, vector<128x128xbf16>, vector<32x128xf32> -> vector<32x128xf32>
    %cst_543 = arith.constant dense<0.000000e+00> : vector<128xf32>
    %1221 = vector.multi_reduction <add>, %1220, %cst_543 [0] : vector<32x128xf32> to vector<128xf32>
    %1222 = vector.shape_cast %1221 : vector<128xf32> to vector<1x128xf32>
    %c8_i32_544 = arith.constant 8 : i32
    %1223 = tpu.dynamic_rotate %1222 by %c8_i32_544 dim 1 : vector<1x128xf32>, i32 -> vector<1x128xf32>
    %1224 = arith.addf %1222, %1223 : vector<1x128xf32>
    %c16_i32_545 = arith.constant 16 : i32
    %1225 = tpu.dynamic_rotate %1224 by %c16_i32_545 dim 1 : vector<1x128xf32>, i32 -> vector<1x128xf32>
    %1226 = arith.addf %1224, %1225 : vector<1x128xf32>
    %c32_i32_546 = arith.constant 32 : i32
    %1227 = tpu.dynamic_rotate %1226 by %c32_i32_546 dim 1 : vector<1x128xf32>, i32 -> vector<1x128xf32>
    %1228 = arith.addf %1226, %1227 : vector<1x128xf32>
    %c64_i32_547 = arith.constant 64 : i32
    %1229 = tpu.dynamic_rotate %1228 by %c64_i32_547 dim 1 : vector<1x128xf32>, i32 -> vector<1x128xf32>
    %1230 = arith.addf %1228, %1229 : vector<1x128xf32>
    %cst_548 = arith.constant 5.120000e+02 : f32
    %1231 = vector.broadcast %cst_548 : f32 to vector<1x128xf32>
    %1232 = arith.divf %1230, %1231 : vector<1x128xf32>
    %1233 = vector.broadcast %1232 : vector<1x128xf32> to vector<32x128xf32>
    %1234 = arith.subf %1220, %1233 : vector<32x128xf32>
    %1235 = arith.mulf %1234, %1234 : vector<32x128xf32>
    %cst_549 = arith.constant dense<0.000000e+00> : vector<128xf32>
    %1236 = vector.multi_reduction <add>, %1235, %cst_549 [0] : vector<32x128xf32> to vector<128xf32>
    %1237 = vector.shape_cast %1236 : vector<128xf32> to vector<1x128xf32>
    %c8_i32_550 = arith.constant 8 : i32
    %1238 = tpu.dynamic_rotate %1237 by %c8_i32_550 dim 1 : vector<1x128xf32>, i32 -> vector<1x128xf32>
    %1239 = arith.addf %1237, %1238 : vector<1x128xf32>
    %c16_i32_551 = arith.constant 16 : i32
    %1240 = tpu.dynamic_rotate %1239 by %c16_i32_551 dim 1 : vector<1x128xf32>, i32 -> vector<1x128xf32>
    %1241 = arith.addf %1239, %1240 : vector<1x128xf32>
    %c32_i32_552 = arith.constant 32 : i32
    %1242 = tpu.dynamic_rotate %1241 by %c32_i32_552 dim 1 : vector<1x128xf32>, i32 -> vector<1x128xf32>
    %1243 = arith.addf %1241, %1242 : vector<1x128xf32>
    %c64_i32_553 = arith.constant 64 : i32
    %1244 = tpu.dynamic_rotate %1243 by %c64_i32_553 dim 1 : vector<1x128xf32>, i32 -> vector<1x128xf32>
    %1245 = arith.addf %1243, %1244 : vector<1x128xf32>
    %cst_554 = arith.constant 5.120000e+02 : f32
    %1246 = vector.broadcast %cst_554 : f32 to vector<1x128xf32>
    %1247 = arith.divf %1245, %1246 : vector<1x128xf32>
    %cst_555 = arith.constant 9.99999974E-6 : f32
    %1248 = vector.broadcast %cst_555 : f32 to vector<1x128xf32>
    %1249 = arith.addf %1247, %1248 : vector<1x128xf32>
    %1250 = math.rsqrt %1249 : vector<1x128xf32>
    %1251 = vector.broadcast %1250 : vector<1x128xf32> to vector<32x128xf32>
    %1252 = arith.mulf %1234, %1251 : vector<32x128xf32>
    %cst_556 = arith.constant 0.000000e+00 : f32
    %1253 = vector.broadcast %cst_556 : f32 to vector<32x128xf32>
    %1254 = arith.maximumf %1252, %1253 : vector<32x128xf32>
    %cst_557 = arith.constant 0.000000e+00 : f32
    %1255 = vector.broadcast %cst_557 : f32 to vector<32x128xf32>
    %c1_i32_558 = arith.constant 1 : i32
    %1256 = tpu.dynamic_rotate %1254 by %c1_i32_558 dim 0 : vector<32x128xf32>, i32 -> vector<32x128xf32>
    %c1_559 = arith.constant 1 : index
    %c0_560 = arith.constant 0 : index
    %c0_561 = arith.constant 0 : index
    %1257 = vector.load %arg4[%c1_559, %c0_560, %c0_561] : memref<5x32x1xf32, #tpu.memory_space<vmem>>, vector<1x32x1xf32>
    %1258 = vector.shape_cast %1257 : vector<1x32x1xf32> to vector<32x1xf32>
    %1259 = vector.broadcast %1258 : vector<32x1xf32> to vector<32x128xf32>
    %1260 = arith.mulf %1256, %1259 : vector<32x128xf32>
    %c8_i32_562 = arith.constant 8 : i32
    %1261 = tpu.dynamic_rotate %1260 by %c8_i32_562 dim 1 : vector<32x128xf32>, i32 -> vector<32x128xf32>
    %c225 = arith.constant 225 : index
    %c0_563 = arith.constant 0 : index
    %1262 = vector.load %arg6[%c225, %c0_563] : memref<250x128xf32, #tpu.memory_space<vmem>>, vector<1x128xf32>
    %1263 = vector.broadcast %1262 : vector<1x128xf32> to vector<32x128xf32>
    %1264 = arith.mulf %1261, %1263 : vector<32x128xf32>
    %1265 = arith.addf %1255, %1264 : vector<32x128xf32>
    %c226 = arith.constant 226 : index
    %c0_564 = arith.constant 0 : index
    %1266 = vector.load %arg6[%c226, %c0_564] : memref<250x128xf32, #tpu.memory_space<vmem>>, vector<1x128xf32>
    %1267 = vector.broadcast %1266 : vector<1x128xf32> to vector<32x128xf32>
    %1268 = arith.mulf %1260, %1267 : vector<32x128xf32>
    %1269 = arith.addf %1265, %1268 : vector<32x128xf32>
    %c120_i32_565 = arith.constant 120 : i32
    %1270 = tpu.dynamic_rotate %1260 by %c120_i32_565 dim 1 : vector<32x128xf32>, i32 -> vector<32x128xf32>
    %c227 = arith.constant 227 : index
    %c0_566 = arith.constant 0 : index
    %1271 = vector.load %arg6[%c227, %c0_566] : memref<250x128xf32, #tpu.memory_space<vmem>>, vector<1x128xf32>
    %1272 = vector.broadcast %1271 : vector<1x128xf32> to vector<32x128xf32>
    %1273 = arith.mulf %1270, %1272 : vector<32x128xf32>
    %1274 = arith.addf %1269, %1273 : vector<32x128xf32>
    %c8_i32_567 = arith.constant 8 : i32
    %1275 = tpu.dynamic_rotate %1254 by %c8_i32_567 dim 1 : vector<32x128xf32>, i32 -> vector<32x128xf32>
    %c230 = arith.constant 230 : index
    %c0_568 = arith.constant 0 : index
    %1276 = vector.load %arg6[%c230, %c0_568] : memref<250x128xf32, #tpu.memory_space<vmem>>, vector<1x128xf32>
    %1277 = vector.broadcast %1276 : vector<1x128xf32> to vector<32x128xf32>
    %1278 = arith.mulf %1275, %1277 : vector<32x128xf32>
    %1279 = arith.addf %1274, %1278 : vector<32x128xf32>
    %c231 = arith.constant 231 : index
    %c0_569 = arith.constant 0 : index
    %1280 = vector.load %arg6[%c231, %c0_569] : memref<250x128xf32, #tpu.memory_space<vmem>>, vector<1x128xf32>
    %1281 = vector.broadcast %1280 : vector<1x128xf32> to vector<32x128xf32>
    %1282 = arith.mulf %1254, %1281 : vector<32x128xf32>
    %1283 = arith.addf %1279, %1282 : vector<32x128xf32>
    %c120_i32_570 = arith.constant 120 : i32
    %1284 = tpu.dynamic_rotate %1254 by %c120_i32_570 dim 1 : vector<32x128xf32>, i32 -> vector<32x128xf32>
    %c232 = arith.constant 232 : index
    %c0_571 = arith.constant 0 : index
    %1285 = vector.load %arg6[%c232, %c0_571] : memref<250x128xf32, #tpu.memory_space<vmem>>, vector<1x128xf32>
    %1286 = vector.broadcast %1285 : vector<1x128xf32> to vector<32x128xf32>
    %1287 = arith.mulf %1284, %1286 : vector<32x128xf32>
    %1288 = arith.addf %1283, %1287 : vector<32x128xf32>
    %c31_i32_572 = arith.constant 31 : i32
    %1289 = tpu.dynamic_rotate %1254 by %c31_i32_572 dim 0 : vector<32x128xf32>, i32 -> vector<32x128xf32>
    %c3_573 = arith.constant 3 : index
    %c0_574 = arith.constant 0 : index
    %c0_575 = arith.constant 0 : index
    %1290 = vector.load %arg4[%c3_573, %c0_574, %c0_575] : memref<5x32x1xf32, #tpu.memory_space<vmem>>, vector<1x32x1xf32>
    %1291 = vector.shape_cast %1290 : vector<1x32x1xf32> to vector<32x1xf32>
    %1292 = vector.broadcast %1291 : vector<32x1xf32> to vector<32x128xf32>
    %1293 = arith.mulf %1289, %1292 : vector<32x128xf32>
    %c8_i32_576 = arith.constant 8 : i32
    %1294 = tpu.dynamic_rotate %1293 by %c8_i32_576 dim 1 : vector<32x128xf32>, i32 -> vector<32x128xf32>
    %c235 = arith.constant 235 : index
    %c0_577 = arith.constant 0 : index
    %1295 = vector.load %arg6[%c235, %c0_577] : memref<250x128xf32, #tpu.memory_space<vmem>>, vector<1x128xf32>
    %1296 = vector.broadcast %1295 : vector<1x128xf32> to vector<32x128xf32>
    %1297 = arith.mulf %1294, %1296 : vector<32x128xf32>
    %1298 = arith.addf %1288, %1297 : vector<32x128xf32>
    %c236 = arith.constant 236 : index
    %c0_578 = arith.constant 0 : index
    %1299 = vector.load %arg6[%c236, %c0_578] : memref<250x128xf32, #tpu.memory_space<vmem>>, vector<1x128xf32>
    %1300 = vector.broadcast %1299 : vector<1x128xf32> to vector<32x128xf32>
    %1301 = arith.mulf %1293, %1300 : vector<32x128xf32>
    %1302 = arith.addf %1298, %1301 : vector<32x128xf32>
    %c120_i32_579 = arith.constant 120 : i32
    %1303 = tpu.dynamic_rotate %1293 by %c120_i32_579 dim 1 : vector<32x128xf32>, i32 -> vector<32x128xf32>
    %c237 = arith.constant 237 : index
    %c0_580 = arith.constant 0 : index
    %1304 = vector.load %arg6[%c237, %c0_580] : memref<250x128xf32, #tpu.memory_space<vmem>>, vector<1x128xf32>
    %1305 = vector.broadcast %1304 : vector<1x128xf32> to vector<32x128xf32>
    %1306 = arith.mulf %1303, %1305 : vector<32x128xf32>
    %1307 = arith.addf %1302, %1306 : vector<32x128xf32>
    %1308 = arith.truncf %1307 : vector<32x128xf32> to vector<32x128xbf16>
    %c9 = arith.constant 9 : index
    %c0_581 = arith.constant 0 : index
    %c0_582 = arith.constant 0 : index
    %1309 = vector.load %arg5[%c9, %c0_581, %c0_582] : memref<10x128x128xbf16, #tpu.memory_space<vmem>>, vector<1x128x128xbf16>
    %1310 = vector.shape_cast %1309 : vector<1x128x128xbf16> to vector<128x128xbf16>
    %cst_583 = arith.constant dense<0.000000e+00> : vector<32x128xf32>
    %1311 = tpu.matmul %1308, %1310, %cst_583 {dimension_numbers = #tpu.dot_dimension_numbers<[1], [0], [0], [1], [0, 0, 1, 1], [], []>} : vector<32x128xbf16>, vector<128x128xbf16>, vector<32x128xf32> -> vector<32x128xf32>
    %cst_584 = arith.constant dense<0.000000e+00> : vector<128xf32>
    %1312 = vector.multi_reduction <add>, %1311, %cst_584 [0] : vector<32x128xf32> to vector<128xf32>
    %1313 = vector.shape_cast %1312 : vector<128xf32> to vector<1x128xf32>
    %c8_i32_585 = arith.constant 8 : i32
    %1314 = tpu.dynamic_rotate %1313 by %c8_i32_585 dim 1 : vector<1x128xf32>, i32 -> vector<1x128xf32>
    %1315 = arith.addf %1313, %1314 : vector<1x128xf32>
    %c16_i32_586 = arith.constant 16 : i32
    %1316 = tpu.dynamic_rotate %1315 by %c16_i32_586 dim 1 : vector<1x128xf32>, i32 -> vector<1x128xf32>
    %1317 = arith.addf %1315, %1316 : vector<1x128xf32>
    %c32_i32_587 = arith.constant 32 : i32
    %1318 = tpu.dynamic_rotate %1317 by %c32_i32_587 dim 1 : vector<1x128xf32>, i32 -> vector<1x128xf32>
    %1319 = arith.addf %1317, %1318 : vector<1x128xf32>
    %c64_i32_588 = arith.constant 64 : i32
    %1320 = tpu.dynamic_rotate %1319 by %c64_i32_588 dim 1 : vector<1x128xf32>, i32 -> vector<1x128xf32>
    %1321 = arith.addf %1319, %1320 : vector<1x128xf32>
    %cst_589 = arith.constant 5.120000e+02 : f32
    %1322 = vector.broadcast %cst_589 : f32 to vector<1x128xf32>
    %1323 = arith.divf %1321, %1322 : vector<1x128xf32>
    %1324 = vector.broadcast %1323 : vector<1x128xf32> to vector<32x128xf32>
    %1325 = arith.subf %1311, %1324 : vector<32x128xf32>
    %1326 = arith.mulf %1325, %1325 : vector<32x128xf32>
    %cst_590 = arith.constant dense<0.000000e+00> : vector<128xf32>
    %1327 = vector.multi_reduction <add>, %1326, %cst_590 [0] : vector<32x128xf32> to vector<128xf32>
    %1328 = vector.shape_cast %1327 : vector<128xf32> to vector<1x128xf32>
    %c8_i32_591 = arith.constant 8 : i32
    %1329 = tpu.dynamic_rotate %1328 by %c8_i32_591 dim 1 : vector<1x128xf32>, i32 -> vector<1x128xf32>
    %1330 = arith.addf %1328, %1329 : vector<1x128xf32>
    %c16_i32_592 = arith.constant 16 : i32
    %1331 = tpu.dynamic_rotate %1330 by %c16_i32_592 dim 1 : vector<1x128xf32>, i32 -> vector<1x128xf32>
    %1332 = arith.addf %1330, %1331 : vector<1x128xf32>
    %c32_i32_593 = arith.constant 32 : i32
    %1333 = tpu.dynamic_rotate %1332 by %c32_i32_593 dim 1 : vector<1x128xf32>, i32 -> vector<1x128xf32>
    %1334 = arith.addf %1332, %1333 : vector<1x128xf32>
    %c64_i32_594 = arith.constant 64 : i32
    %1335 = tpu.dynamic_rotate %1334 by %c64_i32_594 dim 1 : vector<1x128xf32>, i32 -> vector<1x128xf32>
    %1336 = arith.addf %1334, %1335 : vector<1x128xf32>
    %cst_595 = arith.constant 5.120000e+02 : f32
    %1337 = vector.broadcast %cst_595 : f32 to vector<1x128xf32>
    %1338 = arith.divf %1336, %1337 : vector<1x128xf32>
    %cst_596 = arith.constant 9.99999974E-6 : f32
    %1339 = vector.broadcast %cst_596 : f32 to vector<1x128xf32>
    %1340 = arith.addf %1338, %1339 : vector<1x128xf32>
    %1341 = math.rsqrt %1340 : vector<1x128xf32>
    %1342 = vector.broadcast %1341 : vector<1x128xf32> to vector<32x128xf32>
    %1343 = arith.mulf %1325, %1342 : vector<32x128xf32>
    %1344 = arith.addf %1161, %1343 : vector<32x128xf32>
    %c0_597 = arith.constant 0 : index
    %c0_598 = arith.constant 0 : index
    %c0_599 = arith.constant 0 : index
    %1345 = vector.load %arg7[%c0_597, %c0_598, %c0_599] : memref<2x32x128xf32, #tpu.memory_space<vmem>>, vector<1x32x128xf32>
    %1346 = vector.shape_cast %1345 : vector<1x32x128xf32> to vector<32x128xf32>
    %1347 = vector.shape_cast %618 : vector<32x128xf32> to vector<1x32x128xf32>
    tpu.vector_store %arg7[%c0_597, %c0_598, %c0_599], %1347 {strides = array<i32>} : memref<2x32x128xf32, #tpu.memory_space<vmem>>, vector<1x32x128xf32>,
    %c1_600 = arith.constant 1 : index
    %c0_601 = arith.constant 0 : index
    %c0_602 = arith.constant 0 : index
    %1348 = vector.load %arg7[%c1_600, %c0_601, %c0_602] : memref<2x32x128xf32, #tpu.memory_space<vmem>>, vector<1x32x128xf32>
    %1349 = vector.shape_cast %1348 : vector<1x32x128xf32> to vector<32x128xf32>
    %1350 = vector.shape_cast %1344 : vector<32x128xf32> to vector<1x32x128xf32>
    tpu.vector_store %arg7[%c1_600, %c0_601, %c0_602], %1350 {strides = array<i32>} : memref<2x32x128xf32, #tpu.memory_space<vmem>>, vector<1x32x128xf32>,
    return
  }
}

</mosaic_0001>

<llo_original>
// kernel: fixed_cell_forward.1
$region0: #{fixed_cell_forward.1}
  #allocation0 [shape = 'u32[]', space=smem, size = 0x4, offset = 0x4, fixed_abs, tag = 'smem constant byte address 0x4 - core index']
  #allocation1 [shape = 'u32[144,128]{1,0:T(1,128)}', space=vmem, size = 0x12000, scoped, tag = 'internal scratch']
  %s0 = inlined_call_operand.vmem [shape: f32[32,64], index: 0, kind: input, shape index: {}]
  %s1 = inlined_call_operand.vmem [shape: f32[32,64], index: 1, kind: input, shape index: {}]
  %s2 = inlined_call_operand.vmem [shape: bf16[64,128], index: 2, kind: input, shape index: {}]
  %s3 = inlined_call_operand.vmem [shape: bf16[64,128], index: 3, kind: input, shape index: {}]
  %s4 = inlined_call_operand.vmem [shape: f32[5,32,1], index: 4, kind: input, shape index: {}]
  %s5 = inlined_call_operand.vmem [shape: bf16[10,128,128], index: 5, kind: input, shape index: {}]
  %s6 = inlined_call_operand.vmem [shape: f32[250,128], index: 6, kind: input, shape index: {}]
  %s7 = inlined_call_operand.vmem [shape: f32[2,32,128], index: 7, kind: output, shape index: {}]
  %s8 = sld [smem:[#allocation0]]
  $region38: #{fixed_cell_forward.1} parent=0
    _
  %s10 = ssub.s32 1, %s8
  %s11 = scalar_select 0, %s10, %s8
  // Predicated region
  $region2: #{fixed_cell_forward.1} parent=0 // pred_check
    _
  $region3: #{fixed_cell_forward.1} parent=0 // pred_check_branch
    %13 = sbr.rel (0) target = $region5
  $region4: #{fixed_cell_forward.1} parent=0 // pred_region
    _
  $region5: #{fixed_cell_forward.1} parent=0 // pred_fallthru
    _
  // Predicated region
  $region6: #{fixed_cell_forward.1} parent=0 // pred_check
    _
  $region7: #{fixed_cell_forward.1} parent=0 // pred_check_branch
    %15 = sbr.rel (0) target = $region9
  $region8: #{fixed_cell_forward.1} parent=0 // pred_region
    _
  $region9: #{fixed_cell_forward.1} parent=0 // pred_fallthru
    _
  // Predicated region
  $region10: #{fixed_cell_forward.1} parent=0 // pred_check
    _
  $region11: #{fixed_cell_forward.1} parent=0 // pred_check_branch
    %17 = sbr.rel (0) target = $region13
  $region12: #{fixed_cell_forward.1} parent=0 // pred_region
    _
  $region13: #{fixed_cell_forward.1} parent=0 // pred_fallthru
    _
  // Predicated region
  $region14: #{fixed_cell_forward.1} parent=0 // pred_check
    _
  $region15: #{fixed_cell_forward.1} parent=0 // pred_check_branch
    %19 = sbr.rel (0) target = $region17
  $region16: #{fixed_cell_forward.1} parent=0 // pred_region
    _
  $region17: #{fixed_cell_forward.1} parent=0 // pred_fallthru
    _
  // Predicated region
  $region18: #{fixed_cell_forward.1} parent=0 // pred_check
    _
  $region19: #{fixed_cell_forward.1} parent=0 // pred_check_branch
    %21 = sbr.rel (0) target = $region21
  $region20: #{fixed_cell_forward.1} parent=0 // pred_region
    _
  $region21: #{fixed_cell_forward.1} parent=0 // pred_fallthru
    _
  // Predicated region
  $region22: #{fixed_cell_forward.1} parent=0 // pred_check
    _
  $region23: #{fixed_cell_forward.1} parent=0 // pred_check_branch
    %23 = sbr.rel (0) target = $region25
  $region24: #{fixed_cell_forward.1} parent=0 // pred_region
    _
  $region25: #{fixed_cell_forward.1} parent=0 // pred_fallthru
    _
  // Predicated region
  $region26: #{fixed_cell_forward.1} parent=0 // pred_check
    _
  $region27: #{fixed_cell_forward.1} parent=0 // pred_check_branch
    %25 = sbr.rel (0) target = $region29
  $region28: #{fixed_cell_forward.1} parent=0 // pred_region
    _
  $region29: #{fixed_cell_forward.1} parent=0 // pred_fallthru
    _
  %v27 = vld [vmem:[%s0] sm:$0xff]
  %v28 = vld [vmem:[%s0 + $0x8] sm:$0xff]
  %v29 = vld [vmem:[%s0 + $0x10] sm:$0xff]
  %v30 = vld [vmem:[%s0 + $0x18] sm:$0xff]
  %v31 = vmax.f32 %v27, 0.0
  %v32 = vmax.f32 %v28, 0.0
  %v33 = vmax.f32 %v29, 0.0
  %v34 = vmax.f32 %v30, 0.0
  %v35 = vpack.c.bf16 %v32, %v31
  %v36 = vpack.c.bf16 %v34, %v33
  %v37 = vld [vmem:[%s2] sm:$0xf]
  %v38 = vld [vmem:[%s2 + $0x4] sm:$0xf]
  %v39 = vld [vmem:[%s2 + $0x8] sm:$0xf]
  %v40 = vld [vmem:[%s2 + $0xc] sm:$0xf]
  %v41 = vld [vmem:[%s2 + $0x10] sm:$0xf]
  %v42 = vld [vmem:[%s2 + $0x14] sm:$0xf]
  %v43 = vld [vmem:[%s2 + $0x18] sm:$0xf]
  %v44 = vld [vmem:[%s2 + $0x1c] sm:$0xf]
  %v53 = vunpack.c.l.b16 %v37
  %v54 = vunpack.c.l.b16 %v38
  %v55 = vunpack.c.l.b16 %v39
  %v56 = vunpack.c.l.b16 %v40
  %v57 = vunpack.c.l.b16 %v41
  %v58 = vunpack.c.l.b16 %v42
  %v59 = vunpack.c.l.b16 %v43
  %v60 = vunpack.c.l.b16 %v44
  %v61 = vpack.c.b16 %v54, %v53
  %v62 = vpack.c.b16 %v56, %v55
  %v63 = vpack.c.b16 %v58, %v57
  %v64 = vpack.c.b16 %v60, %v59
  %vm69 = vcmask 523264
  %v71 = vsel %vm69, %v35, 0
  %v74 = vsel %vm69, %v36, 0
  %76 = vmatprep.subr.bf16.mxu0 0
  %77 = vmatpush1.bf16.msra.mxu0 %v61
  %78 = vmatprep.subr.bf16.mxu0 0
  %79 = vmatpush1.bf16.msra.mxu0 %v62
  %80 = vmatprep.subr.bf16.mxu0 0
  %81 = vmatpush1.bf16.msra.mxu0 %v63
  %82 = vmatprep.subr.bf16.mxu0 0
  %83 = vmatpush1.bf16.msra.mxu0 %v64
  %84 = vmatprep.subr.bf16.mxu0 0
  %85 = vmatpush1.bf16.msra.mxu0 0
  %86 = vmatprep.subr.bf16.mxu0 0
  %87 = vmatpush1.bf16.msra.mxu0 0
  %88 = vmatprep.subr.bf16.mxu0 0
  %89 = vmatpush1.bf16.msra.mxu0 0
  %90 = vmatprep.subr.bf16.mxu0 0
  %91 = vmatpush1.bf16.msra.mxu0 0
  %92 = vmatprep.subr.bf16.mxu0 0
  %93 = vmatpush1.bf16.msra.mxu0 0
  %94 = vmatprep.subr.bf16.mxu0 0
  %95 = vmatpush1.bf16.msra.mxu0 0
  %96 = vmatprep.subr.bf16.mxu0 0
  %97 = vmatpush1.bf16.msra.mxu0 0
  %98 = vmatprep.subr.bf16.mxu0 0
  %99 = vmatpush1.bf16.msra.mxu0 0
  %100 = vmatprep.subr.bf16.mxu0 0
  %101 = vmatpush1.bf16.msra.mxu0 0
  %102 = vmatprep.subr.bf16.mxu0 0
  %103 = vmatpush1.bf16.msra.mxu0 0
  %104 = vmatprep.subr.bf16.mxu0 0
  %105 = vmatpush1.bf16.msra.mxu0 0
  %106 = vmatprep.subr.bf16.mxu0 0
  %107 = vmatpush1.bf16.msra.mxu0 0
  %108 = vmatprep.mubr.bf16.mxu0 0
  %109 = vmatmul.mubr.bf16.gmra.mrb[0].mxu0 %v71
  %v110 = vpop.f32.mrb[0].mxu0
  %v111 = vadd.f32 0.0, %v110
  %v112 = vpop.f32.mrb[0].mxu0
  %v113 = vpop.f32.mrb[0].mxu0
  %v114 = vadd.f32 0.0, %v113
  %v115 = vpop.f32.mrb[0].mxu0
  %116 = vmatprep.mubr.bf16.mxu0 0
  %117 = vmatmul.mubr.bf16.gmra.mrb[0].mxu0 %v74
  %v118 = vpop.f32.mrb[0].mxu0
  %v119 = vadd.f32 0.0, %v118
  %v120 = vpop.f32.mrb[0].mxu0
  %v121 = vpop.f32.mrb[0].mxu0
  %v122 = vadd.f32 0.0, %v121
  %v123 = vpop.f32.mrb[0].mxu0
  %124 = vdwg.mxu0
  %v125 = vadd.f32 %v111, %v114
  %v126 = vadd.f32 %v125, %v119
  %v127 = vadd.f32 %v126, %v122
  %v128 = vrot.slane %v127, 4
  %v129 = vadd.f32 %v127, %v128
  %v130 = vrot.slane %v129, 2
  %v131 = vadd.f32 %v129, %v130
  %v132 = vrot.slane %v131, 1
  %v133 = vadd.f32 %v131, %v132
  %134 = vrot.lane.b32.xlu0 %v133, 8
  %v135 = vpop.permute.xlu0 %134
  %v136 = vadd.f32 %v133, %v135
  %137 = vrot.lane.b32.xlu0 %v136, 16
  %v138 = vpop.permute.xlu0 %137
  %v139 = vadd.f32 %v136, %v138
  %140 = vrot.lane.b32.xlu0 %v139, 32
  %v141 = vpop.permute.xlu0 %140
  %v142 = vadd.f32 %v139, %v141
  %143 = vrot.lane.b32.xlu0 %v142, 64
  %v144 = vpop.permute.xlu0 %143
  %v145 = vadd.f32 %v142, %v144
  %v146 = vrcp.pop 512.0
  %v147 = vmul.f32 %v145, %v146
  %v148 = vlaneseq
  %v149 = vshrl.u32 %v148, 7
  %v150 = vsub.s32 0, %v149
  %v151 = vrot.slane %v147, %v150
  %v152 = vsub.f32 %v111, %v151
  %v153 = vsub.f32 %v114, %v151
  %v154 = vsub.f32 %v119, %v151
  %v155 = vsub.f32 %v122, %v151
  %v156 = vmul.f32 %v152, %v152
  %v157 = vmul.f32 %v153, %v153
  %v158 = vmul.f32 %v154, %v154
  %v159 = vmul.f32 %v155, %v155
  %v160 = vadd.f32 %v156, %v157
  %v161 = vadd.f32 %v160, %v158
  %v162 = vadd.f32 %v161, %v159
  %v163 = vrot.slane %v162, 4
  %v164 = vadd.f32 %v162, %v163
  %v165 = vrot.slane %v164, 2
  %v166 = vadd.f32 %v164, %v165
  %v167 = vrot.slane %v166, 1
  %v168 = vadd.f32 %v166, %v167
  %169 = vrot.lane.b32.xlu0 %v168, 8
  %v170 = vpop.permute.xlu0 %169
  %v171 = vadd.f32 %v168, %v170
  %172 = vrot.lane.b32.xlu0 %v171, 16
  %v173 = vpop.permute.xlu0 %172
  %v174 = vadd.f32 %v171, %v173
  %175 = vrot.lane.b32.xlu0 %v174, 32
  %v176 = vpop.permute.xlu0 %175
  %v177 = vadd.f32 %v174, %v176
  %178 = vrot.lane.b32.xlu0 %v177, 64
  %v179 = vpop.permute.xlu0 %178
  %v180 = vadd.f32 %v177, %v179
  %v181 = vmul.f32 %v180, %v146
  %v182 = vadd.f32 %v181, 1e-05
  %v183 = vrsqrt.pop %v182
  %v184 = vlaneseq
  %v185 = vshrl.u32 %v184, 7
  %v186 = vsub.s32 0, %v185
  %v187 = vrot.slane %v183, %v186
  %v188 = vmul.f32 %v152, %v187
  %v189 = vmul.f32 %v153, %v187
  %v190 = vmul.f32 %v154, %v187
  %v191 = vmul.f32 %v155, %v187
  %v192 = vld [vmem:[%s1] sm:$0xff]
  %v193 = vld [vmem:[%s1 + $0x8] sm:$0xff]
  %v194 = vld [vmem:[%s1 + $0x10] sm:$0xff]
  %v195 = vld [vmem:[%s1 + $0x18] sm:$0xff]
  %v196 = vmax.f32 %v192, 0.0
  %v197 = vmax.f32 %v193, 0.0
  %v198 = vmax.f32 %v194, 0.0
  %v199 = vmax.f32 %v195, 0.0
  %v200 = vpack.c.bf16 %v197, %v196
  %v201 = vpack.c.bf16 %v199, %v198
  %v202 = vld [vmem:[%s3] sm:$0xf]
  %v203 = vld [vmem:[%s3 + $0x4] sm:$0xf]
  %v204 = vld [vmem:[%s3 + $0x8] sm:$0xf]
  %v205 = vld [vmem:[%s3 + $0xc] sm:$0xf]
  %v206 = vld [vmem:[%s3 + $0x10] sm:$0xf]
  %v207 = vld [vmem:[%s3 + $0x14] sm:$0xf]
  %v208 = vld [vmem:[%s3 + $0x18] sm:$0xf]
  %v209 = vld [vmem:[%s3 + $0x1c] sm:$0xf]
  %v218 = vunpack.c.l.b16 %v202
  %v219 = vunpack.c.l.b16 %v203
  %v220 = vunpack.c.l.b16 %v204
  %v221 = vunpack.c.l.b16 %v205
  %v222 = vunpack.c.l.b16 %v206
  %v223 = vunpack.c.l.b16 %v207
  %v224 = vunpack.c.l.b16 %v208
  %v225 = vunpack.c.l.b16 %v209
  %v226 = vpack.c.b16 %v219, %v218
  %v227 = vpack.c.b16 %v221, %v220
  %v228 = vpack.c.b16 %v223, %v222
  %v229 = vpack.c.b16 %v225, %v224
  %v235 = vsel %vm69, %v200, 0
  %v238 = vsel %vm69, %v201, 0
  %240 = vmatprep.subr.bf16.mxu0 0
  %241 = vmatpush1.bf16.msra.mxu0 %v226
  %242 = vmatprep.subr.bf16.mxu0 0
  %243 = vmatpush1.bf16.msra.mxu0 %v227
  %244 = vmatprep.subr.bf16.mxu0 0
  %245 = vmatpush1.bf16.msra.mxu0 %v228
  %246 = vmatprep.subr.bf16.mxu0 0
  %247 = vmatpush1.bf16.msra.mxu0 %v229
  %248 = vmatprep.subr.bf16.mxu0 0
  %249 = vmatpush1.bf16.msra.mxu0 0
  %250 = vmatprep.subr.bf16.mxu0 0
  %251 = vmatpush1.bf16.msra.mxu0 0
  %252 = vmatprep.subr.bf16.mxu0 0
  %253 = vmatpush1.bf16.msra.mxu0 0
  %254 = vmatprep.subr.bf16.mxu0 0
  %255 = vmatpush1.bf16.msra.mxu0 0
  %256 = vmatprep.subr.bf16.mxu0 0
  %257 = vmatpush1.bf16.msra.mxu0 0
  %258 = vmatprep.subr.bf16.mxu0 0
  %259 = vmatpush1.bf16.msra.mxu0 0
  %260 = vmatprep.subr.bf16.mxu0 0
  %261 = vmatpush1.bf16.msra.mxu0 0
  %262 = vmatprep.subr.bf16.mxu0 0
  %263 = vmatpush1.bf16.msra.mxu0 0
  %264 = vmatprep.subr.bf16.mxu0 0
  %265 = vmatpush1.bf16.msra.mxu0 0
  %266 = vmatprep.subr.bf16.mxu0 0
  %267 = vmatpush1.bf16.msra.mxu0 0
  %268 = vmatprep.subr.bf16.mxu0 0
  %269 = vmatpush1.bf16.msra.mxu0 0
  %270 = vmatprep.subr.bf16.mxu0 0
  %271 = vmatpush1.bf16.msra.mxu0 0
  %272 = vmatprep.mubr.bf16.mxu0 0
  %273 = vmatmul.mubr.bf16.gmra.mrb[0].mxu0 %v235
  %v274 = vpop.f32.mrb[0].mxu0
  %v275 = vadd.f32 0.0, %v274
  %v276 = vpop.f32.mrb[0].mxu0
  %v277 = vpop.f32.mrb[0].mxu0
  %v278 = vadd.f32 0.0, %v277
  %v279 = vpop.f32.mrb[0].mxu0
  %280 = vmatprep.mubr.bf16.mxu0 0
  %281 = vmatmul.mubr.bf16.gmra.mrb[0].mxu0 %v238
  %v282 = vpop.f32.mrb[0].mxu0
  %v283 = vadd.f32 0.0, %v282
  %v284 = vpop.f32.mrb[0].mxu0
  %v285 = vpop.f32.mrb[0].mxu0
  %v286 = vadd.f32 0.0, %v285
  %v287 = vpop.f32.mrb[0].mxu0
  %288 = vdwg.mxu0
  %v289 = vadd.f32 %v275, %v278
  %v290 = vadd.f32 %v289, %v283
  %v291 = vadd.f32 %v290, %v286
  %v292 = vrot.slane %v291, 4
  %v293 = vadd.f32 %v291, %v292
  %v294 = vrot.slane %v293, 2
  %v295 = vadd.f32 %v293, %v294
  %v296 = vrot.slane %v295, 1
  %v297 = vadd.f32 %v295, %v296
  %298 = vrot.lane.b32.xlu0 %v297, 8
  %v299 = vpop.permute.xlu0 %298
  %v300 = vadd.f32 %v297, %v299
  %301 = vrot.lane.b32.xlu0 %v300, 16
  %v302 = vpop.permute.xlu0 %301
  %v303 = vadd.f32 %v300, %v302
  %304 = vrot.lane.b32.xlu0 %v303, 32
  %v305 = vpop.permute.xlu0 %304
  %v306 = vadd.f32 %v303, %v305
  %307 = vrot.lane.b32.xlu0 %v306, 64
  %v308 = vpop.permute.xlu0 %307
  %v309 = vadd.f32 %v306, %v308
  %v310 = vmul.f32 %v309, %v146
  %v311 = vlaneseq
  %v312 = vshrl.u32 %v311, 7
  %v313 = vsub.s32 0, %v312
  %v314 = vrot.slane %v310, %v313
  %v315 = vsub.f32 %v275, %v314
  %v316 = vsub.f32 %v278, %v314
  %v317 = vsub.f32 %v283, %v314
  %v318 = vsub.f32 %v286, %v314
  %v319 = vmul.f32 %v315, %v315
  %v320 = vmul.f32 %v316, %v316
  %v321 = vmul.f32 %v317, %v317
  %v322 = vmul.f32 %v318, %v318
  %v323 = vadd.f32 %v319, %v320
  %v324 = vadd.f32 %v323, %v321
  %v325 = vadd.f32 %v324, %v322
  %v326 = vrot.slane %v325, 4
  %v327 = vadd.f32 %v325, %v326
  %v328 = vrot.slane %v327, 2
  %v329 = vadd.f32 %v327, %v328
  %v330 = vrot.slane %v329, 1
  %v331 = vadd.f32 %v329, %v330
  %332 = vrot.lane.b32.xlu0 %v331, 8
  %v333 = vpop.permute.xlu0 %332
  %v334 = vadd.f32 %v331, %v333
  %335 = vrot.lane.b32.xlu0 %v334, 16
  %v336 = vpop.permute.xlu0 %335
  %v337 = vadd.f32 %v334, %v336
  %338 = vrot.lane.b32.xlu0 %v337, 32
  %v339 = vpop.permute.xlu0 %338
  %v340 = vadd.f32 %v337, %v339
  %341 = vrot.lane.b32.xlu0 %v340, 64
  %v342 = vpop.permute.xlu0 %341
  %v343 = vadd.f32 %v340, %v342
  %v344 = vmul.f32 %v343, %v146
  %v345 = vadd.f32 %v344, 1e-05
  %v346 = vrsqrt.pop %v345
  %v347 = vlaneseq
  %v348 = vshrl.u32 %v347, 7
  %v349 = vsub.s32 0, %v348
  %v350 = vrot.slane %v346, %v349
  %v351 = vmul.f32 %v315, %v350
  %v352 = vmul.f32 %v316, %v350
  %v353 = vmul.f32 %v317, %v350
  %v354 = vmul.f32 %v318, %v350
  %v355 = vmax.f32 %v188, 0.0
  %v356 = vmax.f32 %v189, 0.0
  %v357 = vmax.f32 %v190, 0.0
  %v358 = vmax.f32 %v191, 0.0
  %v359 = vrot.slane %v355, 7
  %v360 = vrot.slane %v356, 7
  %v361 = vrot.slane %v357, 7
  %v362 = vrot.slane %v358, 7
  %v363 = vlaneseq
  %v364 = vshrl.u32 %v363, 7
  %vm365 = vcmp.lt.s32.totalorder %v364, 1
  %v366 = vsel %vm365, %v361, %v362
  %v367 = vsel %vm365, %v360, %v361
  %v368 = vsel %vm365, %v359, %v360
  %v369 = vsel %vm365, %v362, %v359
  %s370 = scalar_lea.vmem %s4, 32
  %v371 = vld [vmem:[%s370] sm:$0xff]
  %v372 = vld [vmem:[%s370 + $0x8] sm:$0xff]
  %v373 = vld [vmem:[%s370 + $0x10] sm:$0xff]
  %v374 = vld [vmem:[%s370 + $0x18] sm:$0xff]
  %376 = vset.pattern.permute.xlu0 0
  %377 = vperm.xlu0 %376, %v371
  %v378 = vpop.permute.xlu0 %377
  %381 = vset.pattern.permute.xlu0 0
  %382 = vperm.xlu0 %381, %v372
  %v383 = vpop.permute.xlu0 %382
  %386 = vset.pattern.permute.xlu0 0
  %387 = vperm.xlu0 %386, %v373
  %v388 = vpop.permute.xlu0 %387
  %391 = vset.pattern.permute.xlu0 0
  %392 = vperm.xlu0 %391, %v374
  %v393 = vpop.permute.xlu0 %392
  %v395 = vmul.f32 %v369, %v378
  %v396 = vmul.f32 %v368, %v383
  %v397 = vmul.f32 %v367, %v388
  %v398 = vmul.f32 %v366, %v393
  %399 = vrot.lane.b32.xlu0 %v395, 8
  %v400 = vpop.permute.xlu0 %399
  %401 = vrot.lane.b32.xlu0 %v396, 8
  %v402 = vpop.permute.xlu0 %401
  %403 = vrot.lane.b32.xlu0 %v397, 8
  %v404 = vpop.permute.xlu0 %403
  %405 = vrot.lane.b32.xlu0 %v398, 8
  %v406 = vpop.permute.xlu0 %405
  %v407 = vld [vmem:[%s6] sm:$0x1]
  %v408 = vlaneseq
  %v409 = vshrl.u32 %v408, 7
  %v410 = vsub.s32 0, %v409
  %v411 = vrot.slane %v407, %v410
  %v412 = vmul.f32 %v400, %v411
  %v413 = vmul.f32 %v402, %v411
  %v414 = vmul.f32 %v404, %v411
  %v415 = vmul.f32 %v406, %v411
  %v416 = vadd.f32 %v412, 0.0
  %v417 = vadd.f32 %v413, 0.0
  %v418 = vadd.f32 %v414, 0.0
  %v419 = vadd.f32 %v415, 0.0
  %v420 = vld [vmem:[%s6 + $0x1] sm:$0x1]
  %v421 = vlaneseq
  %v422 = vshrl.u32 %v421, 7
  %v423 = vsub.s32 0, %v422
  %v424 = vrot.slane %v420, %v423
  %v425 = vmul.f32 %v395, %v424
  %v426 = vmul.f32 %v396, %v424
  %v427 = vmul.f32 %v397, %v424
  %v428 = vmul.f32 %v398, %v424
  %v429 = vadd.f32 %v416, %v425
  %v430 = vadd.f32 %v417, %v426
  %v431 = vadd.f32 %v418, %v427
  %v432 = vadd.f32 %v419, %v428
  %433 = vrot.lane.b32.xlu0 %v395, 120
  %v434 = vpop.permute.xlu0 %433
  %435 = vrot.lane.b32.xlu0 %v396, 120
  %v436 = vpop.permute.xlu0 %435
  %437 = vrot.lane.b32.xlu0 %v397, 120
  %v438 = vpop.permute.xlu0 %437
  %439 = vrot.lane.b32.xlu0 %v398, 120
  %v440 = vpop.permute.xlu0 %439
  %v441 = vld [vmem:[%s6 + $0x2] sm:$0x1]
  %v442 = vlaneseq
  %v443 = vshrl.u32 %v442, 7
  %v444 = vsub.s32 0, %v443
  %v445 = vrot.slane %v441, %v444
  %v446 = vmul.f32 %v434, %v445
  %v447 = vmul.f32 %v436, %v445
  %v448 = vmul.f32 %v438, %v445
  %v449 = vmul.f32 %v440, %v445
  %v450 = vadd.f32 %v429, %v446
  %v451 = vadd.f32 %v430, %v447
  %v452 = vadd.f32 %v431, %v448
  %v453 = vadd.f32 %v432, %v449
  %454 = vrot.lane.b32.xlu0 %v355, 8
  %v455 = vpop.permute.xlu0 %454
  %456 = vrot.lane.b32.xlu0 %v356, 8
  %v457 = vpop.permute.xlu0 %456
  %458 = vrot.lane.b32.xlu0 %v357, 8
  %v459 = vpop.permute.xlu0 %458
  %460 = vrot.lane.b32.xlu0 %v358, 8
  %v461 = vpop.permute.xlu0 %460
  %v462 = vld [vmem:[%s6 + $0x5] sm:$0x1]
  %v463 = vlaneseq
  %v464 = vshrl.u32 %v463, 7
  %v465 = vsub.s32 0, %v464
  %v466 = vrot.slane %v462, %v465
  %v467 = vmul.f32 %v455, %v466
  %v468 = vmul.f32 %v457, %v466
  %v469 = vmul.f32 %v459, %v466
  %v470 = vmul.f32 %v461, %v466
  %v471 = vadd.f32 %v450, %v467
  %v472 = vadd.f32 %v451, %v468
  %v473 = vadd.f32 %v452, %v469
  %v474 = vadd.f32 %v453, %v470
  %v475 = vld [vmem:[%s6 + $0x6] sm:$0x1]
  %v476 = vlaneseq
  %v477 = vshrl.u32 %v476, 7
  %v478 = vsub.s32 0, %v477
  %v479 = vrot.slane %v475, %v478
  %v480 = vmul.f32 %v355, %v479
  %v481 = vmul.f32 %v356, %v479
  %v482 = vmul.f32 %v357, %v479
  %v483 = vmul.f32 %v358, %v479
  %v484 = vadd.f32 %v471, %v480
  %v485 = vadd.f32 %v472, %v481
  %v486 = vadd.f32 %v473, %v482
  %v487 = vadd.f32 %v474, %v483
  %488 = vrot.lane.b32.xlu0 %v355, 120
  %v489 = vpop.permute.xlu0 %488
  %490 = vrot.lane.b32.xlu0 %v356, 120
  %v491 = vpop.permute.xlu0 %490
  %492 = vrot.lane.b32.xlu0 %v357, 120
  %v493 = vpop.permute.xlu0 %492
  %494 = vrot.lane.b32.xlu0 %v358, 120
  %v495 = vpop.permute.xlu0 %494
  %v496 = vld [vmem:[%s6 + $0x7] sm:$0x1]
  %v497 = vlaneseq
  %v498 = vshrl.u32 %v497, 7
  %v499 = vsub.s32 0, %v498
  %v500 = vrot.slane %v496, %v499
  %v501 = vmul.f32 %v489, %v500
  %v502 = vmul.f32 %v491, %v500
  %v503 = vmul.f32 %v493, %v500
  %v504 = vmul.f32 %v495, %v500
  %v505 = vadd.f32 %v484, %v501
  %v506 = vadd.f32 %v485, %v502
  %v507 = vadd.f32 %v486, %v503
  %v508 = vadd.f32 %v487, %v504
  %v509 = vrot.slane %v355, 1
  %v510 = vrot.slane %v356, 1
  %v511 = vrot.slane %v357, 1
  %v512 = vrot.slane %v358, 1
  %vm513 = vcmp.lt.s32.totalorder %v364, 7
  %v514 = vsel %vm513, %v511, %v512
  %v515 = vsel %vm513, %v510, %v511
  %v516 = vsel %vm513, %v509, %v510
  %v517 = vsel %vm513, %v512, %v509
  %s518 = scalar_lea.vmem %s4, 96
  %v519 = vld [vmem:[%s518] sm:$0xff]
  %v520 = vld [vmem:[%s518 + $0x8] sm:$0xff]
  %v521 = vld [vmem:[%s518 + $0x10] sm:$0xff]
  %v522 = vld [vmem:[%s518 + $0x18] sm:$0xff]
  %524 = vset.pattern.permute.xlu0 0
  %525 = vperm.xlu0 %524, %v519
  %v526 = vpop.permute.xlu0 %525
  %529 = vset.pattern.permute.xlu0 0
  %530 = vperm.xlu0 %529, %v520
  %v531 = vpop.permute.xlu0 %530
  %534 = vset.pattern.permute.xlu0 0
  %535 = vperm.xlu0 %534, %v521
  %v536 = vpop.permute.xlu0 %535
  %539 = vset.pattern.permute.xlu0 0
  %540 = vperm.xlu0 %539, %v522
  %v541 = vpop.permute.xlu0 %540
  %v543 = vmul.f32 %v516, %v526
  %v544 = vmul.f32 %v515, %v531
  %v545 = vmul.f32 %v514, %v536
  %v546 = vmul.f32 %v517, %v541
  %547 = vrot.lane.b32.xlu0 %v543, 8
  %v548 = vpop.permute.xlu0 %547
  %549 = vrot.lane.b32.xlu0 %v544, 8
  %v550 = vpop.permute.xlu0 %549
  %551 = vrot.lane.b32.xlu0 %v545, 8
  %v552 = vpop.permute.xlu0 %551
  %553 = vrot.lane.b32.xlu0 %v546, 8
  %v554 = vpop.permute.xlu0 %553
  %v555 = vld [vmem:[%s6 + $0xa] sm:$0x1]
  %v556 = vlaneseq
  %v557 = vshrl.u32 %v556, 7
  %v558 = vsub.s32 0, %v557
  %v559 = vrot.slane %v555, %v558
  %v560 = vmul.f32 %v548, %v559
  %v561 = vmul.f32 %v550, %v559
  %v562 = vmul.f32 %v552, %v559
  %v563 = vmul.f32 %v554, %v559
  %v564 = vadd.f32 %v505, %v560
  %v565 = vadd.f32 %v506, %v561
  %v566 = vadd.f32 %v507, %v562
  %v567 = vadd.f32 %v508, %v563
  %v568 = vld [vmem:[%s6 + $0xb] sm:$0x1]
  %v569 = vlaneseq
  %v570 = vshrl.u32 %v569, 7
  %v571 = vsub.s32 0, %v570
  %v572 = vrot.slane %v568, %v571
  %v573 = vmul.f32 %v543, %v572
  %v574 = vmul.f32 %v544, %v572
  %v575 = vmul.f32 %v545, %v572
  %v576 = vmul.f32 %v546, %v572
  %v577 = vadd.f32 %v564, %v573
  %v578 = vadd.f32 %v565, %v574
  %v579 = vadd.f32 %v566, %v575
  %v580 = vadd.f32 %v567, %v576
  %581 = vrot.lane.b32.xlu0 %v543, 120
  %v582 = vpop.permute.xlu0 %581
  %583 = vrot.lane.b32.xlu0 %v544, 120
  %v584 = vpop.permute.xlu0 %583
  %585 = vrot.lane.b32.xlu0 %v545, 120
  %v586 = vpop.permute.xlu0 %585
  %587 = vrot.lane.b32.xlu0 %v546, 120
  %v588 = vpop.permute.xlu0 %587
  %v589 = vld [vmem:[%s6 + $0xc] sm:$0x1]
  %v590 = vlaneseq
  %v591 = vshrl.u32 %v590, 7
  %v592 = vsub.s32 0, %v591
  %v593 = vrot.slane %v589, %v592
  %v594 = vmul.f32 %v582, %v593
  %v595 = vmul.f32 %v584, %v593
  %v596 = vmul.f32 %v586, %v593
  %v597 = vmul.f32 %v588, %v593
  %v598 = vadd.f32 %v577, %v594
  %v599 = vadd.f32 %v578, %v595
  %v600 = vadd.f32 %v579, %v596
  %v601 = vadd.f32 %v580, %v597
  %v602 = vpack.c.bf16 %v599, %v598
  %v603 = vpack.c.bf16 %v601, %v600
  %v604 = vld [vmem:[%s5] sm:$0xf]
  %v605 = vld [vmem:[%s5 + $0x4] sm:$0xf]
  %v606 = vld [vmem:[%s5 + $0x8] sm:$0xf]
  %v607 = vld [vmem:[%s5 + $0xc] sm:$0xf]
  %v608 = vld [vmem:[%s5 + $0x10] sm:$0xf]
  %v609 = vld [vmem:[%s5 + $0x14] sm:$0xf]
  %v610 = vld [vmem:[%s5 + $0x18] sm:$0xf]
  %v611 = vld [vmem:[%s5 + $0x1c] sm:$0xf]
  %v612 = vld [vmem:[%s5 + $0x20] sm:$0xf]
  %v613 = vld [vmem:[%s5 + $0x24] sm:$0xf]
  %v614 = vld [vmem:[%s5 + $0x28] sm:$0xf]
  %v615 = vld [vmem:[%s5 + $0x2c] sm:$0xf]
  %v616 = vld [vmem:[%s5 + $0x30] sm:$0xf]
  %v617 = vld [vmem:[%s5 + $0x34] sm:$0xf]
  %v618 = vld [vmem:[%s5 + $0x38] sm:$0xf]
  %v619 = vld [vmem:[%s5 + $0x3c] sm:$0xf]
  %v636 = vunpack.c.l.b16 %v604
  %v637 = vunpack.c.l.b16 %v605
  %v638 = vunpack.c.l.b16 %v606
  %v639 = vunpack.c.l.b16 %v607
  %v640 = vunpack.c.l.b16 %v608
  %v641 = vunpack.c.l.b16 %v609
  %v642 = vunpack.c.l.b16 %v610
  %v643 = vunpack.c.l.b16 %v611
  %v644 = vunpack.c.l.b16 %v612
  %v645 = vunpack.c.l.b16 %v613
  %v646 = vunpack.c.l.b16 %v614
  %v647 = vunpack.c.l.b16 %v615
  %v648 = vunpack.c.l.b16 %v616
  %v649 = vunpack.c.l.b16 %v617
  %v650 = vunpack.c.l.b16 %v618
  %v651 = vunpack.c.l.b16 %v619
  %v652 = vpack.c.b16 %v637, %v636
  %v653 = vpack.c.b16 %v639, %v638
  %v654 = vpack.c.b16 %v641, %v640
  %v655 = vpack.c.b16 %v643, %v642
  %v656 = vpack.c.b16 %v645, %v644
  %v657 = vpack.c.b16 %v647, %v646
  %v658 = vpack.c.b16 %v649, %v648
  %v659 = vpack.c.b16 %v651, %v650
  %668 = vmatprep.subr.bf16.mxu0 0
  %669 = vmatpush1.bf16.msra.mxu0 %v652
  %670 = vmatprep.subr.bf16.mxu0 0
  %671 = vmatpush1.bf16.msra.mxu0 %v653
  %672 = vmatprep.subr.bf16.mxu0 0
  %673 = vmatpush1.bf16.msra.mxu0 %v654
  %674 = vmatprep.subr.bf16.mxu0 0
  %675 = vmatpush1.bf16.msra.mxu0 %v655
  %676 = vmatprep.subr.bf16.mxu0 0
  %677 = vmatpush1.bf16.msra.mxu0 %v656
  %678 = vmatprep.subr.bf16.mxu0 0
  %679 = vmatpush1.bf16.msra.mxu0 %v657
  %680 = vmatprep.subr.bf16.mxu0 0
  %681 = vmatpush1.bf16.msra.mxu0 %v658
  %682 = vmatprep.subr.bf16.mxu0 0
  %683 = vmatpush1.bf16.msra.mxu0 %v659
  %684 = vmatprep.subr.bf16.mxu0 0
  %685 = vmatpush1.bf16.msra.mxu0 0
  %686 = vmatprep.subr.bf16.mxu0 0
  %687 = vmatpush1.bf16.msra.mxu0 0
  %688 = vmatprep.subr.bf16.mxu0 0
  %689 = vmatpush1.bf16.msra.mxu0 0
  %690 = vmatprep.subr.bf16.mxu0 0
  %691 = vmatpush1.bf16.msra.mxu0 0
  %692 = vmatprep.subr.bf16.mxu0 0
  %693 = vmatpush1.bf16.msra.mxu0 0
  %694 = vmatprep.subr.bf16.mxu0 0
  %695 = vmatpush1.bf16.msra.mxu0 0
  %696 = vmatprep.subr.bf16.mxu0 0
  %697 = vmatpush1.bf16.msra.mxu0 0
  %698 = vmatprep.subr.bf16.mxu0 0
  %699 = vmatpush1.bf16.msra.mxu0 0
  %700 = vmatprep.mubr.bf16.mxu0 0
  %701 = vmatmul.mubr.bf16.gmra.mrb[0].mxu0 %v602
  %v702 = vpop.f32.mrb[0].mxu0
  %v703 = vadd.f32 0.0, %v702
  %v704 = vpop.f32.mrb[0].mxu0
  %v705 = vpop.f32.mrb[0].mxu0
  %v706 = vadd.f32 0.0, %v705
  %v707 = vpop.f32.mrb[0].mxu0
  %708 = vmatprep.mubr.bf16.mxu0 0
  %709 = vmatmul.mubr.bf16.gmra.mrb[0].mxu0 %v603
  %v710 = vpop.f32.mrb[0].mxu0
  %v711 = vadd.f32 0.0, %v710
  %v712 = vpop.f32.mrb[0].mxu0
  %v713 = vpop.f32.mrb[0].mxu0
  %v714 = vadd.f32 0.0, %v713
  %v715 = vpop.f32.mrb[0].mxu0
  %716 = vdwg.mxu0
  %v717 = vadd.f32 %v703, %v706
  %v718 = vadd.f32 %v717, %v711
  %v719 = vadd.f32 %v718, %v714
  %v720 = vrot.slane %v719, 4
  %v721 = vadd.f32 %v719, %v720
  %v722 = vrot.slane %v721, 2
  %v723 = vadd.f32 %v721, %v722
  %v724 = vrot.slane %v723, 1
  %v725 = vadd.f32 %v723, %v724
  %726 = vrot.lane.b32.xlu0 %v725, 8
  %v727 = vpop.permute.xlu0 %726
  %v728 = vadd.f32 %v725, %v727
  %729 = vrot.lane.b32.xlu0 %v728, 16
  %v730 = vpop.permute.xlu0 %729
  %v731 = vadd.f32 %v728, %v730
  %732 = vrot.lane.b32.xlu0 %v731, 32
  %v733 = vpop.permute.xlu0 %732
  %v734 = vadd.f32 %v731, %v733
  %735 = vrot.lane.b32.xlu0 %v734, 64
  %v736 = vpop.permute.xlu0 %735
  %v737 = vadd.f32 %v734, %v736
  %v738 = vmul.f32 %v737, %v146
  %v739 = vlaneseq
  %v740 = vshrl.u32 %v739, 7
  %v741 = vsub.s32 0, %v740
  %v742 = vrot.slane %v738, %v741
  %v743 = vsub.f32 %v703, %v742
  %v744 = vsub.f32 %v706, %v742
  %v745 = vsub.f32 %v711, %v742
  %v746 = vsub.f32 %v714, %v742
  %v747 = vmul.f32 %v743, %v743
  %v748 = vmul.f32 %v744, %v744
  %v749 = vmul.f32 %v745, %v745
  %v750 = vmul.f32 %v746, %v746
  %v751 = vadd.f32 %v747, %v748
  %v752 = vadd.f32 %v751, %v749
  %v753 = vadd.f32 %v752, %v750
  %v754 = vrot.slane %v753, 4
  %v755 = vadd.f32 %v753, %v754
  %v756 = vrot.slane %v755, 2
  %v757 = vadd.f32 %v755, %v756
  %v758 = vrot.slane %v757, 1
  %v759 = vadd.f32 %v757, %v758
  %760 = vrot.lane.b32.xlu0 %v759, 8
  %v761 = vpop.permute.xlu0 %760
  %v762 = vadd.f32 %v759, %v761
  %763 = vrot.lane.b32.xlu0 %v762, 16
  %v764 = vpop.permute.xlu0 %763
  %v765 = vadd.f32 %v762, %v764
  %766 = vrot.lane.b32.xlu0 %v765, 32
  %v767 = vpop.permute.xlu0 %766
  %v768 = vadd.f32 %v765, %v767
  %769 = vrot.lane.b32.xlu0 %v768, 64
  %v770 = vpop.permute.xlu0 %769
  %v771 = vadd.f32 %v768, %v770
  %v772 = vmul.f32 %v771, %v146
  %v773 = vadd.f32 %v772, 1e-05
  %v774 = vrsqrt.pop %v773
  %v775 = vlaneseq
  %v776 = vshrl.u32 %v775, 7
  %v777 = vsub.s32 0, %v776
  %v778 = vrot.slane %v774, %v777
  %v779 = vmul.f32 %v743, %v778
  %v780 = vmul.f32 %v744, %v778
  %v781 = vmul.f32 %v745, %v778
  %v782 = vmul.f32 %v746, %v778
  %v783 = vmax.f32 %v779, 0.0
  %v784 = vmax.f32 %v780, 0.0
  %v785 = vmax.f32 %v781, 0.0
  %v786 = vmax.f32 %v782, 0.0
  %v787 = vrot.slane %v783, 7
  %v788 = vrot.slane %v784, 7
  %v789 = vrot.slane %v785, 7
  %v790 = vrot.slane %v786, 7
  %v791 = vsel %vm365, %v789, %v790
  %v792 = vsel %vm365, %v788, %v789
  %v793 = vsel %vm365, %v787, %v788
  %v794 = vsel %vm365, %v790, %v787
  %v795 = vmul.f32 %v794, %v378
  %v796 = vmul.f32 %v793, %v383
  %v797 = vmul.f32 %v792, %v388
  %v798 = vmul.f32 %v791, %v393
  %799 = vrot.lane.b32.xlu0 %v795, 8
  %v800 = vpop.permute.xlu0 %799
  %801 = vrot.lane.b32.xlu0 %v796, 8
  %v802 = vpop.permute.xlu0 %801
  %803 = vrot.lane.b32.xlu0 %v797, 8
  %v804 = vpop.permute.xlu0 %803
  %805 = vrot.lane.b32.xlu0 %v798, 8
  %v806 = vpop.permute.xlu0 %805
  %v807 = vld [vmem:[%s6 + $0x19] sm:$0x1]
  %v808 = vlaneseq
  %v809 = vshrl.u32 %v808, 7
  %v810 = vsub.s32 0, %v809
  %v811 = vrot.slane %v807, %v810
  %v812 = vmul.f32 %v800, %v811
  %v813 = vmul.f32 %v802, %v811
  %v814 = vmul.f32 %v804, %v811
  %v815 = vmul.f32 %v806, %v811
  %v816 = vadd.f32 %v812, 0.0
  %v817 = vadd.f32 %v813, 0.0
  %v818 = vadd.f32 %v814, 0.0
  %v819 = vadd.f32 %v815, 0.0
  %v820 = vld [vmem:[%s6 + $0x1a] sm:$0x1]
  %v821 = vlaneseq
  %v822 = vshrl.u32 %v821, 7
  %v823 = vsub.s32 0, %v822
  %v824 = vrot.slane %v820, %v823
  %v825 = vmul.f32 %v795, %v824
  %v826 = vmul.f32 %v796, %v824
  %v827 = vmul.f32 %v797, %v824
  %v828 = vmul.f32 %v798, %v824
  %v829 = vadd.f32 %v816, %v825
  %v830 = vadd.f32 %v817, %v826
  %v831 = vadd.f32 %v818, %v827
  %v832 = vadd.f32 %v819, %v828
  %833 = vrot.lane.b32.xlu0 %v795, 120
  %v834 = vpop.permute.xlu0 %833
  %835 = vrot.lane.b32.xlu0 %v796, 120
  %v836 = vpop.permute.xlu0 %835
  %837 = vrot.lane.b32.xlu0 %v797, 120
  %v838 = vpop.permute.xlu0 %837
  %839 = vrot.lane.b32.xlu0 %v798, 120
  %v840 = vpop.permute.xlu0 %839
  %v841 = vld [vmem:[%s6 + $0x1b] sm:$0x1]
  %v842 = vlaneseq
  %v843 = vshrl.u32 %v842, 7
  %v844 = vsub.s32 0, %v843
  %v845 = vrot.slane %v841, %v844
  %v846 = vmul.f32 %v834, %v845
  %v847 = vmul.f32 %v836, %v845
  %v848 = vmul.f32 %v838, %v845
  %v849 = vmul.f32 %v840, %v845
  %v850 = vadd.f32 %v829, %v846
  %v851 = vadd.f32 %v830, %v847
  %v852 = vadd.f32 %v831, %v848
  %v853 = vadd.f32 %v832, %v849
  %854 = vrot.lane.b32.xlu0 %v783, 8
  %v855 = vpop.permute.xlu0 %854
  %856 = vrot.lane.b32.xlu0 %v784, 8
  %v857 = vpop.permute.xlu0 %856
  %858 = vrot.lane.b32.xlu0 %v785, 8
  %v859 = vpop.permute.xlu0 %858
  %860 = vrot.lane.b32.xlu0 %v786, 8
  %v861 = vpop.permute.xlu0 %860
  %v862 = vld [vmem:[%s6 + $0x1e] sm:$0x1]
  %v863 = vlaneseq
  %v864 = vshrl.u32 %v863, 7
  %v865 = vsub.s32 0, %v864
  %v866 = vrot.slane %v862, %v865
  %v867 = vmul.f32 %v855, %v866
  %v868 = vmul.f32 %v857, %v866
  %v869 = vmul.f32 %v859, %v866
  %v870 = vmul.f32 %v861, %v866
  %v871 = vadd.f32 %v850, %v867
  %v872 = vadd.f32 %v851, %v868
  %v873 = vadd.f32 %v852, %v869
  %v874 = vadd.f32 %v853, %v870
  %v875 = vld [vmem:[%s6 + $0x1f] sm:$0x1]
  %v876 = vlaneseq
  %v877 = vshrl.u32 %v876, 7
  %v878 = vsub.s32 0, %v877
  %v879 = vrot.slane %v875, %v878
  %v880 = vmul.f32 %v783, %v879
  %v881 = vmul.f32 %v784, %v879
  %v882 = vmul.f32 %v785, %v879
  %v883 = vmul.f32 %v786, %v879
  %v884 = vadd.f32 %v871, %v880
  %v885 = vadd.f32 %v872, %v881
  %v886 = vadd.f32 %v873, %v882
  %v887 = vadd.f32 %v874, %v883
  %888 = vrot.lane.b32.xlu0 %v783, 120
  %v889 = vpop.permute.xlu0 %888
  %890 = vrot.lane.b32.xlu0 %v784, 120
  %v891 = vpop.permute.xlu0 %890
  %892 = vrot.lane.b32.xlu0 %v785, 120
  %v893 = vpop.permute.xlu0 %892
  %894 = vrot.lane.b32.xlu0 %v786, 120
  %v895 = vpop.permute.xlu0 %894
  %v896 = vld [vmem:[%s6 + $0x20] sm:$0x1]
  %v897 = vlaneseq
  %v898 = vshrl.u32 %v897, 7
  %v899 = vsub.s32 0, %v898
  %v900 = vrot.slane %v896, %v899
  %v901 = vmul.f32 %v889, %v900
  %v902 = vmul.f32 %v891, %v900
  %v903 = vmul.f32 %v893, %v900
  %v904 = vmul.f32 %v895, %v900
  %v905 = vadd.f32 %v884, %v901
  %v906 = vadd.f32 %v885, %v902
  %v907 = vadd.f32 %v886, %v903
  %v908 = vadd.f32 %v887, %v904
  %v909 = vrot.slane %v783, 1
  %v910 = vrot.slane %v784, 1
  %v911 = vrot.slane %v785, 1
  %v912 = vrot.slane %v786, 1
  %v913 = vsel %vm513, %v911, %v912
  %v914 = vsel %vm513, %v910, %v911
  %v915 = vsel %vm513, %v909, %v910
  %v916 = vsel %vm513, %v912, %v909
  %v917 = vmul.f32 %v915, %v526
  %v918 = vmul.f32 %v914, %v531
  %v919 = vmul.f32 %v913, %v536
  %v920 = vmul.f32 %v916, %v541
  %921 = vrot.lane.b32.xlu0 %v917, 8
  %v922 = vpop.permute.xlu0 %921
  %923 = vrot.lane.b32.xlu0 %v918, 8
  %v924 = vpop.permute.xlu0 %923
  %925 = vrot.lane.b32.xlu0 %v919, 8
  %v926 = vpop.permute.xlu0 %925
  %927 = vrot.lane.b32.xlu0 %v920, 8
  %v928 = vpop.permute.xlu0 %927
  %v929 = vld [vmem:[%s6 + $0x23] sm:$0x1]
  %v930 = vlaneseq
  %v931 = vshrl.u32 %v930, 7
  %v932 = vsub.s32 0, %v931
  %v933 = vrot.slane %v929, %v932
  %v934 = vmul.f32 %v922, %v933
  %v935 = vmul.f32 %v924, %v933
  %v936 = vmul.f32 %v926, %v933
  %v937 = vmul.f32 %v928, %v933
  %v938 = vadd.f32 %v905, %v934
  %v939 = vadd.f32 %v906, %v935
  %v940 = vadd.f32 %v907, %v936
  %v941 = vadd.f32 %v908, %v937
  %v942 = vld [vmem:[%s6 + $0x24] sm:$0x1]
  %v943 = vlaneseq
  %v944 = vshrl.u32 %v943, 7
  %v945 = vsub.s32 0, %v944
  %v946 = vrot.slane %v942, %v945
  %v947 = vmul.f32 %v917, %v946
  %v948 = vmul.f32 %v918, %v946
  %v949 = vmul.f32 %v919, %v946
  %v950 = vmul.f32 %v920, %v946
  %v951 = vadd.f32 %v938, %v947
  %v952 = vadd.f32 %v939, %v948
  %v953 = vadd.f32 %v940, %v949
  %v954 = vadd.f32 %v941, %v950
  %955 = vrot.lane.b32.xlu0 %v917, 120
  %v956 = vpop.permute.xlu0 %955
  %957 = vrot.lane.b32.xlu0 %v918, 120
  %v958 = vpop.permute.xlu0 %957
  %959 = vrot.lane.b32.xlu0 %v919, 120
  %v960 = vpop.permute.xlu0 %959
  %961 = vrot.lane.b32.xlu0 %v920, 120
  %v962 = vpop.permute.xlu0 %961
  %v963 = vld [vmem:[%s6 + $0x25] sm:$0x1]
  %v964 = vlaneseq
  %v965 = vshrl.u32 %v964, 7
  %v966 = vsub.s32 0, %v965
  %v967 = vrot.slane %v963, %v966
  %v968 = vmul.f32 %v956, %v967
  %v969 = vmul.f32 %v958, %v967
  %v970 = vmul.f32 %v960, %v967
  %v971 = vmul.f32 %v962, %v967
  %v972 = vadd.f32 %v951, %v968
  %v973 = vadd.f32 %v952, %v969
  %v974 = vadd.f32 %v953, %v970
  %v975 = vadd.f32 %v954, %v971
  %v976 = vpack.c.bf16 %v973, %v972
  %v977 = vpack.c.bf16 %v975, %v974
  %s978 = scalar_lea.vmem %s5, 64
  %v979 = vld [vmem:[%s978] sm:$0xf]
  %v980 = vld [vmem:[%s978 + $0x4] sm:$0xf]
  %v981 = vld [vmem:[%s978 + $0x8] sm:$0xf]
  %v982 = vld [vmem:[%s978 + $0xc] sm:$0xf]
  %v983 = vld [vmem:[%s978 + $0x10] sm:$0xf]
  %v984 = vld [vmem:[%s978 + $0x14] sm:$0xf]
  %v985 = vld [vmem:[%s978 + $0x18] sm:$0xf]
  %v986 = vld [vmem:[%s978 + $0x1c] sm:$0xf]
  %v987 = vld [vmem:[%s978 + $0x20] sm:$0xf]
  %v988 = vld [vmem:[%s978 + $0x24] sm:$0xf]
  %v989 = vld [vmem:[%s978 + $0x28] sm:$0xf]
  %v990 = vld [vmem:[%s978 + $0x2c] sm:$0xf]
  %v991 = vld [vmem:[%s978 + $0x30] sm:$0xf]
  %v992 = vld [vmem:[%s978 + $0x34] sm:$0xf]
  %v993 = vld [vmem:[%s978 + $0x38] sm:$0xf]
  %v994 = vld [vmem:[%s978 + $0x3c] sm:$0xf]
  %v1011 = vunpack.c.l.b16 %v979
  %v1012 = vunpack.c.l.b16 %v980
  %v1013 = vunpack.c.l.b16 %v981
  %v1014 = vunpack.c.l.b16 %v982
  %v1015 = vunpack.c.l.b16 %v983
  %v1016 = vunpack.c.l.b16 %v984
  %v1017 = vunpack.c.l.b16 %v985
  %v1018 = vunpack.c.l.b16 %v986
  %v1019 = vunpack.c.l.b16 %v987
  %v1020 = vunpack.c.l.b16 %v988
  %v1021 = vunpack.c.l.b16 %v989
  %v1022 = vunpack.c.l.b16 %v990
  %v1023 = vunpack.c.l.b16 %v991
  %v1024 = vunpack.c.l.b16 %v992
  %v1025 = vunpack.c.l.b16 %v993
  %v1026 = vunpack.c.l.b16 %v994
  %v1027 = vpack.c.b16 %v1012, %v1011
  %v1028 = vpack.c.b16 %v1014, %v1013
  %v1029 = vpack.c.b16 %v1016, %v1015
  %v1030 = vpack.c.b16 %v1018, %v1017
  %v1031 = vpack.c.b16 %v1020, %v1019
  %v1032 = vpack.c.b16 %v1022, %v1021
  %v1033 = vpack.c.b16 %v1024, %v1023
  %v1034 = vpack.c.b16 %v1026, %v1025
  %1043 = vmatprep.subr.bf16.mxu0 0
  %1044 = vmatpush1.bf16.msra.mxu0 %v1027
  %1045 = vmatprep.subr.bf16.mxu0 0
  %1046 = vmatpush1.bf16.msra.mxu0 %v1028
  %1047 = vmatprep.subr.bf16.mxu0 0
  %1048 = vmatpush1.bf16.msra.mxu0 %v1029
  %1049 = vmatprep.subr.bf16.mxu0 0
  %1050 = vmatpush1.bf16.msra.mxu0 %v1030
  %1051 = vmatprep.subr.bf16.mxu0 0
  %1052 = vmatpush1.bf16.msra.mxu0 %v1031
  %1053 = vmatprep.subr.bf16.mxu0 0
  %1054 = vmatpush1.bf16.msra.mxu0 %v1032
  %1055 = vmatprep.subr.bf16.mxu0 0
  %1056 = vmatpush1.bf16.msra.mxu0 %v1033
  %1057 = vmatprep.subr.bf16.mxu0 0
  %1058 = vmatpush1.bf16.msra.mxu0 %v1034
  %1059 = vmatprep.subr.bf16.mxu0 0
  %1060 = vmatpush1.bf16.msra.mxu0 0
  %1061 = vmatprep.subr.bf16.mxu0 0
  %1062 = vmatpush1.bf16.msra.mxu0 0
  %1063 = vmatprep.subr.bf16.mxu0 0
  %1064 = vmatpush1.bf16.msra.mxu0 0
  %1065 = vmatprep.subr.bf16.mxu0 0
  %1066 = vmatpush1.bf16.msra.mxu0 0
  %1067 = vmatprep.subr.bf16.mxu0 0
  %1068 = vmatpush1.bf16.msra.mxu0 0
  %1069 = vmatprep.subr.bf16.mxu0 0
  %1070 = vmatpush1.bf16.msra.mxu0 0
  %1071 = vmatprep.subr.bf16.mxu0 0
  %1072 = vmatpush1.bf16.msra.mxu0 0
  %1073 = vmatprep.subr.bf16.mxu0 0
  %1074 = vmatpush1.bf16.msra.mxu0 0
  %1075 = vmatprep.mubr.bf16.mxu0 0
  %1076 = vmatmul.mubr.bf16.gmra.mrb[0].mxu0 %v976
  %v1077 = vpop.f32.mrb[0].mxu0
  %v1078 = vadd.f32 0.0, %v1077
  %v1079 = vpop.f32.mrb[0].mxu0
  %v1080 = vpop.f32.mrb[0].mxu0
  %v1081 = vadd.f32 0.0, %v1080
  %v1082 = vpop.f32.mrb[0].mxu0
  %1083 = vmatprep.mubr.bf16.mxu0 0
  %1084 = vmatmul.mubr.bf16.gmra.mrb[0].mxu0 %v977
  %v1085 = vpop.f32.mrb[0].mxu0
  %v1086 = vadd.f32 0.0, %v1085
  %v1087 = vpop.f32.mrb[0].mxu0
  %v1088 = vpop.f32.mrb[0].mxu0
  %v1089 = vadd.f32 0.0, %v1088
  %v1090 = vpop.f32.mrb[0].mxu0
  %1091 = vdwg.mxu0
  %v1092 = vadd.f32 %v1078, %v1081
  %v1093 = vadd.f32 %v1092, %v1086
  %v1094 = vadd.f32 %v1093, %v1089
  %v1095 = vrot.slane %v1094, 4
  %v1096 = vadd.f32 %v1094, %v1095
  %v1097 = vrot.slane %v1096, 2
  %v1098 = vadd.f32 %v1096, %v1097
  %v1099 = vrot.slane %v1098, 1
  %v1100 = vadd.f32 %v1098, %v1099
  %1101 = vrot.lane.b32.xlu0 %v1100, 8
  %v1102 = vpop.permute.xlu0 %1101
  %v1103 = vadd.f32 %v1100, %v1102
  %1104 = vrot.lane.b32.xlu0 %v1103, 16
  %v1105 = vpop.permute.xlu0 %1104
  %v1106 = vadd.f32 %v1103, %v1105
  %1107 = vrot.lane.b32.xlu0 %v1106, 32
  %v1108 = vpop.permute.xlu0 %1107
  %v1109 = vadd.f32 %v1106, %v1108
  %1110 = vrot.lane.b32.xlu0 %v1109, 64
  %v1111 = vpop.permute.xlu0 %1110
  %v1112 = vadd.f32 %v1109, %v1111
  %v1113 = vmul.f32 %v1112, %v146
  %v1114 = vlaneseq
  %v1115 = vshrl.u32 %v1114, 7
  %v1116 = vsub.s32 0, %v1115
  %v1117 = vrot.slane %v1113, %v1116
  %v1118 = vsub.f32 %v1078, %v1117
  %v1119 = vsub.f32 %v1081, %v1117
  %v1120 = vsub.f32 %v1086, %v1117
  %v1121 = vsub.f32 %v1089, %v1117
  %v1122 = vmul.f32 %v1118, %v1118
  %v1123 = vmul.f32 %v1119, %v1119
  %v1124 = vmul.f32 %v1120, %v1120
  %v1125 = vmul.f32 %v1121, %v1121
  %v1126 = vadd.f32 %v1122, %v1123
  %v1127 = vadd.f32 %v1126, %v1124
  %v1128 = vadd.f32 %v1127, %v1125
  %v1129 = vrot.slane %v1128, 4
  %v1130 = vadd.f32 %v1128, %v1129
  %v1131 = vrot.slane %v1130, 2
  %v1132 = vadd.f32 %v1130, %v1131
  %v1133 = vrot.slane %v1132, 1
  %v1134 = vadd.f32 %v1132, %v1133
  %1135 = vrot.lane.b32.xlu0 %v1134, 8
  %v1136 = vpop.permute.xlu0 %1135
  %v1137 = vadd.f32 %v1134, %v1136
  %1138 = vrot.lane.b32.xlu0 %v1137, 16
  %v1139 = vpop.permute.xlu0 %1138
  %v1140 = vadd.f32 %v1137, %v1139
  %1141 = vrot.lane.b32.xlu0 %v1140, 32
  %v1142 = vpop.permute.xlu0 %1141
  %v1143 = vadd.f32 %v1140, %v1142
  %1144 = vrot.lane.b32.xlu0 %v1143, 64
  %v1145 = vpop.permute.xlu0 %1144
  %v1146 = vadd.f32 %v1143, %v1145
  %v1147 = vmul.f32 %v1146, %v146
  %v1148 = vadd.f32 %v1147, 1e-05
  %v1149 = vrsqrt.pop %v1148
  %v1150 = vlaneseq
  %v1151 = vshrl.u32 %v1150, 7
  %v1152 = vsub.s32 0, %v1151
  %v1153 = vrot.slane %v1149, %v1152
  %v1154 = vmul.f32 %v1118, %v1153
  %v1155 = vmul.f32 %v1119, %v1153
  %v1156 = vmul.f32 %v1120, %v1153
  %v1157 = vmul.f32 %v1121, %v1153
  %v1158 = vadd.f32 %v1154, 0.0
  %v1159 = vadd.f32 %v1155, 0.0
  %v1160 = vadd.f32 %v1156, 0.0
  %v1161 = vadd.f32 %v1157, 0.0
  %v1162 = vmax.f32 %v351, 0.0
  %v1163 = vmax.f32 %v352, 0.0
  %v1164 = vmax.f32 %v353, 0.0
  %v1165 = vmax.f32 %v354, 0.0
  %v1166 = vrot.slane %v1162, 6
  %v1167 = vrot.slane %v1163, 6
  %v1168 = vrot.slane %v1164, 6
  %v1169 = vrot.slane %v1165, 6
  %vm1170 = vcmp.lt.s32.totalorder %v364, 2
  %v1171 = vsel %vm1170, %v1168, %v1169
  %v1172 = vsel %vm1170, %v1167, %v1168
  %v1173 = vsel %vm1170, %v1166, %v1167
  %v1174 = vsel %vm1170, %v1169, %v1166
  %v1175 = vld [vmem:[%s4] sm:$0xff]
  %v1176 = vld [vmem:[%s4 + $0x8] sm:$0xff]
  %v1177 = vld [vmem:[%s4 + $0x10] sm:$0xff]
  %v1178 = vld [vmem:[%s4 + $0x18] sm:$0xff]
  %1180 = vset.pattern.permute.xlu0 0
  %1181 = vperm.xlu0 %1180, %v1175
  %v1182 = vpop.permute.xlu0 %1181
  %1185 = vset.pattern.permute.xlu0 0
  %1186 = vperm.xlu0 %1185, %v1176
  %v1187 = vpop.permute.xlu0 %1186
  %1190 = vset.pattern.permute.xlu0 0
  %1191 = vperm.xlu0 %1190, %v1177
  %v1192 = vpop.permute.xlu0 %1191
  %1195 = vset.pattern.permute.xlu0 0
  %1196 = vperm.xlu0 %1195, %v1178
  %v1197 = vpop.permute.xlu0 %1196
  %v1199 = vmul.f32 %v1174, %v1182
  %v1200 = vmul.f32 %v1173, %v1187
  %v1201 = vmul.f32 %v1172, %v1192
  %v1202 = vmul.f32 %v1171, %v1197
  %1203 = vrot.lane.b32.xlu0 %v1199, 16
  %v1204 = vpop.permute.xlu0 %1203
  %1205 = vrot.lane.b32.xlu0 %v1200, 16
  %v1206 = vpop.permute.xlu0 %1205
  %1207 = vrot.lane.b32.xlu0 %v1201, 16
  %v1208 = vpop.permute.xlu0 %1207
  %1209 = vrot.lane.b32.xlu0 %v1202, 16
  %v1210 = vpop.permute.xlu0 %1209
  %v1211 = vld [vmem:[%s6 + $0x32] sm:$0x1]
  %v1212 = vlaneseq
  %v1213 = vshrl.u32 %v1212, 7
  %v1214 = vsub.s32 0, %v1213
  %v1215 = vrot.slane %v1211, %v1214
  %v1216 = vmul.f32 %v1204, %v1215
  %v1217 = vmul.f32 %v1206, %v1215
  %v1218 = vmul.f32 %v1208, %v1215
  %v1219 = vmul.f32 %v1210, %v1215
  %v1220 = vadd.f32 %v1216, 0.0
  %v1221 = vadd.f32 %v1217, 0.0
  %v1222 = vadd.f32 %v1218, 0.0
  %v1223 = vadd.f32 %v1219, 0.0
  %1224 = vrot.lane.b32.xlu0 %v1199, 8
  %v1225 = vpop.permute.xlu0 %1224
  %1226 = vrot.lane.b32.xlu0 %v1200, 8
  %v1227 = vpop.permute.xlu0 %1226
  %1228 = vrot.lane.b32.xlu0 %v1201, 8
  %v1229 = vpop.permute.xlu0 %1228
  %1230 = vrot.lane.b32.xlu0 %v1202, 8
  %v1231 = vpop.permute.xlu0 %1230
  %v1232 = vld [vmem:[%s6 + $0x33] sm:$0x1]
  %v1233 = vlaneseq
  %v1234 = vshrl.u32 %v1233, 7
  %v1235 = vsub.s32 0, %v1234
  %v1236 = vrot.slane %v1232, %v1235
  %v1237 = vmul.f32 %v1225, %v1236
  %v1238 = vmul.f32 %v1227, %v1236
  %v1239 = vmul.f32 %v1229, %v1236
  %v1240 = vmul.f32 %v1231, %v1236
  %v1241 = vadd.f32 %v1220, %v1237
  %v1242 = vadd.f32 %v1221, %v1238
  %v1243 = vadd.f32 %v1222, %v1239
  %v1244 = vadd.f32 %v1223, %v1240
  %v1245 = vld [vmem:[%s6 + $0x34] sm:$0x1]
  %v1246 = vlaneseq
  %v1247 = vshrl.u32 %v1246, 7
  %v1248 = vsub.s32 0, %v1247
  %v1249 = vrot.slane %v1245, %v1248
  %v1250 = vmul.f32 %v1199, %v1249
  %v1251 = vmul.f32 %v1200, %v1249
  %v1252 = vmul.f32 %v1201, %v1249
  %v1253 = vmul.f32 %v1202, %v1249
  %v1254 = vadd.f32 %v1241, %v1250
  %v1255 = vadd.f32 %v1242, %v1251
  %v1256 = vadd.f32 %v1243, %v1252
  %v1257 = vadd.f32 %v1244, %v1253
  %1258 = vrot.lane.b32.xlu0 %v1199, 120
  %v1259 = vpop.permute.xlu0 %1258
  %1260 = vrot.lane.b32.xlu0 %v1200, 120
  %v1261 = vpop.permute.xlu0 %1260
  %1262 = vrot.lane.b32.xlu0 %v1201, 120
  %v1263 = vpop.permute.xlu0 %1262
  %1264 = vrot.lane.b32.xlu0 %v1202, 120
  %v1265 = vpop.permute.xlu0 %1264
  %v1266 = vld [vmem:[%s6 + $0x35] sm:$0x1]
  %v1267 = vlaneseq
  %v1268 = vshrl.u32 %v1267, 7
  %v1269 = vsub.s32 0, %v1268
  %v1270 = vrot.slane %v1266, %v1269
  %v1271 = vmul.f32 %v1259, %v1270
  %v1272 = vmul.f32 %v1261, %v1270
  %v1273 = vmul.f32 %v1263, %v1270
  %v1274 = vmul.f32 %v1265, %v1270
  %v1275 = vadd.f32 %v1254, %v1271
  %v1276 = vadd.f32 %v1255, %v1272
  %v1277 = vadd.f32 %v1256, %v1273
  %v1278 = vadd.f32 %v1257, %v1274
  %1279 = vrot.lane.b32.xlu0 %v1199, 112
  %v1280 = vpop.permute.xlu0 %1279
  %1281 = vrot.lane.b32.xlu0 %v1200, 112
  %v1282 = vpop.permute.xlu0 %1281
  %1283 = vrot.lane.b32.xlu0 %v1201, 112
  %v1284 = vpop.permute.xlu0 %1283
  %1285 = vrot.lane.b32.xlu0 %v1202, 112
  %v1286 = vpop.permute.xlu0 %1285
  %v1287 = vld [vmem:[%s6 + $0x36] sm:$0x1]
  %v1288 = vlaneseq
  %v1289 = vshrl.u32 %v1288, 7
  %v1290 = vsub.s32 0, %v1289
  %v1291 = vrot.slane %v1287, %v1290
  %v1292 = vmul.f32 %v1280, %v1291
  %v1293 = vmul.f32 %v1282, %v1291
  %v1294 = vmul.f32 %v1284, %v1291
  %v1295 = vmul.f32 %v1286, %v1291
  %v1296 = vadd.f32 %v1275, %v1292
  %v1297 = vadd.f32 %v1276, %v1293
  %v1298 = vadd.f32 %v1277, %v1294
  %v1299 = vadd.f32 %v1278, %v1295
  %v1300 = vrot.slane %v1162, 7
  %v1301 = vrot.slane %v1163, 7
  %v1302 = vrot.slane %v1164, 7
  %v1303 = vrot.slane %v1165, 7
  %v1304 = vsel %vm365, %v1302, %v1303
  %v1305 = vsel %vm365, %v1301, %v1302
  %v1306 = vsel %vm365, %v1300, %v1301
  %v1307 = vsel %vm365, %v1303, %v1300
  %v1308 = vmul.f32 %v1307, %v378
  %v1309 = vmul.f32 %v1306, %v383
  %v1310 = vmul.f32 %v1305, %v388
  %v1311 = vmul.f32 %v1304, %v393
  %1312 = vrot.lane.b32.xlu0 %v1308, 16
  %v1313 = vpop.permute.xlu0 %1312
  %1314 = vrot.lane.b32.xlu0 %v1309, 16
  %v1315 = vpop.permute.xlu0 %1314
  %1316 = vrot.lane.b32.xlu0 %v1310, 16
  %v1317 = vpop.permute.xlu0 %1316
  %1318 = vrot.lane.b32.xlu0 %v1311, 16
  %v1319 = vpop.permute.xlu0 %1318
  %v1320 = vld [vmem:[%s6 + $0x37] sm:$0x1]
  %v1321 = vlaneseq
  %v1322 = vshrl.u32 %v1321, 7
  %v1323 = vsub.s32 0, %v1322
  %v1324 = vrot.slane %v1320, %v1323
  %v1325 = vmul.f32 %v1313, %v1324
  %v1326 = vmul.f32 %v1315, %v1324
  %v1327 = vmul.f32 %v1317, %v1324
  %v1328 = vmul.f32 %v1319, %v1324
  %v1329 = vadd.f32 %v1296, %v1325
  %v1330 = vadd.f32 %v1297, %v1326
  %v1331 = vadd.f32 %v1298, %v1327
  %v1332 = vadd.f32 %v1299, %v1328
  %1333 = vrot.lane.b32.xlu0 %v1308, 8
  %v1334 = vpop.permute.xlu0 %1333
  %1335 = vrot.lane.b32.xlu0 %v1309, 8
  %v1336 = vpop.permute.xlu0 %1335
  %1337 = vrot.lane.b32.xlu0 %v1310, 8
  %v1338 = vpop.permute.xlu0 %1337
  %1339 = vrot.lane.b32.xlu0 %v1311, 8
  %v1340 = vpop.permute.xlu0 %1339
  %v1341 = vld [vmem:[%s6 + $0x38] sm:$0x1]
  %v1342 = vlaneseq
  %v1343 = vshrl.u32 %v1342, 7
  %v1344 = vsub.s32 0, %v1343
  %v1345 = vrot.slane %v1341, %v1344
  %v1346 = vmul.f32 %v1334, %v1345
  %v1347 = vmul.f32 %v1336, %v1345
  %v1348 = vmul.f32 %v1338, %v1345
  %v1349 = vmul.f32 %v1340, %v1345
  %v1350 = vadd.f32 %v1329, %v1346
  %v1351 = vadd.f32 %v1330, %v1347
  %v1352 = vadd.f32 %v1331, %v1348
  %v1353 = vadd.f32 %v1332, %v1349
  %v1354 = vld [vmem:[%s6 + $0x39] sm:$0x1]
  %v1355 = vlaneseq
  %v1356 = vshrl.u32 %v1355, 7
  %v1357 = vsub.s32 0, %v1356
  %v1358 = vrot.slane %v1354, %v1357
  %v1359 = vmul.f32 %v1308, %v1358
  %v1360 = vmul.f32 %v1309, %v1358
  %v1361 = vmul.f32 %v1310, %v1358
  %v1362 = vmul.f32 %v1311, %v1358
  %v1363 = vadd.f32 %v1350, %v1359
  %v1364 = vadd.f32 %v1351, %v1360
  %v1365 = vadd.f32 %v1352, %v1361
  %v1366 = vadd.f32 %v1353, %v1362
  %1367 = vrot.lane.b32.xlu0 %v1308, 120
  %v1368 = vpop.permute.xlu0 %1367
  %1369 = vrot.lane.b32.xlu0 %v1309, 120
  %v1370 = vpop.permute.xlu0 %1369
  %1371 = vrot.lane.b32.xlu0 %v1310, 120
  %v1372 = vpop.permute.xlu0 %1371
  %1373 = vrot.lane.b32.xlu0 %v1311, 120
  %v1374 = vpop.permute.xlu0 %1373
  %v1375 = vld [vmem:[%s6 + $0x3a] sm:$0x1]
  %v1376 = vlaneseq
  %v1377 = vshrl.u32 %v1376, 7
  %v1378 = vsub.s32 0, %v1377
  %v1379 = vrot.slane %v1375, %v1378
  %v1380 = vmul.f32 %v1368, %v1379
  %v1381 = vmul.f32 %v1370, %v1379
  %v1382 = vmul.f32 %v1372, %v1379
  %v1383 = vmul.f32 %v1374, %v1379
  %v1384 = vadd.f32 %v1363, %v1380
  %v1385 = vadd.f32 %v1364, %v1381
  %v1386 = vadd.f32 %v1365, %v1382
  %v1387 = vadd.f32 %v1366, %v1383
  %1388 = vrot.lane.b32.xlu0 %v1308, 112
  %v1389 = vpop.permute.xlu0 %1388
  %1390 = vrot.lane.b32.xlu0 %v1309, 112
  %v1391 = vpop.permute.xlu0 %1390
  %1392 = vrot.lane.b32.xlu0 %v1310, 112
  %v1393 = vpop.permute.xlu0 %1392
  %1394 = vrot.lane.b32.xlu0 %v1311, 112
  %v1395 = vpop.permute.xlu0 %1394
  %v1396 = vld [vmem:[%s6 + $0x3b] sm:$0x1]
  %v1397 = vlaneseq
  %v1398 = vshrl.u32 %v1397, 7
  %v1399 = vsub.s32 0, %v1398
  %v1400 = vrot.slane %v1396, %v1399
  %v1401 = vmul.f32 %v1389, %v1400
  %v1402 = vmul.f32 %v1391, %v1400
  %v1403 = vmul.f32 %v1393, %v1400
  %v1404 = vmul.f32 %v1395, %v1400
  %v1405 = vadd.f32 %v1384, %v1401
  %v1406 = vadd.f32 %v1385, %v1402
  %v1407 = vadd.f32 %v1386, %v1403
  %v1408 = vadd.f32 %v1387, %v1404
  %1409 = vrot.lane.b32.xlu0 %v1162, 16
  %v1410 = vpop.permute.xlu0 %1409
  %1411 = vrot.lane.b32.xlu0 %v1163, 16
  %v1412 = vpop.permute.xlu0 %1411
  %1413 = vrot.lane.b32.xlu0 %v1164, 16
  %v1414 = vpop.permute.xlu0 %1413
  %1415 = vrot.lane.b32.xlu0 %v1165, 16
  %v1416 = vpop.permute.xlu0 %1415
  %v1417 = vld [vmem:[%s6 + $0x3c] sm:$0x1]
  %v1418 = vlaneseq
  %v1419 = vshrl.u32 %v1418, 7
  %v1420 = vsub.s32 0, %v1419
  %v1421 = vrot.slane %v1417, %v1420
  %v1422 = vmul.f32 %v1410, %v1421
  %v1423 = vmul.f32 %v1412, %v1421
  %v1424 = vmul.f32 %v1414, %v1421
  %v1425 = vmul.f32 %v1416, %v1421
  %v1426 = vadd.f32 %v1405, %v1422
  %v1427 = vadd.f32 %v1406, %v1423
  %v1428 = vadd.f32 %v1407, %v1424
  %v1429 = vadd.f32 %v1408, %v1425
  %1430 = vrot.lane.b32.xlu0 %v1162, 8
  %v1431 = vpop.permute.xlu0 %1430
  %1432 = vrot.lane.b32.xlu0 %v1163, 8
  %v1433 = vpop.permute.xlu0 %1432
  %1434 = vrot.lane.b32.xlu0 %v1164, 8
  %v1435 = vpop.permute.xlu0 %1434
  %1436 = vrot.lane.b32.xlu0 %v1165, 8
  %v1437 = vpop.permute.xlu0 %1436
  %v1438 = vld [vmem:[%s6 + $0x3d] sm:$0x1]
  %v1439 = vlaneseq
  %v1440 = vshrl.u32 %v1439, 7
  %v1441 = vsub.s32 0, %v1440
  %v1442 = vrot.slane %v1438, %v1441
  %v1443 = vmul.f32 %v1431, %v1442
  %v1444 = vmul.f32 %v1433, %v1442
  %v1445 = vmul.f32 %v1435, %v1442
  %v1446 = vmul.f32 %v1437, %v1442
  %v1447 = vadd.f32 %v1426, %v1443
  %v1448 = vadd.f32 %v1427, %v1444
  %v1449 = vadd.f32 %v1428, %v1445
  %v1450 = vadd.f32 %v1429, %v1446
  %v1451 = vld [vmem:[%s6 + $0x3e] sm:$0x1]
  %v1452 = vlaneseq
  %v1453 = vshrl.u32 %v1452, 7
  %v1454 = vsub.s32 0, %v1453
  %v1455 = vrot.slane %v1451, %v1454
  %v1456 = vmul.f32 %v1162, %v1455
  %v1457 = vmul.f32 %v1163, %v1455
  %v1458 = vmul.f32 %v1164, %v1455
  %v1459 = vmul.f32 %v1165, %v1455
  %v1460 = vadd.f32 %v1447, %v1456
  %v1461 = vadd.f32 %v1448, %v1457
  %v1462 = vadd.f32 %v1449, %v1458
  %v1463 = vadd.f32 %v1450, %v1459
  %1464 = vrot.lane.b32.xlu0 %v1162, 120
  %v1465 = vpop.permute.xlu0 %1464
  %1466 = vrot.lane.b32.xlu0 %v1163, 120
  %v1467 = vpop.permute.xlu0 %1466
  %1468 = vrot.lane.b32.xlu0 %v1164, 120
  %v1469 = vpop.permute.xlu0 %1468
  %1470 = vrot.lane.b32.xlu0 %v1165, 120
  %v1471 = vpop.permute.xlu0 %1470
  %v1472 = vld [vmem:[%s6 + $0x3f] sm:$0x1]
  %v1473 = vlaneseq
  %v1474 = vshrl.u32 %v1473, 7
  %v1475 = vsub.s32 0, %v1474
  %v1476 = vrot.slane %v1472, %v1475
  %v1477 = vmul.f32 %v1465, %v1476
  %v1478 = vmul.f32 %v1467, %v1476
  %v1479 = vmul.f32 %v1469, %v1476
  %v1480 = vmul.f32 %v1471, %v1476
  %v1481 = vadd.f32 %v1460, %v1477
  %v1482 = vadd.f32 %v1461, %v1478
  %v1483 = vadd.f32 %v1462, %v1479
  %v1484 = vadd.f32 %v1463, %v1480
  %1485 = vrot.lane.b32.xlu0 %v1162, 112
  %v1486 = vpop.permute.xlu0 %1485
  %1487 = vrot.lane.b32.xlu0 %v1163, 112
  %v1488 = vpop.permute.xlu0 %1487
  %1489 = vrot.lane.b32.xlu0 %v1164, 112
  %v1490 = vpop.permute.xlu0 %1489
  %1491 = vrot.lane.b32.xlu0 %v1165, 112
  %v1492 = vpop.permute.xlu0 %1491
  %v1493 = vld [vmem:[%s6 + $0x40] sm:$0x1]
  %v1494 = vlaneseq
  %v1495 = vshrl.u32 %v1494, 7
  %v1496 = vsub.s32 0, %v1495
  %v1497 = vrot.slane %v1493, %v1496
  %v1498 = vmul.f32 %v1486, %v1497
  %v1499 = vmul.f32 %v1488, %v1497
  %v1500 = vmul.f32 %v1490, %v1497
  %v1501 = vmul.f32 %v1492, %v1497
  %v1502 = vadd.f32 %v1481, %v1498
  %v1503 = vadd.f32 %v1482, %v1499
  %v1504 = vadd.f32 %v1483, %v1500
  %v1505 = vadd.f32 %v1484, %v1501
  %v1506 = vrot.slane %v1162, 1
  %v1507 = vrot.slane %v1163, 1
  %v1508 = vrot.slane %v1164, 1
  %v1509 = vrot.slane %v1165, 1
  %v1510 = vsel %vm513, %v1508, %v1509
  %v1511 = vsel %vm513, %v1507, %v1508
  %v1512 = vsel %vm513, %v1506, %v1507
  %v1513 = vsel %vm513, %v1509, %v1506
  %v1514 = vmul.f32 %v1512, %v526
  %v1515 = vmul.f32 %v1511, %v531
  %v1516 = vmul.f32 %v1510, %v536
  %v1517 = vmul.f32 %v1513, %v541
  %1518 = vrot.lane.b32.xlu0 %v1514, 16
  %v1519 = vpop.permute.xlu0 %1518
  %1520 = vrot.lane.b32.xlu0 %v1515, 16
  %v1521 = vpop.permute.xlu0 %1520
  %1522 = vrot.lane.b32.xlu0 %v1516, 16
  %v1523 = vpop.permute.xlu0 %1522
  %1524 = vrot.lane.b32.xlu0 %v1517, 16
  %v1525 = vpop.permute.xlu0 %1524
  %v1526 = vld [vmem:[%s6 + $0x41] sm:$0x1]
  %v1527 = vlaneseq
  %v1528 = vshrl.u32 %v1527, 7
  %v1529 = vsub.s32 0, %v1528
  %v1530 = vrot.slane %v1526, %v1529
  %v1531 = vmul.f32 %v1519, %v1530
  %v1532 = vmul.f32 %v1521, %v1530
  %v1533 = vmul.f32 %v1523, %v1530
  %v1534 = vmul.f32 %v1525, %v1530
  %v1535 = vadd.f32 %v1502, %v1531
  %v1536 = vadd.f32 %v1503, %v1532
  %v1537 = vadd.f32 %v1504, %v1533
  %v1538 = vadd.f32 %v1505, %v1534
  %1539 = vrot.lane.b32.xlu0 %v1514, 8
  %v1540 = vpop.permute.xlu0 %1539
  %1541 = vrot.lane.b32.xlu0 %v1515, 8
  %v1542 = vpop.permute.xlu0 %1541
  %1543 = vrot.lane.b32.xlu0 %v1516, 8
  %v1544 = vpop.permute.xlu0 %1543
  %1545 = vrot.lane.b32.xlu0 %v1517, 8
  %v1546 = vpop.permute.xlu0 %1545
  %v1547 = vld [vmem:[%s6 + $0x42] sm:$0x1]
  %v1548 = vlaneseq
  %v1549 = vshrl.u32 %v1548, 7
  %v1550 = vsub.s32 0, %v1549
  %v1551 = vrot.slane %v1547, %v1550
  %v1552 = vmul.f32 %v1540, %v1551
  %v1553 = vmul.f32 %v1542, %v1551
  %v1554 = vmul.f32 %v1544, %v1551
  %v1555 = vmul.f32 %v1546, %v1551
  %v1556 = vadd.f32 %v1535, %v1552
  %v1557 = vadd.f32 %v1536, %v1553
  %v1558 = vadd.f32 %v1537, %v1554
  %v1559 = vadd.f32 %v1538, %v1555
  %v1560 = vld [vmem:[%s6 + $0x43] sm:$0x1]
  %v1561 = vlaneseq
  %v1562 = vshrl.u32 %v1561, 7
  %v1563 = vsub.s32 0, %v1562
  %v1564 = vrot.slane %v1560, %v1563
  %v1565 = vmul.f32 %v1514, %v1564
  %v1566 = vmul.f32 %v1515, %v1564
  %v1567 = vmul.f32 %v1516, %v1564
  %v1568 = vmul.f32 %v1517, %v1564
  %v1569 = vadd.f32 %v1556, %v1565
  %v1570 = vadd.f32 %v1557, %v1566
  %v1571 = vadd.f32 %v1558, %v1567
  %v1572 = vadd.f32 %v1559, %v1568
  %1573 = vrot.lane.b32.xlu0 %v1514, 120
  %v1574 = vpop.permute.xlu0 %1573
  %1575 = vrot.lane.b32.xlu0 %v1515, 120
  %v1576 = vpop.permute.xlu0 %1575
  %1577 = vrot.lane.b32.xlu0 %v1516, 120
  %v1578 = vpop.permute.xlu0 %1577
  %1579 = vrot.lane.b32.xlu0 %v1517, 120
  %v1580 = vpop.permute.xlu0 %1579
  %v1581 = vld [vmem:[%s6 + $0x44] sm:$0x1]
  %v1582 = vlaneseq
  %v1583 = vshrl.u32 %v1582, 7
  %v1584 = vsub.s32 0, %v1583
  %v1585 = vrot.slane %v1581, %v1584
  %v1586 = vmul.f32 %v1574, %v1585
  %v1587 = vmul.f32 %v1576, %v1585
  %v1588 = vmul.f32 %v1578, %v1585
  %v1589 = vmul.f32 %v1580, %v1585
  %v1590 = vadd.f32 %v1569, %v1586
  %v1591 = vadd.f32 %v1570, %v1587
  %v1592 = vadd.f32 %v1571, %v1588
  %v1593 = vadd.f32 %v1572, %v1589
  %1594 = vrot.lane.b32.xlu0 %v1514, 112
  %v1595 = vpop.permute.xlu0 %1594
  %1596 = vrot.lane.b32.xlu0 %v1515, 112
  %v1597 = vpop.permute.xlu0 %1596
  %1598 = vrot.lane.b32.xlu0 %v1516, 112
  %v1599 = vpop.permute.xlu0 %1598
  %1600 = vrot.lane.b32.xlu0 %v1517, 112
  %v1601 = vpop.permute.xlu0 %1600
  %v1602 = vld [vmem:[%s6 + $0x45] sm:$0x1]
  %v1603 = vlaneseq
  %v1604 = vshrl.u32 %v1603, 7
  %v1605 = vsub.s32 0, %v1604
  %v1606 = vrot.slane %v1602, %v1605
  %v1607 = vmul.f32 %v1595, %v1606
  %v1608 = vmul.f32 %v1597, %v1606
  %v1609 = vmul.f32 %v1599, %v1606
  %v1610 = vmul.f32 %v1601, %v1606
  %v1611 = vadd.f32 %v1590, %v1607
  %v1612 = vadd.f32 %v1591, %v1608
  %v1613 = vadd.f32 %v1592, %v1609
  %v1614 = vadd.f32 %v1593, %v1610
  %v1615 = vrot.slane %v1162, 2
  %v1616 = vrot.slane %v1163, 2
  %v1617 = vrot.slane %v1164, 2
  %v1618 = vrot.slane %v1165, 2
  %vm1619 = vcmp.lt.s32.totalorder %v364, 6
  %v1620 = vsel %vm1619, %v1617, %v1618
  %v1621 = vsel %vm1619, %v1616, %v1617
  %v1622 = vsel %vm1619, %v1615, %v1616
  %v1623 = vsel %vm1619, %v1618, %v1615
  %s1624 = scalar_lea.vmem %s4, 128
  %v1625 = vld [vmem:[%s1624] sm:$0xff]
  %v1626 = vld [vmem:[%s1624 + $0x8] sm:$0xff]
  %v1627 = vld [vmem:[%s1624 + $0x10] sm:$0xff]
  %v1628 = vld [vmem:[%s1624 + $0x18] sm:$0xff]
  %1630 = vset.pattern.permute.xlu0 0
  %1631 = vperm.xlu0 %1630, %v1625
  %v1632 = vpop.permute.xlu0 %1631
  %1635 = vset.pattern.permute.xlu0 0
  %1636 = vperm.xlu0 %1635, %v1626
  %v1637 = vpop.permute.xlu0 %1636
  %1640 = vset.pattern.permute.xlu0 0
  %1641 = vperm.xlu0 %1640, %v1627
  %v1642 = vpop.permute.xlu0 %1641
  %1645 = vset.pattern.permute.xlu0 0
  %1646 = vperm.xlu0 %1645, %v1628
  %v1647 = vpop.permute.xlu0 %1646
  %v1649 = vmul.f32 %v1622, %v1632
  %v1650 = vmul.f32 %v1621, %v1637
  %v1651 = vmul.f32 %v1620, %v1642
  %v1652 = vmul.f32 %v1623, %v1647
  %1653 = vrot.lane.b32.xlu0 %v1649, 16
  %v1654 = vpop.permute.xlu0 %1653
  %1655 = vrot.lane.b32.xlu0 %v1650, 16
  %v1656 = vpop.permute.xlu0 %1655
  %1657 = vrot.lane.b32.xlu0 %v1651, 16
  %v1658 = vpop.permute.xlu0 %1657
  %1659 = vrot.lane.b32.xlu0 %v1652, 16
  %v1660 = vpop.permute.xlu0 %1659
  %v1661 = vld [vmem:[%s6 + $0x46] sm:$0x1]
  %v1662 = vlaneseq
  %v1663 = vshrl.u32 %v1662, 7
  %v1664 = vsub.s32 0, %v1663
  %v1665 = vrot.slane %v1661, %v1664
  %v1666 = vmul.f32 %v1654, %v1665
  %v1667 = vmul.f32 %v1656, %v1665
  %v1668 = vmul.f32 %v1658, %v1665
  %v1669 = vmul.f32 %v1660, %v1665
  %v1670 = vadd.f32 %v1611, %v1666
  %v1671 = vadd.f32 %v1612, %v1667
  %v1672 = vadd.f32 %v1613, %v1668
  %v1673 = vadd.f32 %v1614, %v1669
  %1674 = vrot.lane.b32.xlu0 %v1649, 8
  %v1675 = vpop.permute.xlu0 %1674
  %1676 = vrot.lane.b32.xlu0 %v1650, 8
  %v1677 = vpop.permute.xlu0 %1676
  %1678 = vrot.lane.b32.xlu0 %v1651, 8
  %v1679 = vpop.permute.xlu0 %1678
  %1680 = vrot.lane.b32.xlu0 %v1652, 8
  %v1681 = vpop.permute.xlu0 %1680
  %v1682 = vld [vmem:[%s6 + $0x47] sm:$0x1]
  %v1683 = vlaneseq
  %v1684 = vshrl.u32 %v1683, 7
  %v1685 = vsub.s32 0, %v1684
  %v1686 = vrot.slane %v1682, %v1685
  %v1687 = vmul.f32 %v1675, %v1686
  %v1688 = vmul.f32 %v1677, %v1686
  %v1689 = vmul.f32 %v1679, %v1686
  %v1690 = vmul.f32 %v1681, %v1686
  %v1691 = vadd.f32 %v1670, %v1687
  %v1692 = vadd.f32 %v1671, %v1688
  %v1693 = vadd.f32 %v1672, %v1689
  %v1694 = vadd.f32 %v1673, %v1690
  %v1695 = vld [vmem:[%s6 + $0x48] sm:$0x1]
  %v1696 = vlaneseq
  %v1697 = vshrl.u32 %v1696, 7
  %v1698 = vsub.s32 0, %v1697
  %v1699 = vrot.slane %v1695, %v1698
  %v1700 = vmul.f32 %v1649, %v1699
  %v1701 = vmul.f32 %v1650, %v1699
  %v1702 = vmul.f32 %v1651, %v1699
  %v1703 = vmul.f32 %v1652, %v1699
  %v1704 = vadd.f32 %v1691, %v1700
  %v1705 = vadd.f32 %v1692, %v1701
  %v1706 = vadd.f32 %v1693, %v1702
  %v1707 = vadd.f32 %v1694, %v1703
  %1708 = vrot.lane.b32.xlu0 %v1649, 120
  %v1709 = vpop.permute.xlu0 %1708
  %1710 = vrot.lane.b32.xlu0 %v1650, 120
  %v1711 = vpop.permute.xlu0 %1710
  %1712 = vrot.lane.b32.xlu0 %v1651, 120
  %v1713 = vpop.permute.xlu0 %1712
  %1714 = vrot.lane.b32.xlu0 %v1652, 120
  %v1715 = vpop.permute.xlu0 %1714
  %v1716 = vld [vmem:[%s6 + $0x49] sm:$0x1]
  %v1717 = vlaneseq
  %v1718 = vshrl.u32 %v1717, 7
  %v1719 = vsub.s32 0, %v1718
  %v1720 = vrot.slane %v1716, %v1719
  %v1721 = vmul.f32 %v1709, %v1720
  %v1722 = vmul.f32 %v1711, %v1720
  %v1723 = vmul.f32 %v1713, %v1720
  %v1724 = vmul.f32 %v1715, %v1720
  %v1725 = vadd.f32 %v1704, %v1721
  %v1726 = vadd.f32 %v1705, %v1722
  %v1727 = vadd.f32 %v1706, %v1723
  %v1728 = vadd.f32 %v1707, %v1724
  %1729 = vrot.lane.b32.xlu0 %v1649, 112
  %v1730 = vpop.permute.xlu0 %1729
  %1731 = vrot.lane.b32.xlu0 %v1650, 112
  %v1732 = vpop.permute.xlu0 %1731
  %1733 = vrot.lane.b32.xlu0 %v1651, 112
  %v1734 = vpop.permute.xlu0 %1733
  %1735 = vrot.lane.b32.xlu0 %v1652, 112
  %v1736 = vpop.permute.xlu0 %1735
  %v1737 = vld [vmem:[%s6 + $0x4a] sm:$0x1]
  %v1738 = vlaneseq
  %v1739 = vshrl.u32 %v1738, 7
  %v1740 = vsub.s32 0, %v1739
  %v1741 = vrot.slane %v1737, %v1740
  %v1742 = vmul.f32 %v1730, %v1741
  %v1743 = vmul.f32 %v1732, %v1741
  %v1744 = vmul.f32 %v1734, %v1741
  %v1745 = vmul.f32 %v1736, %v1741
  %v1746 = vadd.f32 %v1725, %v1742
  %v1747 = vadd.f32 %v1726, %v1743
  %v1748 = vadd.f32 %v1727, %v1744
  %v1749 = vadd.f32 %v1728, %v1745
  %v1750 = vpack.c.bf16 %v1747, %v1746
  %v1751 = vpack.c.bf16 %v1749, %v1748
  %s1752 = scalar_lea.vmem %s5, 128
  %v1753 = vld [vmem:[%s1752] sm:$0xf]
  %v1754 = vld [vmem:[%s1752 + $0x4] sm:$0xf]
  %v1755 = vld [vmem:[%s1752 + $0x8] sm:$0xf]
  %v1756 = vld [vmem:[%s1752 + $0xc] sm:$0xf]
  %v1757 = vld [vmem:[%s1752 + $0x10] sm:$0xf]
  %v1758 = vld [vmem:[%s1752 + $0x14] sm:$0xf]
  %v1759 = vld [vmem:[%s1752 + $0x18] sm:$0xf]
  %v1760 = vld [vmem:[%s1752 + $0x1c] sm:$0xf]
  %v1761 = vld [vmem:[%s1752 + $0x20] sm:$0xf]
  %v1762 = vld [vmem:[%s1752 + $0x24] sm:$0xf]
  %v1763 = vld [vmem:[%s1752 + $0x28] sm:$0xf]
  %v1764 = vld [vmem:[%s1752 + $0x2c] sm:$0xf]
  %v1765 = vld [vmem:[%s1752 + $0x30] sm:$0xf]
  %v1766 = vld [vmem:[%s1752 + $0x34] sm:$0xf]
  %v1767 = vld [vmem:[%s1752 + $0x38] sm:$0xf]
  %v1768 = vld [vmem:[%s1752 + $0x3c] sm:$0xf]
  %v1785 = vunpack.c.l.b16 %v1753
  %v1786 = vunpack.c.l.b16 %v1754
  %v1787 = vunpack.c.l.b16 %v1755
  %v1788 = vunpack.c.l.b16 %v1756
  %v1789 = vunpack.c.l.b16 %v1757
  %v1790 = vunpack.c.l.b16 %v1758
  %v1791 = vunpack.c.l.b16 %v1759
  %v1792 = vunpack.c.l.b16 %v1760
  %v1793 = vunpack.c.l.b16 %v1761
  %v1794 = vunpack.c.l.b16 %v1762
  %v1795 = vunpack.c.l.b16 %v1763
  %v1796 = vunpack.c.l.b16 %v1764
  %v1797 = vunpack.c.l.b16 %v1765
  %v1798 = vunpack.c.l.b16 %v1766
  %v1799 = vunpack.c.l.b16 %v1767
  %v1800 = vunpack.c.l.b16 %v1768
  %v1801 = vpack.c.b16 %v1786, %v1785
  %v1802 = vpack.c.b16 %v1788, %v1787
  %v1803 = vpack.c.b16 %v1790, %v1789
  %v1804 = vpack.c.b16 %v1792, %v1791
  %v1805 = vpack.c.b16 %v1794, %v1793
  %v1806 = vpack.c.b16 %v1796, %v1795
  %v1807 = vpack.c.b16 %v1798, %v1797
  %v1808 = vpack.c.b16 %v1800, %v1799
  %1817 = vmatprep.subr.bf16.mxu0 0
  %1818 = vmatpush1.bf16.msra.mxu0 %v1801
  %1819 = vmatprep.subr.bf16.mxu0 0
  %1820 = vmatpush1.bf16.msra.mxu0 %v1802
  %1821 = vmatprep.subr.bf16.mxu0 0
  %1822 = vmatpush1.bf16.msra.mxu0 %v1803
  %1823 = vmatprep.subr.bf16.mxu0 0
  %1824 = vmatpush1.bf16.msra.mxu0 %v1804
  %1825 = vmatprep.subr.bf16.mxu0 0
  %1826 = vmatpush1.bf16.msra.mxu0 %v1805
  %1827 = vmatprep.subr.bf16.mxu0 0
  %1828 = vmatpush1.bf16.msra.mxu0 %v1806
  %1829 = vmatprep.subr.bf16.mxu0 0
  %1830 = vmatpush1.bf16.msra.mxu0 %v1807
  %1831 = vmatprep.subr.bf16.mxu0 0
  %1832 = vmatpush1.bf16.msra.mxu0 %v1808
  %1833 = vmatprep.subr.bf16.mxu0 0
  %1834 = vmatpush1.bf16.msra.mxu0 0
  %1835 = vmatprep.subr.bf16.mxu0 0
  %1836 = vmatpush1.bf16.msra.mxu0 0
  %1837 = vmatprep.subr.bf16.mxu0 0
  %1838 = vmatpush1.bf16.msra.mxu0 0
  %1839 = vmatprep.subr.bf16.mxu0 0
  %1840 = vmatpush1.bf16.msra.mxu0 0
  %1841 = vmatprep.subr.bf16.mxu0 0
  %1842 = vmatpush1.bf16.msra.mxu0 0
  %1843 = vmatprep.subr.bf16.mxu0 0
  %1844 = vmatpush1.bf16.msra.mxu0 0
  %1845 = vmatprep.subr.bf16.mxu0 0
  %1846 = vmatpush1.bf16.msra.mxu0 0
  %1847 = vmatprep.subr.bf16.mxu0 0
  %1848 = vmatpush1.bf16.msra.mxu0 0
  %1849 = vmatprep.mubr.bf16.mxu0 0
  %1850 = vmatmul.mubr.bf16.gmra.mrb[0].mxu0 %v1750
  %v1851 = vpop.f32.mrb[0].mxu0
  %v1852 = vadd.f32 0.0, %v1851
  %v1853 = vpop.f32.mrb[0].mxu0
  %v1854 = vpop.f32.mrb[0].mxu0
  %v1855 = vadd.f32 0.0, %v1854
  %v1856 = vpop.f32.mrb[0].mxu0
  %1857 = vmatprep.mubr.bf16.mxu0 0
  %1858 = vmatmul.mubr.bf16.gmra.mrb[0].mxu0 %v1751
  %v1859 = vpop.f32.mrb[0].mxu0
  %v1860 = vadd.f32 0.0, %v1859
  %v1861 = vpop.f32.mrb[0].mxu0
  %v1862 = vpop.f32.mrb[0].mxu0
  %v1863 = vadd.f32 0.0, %v1862
  %v1864 = vpop.f32.mrb[0].mxu0
  %1865 = vdwg.mxu0
  %v1866 = vadd.f32 %v1852, %v1855
  %v1867 = vadd.f32 %v1866, %v1860
  %v1868 = vadd.f32 %v1867, %v1863
  %v1869 = vrot.slane %v1868, 4
  %v1870 = vadd.f32 %v1868, %v1869
  %v1871 = vrot.slane %v1870, 2
  %v1872 = vadd.f32 %v1870, %v1871
  %v1873 = vrot.slane %v1872, 1
  %v1874 = vadd.f32 %v1872, %v1873
  %1875 = vrot.lane.b32.xlu0 %v1874, 8
  %v1876 = vpop.permute.xlu0 %1875
  %v1877 = vadd.f32 %v1874, %v1876
  %1878 = vrot.lane.b32.xlu0 %v1877, 16
  %v1879 = vpop.permute.xlu0 %1878
  %v1880 = vadd.f32 %v1877, %v1879
  %1881 = vrot.lane.b32.xlu0 %v1880, 32
  %v1882 = vpop.permute.xlu0 %1881
  %v1883 = vadd.f32 %v1880, %v1882
  %1884 = vrot.lane.b32.xlu0 %v1883, 64
  %v1885 = vpop.permute.xlu0 %1884
  %v1886 = vadd.f32 %v1883, %v1885
  %v1887 = vmul.f32 %v1886, %v146
  %v1888 = vlaneseq
  %v1889 = vshrl.u32 %v1888, 7
  %v1890 = vsub.s32 0, %v1889
  %v1891 = vrot.slane %v1887, %v1890
  %v1892 = vsub.f32 %v1852, %v1891
  %v1893 = vsub.f32 %v1855, %v1891
  %v1894 = vsub.f32 %v1860, %v1891
  %v1895 = vsub.f32 %v1863, %v1891
  %v1896 = vmul.f32 %v1892, %v1892
  %v1897 = vmul.f32 %v1893, %v1893
  %v1898 = vmul.f32 %v1894, %v1894
  %v1899 = vmul.f32 %v1895, %v1895
  %v1900 = vadd.f32 %v1896, %v1897
  %v1901 = vadd.f32 %v1900, %v1898
  %v1902 = vadd.f32 %v1901, %v1899
  %v1903 = vrot.slane %v1902, 4
  %v1904 = vadd.f32 %v1902, %v1903
  %v1905 = vrot.slane %v1904, 2
  %v1906 = vadd.f32 %v1904, %v1905
  %v1907 = vrot.slane %v1906, 1
  %v1908 = vadd.f32 %v1906, %v1907
  %1909 = vrot.lane.b32.xlu0 %v1908, 8
  %v1910 = vpop.permute.xlu0 %1909
  %v1911 = vadd.f32 %v1908, %v1910
  %1912 = vrot.lane.b32.xlu0 %v1911, 16
  %v1913 = vpop.permute.xlu0 %1912
  %v1914 = vadd.f32 %v1911, %v1913
  %1915 = vrot.lane.b32.xlu0 %v1914, 32
  %v1916 = vpop.permute.xlu0 %1915
  %v1917 = vadd.f32 %v1914, %v1916
  %1918 = vrot.lane.b32.xlu0 %v1917, 64
  %v1919 = vpop.permute.xlu0 %1918
  %v1920 = vadd.f32 %v1917, %v1919
  %v1921 = vmul.f32 %v1920, %v146
  %v1922 = vadd.f32 %v1921, 1e-05
  %v1923 = vrsqrt.pop %v1922
  %v1924 = vlaneseq
  %v1925 = vshrl.u32 %v1924, 7
  %v1926 = vsub.s32 0, %v1925
  %v1927 = vrot.slane %v1923, %v1926
  %v1928 = vmul.f32 %v1892, %v1927
  %v1929 = vmul.f32 %v1893, %v1927
  %v1930 = vmul.f32 %v1894, %v1927
  %v1931 = vmul.f32 %v1895, %v1927
  %v1932 = vmax.f32 %v1928, 0.0
  %v1933 = vmax.f32 %v1929, 0.0
  %v1934 = vmax.f32 %v1930, 0.0
  %v1935 = vmax.f32 %v1931, 0.0
  %v1936 = vrot.slane %v1932, 6
  %v1937 = vrot.slane %v1933, 6
  %v1938 = vrot.slane %v1934, 6
  %v1939 = vrot.slane %v1935, 6
  %v1940 = vsel %vm1170, %v1938, %v1939
  %v1941 = vsel %vm1170, %v1937, %v1938
  %v1942 = vsel %vm1170, %v1936, %v1937
  %v1943 = vsel %vm1170, %v1939, %v1936
  %v1944 = vmul.f32 %v1943, %v1182
  %v1945 = vmul.f32 %v1942, %v1187
  %v1946 = vmul.f32 %v1941, %v1192
  %v1947 = vmul.f32 %v1940, %v1197
  %1948 = vrot.lane.b32.xlu0 %v1944, 16
  %v1949 = vpop.permute.xlu0 %1948
  %1950 = vrot.lane.b32.xlu0 %v1945, 16
  %v1951 = vpop.permute.xlu0 %1950
  %1952 = vrot.lane.b32.xlu0 %v1946, 16
  %v1953 = vpop.permute.xlu0 %1952
  %1954 = vrot.lane.b32.xlu0 %v1947, 16
  %v1955 = vpop.permute.xlu0 %1954
  %v1956 = vld [vmem:[%s6 + $0x4b] sm:$0x1]
  %v1957 = vlaneseq
  %v1958 = vshrl.u32 %v1957, 7
  %v1959 = vsub.s32 0, %v1958
  %v1960 = vrot.slane %v1956, %v1959
  %v1961 = vmul.f32 %v1949, %v1960
  %v1962 = vmul.f32 %v1951, %v1960
  %v1963 = vmul.f32 %v1953, %v1960
  %v1964 = vmul.f32 %v1955, %v1960
  %v1965 = vadd.f32 %v1961, 0.0
  %v1966 = vadd.f32 %v1962, 0.0
  %v1967 = vadd.f32 %v1963, 0.0
  %v1968 = vadd.f32 %v1964, 0.0
  %1969 = vrot.lane.b32.xlu0 %v1944, 8
  %v1970 = vpop.permute.xlu0 %1969
  %1971 = vrot.lane.b32.xlu0 %v1945, 8
  %v1972 = vpop.permute.xlu0 %1971
  %1973 = vrot.lane.b32.xlu0 %v1946, 8
  %v1974 = vpop.permute.xlu0 %1973
  %1975 = vrot.lane.b32.xlu0 %v1947, 8
  %v1976 = vpop.permute.xlu0 %1975
  %v1977 = vld [vmem:[%s6 + $0x4c] sm:$0x1]
  %v1978 = vlaneseq
  %v1979 = vshrl.u32 %v1978, 7
  %v1980 = vsub.s32 0, %v1979
  %v1981 = vrot.slane %v1977, %v1980
  %v1982 = vmul.f32 %v1970, %v1981
  %v1983 = vmul.f32 %v1972, %v1981
  %v1984 = vmul.f32 %v1974, %v1981
  %v1985 = vmul.f32 %v1976, %v1981
  %v1986 = vadd.f32 %v1965, %v1982
  %v1987 = vadd.f32 %v1966, %v1983
  %v1988 = vadd.f32 %v1967, %v1984
  %v1989 = vadd.f32 %v1968, %v1985
  %v1990 = vld [vmem:[%s6 + $0x4d] sm:$0x1]
  %v1991 = vlaneseq
  %v1992 = vshrl.u32 %v1991, 7
  %v1993 = vsub.s32 0, %v1992
  %v1994 = vrot.slane %v1990, %v1993
  %v1995 = vmul.f32 %v1944, %v1994
  %v1996 = vmul.f32 %v1945, %v1994
  %v1997 = vmul.f32 %v1946, %v1994
  %v1998 = vmul.f32 %v1947, %v1994
  %v1999 = vadd.f32 %v1986, %v1995
  %v2000 = vadd.f32 %v1987, %v1996
  %v2001 = vadd.f32 %v1988, %v1997
  %v2002 = vadd.f32 %v1989, %v1998
  %2003 = vrot.lane.b32.xlu0 %v1944, 120
  %v2004 = vpop.permute.xlu0 %2003
  %2005 = vrot.lane.b32.xlu0 %v1945, 120
  %v2006 = vpop.permute.xlu0 %2005
  %2007 = vrot.lane.b32.xlu0 %v1946, 120
  %v2008 = vpop.permute.xlu0 %2007
  %2009 = vrot.lane.b32.xlu0 %v1947, 120
  %v2010 = vpop.permute.xlu0 %2009
  %v2011 = vld [vmem:[%s6 + $0x4e] sm:$0x1]
  %v2012 = vlaneseq
  %v2013 = vshrl.u32 %v2012, 7
  %v2014 = vsub.s32 0, %v2013
  %v2015 = vrot.slane %v2011, %v2014
  %v2016 = vmul.f32 %v2004, %v2015
  %v2017 = vmul.f32 %v2006, %v2015
  %v2018 = vmul.f32 %v2008, %v2015
  %v2019 = vmul.f32 %v2010, %v2015
  %v2020 = vadd.f32 %v1999, %v2016
  %v2021 = vadd.f32 %v2000, %v2017
  %v2022 = vadd.f32 %v2001, %v2018
  %v2023 = vadd.f32 %v2002, %v2019
  %2024 = vrot.lane.b32.xlu0 %v1944, 112
  %v2025 = vpop.permute.xlu0 %2024
  %2026 = vrot.lane.b32.xlu0 %v1945, 112
  %v2027 = vpop.permute.xlu0 %2026
  %2028 = vrot.lane.b32.xlu0 %v1946, 112
  %v2029 = vpop.permute.xlu0 %2028
  %2030 = vrot.lane.b32.xlu0 %v1947, 112
  %v2031 = vpop.permute.xlu0 %2030
  %v2032 = vld [vmem:[%s6 + $0x4f] sm:$0x1]
  %v2033 = vlaneseq
  %v2034 = vshrl.u32 %v2033, 7
  %v2035 = vsub.s32 0, %v2034
  %v2036 = vrot.slane %v2032, %v2035
  %v2037 = vmul.f32 %v2025, %v2036
  %v2038 = vmul.f32 %v2027, %v2036
  %v2039 = vmul.f32 %v2029, %v2036
  %v2040 = vmul.f32 %v2031, %v2036
  %v2041 = vadd.f32 %v2020, %v2037
  %v2042 = vadd.f32 %v2021, %v2038
  %v2043 = vadd.f32 %v2022, %v2039
  %v2044 = vadd.f32 %v2023, %v2040
  %v2045 = vrot.slane %v1932, 7
  %v2046 = vrot.slane %v1933, 7
  %v2047 = vrot.slane %v1934, 7
  %v2048 = vrot.slane %v1935, 7
  %v2049 = vsel %vm365, %v2047, %v2048
  %v2050 = vsel %vm365, %v2046, %v2047
  %v2051 = vsel %vm365, %v2045, %v2046
  %v2052 = vsel %vm365, %v2048, %v2045
  %v2053 = vmul.f32 %v2052, %v378
  %v2054 = vmul.f32 %v2051, %v383
  %v2055 = vmul.f32 %v2050, %v388
  %v2056 = vmul.f32 %v2049, %v393
  %2057 = vrot.lane.b32.xlu0 %v2053, 16
  %v2058 = vpop.permute.xlu0 %2057
  %2059 = vrot.lane.b32.xlu0 %v2054, 16
  %v2060 = vpop.permute.xlu0 %2059
  %2061 = vrot.lane.b32.xlu0 %v2055, 16
  %v2062 = vpop.permute.xlu0 %2061
  %2063 = vrot.lane.b32.xlu0 %v2056, 16
  %v2064 = vpop.permute.xlu0 %2063
  %v2065 = vld [vmem:[%s6 + $0x50] sm:$0x1]
  %v2066 = vlaneseq
  %v2067 = vshrl.u32 %v2066, 7
  %v2068 = vsub.s32 0, %v2067
  %v2069 = vrot.slane %v2065, %v2068
  %v2070 = vmul.f32 %v2058, %v2069
  %v2071 = vmul.f32 %v2060, %v2069
  %v2072 = vmul.f32 %v2062, %v2069
  %v2073 = vmul.f32 %v2064, %v2069
  %v2074 = vadd.f32 %v2041, %v2070
  %v2075 = vadd.f32 %v2042, %v2071
  %v2076 = vadd.f32 %v2043, %v2072
  %v2077 = vadd.f32 %v2044, %v2073
  %2078 = vrot.lane.b32.xlu0 %v2053, 8
  %v2079 = vpop.permute.xlu0 %2078
  %2080 = vrot.lane.b32.xlu0 %v2054, 8
  %v2081 = vpop.permute.xlu0 %2080
  %2082 = vrot.lane.b32.xlu0 %v2055, 8
  %v2083 = vpop.permute.xlu0 %2082
  %2084 = vrot.lane.b32.xlu0 %v2056, 8
  %v2085 = vpop.permute.xlu0 %2084
  %v2086 = vld [vmem:[%s6 + $0x51] sm:$0x1]
  %v2087 = vlaneseq
  %v2088 = vshrl.u32 %v2087, 7
  %v2089 = vsub.s32 0, %v2088
  %v2090 = vrot.slane %v2086, %v2089
  %v2091 = vmul.f32 %v2079, %v2090
  %v2092 = vmul.f32 %v2081, %v2090
  %v2093 = vmul.f32 %v2083, %v2090
  %v2094 = vmul.f32 %v2085, %v2090
  %v2095 = vadd.f32 %v2074, %v2091
  %v2096 = vadd.f32 %v2075, %v2092
  %v2097 = vadd.f32 %v2076, %v2093
  %v2098 = vadd.f32 %v2077, %v2094
  %v2099 = vld [vmem:[%s6 + $0x52] sm:$0x1]
  %v2100 = vlaneseq
  %v2101 = vshrl.u32 %v2100, 7
  %v2102 = vsub.s32 0, %v2101
  %v2103 = vrot.slane %v2099, %v2102
  %v2104 = vmul.f32 %v2053, %v2103
  %v2105 = vmul.f32 %v2054, %v2103
  %v2106 = vmul.f32 %v2055, %v2103
  %v2107 = vmul.f32 %v2056, %v2103
  %v2108 = vadd.f32 %v2095, %v2104
  %v2109 = vadd.f32 %v2096, %v2105
  %v2110 = vadd.f32 %v2097, %v2106
  %v2111 = vadd.f32 %v2098, %v2107
  %2112 = vrot.lane.b32.xlu0 %v2053, 120
  %v2113 = vpop.permute.xlu0 %2112
  %2114 = vrot.lane.b32.xlu0 %v2054, 120
  %v2115 = vpop.permute.xlu0 %2114
  %2116 = vrot.lane.b32.xlu0 %v2055, 120
  %v2117 = vpop.permute.xlu0 %2116
  %2118 = vrot.lane.b32.xlu0 %v2056, 120
  %v2119 = vpop.permute.xlu0 %2118
  %v2120 = vld [vmem:[%s6 + $0x53] sm:$0x1]
  %v2121 = vlaneseq
  %v2122 = vshrl.u32 %v2121, 7
  %v2123 = vsub.s32 0, %v2122
  %v2124 = vrot.slane %v2120, %v2123
  %v2125 = vmul.f32 %v2113, %v2124
  %v2126 = vmul.f32 %v2115, %v2124
  %v2127 = vmul.f32 %v2117, %v2124
  %v2128 = vmul.f32 %v2119, %v2124
  %v2129 = vadd.f32 %v2108, %v2125
  %v2130 = vadd.f32 %v2109, %v2126
  %v2131 = vadd.f32 %v2110, %v2127
  %v2132 = vadd.f32 %v2111, %v2128
  %2133 = vrot.lane.b32.xlu0 %v2053, 112
  %v2134 = vpop.permute.xlu0 %2133
  %2135 = vrot.lane.b32.xlu0 %v2054, 112
  %v2136 = vpop.permute.xlu0 %2135
  %2137 = vrot.lane.b32.xlu0 %v2055, 112
  %v2138 = vpop.permute.xlu0 %2137
  %2139 = vrot.lane.b32.xlu0 %v2056, 112
  %v2140 = vpop.permute.xlu0 %2139
  %v2141 = vld [vmem:[%s6 + $0x54] sm:$0x1]
  %v2142 = vlaneseq
  %v2143 = vshrl.u32 %v2142, 7
  %v2144 = vsub.s32 0, %v2143
  %v2145 = vrot.slane %v2141, %v2144
  %v2146 = vmul.f32 %v2134, %v2145
  %v2147 = vmul.f32 %v2136, %v2145
  %v2148 = vmul.f32 %v2138, %v2145
  %v2149 = vmul.f32 %v2140, %v2145
  %v2150 = vadd.f32 %v2129, %v2146
  %v2151 = vadd.f32 %v2130, %v2147
  %v2152 = vadd.f32 %v2131, %v2148
  %v2153 = vadd.f32 %v2132, %v2149
  %2154 = vrot.lane.b32.xlu0 %v1932, 16
  %v2155 = vpop.permute.xlu0 %2154
  %2156 = vrot.lane.b32.xlu0 %v1933, 16
  %v2157 = vpop.permute.xlu0 %2156
  %2158 = vrot.lane.b32.xlu0 %v1934, 16
  %v2159 = vpop.permute.xlu0 %2158
  %2160 = vrot.lane.b32.xlu0 %v1935, 16
  %v2161 = vpop.permute.xlu0 %2160
  %v2162 = vld [vmem:[%s6 + $0x55] sm:$0x1]
  %v2163 = vlaneseq
  %v2164 = vshrl.u32 %v2163, 7
  %v2165 = vsub.s32 0, %v2164
  %v2166 = vrot.slane %v2162, %v2165
  %v2167 = vmul.f32 %v2155, %v2166
  %v2168 = vmul.f32 %v2157, %v2166
  %v2169 = vmul.f32 %v2159, %v2166
  %v2170 = vmul.f32 %v2161, %v2166
  %v2171 = vadd.f32 %v2150, %v2167
  %v2172 = vadd.f32 %v2151, %v2168
  %v2173 = vadd.f32 %v2152, %v2169
  %v2174 = vadd.f32 %v2153, %v2170
  %2175 = vrot.lane.b32.xlu0 %v1932, 8
  %v2176 = vpop.permute.xlu0 %2175
  %2177 = vrot.lane.b32.xlu0 %v1933, 8
  %v2178 = vpop.permute.xlu0 %2177
  %2179 = vrot.lane.b32.xlu0 %v1934, 8
  %v2180 = vpop.permute.xlu0 %2179
  %2181 = vrot.lane.b32.xlu0 %v1935, 8
  %v2182 = vpop.permute.xlu0 %2181
  %v2183 = vld [vmem:[%s6 + $0x56] sm:$0x1]
  %v2184 = vlaneseq
  %v2185 = vshrl.u32 %v2184, 7
  %v2186 = vsub.s32 0, %v2185
  %v2187 = vrot.slane %v2183, %v2186
  %v2188 = vmul.f32 %v2176, %v2187
  %v2189 = vmul.f32 %v2178, %v2187
  %v2190 = vmul.f32 %v2180, %v2187
  %v2191 = vmul.f32 %v2182, %v2187
  %v2192 = vadd.f32 %v2171, %v2188
  %v2193 = vadd.f32 %v2172, %v2189
  %v2194 = vadd.f32 %v2173, %v2190
  %v2195 = vadd.f32 %v2174, %v2191
  %v2196 = vld [vmem:[%s6 + $0x57] sm:$0x1]
  %v2197 = vlaneseq
  %v2198 = vshrl.u32 %v2197, 7
  %v2199 = vsub.s32 0, %v2198
  %v2200 = vrot.slane %v2196, %v2199
  %v2201 = vmul.f32 %v1932, %v2200
  %v2202 = vmul.f32 %v1933, %v2200
  %v2203 = vmul.f32 %v1934, %v2200
  %v2204 = vmul.f32 %v1935, %v2200
  %v2205 = vadd.f32 %v2192, %v2201
  %v2206 = vadd.f32 %v2193, %v2202
  %v2207 = vadd.f32 %v2194, %v2203
  %v2208 = vadd.f32 %v2195, %v2204
  %2209 = vrot.lane.b32.xlu0 %v1932, 120
  %v2210 = vpop.permute.xlu0 %2209
  %2211 = vrot.lane.b32.xlu0 %v1933, 120
  %v2212 = vpop.permute.xlu0 %2211
  %2213 = vrot.lane.b32.xlu0 %v1934, 120
  %v2214 = vpop.permute.xlu0 %2213
  %2215 = vrot.lane.b32.xlu0 %v1935, 120
  %v2216 = vpop.permute.xlu0 %2215
  %v2217 = vld [vmem:[%s6 + $0x58] sm:$0x1]
  %v2218 = vlaneseq
  %v2219 = vshrl.u32 %v2218, 7
  %v2220 = vsub.s32 0, %v2219
  %v2221 = vrot.slane %v2217, %v2220
  %v2222 = vmul.f32 %v2210, %v2221
  %v2223 = vmul.f32 %v2212, %v2221
  %v2224 = vmul.f32 %v2214, %v2221
  %v2225 = vmul.f32 %v2216, %v2221
  %v2226 = vadd.f32 %v2205, %v2222
  %v2227 = vadd.f32 %v2206, %v2223
  %v2228 = vadd.f32 %v2207, %v2224
  %v2229 = vadd.f32 %v2208, %v2225
  %2230 = vrot.lane.b32.xlu0 %v1932, 112
  %v2231 = vpop.permute.xlu0 %2230
  %2232 = vrot.lane.b32.xlu0 %v1933, 112
  %v2233 = vpop.permute.xlu0 %2232
  %2234 = vrot.lane.b32.xlu0 %v1934, 112
  %v2235 = vpop.permute.xlu0 %2234
  %2236 = vrot.lane.b32.xlu0 %v1935, 112
  %v2237 = vpop.permute.xlu0 %2236
  %v2238 = vld [vmem:[%s6 + $0x59] sm:$0x1]
  %v2239 = vlaneseq
  %v2240 = vshrl.u32 %v2239, 7
  %v2241 = vsub.s32 0, %v2240
  %v2242 = vrot.slane %v2238, %v2241
  %v2243 = vmul.f32 %v2231, %v2242
  %v2244 = vmul.f32 %v2233, %v2242
  %v2245 = vmul.f32 %v2235, %v2242
  %v2246 = vmul.f32 %v2237, %v2242
  %v2247 = vadd.f32 %v2226, %v2243
  %v2248 = vadd.f32 %v2227, %v2244
  %v2249 = vadd.f32 %v2228, %v2245
  %v2250 = vadd.f32 %v2229, %v2246
  %v2251 = vrot.slane %v1932, 1
  %v2252 = vrot.slane %v1933, 1
  %v2253 = vrot.slane %v1934, 1
  %v2254 = vrot.slane %v1935, 1
  %v2255 = vsel %vm513, %v2253, %v2254
  %v2256 = vsel %vm513, %v2252, %v2253
  %v2257 = vsel %vm513, %v2251, %v2252
  %v2258 = vsel %vm513, %v2254, %v2251
  %v2259 = vmul.f32 %v2257, %v526
  %v2260 = vmul.f32 %v2256, %v531
  %v2261 = vmul.f32 %v2255, %v536
  %v2262 = vmul.f32 %v2258, %v541
  %2263 = vrot.lane.b32.xlu0 %v2259, 16
  %v2264 = vpop.permute.xlu0 %2263
  %2265 = vrot.lane.b32.xlu0 %v2260, 16
  %v2266 = vpop.permute.xlu0 %2265
  %2267 = vrot.lane.b32.xlu0 %v2261, 16
  %v2268 = vpop.permute.xlu0 %2267
  %2269 = vrot.lane.b32.xlu0 %v2262, 16
  %v2270 = vpop.permute.xlu0 %2269
  %v2271 = vld [vmem:[%s6 + $0x5a] sm:$0x1]
  %v2272 = vlaneseq
  %v2273 = vshrl.u32 %v2272, 7
  %v2274 = vsub.s32 0, %v2273
  %v2275 = vrot.slane %v2271, %v2274
  %v2276 = vmul.f32 %v2264, %v2275
  %v2277 = vmul.f32 %v2266, %v2275
  %v2278 = vmul.f32 %v2268, %v2275
  %v2279 = vmul.f32 %v2270, %v2275
  %v2280 = vadd.f32 %v2247, %v2276
  %v2281 = vadd.f32 %v2248, %v2277
  %v2282 = vadd.f32 %v2249, %v2278
  %v2283 = vadd.f32 %v2250, %v2279
  %2284 = vrot.lane.b32.xlu0 %v2259, 8
  %v2285 = vpop.permute.xlu0 %2284
  %2286 = vrot.lane.b32.xlu0 %v2260, 8
  %v2287 = vpop.permute.xlu0 %2286
  %2288 = vrot.lane.b32.xlu0 %v2261, 8
  %v2289 = vpop.permute.xlu0 %2288
  %2290 = vrot.lane.b32.xlu0 %v2262, 8
  %v2291 = vpop.permute.xlu0 %2290
  %v2292 = vld [vmem:[%s6 + $0x5b] sm:$0x1]
  %v2293 = vlaneseq
  %v2294 = vshrl.u32 %v2293, 7
  %v2295 = vsub.s32 0, %v2294
  %v2296 = vrot.slane %v2292, %v2295
  %v2297 = vmul.f32 %v2285, %v2296
  %v2298 = vmul.f32 %v2287, %v2296
  %v2299 = vmul.f32 %v2289, %v2296
  %v2300 = vmul.f32 %v2291, %v2296
  %v2301 = vadd.f32 %v2280, %v2297
  %v2302 = vadd.f32 %v2281, %v2298
  %v2303 = vadd.f32 %v2282, %v2299
  %v2304 = vadd.f32 %v2283, %v2300
  %v2305 = vld [vmem:[%s6 + $0x5c] sm:$0x1]
  %v2306 = vlaneseq
  %v2307 = vshrl.u32 %v2306, 7
  %v2308 = vsub.s32 0, %v2307
  %v2309 = vrot.slane %v2305, %v2308
  %v2310 = vmul.f32 %v2259, %v2309
  %v2311 = vmul.f32 %v2260, %v2309
  %v2312 = vmul.f32 %v2261, %v2309
  %v2313 = vmul.f32 %v2262, %v2309
  %v2314 = vadd.f32 %v2301, %v2310
  %v2315 = vadd.f32 %v2302, %v2311
  %v2316 = vadd.f32 %v2303, %v2312
  %v2317 = vadd.f32 %v2304, %v2313
  %2318 = vrot.lane.b32.xlu0 %v2259, 120
  %v2319 = vpop.permute.xlu0 %2318
  %2320 = vrot.lane.b32.xlu0 %v2260, 120
  %v2321 = vpop.permute.xlu0 %2320
  %2322 = vrot.lane.b32.xlu0 %v2261, 120
  %v2323 = vpop.permute.xlu0 %2322
  %2324 = vrot.lane.b32.xlu0 %v2262, 120
  %v2325 = vpop.permute.xlu0 %2324
  %v2326 = vld [vmem:[%s6 + $0x5d] sm:$0x1]
  %v2327 = vlaneseq
  %v2328 = vshrl.u32 %v2327, 7
  %v2329 = vsub.s32 0, %v2328
  %v2330 = vrot.slane %v2326, %v2329
  %v2331 = vmul.f32 %v2319, %v2330
  %v2332 = vmul.f32 %v2321, %v2330
  %v2333 = vmul.f32 %v2323, %v2330
  %v2334 = vmul.f32 %v2325, %v2330
  %v2335 = vadd.f32 %v2314, %v2331
  %v2336 = vadd.f32 %v2315, %v2332
  %v2337 = vadd.f32 %v2316, %v2333
  %v2338 = vadd.f32 %v2317, %v2334
  %2339 = vrot.lane.b32.xlu0 %v2259, 112
  %v2340 = vpop.permute.xlu0 %2339
  %2341 = vrot.lane.b32.xlu0 %v2260, 112
  %v2342 = vpop.permute.xlu0 %2341
  %2343 = vrot.lane.b32.xlu0 %v2261, 112
  %v2344 = vpop.permute.xlu0 %2343
  %2345 = vrot.lane.b32.xlu0 %v2262, 112
  %v2346 = vpop.permute.xlu0 %2345
  %v2347 = vld [vmem:[%s6 + $0x5e] sm:$0x1]
  %v2348 = vlaneseq
  %v2349 = vshrl.u32 %v2348, 7
  %v2350 = vsub.s32 0, %v2349
  %v2351 = vrot.slane %v2347, %v2350
  %v2352 = vmul.f32 %v2340, %v2351
  %v2353 = vmul.f32 %v2342, %v2351
  %v2354 = vmul.f32 %v2344, %v2351
  %v2355 = vmul.f32 %v2346, %v2351
  %v2356 = vadd.f32 %v2335, %v2352
  %v2357 = vadd.f32 %v2336, %v2353
  %v2358 = vadd.f32 %v2337, %v2354
  %v2359 = vadd.f32 %v2338, %v2355
  %v2360 = vrot.slane %v1932, 2
  %v2361 = vrot.slane %v1933, 2
  %v2362 = vrot.slane %v1934, 2
  %v2363 = vrot.slane %v1935, 2
  %v2364 = vsel %vm1619, %v2362, %v2363
  %v2365 = vsel %vm1619, %v2361, %v2362
  %v2366 = vsel %vm1619, %v2360, %v2361
  %v2367 = vsel %vm1619, %v2363, %v2360
  %v2368 = vmul.f32 %v2366, %v1632
  %v2369 = vmul.f32 %v2365, %v1637
  %v2370 = vmul.f32 %v2364, %v1642
  %v2371 = vmul.f32 %v2367, %v1647
  %2372 = vrot.lane.b32.xlu0 %v2368, 16
  %v2373 = vpop.permute.xlu0 %2372
  %2374 = vrot.lane.b32.xlu0 %v2369, 16
  %v2375 = vpop.permute.xlu0 %2374
  %2376 = vrot.lane.b32.xlu0 %v2370, 16
  %v2377 = vpop.permute.xlu0 %2376
  %2378 = vrot.lane.b32.xlu0 %v2371, 16
  %v2379 = vpop.permute.xlu0 %2378
  %v2380 = vld [vmem:[%s6 + $0x5f] sm:$0x1]
  %v2381 = vlaneseq
  %v2382 = vshrl.u32 %v2381, 7
  %v2383 = vsub.s32 0, %v2382
  %v2384 = vrot.slane %v2380, %v2383
  %v2385 = vmul.f32 %v2373, %v2384
  %v2386 = vmul.f32 %v2375, %v2384
  %v2387 = vmul.f32 %v2377, %v2384
  %v2388 = vmul.f32 %v2379, %v2384
  %v2389 = vadd.f32 %v2356, %v2385
  %v2390 = vadd.f32 %v2357, %v2386
  %v2391 = vadd.f32 %v2358, %v2387
  %v2392 = vadd.f32 %v2359, %v2388
  %2393 = vrot.lane.b32.xlu0 %v2368, 8
  %v2394 = vpop.permute.xlu0 %2393
  %2395 = vrot.lane.b32.xlu0 %v2369, 8
  %v2396 = vpop.permute.xlu0 %2395
  %2397 = vrot.lane.b32.xlu0 %v2370, 8
  %v2398 = vpop.permute.xlu0 %2397
  %2399 = vrot.lane.b32.xlu0 %v2371, 8
  %v2400 = vpop.permute.xlu0 %2399
  %v2401 = vld [vmem:[%s6 + $0x60] sm:$0x1]
  %v2402 = vlaneseq
  %v2403 = vshrl.u32 %v2402, 7
  %v2404 = vsub.s32 0, %v2403
  %v2405 = vrot.slane %v2401, %v2404
  %v2406 = vmul.f32 %v2394, %v2405
  %v2407 = vmul.f32 %v2396, %v2405
  %v2408 = vmul.f32 %v2398, %v2405
  %v2409 = vmul.f32 %v2400, %v2405
  %v2410 = vadd.f32 %v2389, %v2406
  %v2411 = vadd.f32 %v2390, %v2407
  %v2412 = vadd.f32 %v2391, %v2408
  %v2413 = vadd.f32 %v2392, %v2409
  %v2414 = vld [vmem:[%s6 + $0x61] sm:$0x1]
  %v2415 = vlaneseq
  %v2416 = vshrl.u32 %v2415, 7
  %v2417 = vsub.s32 0, %v2416
  %v2418 = vrot.slane %v2414, %v2417
  %v2419 = vmul.f32 %v2368, %v2418
  %v2420 = vmul.f32 %v2369, %v2418
  %v2421 = vmul.f32 %v2370, %v2418
  %v2422 = vmul.f32 %v2371, %v2418
  %v2423 = vadd.f32 %v2410, %v2419
  %v2424 = vadd.f32 %v2411, %v2420
  %v2425 = vadd.f32 %v2412, %v2421
  %v2426 = vadd.f32 %v2413, %v2422
  %2427 = vrot.lane.b32.xlu0 %v2368, 120
  %v2428 = vpop.permute.xlu0 %2427
  %2429 = vrot.lane.b32.xlu0 %v2369, 120
  %v2430 = vpop.permute.xlu0 %2429
  %2431 = vrot.lane.b32.xlu0 %v2370, 120
  %v2432 = vpop.permute.xlu0 %2431
  %2433 = vrot.lane.b32.xlu0 %v2371, 120
  %v2434 = vpop.permute.xlu0 %2433
  %v2435 = vld [vmem:[%s6 + $0x62] sm:$0x1]
  %v2436 = vlaneseq
  %v2437 = vshrl.u32 %v2436, 7
  %v2438 = vsub.s32 0, %v2437
  %v2439 = vrot.slane %v2435, %v2438
  %v2440 = vmul.f32 %v2428, %v2439
  %v2441 = vmul.f32 %v2430, %v2439
  %v2442 = vmul.f32 %v2432, %v2439
  %v2443 = vmul.f32 %v2434, %v2439
  %v2444 = vadd.f32 %v2423, %v2440
  %v2445 = vadd.f32 %v2424, %v2441
  %v2446 = vadd.f32 %v2425, %v2442
  %v2447 = vadd.f32 %v2426, %v2443
  %2448 = vrot.lane.b32.xlu0 %v2368, 112
  %v2449 = vpop.permute.xlu0 %2448
  %2450 = vrot.lane.b32.xlu0 %v2369, 112
  %v2451 = vpop.permute.xlu0 %2450
  %2452 = vrot.lane.b32.xlu0 %v2370, 112
  %v2453 = vpop.permute.xlu0 %2452
  %2454 = vrot.lane.b32.xlu0 %v2371, 112
  %v2455 = vpop.permute.xlu0 %2454
  %v2456 = vld [vmem:[%s6 + $0x63] sm:$0x1]
  %v2457 = vlaneseq
  %v2458 = vshrl.u32 %v2457, 7
  %v2459 = vsub.s32 0, %v2458
  %v2460 = vrot.slane %v2456, %v2459
  %v2461 = vmul.f32 %v2449, %v2460
  %v2462 = vmul.f32 %v2451, %v2460
  %v2463 = vmul.f32 %v2453, %v2460
  %v2464 = vmul.f32 %v2455, %v2460
  %v2465 = vadd.f32 %v2444, %v2461
  %v2466 = vadd.f32 %v2445, %v2462
  %v2467 = vadd.f32 %v2446, %v2463
  %v2468 = vadd.f32 %v2447, %v2464
  %v2469 = vpack.c.bf16 %v2466, %v2465
  %v2470 = vpack.c.bf16 %v2468, %v2467
  %s2471 = scalar_lea.vmem %s5, 192
  %v2472 = vld [vmem:[%s2471] sm:$0xf]
  %v2473 = vld [vmem:[%s2471 + $0x4] sm:$0xf]
  %v2474 = vld [vmem:[%s2471 + $0x8] sm:$0xf]
  %v2475 = vld [vmem:[%s2471 + $0xc] sm:$0xf]
  %v2476 = vld [vmem:[%s2471 + $0x10] sm:$0xf]
  %v2477 = vld [vmem:[%s2471 + $0x14] sm:$0xf]
  %v2478 = vld [vmem:[%s2471 + $0x18] sm:$0xf]
  %v2479 = vld [vmem:[%s2471 + $0x1c] sm:$0xf]
  %v2480 = vld [vmem:[%s2471 + $0x20] sm:$0xf]
  %v2481 = vld [vmem:[%s2471 + $0x24] sm:$0xf]
  %v2482 = vld [vmem:[%s2471 + $0x28] sm:$0xf]
  %v2483 = vld [vmem:[%s2471 + $0x2c] sm:$0xf]
  %v2484 = vld [vmem:[%s2471 + $0x30] sm:$0xf]
  %v2485 = vld [vmem:[%s2471 + $0x34] sm:$0xf]
  %v2486 = vld [vmem:[%s2471 + $0x38] sm:$0xf]
  %v2487 = vld [vmem:[%s2471 + $0x3c] sm:$0xf]
  %v2504 = vunpack.c.l.b16 %v2472
  %v2505 = vunpack.c.l.b16 %v2473
  %v2506 = vunpack.c.l.b16 %v2474
  %v2507 = vunpack.c.l.b16 %v2475
  %v2508 = vunpack.c.l.b16 %v2476
  %v2509 = vunpack.c.l.b16 %v2477
  %v2510 = vunpack.c.l.b16 %v2478
  %v2511 = vunpack.c.l.b16 %v2479
  %v2512 = vunpack.c.l.b16 %v2480
  %v2513 = vunpack.c.l.b16 %v2481
  %v2514 = vunpack.c.l.b16 %v2482
  %v2515 = vunpack.c.l.b16 %v2483
  %v2516 = vunpack.c.l.b16 %v2484
  %v2517 = vunpack.c.l.b16 %v2485
  %v2518 = vunpack.c.l.b16 %v2486
  %v2519 = vunpack.c.l.b16 %v2487
  %v2520 = vpack.c.b16 %v2505, %v2504
  %v2521 = vpack.c.b16 %v2507, %v2506
  %v2522 = vpack.c.b16 %v2509, %v2508
  %v2523 = vpack.c.b16 %v2511, %v2510
  %v2524 = vpack.c.b16 %v2513, %v2512
  %v2525 = vpack.c.b16 %v2515, %v2514
  %v2526 = vpack.c.b16 %v2517, %v2516
  %v2527 = vpack.c.b16 %v2519, %v2518
  %2536 = vmatprep.subr.bf16.mxu0 0
  %2537 = vmatpush1.bf16.msra.mxu0 %v2520
  %2538 = vmatprep.subr.bf16.mxu0 0
  %2539 = vmatpush1.bf16.msra.mxu0 %v2521
  %2540 = vmatprep.subr.bf16.mxu0 0
  %2541 = vmatpush1.bf16.msra.mxu0 %v2522
  %2542 = vmatprep.subr.bf16.mxu0 0
  %2543 = vmatpush1.bf16.msra.mxu0 %v2523
  %2544 = vmatprep.subr.bf16.mxu0 0
  %2545 = vmatpush1.bf16.msra.mxu0 %v2524
  %2546 = vmatprep.subr.bf16.mxu0 0
  %2547 = vmatpush1.bf16.msra.mxu0 %v2525
  %2548 = vmatprep.subr.bf16.mxu0 0
  %2549 = vmatpush1.bf16.msra.mxu0 %v2526
  %2550 = vmatprep.subr.bf16.mxu0 0
  %2551 = vmatpush1.bf16.msra.mxu0 %v2527
  %2552 = vmatprep.subr.bf16.mxu0 0
  %2553 = vmatpush1.bf16.msra.mxu0 0
  %2554 = vmatprep.subr.bf16.mxu0 0
  %2555 = vmatpush1.bf16.msra.mxu0 0
  %2556 = vmatprep.subr.bf16.mxu0 0
  %2557 = vmatpush1.bf16.msra.mxu0 0
  %2558 = vmatprep.subr.bf16.mxu0 0
  %2559 = vmatpush1.bf16.msra.mxu0 0
  %2560 = vmatprep.subr.bf16.mxu0 0
  %2561 = vmatpush1.bf16.msra.mxu0 0
  %2562 = vmatprep.subr.bf16.mxu0 0
  %2563 = vmatpush1.bf16.msra.mxu0 0
  %2564 = vmatprep.subr.bf16.mxu0 0
  %2565 = vmatpush1.bf16.msra.mxu0 0
  %2566 = vmatprep.subr.bf16.mxu0 0
  %2567 = vmatpush1.bf16.msra.mxu0 0
  %2568 = vmatprep.mubr.bf16.mxu0 0
  %2569 = vmatmul.mubr.bf16.gmra.mrb[0].mxu0 %v2469
  %v2570 = vpop.f32.mrb[0].mxu0
  %v2571 = vadd.f32 0.0, %v2570
  %v2572 = vpop.f32.mrb[0].mxu0
  %v2573 = vpop.f32.mrb[0].mxu0
  %v2574 = vadd.f32 0.0, %v2573
  %v2575 = vpop.f32.mrb[0].mxu0
  %2576 = vmatprep.mubr.bf16.mxu0 0
  %2577 = vmatmul.mubr.bf16.gmra.mrb[0].mxu0 %v2470
  %v2578 = vpop.f32.mrb[0].mxu0
  %v2579 = vadd.f32 0.0, %v2578
  %v2580 = vpop.f32.mrb[0].mxu0
  %v2581 = vpop.f32.mrb[0].mxu0
  %v2582 = vadd.f32 0.0, %v2581
  %v2583 = vpop.f32.mrb[0].mxu0
  %2584 = vdwg.mxu0
  %v2585 = vadd.f32 %v2571, %v2574
  %v2586 = vadd.f32 %v2585, %v2579
  %v2587 = vadd.f32 %v2586, %v2582
  %v2588 = vrot.slane %v2587, 4
  %v2589 = vadd.f32 %v2587, %v2588
  %v2590 = vrot.slane %v2589, 2
  %v2591 = vadd.f32 %v2589, %v2590
  %v2592 = vrot.slane %v2591, 1
  %v2593 = vadd.f32 %v2591, %v2592
  %2594 = vrot.lane.b32.xlu0 %v2593, 8
  %v2595 = vpop.permute.xlu0 %2594
  %v2596 = vadd.f32 %v2593, %v2595
  %2597 = vrot.lane.b32.xlu0 %v2596, 16
  %v2598 = vpop.permute.xlu0 %2597
  %v2599 = vadd.f32 %v2596, %v2598
  %2600 = vrot.lane.b32.xlu0 %v2599, 32
  %v2601 = vpop.permute.xlu0 %2600
  %v2602 = vadd.f32 %v2599, %v2601
  %2603 = vrot.lane.b32.xlu0 %v2602, 64
  %v2604 = vpop.permute.xlu0 %2603
  %v2605 = vadd.f32 %v2602, %v2604
  %v2606 = vmul.f32 %v2605, %v146
  %v2607 = vlaneseq
  %v2608 = vshrl.u32 %v2607, 7
  %v2609 = vsub.s32 0, %v2608
  %v2610 = vrot.slane %v2606, %v2609
  %v2611 = vsub.f32 %v2571, %v2610
  %v2612 = vsub.f32 %v2574, %v2610
  %v2613 = vsub.f32 %v2579, %v2610
  %v2614 = vsub.f32 %v2582, %v2610
  %v2615 = vmul.f32 %v2611, %v2611
  %v2616 = vmul.f32 %v2612, %v2612
  %v2617 = vmul.f32 %v2613, %v2613
  %v2618 = vmul.f32 %v2614, %v2614
  %v2619 = vadd.f32 %v2615, %v2616
  %v2620 = vadd.f32 %v2619, %v2617
  %v2621 = vadd.f32 %v2620, %v2618
  %v2622 = vrot.slane %v2621, 4
  %v2623 = vadd.f32 %v2621, %v2622
  %v2624 = vrot.slane %v2623, 2
  %v2625 = vadd.f32 %v2623, %v2624
  %v2626 = vrot.slane %v2625, 1
  %v2627 = vadd.f32 %v2625, %v2626
  %2628 = vrot.lane.b32.xlu0 %v2627, 8
  %v2629 = vpop.permute.xlu0 %2628
  %v2630 = vadd.f32 %v2627, %v2629
  %2631 = vrot.lane.b32.xlu0 %v2630, 16
  %v2632 = vpop.permute.xlu0 %2631
  %v2633 = vadd.f32 %v2630, %v2632
  %2634 = vrot.lane.b32.xlu0 %v2633, 32
  %v2635 = vpop.permute.xlu0 %2634
  %v2636 = vadd.f32 %v2633, %v2635
  %2637 = vrot.lane.b32.xlu0 %v2636, 64
  %v2638 = vpop.permute.xlu0 %2637
  %v2639 = vadd.f32 %v2636, %v2638
  %v2640 = vmul.f32 %v2639, %v146
  %v2641 = vadd.f32 %v2640, 1e-05
  %v2642 = vrsqrt.pop %v2641
  %v2643 = vlaneseq
  %v2644 = vshrl.u32 %v2643, 7
  %v2645 = vsub.s32 0, %v2644
  %v2646 = vrot.slane %v2642, %v2645
  %v2647 = vmul.f32 %v2611, %v2646
  %v2648 = vmul.f32 %v2612, %v2646
  %v2649 = vmul.f32 %v2613, %v2646
  %v2650 = vmul.f32 %v2614, %v2646
  %v2651 = vadd.f32 %v1158, %v2647
  %v2652 = vadd.f32 %v1159, %v2648
  %v2653 = vadd.f32 %v1160, %v2649
  %v2654 = vadd.f32 %v1161, %v2650
  %v2655 = vld [vmem:[%s6 + $0x64] sm:$0x1]
  %v2656 = vlaneseq
  %v2657 = vshrl.u32 %v2656, 7
  %v2658 = vsub.s32 0, %v2657
  %v2659 = vrot.slane %v2655, %v2658
  %v2660 = vmul.f32 %v400, %v2659
  %v2661 = vmul.f32 %v402, %v2659
  %v2662 = vmul.f32 %v404, %v2659
  %v2663 = vmul.f32 %v406, %v2659
  %v2664 = vadd.f32 %v2660, 0.0
  %v2665 = vadd.f32 %v2661, 0.0
  %v2666 = vadd.f32 %v2662, 0.0
  %v2667 = vadd.f32 %v2663, 0.0
  %v2668 = vld [vmem:[%s6 + $0x65] sm:$0x1]
  %v2669 = vlaneseq
  %v2670 = vshrl.u32 %v2669, 7
  %v2671 = vsub.s32 0, %v2670
  %v2672 = vrot.slane %v2668, %v2671
  %v2673 = vmul.f32 %v395, %v2672
  %v2674 = vmul.f32 %v396, %v2672
  %v2675 = vmul.f32 %v397, %v2672
  %v2676 = vmul.f32 %v398, %v2672
  %v2677 = vadd.f32 %v2664, %v2673
  %v2678 = vadd.f32 %v2665, %v2674
  %v2679 = vadd.f32 %v2666, %v2675
  %v2680 = vadd.f32 %v2667, %v2676
  %v2681 = vld [vmem:[%s6 + $0x66] sm:$0x1]
  %v2682 = vlaneseq
  %v2683 = vshrl.u32 %v2682, 7
  %v2684 = vsub.s32 0, %v2683
  %v2685 = vrot.slane %v2681, %v2684
  %v2686 = vmul.f32 %v434, %v2685
  %v2687 = vmul.f32 %v436, %v2685
  %v2688 = vmul.f32 %v438, %v2685
  %v2689 = vmul.f32 %v440, %v2685
  %v2690 = vadd.f32 %v2677, %v2686
  %v2691 = vadd.f32 %v2678, %v2687
  %v2692 = vadd.f32 %v2679, %v2688
  %v2693 = vadd.f32 %v2680, %v2689
  %v2694 = vld [vmem:[%s6 + $0x69] sm:$0x1]
  %v2695 = vlaneseq
  %v2696 = vshrl.u32 %v2695, 7
  %v2697 = vsub.s32 0, %v2696
  %v2698 = vrot.slane %v2694, %v2697
  %v2699 = vmul.f32 %v455, %v2698
  %v2700 = vmul.f32 %v457, %v2698
  %v2701 = vmul.f32 %v459, %v2698
  %v2702 = vmul.f32 %v461, %v2698
  %v2703 = vadd.f32 %v2690, %v2699
  %v2704 = vadd.f32 %v2691, %v2700
  %v2705 = vadd.f32 %v2692, %v2701
  %v2706 = vadd.f32 %v2693, %v2702
  %v2707 = vld [vmem:[%s6 + $0x6a] sm:$0x1]
  %v2708 = vlaneseq
  %v2709 = vshrl.u32 %v2708, 7
  %v2710 = vsub.s32 0, %v2709
  %v2711 = vrot.slane %v2707, %v2710
  %v2712 = vmul.f32 %v355, %v2711
  %v2713 = vmul.f32 %v356, %v2711
  %v2714 = vmul.f32 %v357, %v2711
  %v2715 = vmul.f32 %v358, %v2711
  %v2716 = vadd.f32 %v2703, %v2712
  %v2717 = vadd.f32 %v2704, %v2713
  %v2718 = vadd.f32 %v2705, %v2714
  %v2719 = vadd.f32 %v2706, %v2715
  %v2720 = vld [vmem:[%s6 + $0x6b] sm:$0x1]
  %v2721 = vlaneseq
  %v2722 = vshrl.u32 %v2721, 7
  %v2723 = vsub.s32 0, %v2722
  %v2724 = vrot.slane %v2720, %v2723
  %v2725 = vmul.f32 %v489, %v2724
  %v2726 = vmul.f32 %v491, %v2724
  %v2727 = vmul.f32 %v493, %v2724
  %v2728 = vmul.f32 %v495, %v2724
  %v2729 = vadd.f32 %v2716, %v2725
  %v2730 = vadd.f32 %v2717, %v2726
  %v2731 = vadd.f32 %v2718, %v2727
  %v2732 = vadd.f32 %v2719, %v2728
  %v2733 = vld [vmem:[%s6 + $0x6e] sm:$0x1]
  %v2734 = vlaneseq
  %v2735 = vshrl.u32 %v2734, 7
  %v2736 = vsub.s32 0, %v2735
  %v2737 = vrot.slane %v2733, %v2736
  %v2738 = vmul.f32 %v548, %v2737
  %v2739 = vmul.f32 %v550, %v2737
  %v2740 = vmul.f32 %v552, %v2737
  %v2741 = vmul.f32 %v554, %v2737
  %v2742 = vadd.f32 %v2729, %v2738
  %v2743 = vadd.f32 %v2730, %v2739
  %v2744 = vadd.f32 %v2731, %v2740
  %v2745 = vadd.f32 %v2732, %v2741
  %v2746 = vld [vmem:[%s6 + $0x6f] sm:$0x1]
  %v2747 = vlaneseq
  %v2748 = vshrl.u32 %v2747, 7
  %v2749 = vsub.s32 0, %v2748
  %v2750 = vrot.slane %v2746, %v2749
  %v2751 = vmul.f32 %v543, %v2750
  %v2752 = vmul.f32 %v544, %v2750
  %v2753 = vmul.f32 %v545, %v2750
  %v2754 = vmul.f32 %v546, %v2750
  %v2755 = vadd.f32 %v2742, %v2751
  %v2756 = vadd.f32 %v2743, %v2752
  %v2757 = vadd.f32 %v2744, %v2753
  %v2758 = vadd.f32 %v2745, %v2754
  %v2759 = vld [vmem:[%s6 + $0x70] sm:$0x1]
  %v2760 = vlaneseq
  %v2761 = vshrl.u32 %v2760, 7
  %v2762 = vsub.s32 0, %v2761
  %v2763 = vrot.slane %v2759, %v2762
  %v2764 = vmul.f32 %v582, %v2763
  %v2765 = vmul.f32 %v584, %v2763
  %v2766 = vmul.f32 %v586, %v2763
  %v2767 = vmul.f32 %v588, %v2763
  %v2768 = vadd.f32 %v2755, %v2764
  %v2769 = vadd.f32 %v2756, %v2765
  %v2770 = vadd.f32 %v2757, %v2766
  %v2771 = vadd.f32 %v2758, %v2767
  %v2772 = vpack.c.bf16 %v2769, %v2768
  %v2773 = vpack.c.bf16 %v2771, %v2770
  %s2774 = scalar_lea.vmem %s5, 256
  %v2775 = vld [vmem:[%s2774] sm:$0xf]
  %v2776 = vld [vmem:[%s2774 + $0x4] sm:$0xf]
  %v2777 = vld [vmem:[%s2774 + $0x8] sm:$0xf]
  %v2778 = vld [vmem:[%s2774 + $0xc] sm:$0xf]
  %v2779 = vld [vmem:[%s2774 + $0x10] sm:$0xf]
  %v2780 = vld [vmem:[%s2774 + $0x14] sm:$0xf]
  %v2781 = vld [vmem:[%s2774 + $0x18] sm:$0xf]
  %v2782 = vld [vmem:[%s2774 + $0x1c] sm:$0xf]
  %v2783 = vld [vmem:[%s2774 + $0x20] sm:$0xf]
  %v2784 = vld [vmem:[%s2774 + $0x24] sm:$0xf]
  %v2785 = vld [vmem:[%s2774 + $0x28] sm:$0xf]
  %v2786 = vld [vmem:[%s2774 + $0x2c] sm:$0xf]
  %v2787 = vld [vmem:[%s2774 + $0x30] sm:$0xf]
  %v2788 = vld [vmem:[%s2774 + $0x34] sm:$0xf]
  %v2789 = vld [vmem:[%s2774 + $0x38] sm:$0xf]
  %v2790 = vld [vmem:[%s2774 + $0x3c] sm:$0xf]
  %v2807 = vunpack.c.l.b16 %v2775
  %v2808 = vunpack.c.l.b16 %v2776
  %v2809 = vunpack.c.l.b16 %v2777
  %v2810 = vunpack.c.l.b16 %v2778
  %v2811 = vunpack.c.l.b16 %v2779
  %v2812 = vunpack.c.l.b16 %v2780
  %v2813 = vunpack.c.l.b16 %v2781
  %v2814 = vunpack.c.l.b16 %v2782
  %v2815 = vunpack.c.l.b16 %v2783
  %v2816 = vunpack.c.l.b16 %v2784
  %v2817 = vunpack.c.l.b16 %v2785
  %v2818 = vunpack.c.l.b16 %v2786
  %v2819 = vunpack.c.l.b16 %v2787
  %v2820 = vunpack.c.l.b16 %v2788
  %v2821 = vunpack.c.l.b16 %v2789
  %v2822 = vunpack.c.l.b16 %v2790
  %v2823 = vpack.c.b16 %v2808, %v2807
  %v2824 = vpack.c.b16 %v2810, %v2809
  %v2825 = vpack.c.b16 %v2812, %v2811
  %v2826 = vpack.c.b16 %v2814, %v2813
  %v2827 = vpack.c.b16 %v2816, %v2815
  %v2828 = vpack.c.b16 %v2818, %v2817
  %v2829 = vpack.c.b16 %v2820, %v2819
  %v2830 = vpack.c.b16 %v2822, %v2821
  %2839 = vmatprep.subr.bf16.mxu0 0
  %2840 = vmatpush1.bf16.msra.mxu0 %v2823
  %2841 = vmatprep.subr.bf16.mxu0 0
  %2842 = vmatpush1.bf16.msra.mxu0 %v2824
  %2843 = vmatprep.subr.bf16.mxu0 0
  %2844 = vmatpush1.bf16.msra.mxu0 %v2825
  %2845 = vmatprep.subr.bf16.mxu0 0
  %2846 = vmatpush1.bf16.msra.mxu0 %v2826
  %2847 = vmatprep.subr.bf16.mxu0 0
  %2848 = vmatpush1.bf16.msra.mxu0 %v2827
  %2849 = vmatprep.subr.bf16.mxu0 0
  %2850 = vmatpush1.bf16.msra.mxu0 %v2828
  %2851 = vmatprep.subr.bf16.mxu0 0
  %2852 = vmatpush1.bf16.msra.mxu0 %v2829
  %2853 = vmatprep.subr.bf16.mxu0 0
  %2854 = vmatpush1.bf16.msra.mxu0 %v2830
  %2855 = vmatprep.subr.bf16.mxu0 0
  %2856 = vmatpush1.bf16.msra.mxu0 0
  %2857 = vmatprep.subr.bf16.mxu0 0
  %2858 = vmatpush1.bf16.msra.mxu0 0
  %2859 = vmatprep.subr.bf16.mxu0 0
  %2860 = vmatpush1.bf16.msra.mxu0 0
  %2861 = vmatprep.subr.bf16.mxu0 0
  %2862 = vmatpush1.bf16.msra.mxu0 0
  %2863 = vmatprep.subr.bf16.mxu0 0
  %2864 = vmatpush1.bf16.msra.mxu0 0
  %2865 = vmatprep.subr.bf16.mxu0 0
  %2866 = vmatpush1.bf16.msra.mxu0 0
  %2867 = vmatprep.subr.bf16.mxu0 0
  %2868 = vmatpush1.bf16.msra.mxu0 0
  %2869 = vmatprep.subr.bf16.mxu0 0
  %2870 = vmatpush1.bf16.msra.mxu0 0
  %2871 = vmatprep.mubr.bf16.mxu0 0
  %2872 = vmatmul.mubr.bf16.gmra.mrb[0].mxu0 %v2772
  %v2873 = vpop.f32.mrb[0].mxu0
  %v2874 = vadd.f32 0.0, %v2873
  %v2875 = vpop.f32.mrb[0].mxu0
  %v2876 = vpop.f32.mrb[0].mxu0
  %v2877 = vadd.f32 0.0, %v2876
  %v2878 = vpop.f32.mrb[0].mxu0
  %2879 = vmatprep.mubr.bf16.mxu0 0
  %2880 = vmatmul.mubr.bf16.gmra.mrb[0].mxu0 %v2773
  %v2881 = vpop.f32.mrb[0].mxu0
  %v2882 = vadd.f32 0.0, %v2881
  %v2883 = vpop.f32.mrb[0].mxu0
  %v2884 = vpop.f32.mrb[0].mxu0
  %v2885 = vadd.f32 0.0, %v2884
  %v2886 = vpop.f32.mrb[0].mxu0
  %2887 = vdwg.mxu0
  %v2888 = vadd.f32 %v2874, %v2877
  %v2889 = vadd.f32 %v2888, %v2882
  %v2890 = vadd.f32 %v2889, %v2885
  %v2891 = vrot.slane %v2890, 4
  %v2892 = vadd.f32 %v2890, %v2891
  %v2893 = vrot.slane %v2892, 2
  %v2894 = vadd.f32 %v2892, %v2893
  %v2895 = vrot.slane %v2894, 1
  %v2896 = vadd.f32 %v2894, %v2895
  %2897 = vrot.lane.b32.xlu0 %v2896, 8
  %v2898 = vpop.permute.xlu0 %2897
  %v2899 = vadd.f32 %v2896, %v2898
  %2900 = vrot.lane.b32.xlu0 %v2899, 16
  %v2901 = vpop.permute.xlu0 %2900
  %v2902 = vadd.f32 %v2899, %v2901
  %2903 = vrot.lane.b32.xlu0 %v2902, 32
  %v2904 = vpop.permute.xlu0 %2903
  %v2905 = vadd.f32 %v2902, %v2904
  %2906 = vrot.lane.b32.xlu0 %v2905, 64
  %v2907 = vpop.permute.xlu0 %2906
  %v2908 = vadd.f32 %v2905, %v2907
  %v2909 = vmul.f32 %v2908, %v146
  %v2910 = vlaneseq
  %v2911 = vshrl.u32 %v2910, 7
  %v2912 = vsub.s32 0, %v2911
  %v2913 = vrot.slane %v2909, %v2912
  %v2914 = vsub.f32 %v2874, %v2913
  %v2915 = vsub.f32 %v2877, %v2913
  %v2916 = vsub.f32 %v2882, %v2913
  %v2917 = vsub.f32 %v2885, %v2913
  %v2918 = vmul.f32 %v2914, %v2914
  %v2919 = vmul.f32 %v2915, %v2915
  %v2920 = vmul.f32 %v2916, %v2916
  %v2921 = vmul.f32 %v2917, %v2917
  %v2922 = vadd.f32 %v2918, %v2919
  %v2923 = vadd.f32 %v2922, %v2920
  %v2924 = vadd.f32 %v2923, %v2921
  %v2925 = vrot.slane %v2924, 4
  %v2926 = vadd.f32 %v2924, %v2925
  %v2927 = vrot.slane %v2926, 2
  %v2928 = vadd.f32 %v2926, %v2927
  %v2929 = vrot.slane %v2928, 1
  %v2930 = vadd.f32 %v2928, %v2929
  %2931 = vrot.lane.b32.xlu0 %v2930, 8
  %v2932 = vpop.permute.xlu0 %2931
  %v2933 = vadd.f32 %v2930, %v2932
  %2934 = vrot.lane.b32.xlu0 %v2933, 16
  %v2935 = vpop.permute.xlu0 %2934
  %v2936 = vadd.f32 %v2933, %v2935
  %2937 = vrot.lane.b32.xlu0 %v2936, 32
  %v2938 = vpop.permute.xlu0 %2937
  %v2939 = vadd.f32 %v2936, %v2938
  %2940 = vrot.lane.b32.xlu0 %v2939, 64
  %v2941 = vpop.permute.xlu0 %2940
  %v2942 = vadd.f32 %v2939, %v2941
  %v2943 = vmul.f32 %v2942, %v146
  %v2944 = vadd.f32 %v2943, 1e-05
  %v2945 = vrsqrt.pop %v2944
  %v2946 = vlaneseq
  %v2947 = vshrl.u32 %v2946, 7
  %v2948 = vsub.s32 0, %v2947
  %v2949 = vrot.slane %v2945, %v2948
  %v2950 = vmul.f32 %v2914, %v2949
  %v2951 = vmul.f32 %v2915, %v2949
  %v2952 = vmul.f32 %v2916, %v2949
  %v2953 = vmul.f32 %v2917, %v2949
  %v2954 = vmax.f32 %v2950, 0.0
  %v2955 = vmax.f32 %v2951, 0.0
  %v2956 = vmax.f32 %v2952, 0.0
  %v2957 = vmax.f32 %v2953, 0.0
  %v2958 = vrot.slane %v2954, 7
  %v2959 = vrot.slane %v2955, 7
  %v2960 = vrot.slane %v2956, 7
  %v2961 = vrot.slane %v2957, 7
  %v2962 = vsel %vm365, %v2960, %v2961
  %v2963 = vsel %vm365, %v2959, %v2960
  %v2964 = vsel %vm365, %v2958, %v2959
  %v2965 = vsel %vm365, %v2961, %v2958
  %v2966 = vmul.f32 %v2965, %v378
  %v2967 = vmul.f32 %v2964, %v383
  %v2968 = vmul.f32 %v2963, %v388
  %v2969 = vmul.f32 %v2962, %v393
  %2970 = vrot.lane.b32.xlu0 %v2966, 8
  %v2971 = vpop.permute.xlu0 %2970
  %2972 = vrot.lane.b32.xlu0 %v2967, 8
  %v2973 = vpop.permute.xlu0 %2972
  %2974 = vrot.lane.b32.xlu0 %v2968, 8
  %v2975 = vpop.permute.xlu0 %2974
  %2976 = vrot.lane.b32.xlu0 %v2969, 8
  %v2977 = vpop.permute.xlu0 %2976
  %v2978 = vld [vmem:[%s6 + $0x7d] sm:$0x1]
  %v2979 = vlaneseq
  %v2980 = vshrl.u32 %v2979, 7
  %v2981 = vsub.s32 0, %v2980
  %v2982 = vrot.slane %v2978, %v2981
  %v2983 = vmul.f32 %v2971, %v2982
  %v2984 = vmul.f32 %v2973, %v2982
  %v2985 = vmul.f32 %v2975, %v2982
  %v2986 = vmul.f32 %v2977, %v2982
  %v2987 = vadd.f32 %v2983, 0.0
  %v2988 = vadd.f32 %v2984, 0.0
  %v2989 = vadd.f32 %v2985, 0.0
  %v2990 = vadd.f32 %v2986, 0.0
  %v2991 = vld [vmem:[%s6 + $0x7e] sm:$0x1]
  %v2992 = vlaneseq
  %v2993 = vshrl.u32 %v2992, 7
  %v2994 = vsub.s32 0, %v2993
  %v2995 = vrot.slane %v2991, %v2994
  %v2996 = vmul.f32 %v2966, %v2995
  %v2997 = vmul.f32 %v2967, %v2995
  %v2998 = vmul.f32 %v2968, %v2995
  %v2999 = vmul.f32 %v2969, %v2995
  %v3000 = vadd.f32 %v2987, %v2996
  %v3001 = vadd.f32 %v2988, %v2997
  %v3002 = vadd.f32 %v2989, %v2998
  %v3003 = vadd.f32 %v2990, %v2999
  %3004 = vrot.lane.b32.xlu0 %v2966, 120
  %v3005 = vpop.permute.xlu0 %3004
  %3006 = vrot.lane.b32.xlu0 %v2967, 120
  %v3007 = vpop.permute.xlu0 %3006
  %3008 = vrot.lane.b32.xlu0 %v2968, 120
  %v3009 = vpop.permute.xlu0 %3008
  %3010 = vrot.lane.b32.xlu0 %v2969, 120
  %v3011 = vpop.permute.xlu0 %3010
  %v3012 = vld [vmem:[%s6 + $0x7f] sm:$0x1]
  %v3013 = vlaneseq
  %v3014 = vshrl.u32 %v3013, 7
  %v3015 = vsub.s32 0, %v3014
  %v3016 = vrot.slane %v3012, %v3015
  %v3017 = vmul.f32 %v3005, %v3016
  %v3018 = vmul.f32 %v3007, %v3016
  %v3019 = vmul.f32 %v3009, %v3016
  %v3020 = vmul.f32 %v3011, %v3016
  %v3021 = vadd.f32 %v3000, %v3017
  %v3022 = vadd.f32 %v3001, %v3018
  %v3023 = vadd.f32 %v3002, %v3019
  %v3024 = vadd.f32 %v3003, %v3020
  %3025 = vrot.lane.b32.xlu0 %v2954, 8
  %v3026 = vpop.permute.xlu0 %3025
  %3027 = vrot.lane.b32.xlu0 %v2955, 8
  %v3028 = vpop.permute.xlu0 %3027
  %3029 = vrot.lane.b32.xlu0 %v2956, 8
  %v3030 = vpop.permute.xlu0 %3029
  %3031 = vrot.lane.b32.xlu0 %v2957, 8
  %v3032 = vpop.permute.xlu0 %3031
  %v3033 = vld [vmem:[%s6 + $0x82] sm:$0x1]
  %v3034 = vlaneseq
  %v3035 = vshrl.u32 %v3034, 7
  %v3036 = vsub.s32 0, %v3035
  %v3037 = vrot.slane %v3033, %v3036
  %v3038 = vmul.f32 %v3026, %v3037
  %v3039 = vmul.f32 %v3028, %v3037
  %v3040 = vmul.f32 %v3030, %v3037
  %v3041 = vmul.f32 %v3032, %v3037
  %v3042 = vadd.f32 %v3021, %v3038
  %v3043 = vadd.f32 %v3022, %v3039
  %v3044 = vadd.f32 %v3023, %v3040
  %v3045 = vadd.f32 %v3024, %v3041
  %v3046 = vld [vmem:[%s6 + $0x83] sm:$0x1]
  %v3047 = vlaneseq
  %v3048 = vshrl.u32 %v3047, 7
  %v3049 = vsub.s32 0, %v3048
  %v3050 = vrot.slane %v3046, %v3049
  %v3051 = vmul.f32 %v2954, %v3050
  %v3052 = vmul.f32 %v2955, %v3050
  %v3053 = vmul.f32 %v2956, %v3050
  %v3054 = vmul.f32 %v2957, %v3050
  %v3055 = vadd.f32 %v3042, %v3051
  %v3056 = vadd.f32 %v3043, %v3052
  %v3057 = vadd.f32 %v3044, %v3053
  %v3058 = vadd.f32 %v3045, %v3054
  %3059 = vrot.lane.b32.xlu0 %v2954, 120
  %v3060 = vpop.permute.xlu0 %3059
  %3061 = vrot.lane.b32.xlu0 %v2955, 120
  %v3062 = vpop.permute.xlu0 %3061
  %3063 = vrot.lane.b32.xlu0 %v2956, 120
  %v3064 = vpop.permute.xlu0 %3063
  %3065 = vrot.lane.b32.xlu0 %v2957, 120
  %v3066 = vpop.permute.xlu0 %3065
  %v3067 = vld [vmem:[%s6 + $0x84] sm:$0x1]
  %v3068 = vlaneseq
  %v3069 = vshrl.u32 %v3068, 7
  %v3070 = vsub.s32 0, %v3069
  %v3071 = vrot.slane %v3067, %v3070
  %v3072 = vmul.f32 %v3060, %v3071
  %v3073 = vmul.f32 %v3062, %v3071
  %v3074 = vmul.f32 %v3064, %v3071
  %v3075 = vmul.f32 %v3066, %v3071
  %v3076 = vadd.f32 %v3055, %v3072
  %v3077 = vadd.f32 %v3056, %v3073
  %v3078 = vadd.f32 %v3057, %v3074
  %v3079 = vadd.f32 %v3058, %v3075
  %v3080 = vrot.slane %v2954, 1
  %v3081 = vrot.slane %v2955, 1
  %v3082 = vrot.slane %v2956, 1
  %v3083 = vrot.slane %v2957, 1
  %v3084 = vsel %vm513, %v3082, %v3083
  %v3085 = vsel %vm513, %v3081, %v3082
  %v3086 = vsel %vm513, %v3080, %v3081
  %v3087 = vsel %vm513, %v3083, %v3080
  %v3088 = vmul.f32 %v3086, %v526
  %v3089 = vmul.f32 %v3085, %v531
  %v3090 = vmul.f32 %v3084, %v536
  %v3091 = vmul.f32 %v3087, %v541
  %3092 = vrot.lane.b32.xlu0 %v3088, 8
  %v3093 = vpop.permute.xlu0 %3092
  %3094 = vrot.lane.b32.xlu0 %v3089, 8
  %v3095 = vpop.permute.xlu0 %3094
  %3096 = vrot.lane.b32.xlu0 %v3090, 8
  %v3097 = vpop.permute.xlu0 %3096
  %3098 = vrot.lane.b32.xlu0 %v3091, 8
  %v3099 = vpop.permute.xlu0 %3098
  %v3100 = vld [vmem:[%s6 + $0x87] sm:$0x1]
  %v3101 = vlaneseq
  %v3102 = vshrl.u32 %v3101, 7
  %v3103 = vsub.s32 0, %v3102
  %v3104 = vrot.slane %v3100, %v3103
  %v3105 = vmul.f32 %v3093, %v3104
  %v3106 = vmul.f32 %v3095, %v3104
  %v3107 = vmul.f32 %v3097, %v3104
  %v3108 = vmul.f32 %v3099, %v3104
  %v3109 = vadd.f32 %v3076, %v3105
  %v3110 = vadd.f32 %v3077, %v3106
  %v3111 = vadd.f32 %v3078, %v3107
  %v3112 = vadd.f32 %v3079, %v3108
  %v3113 = vld [vmem:[%s6 + $0x88] sm:$0x1]
  %v3114 = vlaneseq
  %v3115 = vshrl.u32 %v3114, 7
  %v3116 = vsub.s32 0, %v3115
  %v3117 = vrot.slane %v3113, %v3116
  %v3118 = vmul.f32 %v3088, %v3117
  %v3119 = vmul.f32 %v3089, %v3117
  %v3120 = vmul.f32 %v3090, %v3117
  %v3121 = vmul.f32 %v3091, %v3117
  %v3122 = vadd.f32 %v3109, %v3118
  %v3123 = vadd.f32 %v3110, %v3119
  %v3124 = vadd.f32 %v3111, %v3120
  %v3125 = vadd.f32 %v3112, %v3121
  %3126 = vrot.lane.b32.xlu0 %v3088, 120
  %v3127 = vpop.permute.xlu0 %3126
  %3128 = vrot.lane.b32.xlu0 %v3089, 120
  %v3129 = vpop.permute.xlu0 %3128
  %3130 = vrot.lane.b32.xlu0 %v3090, 120
  %v3131 = vpop.permute.xlu0 %3130
  %3132 = vrot.lane.b32.xlu0 %v3091, 120
  %v3133 = vpop.permute.xlu0 %3132
  %v3134 = vld [vmem:[%s6 + $0x89] sm:$0x1]
  %v3135 = vlaneseq
  %v3136 = vshrl.u32 %v3135, 7
  %v3137 = vsub.s32 0, %v3136
  %v3138 = vrot.slane %v3134, %v3137
  %v3139 = vmul.f32 %v3127, %v3138
  %v3140 = vmul.f32 %v3129, %v3138
  %v3141 = vmul.f32 %v3131, %v3138
  %v3142 = vmul.f32 %v3133, %v3138
  %v3143 = vadd.f32 %v3122, %v3139
  %v3144 = vadd.f32 %v3123, %v3140
  %v3145 = vadd.f32 %v3124, %v3141
  %v3146 = vadd.f32 %v3125, %v3142
  %v3147 = vpack.c.bf16 %v3144, %v3143
  %v3148 = vpack.c.bf16 %v3146, %v3145
  %s3149 = scalar_lea.vmem %s5, 320
  %v3150 = vld [vmem:[%s3149] sm:$0xf]
  %v3151 = vld [vmem:[%s3149 + $0x4] sm:$0xf]
  %v3152 = vld [vmem:[%s3149 + $0x8] sm:$0xf]
  %v3153 = vld [vmem:[%s3149 + $0xc] sm:$0xf]
  %v3154 = vld [vmem:[%s3149 + $0x10] sm:$0xf]
  %v3155 = vld [vmem:[%s3149 + $0x14] sm:$0xf]
  %v3156 = vld [vmem:[%s3149 + $0x18] sm:$0xf]
  %v3157 = vld [vmem:[%s3149 + $0x1c] sm:$0xf]
  %v3158 = vld [vmem:[%s3149 + $0x20] sm:$0xf]
  %v3159 = vld [vmem:[%s3149 + $0x24] sm:$0xf]
  %v3160 = vld [vmem:[%s3149 + $0x28] sm:$0xf]
  %v3161 = vld [vmem:[%s3149 + $0x2c] sm:$0xf]
  %v3162 = vld [vmem:[%s3149 + $0x30] sm:$0xf]
  %v3163 = vld [vmem:[%s3149 + $0x34] sm:$0xf]
  %v3164 = vld [vmem:[%s3149 + $0x38] sm:$0xf]
  %v3165 = vld [vmem:[%s3149 + $0x3c] sm:$0xf]
  %v3182 = vunpack.c.l.b16 %v3150
  %v3183 = vunpack.c.l.b16 %v3151
  %v3184 = vunpack.c.l.b16 %v3152
  %v3185 = vunpack.c.l.b16 %v3153
  %v3186 = vunpack.c.l.b16 %v3154
  %v3187 = vunpack.c.l.b16 %v3155
  %v3188 = vunpack.c.l.b16 %v3156
  %v3189 = vunpack.c.l.b16 %v3157
  %v3190 = vunpack.c.l.b16 %v3158
  %v3191 = vunpack.c.l.b16 %v3159
  %v3192 = vunpack.c.l.b16 %v3160
  %v3193 = vunpack.c.l.b16 %v3161
  %v3194 = vunpack.c.l.b16 %v3162
  %v3195 = vunpack.c.l.b16 %v3163
  %v3196 = vunpack.c.l.b16 %v3164
  %v3197 = vunpack.c.l.b16 %v3165
  %v3198 = vpack.c.b16 %v3183, %v3182
  %v3199 = vpack.c.b16 %v3185, %v3184
  %v3200 = vpack.c.b16 %v3187, %v3186
  %v3201 = vpack.c.b16 %v3189, %v3188
  %v3202 = vpack.c.b16 %v3191, %v3190
  %v3203 = vpack.c.b16 %v3193, %v3192
  %v3204 = vpack.c.b16 %v3195, %v3194
  %v3205 = vpack.c.b16 %v3197, %v3196
  %3214 = vmatprep.subr.bf16.mxu0 0
  %3215 = vmatpush1.bf16.msra.mxu0 %v3198
  %3216 = vmatprep.subr.bf16.mxu0 0
  %3217 = vmatpush1.bf16.msra.mxu0 %v3199
  %3218 = vmatprep.subr.bf16.mxu0 0
  %3219 = vmatpush1.bf16.msra.mxu0 %v3200
  %3220 = vmatprep.subr.bf16.mxu0 0
  %3221 = vmatpush1.bf16.msra.mxu0 %v3201
  %3222 = vmatprep.subr.bf16.mxu0 0
  %3223 = vmatpush1.bf16.msra.mxu0 %v3202
  %3224 = vmatprep.subr.bf16.mxu0 0
  %3225 = vmatpush1.bf16.msra.mxu0 %v3203
  %3226 = vmatprep.subr.bf16.mxu0 0
  %3227 = vmatpush1.bf16.msra.mxu0 %v3204
  %3228 = vmatprep.subr.bf16.mxu0 0
  %3229 = vmatpush1.bf16.msra.mxu0 %v3205
  %3230 = vmatprep.subr.bf16.mxu0 0
  %3231 = vmatpush1.bf16.msra.mxu0 0
  %3232 = vmatprep.subr.bf16.mxu0 0
  %3233 = vmatpush1.bf16.msra.mxu0 0
  %3234 = vmatprep.subr.bf16.mxu0 0
  %3235 = vmatpush1.bf16.msra.mxu0 0
  %3236 = vmatprep.subr.bf16.mxu0 0
  %3237 = vmatpush1.bf16.msra.mxu0 0
  %3238 = vmatprep.subr.bf16.mxu0 0
  %3239 = vmatpush1.bf16.msra.mxu0 0
  %3240 = vmatprep.subr.bf16.mxu0 0
  %3241 = vmatpush1.bf16.msra.mxu0 0
  %3242 = vmatprep.subr.bf16.mxu0 0
  %3243 = vmatpush1.bf16.msra.mxu0 0
  %3244 = vmatprep.subr.bf16.mxu0 0
  %3245 = vmatpush1.bf16.msra.mxu0 0
  %3246 = vmatprep.mubr.bf16.mxu0 0
  %3247 = vmatmul.mubr.bf16.gmra.mrb[0].mxu0 %v3147
  %v3248 = vpop.f32.mrb[0].mxu0
  %v3249 = vadd.f32 0.0, %v3248
  %v3250 = vpop.f32.mrb[0].mxu0
  %v3251 = vpop.f32.mrb[0].mxu0
  %v3252 = vadd.f32 0.0, %v3251
  %v3253 = vpop.f32.mrb[0].mxu0
  %3254 = vmatprep.mubr.bf16.mxu0 0
  %3255 = vmatmul.mubr.bf16.gmra.mrb[0].mxu0 %v3148
  %v3256 = vpop.f32.mrb[0].mxu0
  %v3257 = vadd.f32 0.0, %v3256
  %v3258 = vpop.f32.mrb[0].mxu0
  %v3259 = vpop.f32.mrb[0].mxu0
  %v3260 = vadd.f32 0.0, %v3259
  %v3261 = vpop.f32.mrb[0].mxu0
  %3262 = vdwg.mxu0
  %v3263 = vadd.f32 %v3249, %v3252
  %v3264 = vadd.f32 %v3263, %v3257
  %v3265 = vadd.f32 %v3264, %v3260
  %v3266 = vrot.slane %v3265, 4
  %v3267 = vadd.f32 %v3265, %v3266
  %v3268 = vrot.slane %v3267, 2
  %v3269 = vadd.f32 %v3267, %v3268
  %v3270 = vrot.slane %v3269, 1
  %v3271 = vadd.f32 %v3269, %v3270
  %3272 = vrot.lane.b32.xlu0 %v3271, 8
  %v3273 = vpop.permute.xlu0 %3272
  %v3274 = vadd.f32 %v3271, %v3273
  %3275 = vrot.lane.b32.xlu0 %v3274, 16
  %v3276 = vpop.permute.xlu0 %3275
  %v3277 = vadd.f32 %v3274, %v3276
  %3278 = vrot.lane.b32.xlu0 %v3277, 32
  %v3279 = vpop.permute.xlu0 %3278
  %v3280 = vadd.f32 %v3277, %v3279
  %3281 = vrot.lane.b32.xlu0 %v3280, 64
  %v3282 = vpop.permute.xlu0 %3281
  %v3283 = vadd.f32 %v3280, %v3282
  %v3284 = vmul.f32 %v3283, %v146
  %v3285 = vlaneseq
  %v3286 = vshrl.u32 %v3285, 7
  %v3287 = vsub.s32 0, %v3286
  %v3288 = vrot.slane %v3284, %v3287
  %v3289 = vsub.f32 %v3249, %v3288
  %v3290 = vsub.f32 %v3252, %v3288
  %v3291 = vsub.f32 %v3257, %v3288
  %v3292 = vsub.f32 %v3260, %v3288
  %v3293 = vmul.f32 %v3289, %v3289
  %v3294 = vmul.f32 %v3290, %v3290
  %v3295 = vmul.f32 %v3291, %v3291
  %v3296 = vmul.f32 %v3292, %v3292
  %v3297 = vadd.f32 %v3293, %v3294
  %v3298 = vadd.f32 %v3297, %v3295
  %v3299 = vadd.f32 %v3298, %v3296
  %v3300 = vrot.slane %v3299, 4
  %v3301 = vadd.f32 %v3299, %v3300
  %v3302 = vrot.slane %v3301, 2
  %v3303 = vadd.f32 %v3301, %v3302
  %v3304 = vrot.slane %v3303, 1
  %v3305 = vadd.f32 %v3303, %v3304
  %3306 = vrot.lane.b32.xlu0 %v3305, 8
  %v3307 = vpop.permute.xlu0 %3306
  %v3308 = vadd.f32 %v3305, %v3307
  %3309 = vrot.lane.b32.xlu0 %v3308, 16
  %v3310 = vpop.permute.xlu0 %3309
  %v3311 = vadd.f32 %v3308, %v3310
  %3312 = vrot.lane.b32.xlu0 %v3311, 32
  %v3313 = vpop.permute.xlu0 %3312
  %v3314 = vadd.f32 %v3311, %v3313
  %3315 = vrot.lane.b32.xlu0 %v3314, 64
  %v3316 = vpop.permute.xlu0 %3315
  %v3317 = vadd.f32 %v3314, %v3316
  %v3318 = vmul.f32 %v3317, %v146
  %v3319 = vadd.f32 %v3318, 1e-05
  %v3320 = vrsqrt.pop %v3319
  %v3321 = vlaneseq
  %v3322 = vshrl.u32 %v3321, 7
  %v3323 = vsub.s32 0, %v3322
  %v3324 = vrot.slane %v3320, %v3323
  %v3325 = vmul.f32 %v3289, %v3324
  %v3326 = vmul.f32 %v3290, %v3324
  %v3327 = vmul.f32 %v3291, %v3324
  %v3328 = vmul.f32 %v3292, %v3324
  %v3329 = vadd.f32 %v3325, 0.0
  %v3330 = vadd.f32 %v3326, 0.0
  %v3331 = vadd.f32 %v3327, 0.0
  %v3332 = vadd.f32 %v3328, 0.0
  %v3333 = vld [vmem:[%s6 + $0x96] sm:$0x1]
  %v3334 = vlaneseq
  %v3335 = vshrl.u32 %v3334, 7
  %v3336 = vsub.s32 0, %v3335
  %v3337 = vrot.slane %v3333, %v3336
  %v3338 = vmul.f32 %v1204, %v3337
  %v3339 = vmul.f32 %v1206, %v3337
  %v3340 = vmul.f32 %v1208, %v3337
  %v3341 = vmul.f32 %v1210, %v3337
  %v3342 = vadd.f32 %v3338, 0.0
  %v3343 = vadd.f32 %v3339, 0.0
  %v3344 = vadd.f32 %v3340, 0.0
  %v3345 = vadd.f32 %v3341, 0.0
  %v3346 = vld [vmem:[%s6 + $0x97] sm:$0x1]
  %v3347 = vlaneseq
  %v3348 = vshrl.u32 %v3347, 7
  %v3349 = vsub.s32 0, %v3348
  %v3350 = vrot.slane %v3346, %v3349
  %v3351 = vmul.f32 %v1225, %v3350
  %v3352 = vmul.f32 %v1227, %v3350
  %v3353 = vmul.f32 %v1229, %v3350
  %v3354 = vmul.f32 %v1231, %v3350
  %v3355 = vadd.f32 %v3342, %v3351
  %v3356 = vadd.f32 %v3343, %v3352
  %v3357 = vadd.f32 %v3344, %v3353
  %v3358 = vadd.f32 %v3345, %v3354
  %v3359 = vld [vmem:[%s6 + $0x98] sm:$0x1]
  %v3360 = vlaneseq
  %v3361 = vshrl.u32 %v3360, 7
  %v3362 = vsub.s32 0, %v3361
  %v3363 = vrot.slane %v3359, %v3362
  %v3364 = vmul.f32 %v1199, %v3363
  %v3365 = vmul.f32 %v1200, %v3363
  %v3366 = vmul.f32 %v1201, %v3363
  %v3367 = vmul.f32 %v1202, %v3363
  %v3368 = vadd.f32 %v3355, %v3364
  %v3369 = vadd.f32 %v3356, %v3365
  %v3370 = vadd.f32 %v3357, %v3366
  %v3371 = vadd.f32 %v3358, %v3367
  %v3372 = vld [vmem:[%s6 + $0x99] sm:$0x1]
  %v3373 = vlaneseq
  %v3374 = vshrl.u32 %v3373, 7
  %v3375 = vsub.s32 0, %v3374
  %v3376 = vrot.slane %v3372, %v3375
  %v3377 = vmul.f32 %v1259, %v3376
  %v3378 = vmul.f32 %v1261, %v3376
  %v3379 = vmul.f32 %v1263, %v3376
  %v3380 = vmul.f32 %v1265, %v3376
  %v3381 = vadd.f32 %v3368, %v3377
  %v3382 = vadd.f32 %v3369, %v3378
  %v3383 = vadd.f32 %v3370, %v3379
  %v3384 = vadd.f32 %v3371, %v3380
  %v3385 = vld [vmem:[%s6 + $0x9a] sm:$0x1]
  %v3386 = vlaneseq
  %v3387 = vshrl.u32 %v3386, 7
  %v3388 = vsub.s32 0, %v3387
  %v3389 = vrot.slane %v3385, %v3388
  %v3390 = vmul.f32 %v1280, %v3389
  %v3391 = vmul.f32 %v1282, %v3389
  %v3392 = vmul.f32 %v1284, %v3389
  %v3393 = vmul.f32 %v1286, %v3389
  %v3394 = vadd.f32 %v3381, %v3390
  %v3395 = vadd.f32 %v3382, %v3391
  %v3396 = vadd.f32 %v3383, %v3392
  %v3397 = vadd.f32 %v3384, %v3393
  %v3398 = vld [vmem:[%s6 + $0x9b] sm:$0x1]
  %v3399 = vlaneseq
  %v3400 = vshrl.u32 %v3399, 7
  %v3401 = vsub.s32 0, %v3400
  %v3402 = vrot.slane %v3398, %v3401
  %v3403 = vmul.f32 %v1313, %v3402
  %v3404 = vmul.f32 %v1315, %v3402
  %v3405 = vmul.f32 %v1317, %v3402
  %v3406 = vmul.f32 %v1319, %v3402
  %v3407 = vadd.f32 %v3394, %v3403
  %v3408 = vadd.f32 %v3395, %v3404
  %v3409 = vadd.f32 %v3396, %v3405
  %v3410 = vadd.f32 %v3397, %v3406
  %v3411 = vld [vmem:[%s6 + $0x9c] sm:$0x1]
  %v3412 = vlaneseq
  %v3413 = vshrl.u32 %v3412, 7
  %v3414 = vsub.s32 0, %v3413
  %v3415 = vrot.slane %v3411, %v3414
  %v3416 = vmul.f32 %v1334, %v3415
  %v3417 = vmul.f32 %v1336, %v3415
  %v3418 = vmul.f32 %v1338, %v3415
  %v3419 = vmul.f32 %v1340, %v3415
  %v3420 = vadd.f32 %v3407, %v3416
  %v3421 = vadd.f32 %v3408, %v3417
  %v3422 = vadd.f32 %v3409, %v3418
  %v3423 = vadd.f32 %v3410, %v3419
  %v3424 = vld [vmem:[%s6 + $0x9d] sm:$0x1]
  %v3425 = vlaneseq
  %v3426 = vshrl.u32 %v3425, 7
  %v3427 = vsub.s32 0, %v3426
  %v3428 = vrot.slane %v3424, %v3427
  %v3429 = vmul.f32 %v1308, %v3428
  %v3430 = vmul.f32 %v1309, %v3428
  %v3431 = vmul.f32 %v1310, %v3428
  %v3432 = vmul.f32 %v1311, %v3428
  %v3433 = vadd.f32 %v3420, %v3429
  %v3434 = vadd.f32 %v3421, %v3430
  %v3435 = vadd.f32 %v3422, %v3431
  %v3436 = vadd.f32 %v3423, %v3432
  %v3437 = vld [vmem:[%s6 + $0x9e] sm:$0x1]
  %v3438 = vlaneseq
  %v3439 = vshrl.u32 %v3438, 7
  %v3440 = vsub.s32 0, %v3439
  %v3441 = vrot.slane %v3437, %v3440
  %v3442 = vmul.f32 %v1368, %v3441
  %v3443 = vmul.f32 %v1370, %v3441
  %v3444 = vmul.f32 %v1372, %v3441
  %v3445 = vmul.f32 %v1374, %v3441
  %v3446 = vadd.f32 %v3433, %v3442
  %v3447 = vadd.f32 %v3434, %v3443
  %v3448 = vadd.f32 %v3435, %v3444
  %v3449 = vadd.f32 %v3436, %v3445
  %v3450 = vld [vmem:[%s6 + $0x9f] sm:$0x1]
  %v3451 = vlaneseq
  %v3452 = vshrl.u32 %v3451, 7
  %v3453 = vsub.s32 0, %v3452
  %v3454 = vrot.slane %v3450, %v3453
  %v3455 = vmul.f32 %v1389, %v3454
  %v3456 = vmul.f32 %v1391, %v3454
  %v3457 = vmul.f32 %v1393, %v3454
  %v3458 = vmul.f32 %v1395, %v3454
  %v3459 = vadd.f32 %v3446, %v3455
  %v3460 = vadd.f32 %v3447, %v3456
  %v3461 = vadd.f32 %v3448, %v3457
  %v3462 = vadd.f32 %v3449, %v3458
  %v3463 = vld [vmem:[%s6 + $0xa0] sm:$0x1]
  %v3464 = vlaneseq
  %v3465 = vshrl.u32 %v3464, 7
  %v3466 = vsub.s32 0, %v3465
  %v3467 = vrot.slane %v3463, %v3466
  %v3468 = vmul.f32 %v1410, %v3467
  %v3469 = vmul.f32 %v1412, %v3467
  %v3470 = vmul.f32 %v1414, %v3467
  %v3471 = vmul.f32 %v1416, %v3467
  %v3472 = vadd.f32 %v3459, %v3468
  %v3473 = vadd.f32 %v3460, %v3469
  %v3474 = vadd.f32 %v3461, %v3470
  %v3475 = vadd.f32 %v3462, %v3471
  %v3476 = vld [vmem:[%s6 + $0xa1] sm:$0x1]
  %v3477 = vlaneseq
  %v3478 = vshrl.u32 %v3477, 7
  %v3479 = vsub.s32 0, %v3478
  %v3480 = vrot.slane %v3476, %v3479
  %v3481 = vmul.f32 %v1431, %v3480
  %v3482 = vmul.f32 %v1433, %v3480
  %v3483 = vmul.f32 %v1435, %v3480
  %v3484 = vmul.f32 %v1437, %v3480
  %v3485 = vadd.f32 %v3472, %v3481
  %v3486 = vadd.f32 %v3473, %v3482
  %v3487 = vadd.f32 %v3474, %v3483
  %v3488 = vadd.f32 %v3475, %v3484
  %v3489 = vld [vmem:[%s6 + $0xa2] sm:$0x1]
  %v3490 = vlaneseq
  %v3491 = vshrl.u32 %v3490, 7
  %v3492 = vsub.s32 0, %v3491
  %v3493 = vrot.slane %v3489, %v3492
  %v3494 = vmul.f32 %v1162, %v3493
  %v3495 = vmul.f32 %v1163, %v3493
  %v3496 = vmul.f32 %v1164, %v3493
  %v3497 = vmul.f32 %v1165, %v3493
  %v3498 = vadd.f32 %v3485, %v3494
  %v3499 = vadd.f32 %v3486, %v3495
  %v3500 = vadd.f32 %v3487, %v3496
  %v3501 = vadd.f32 %v3488, %v3497
  %v3502 = vld [vmem:[%s6 + $0xa3] sm:$0x1]
  %v3503 = vlaneseq
  %v3504 = vshrl.u32 %v3503, 7
  %v3505 = vsub.s32 0, %v3504
  %v3506 = vrot.slane %v3502, %v3505
  %v3507 = vmul.f32 %v1465, %v3506
  %v3508 = vmul.f32 %v1467, %v3506
  %v3509 = vmul.f32 %v1469, %v3506
  %v3510 = vmul.f32 %v1471, %v3506
  %v3511 = vadd.f32 %v3498, %v3507
  %v3512 = vadd.f32 %v3499, %v3508
  %v3513 = vadd.f32 %v3500, %v3509
  %v3514 = vadd.f32 %v3501, %v3510
  %v3515 = vld [vmem:[%s6 + $0xa4] sm:$0x1]
  %v3516 = vlaneseq
  %v3517 = vshrl.u32 %v3516, 7
  %v3518 = vsub.s32 0, %v3517
  %v3519 = vrot.slane %v3515, %v3518
  %v3520 = vmul.f32 %v1486, %v3519
  %v3521 = vmul.f32 %v1488, %v3519
  %v3522 = vmul.f32 %v1490, %v3519
  %v3523 = vmul.f32 %v1492, %v3519
  %v3524 = vadd.f32 %v3511, %v3520
  %v3525 = vadd.f32 %v3512, %v3521
  %v3526 = vadd.f32 %v3513, %v3522
  %v3527 = vadd.f32 %v3514, %v3523
  %v3528 = vld [vmem:[%s6 + $0xa5] sm:$0x1]
  %v3529 = vlaneseq
  %v3530 = vshrl.u32 %v3529, 7
  %v3531 = vsub.s32 0, %v3530
  %v3532 = vrot.slane %v3528, %v3531
  %v3533 = vmul.f32 %v1519, %v3532
  %v3534 = vmul.f32 %v1521, %v3532
  %v3535 = vmul.f32 %v1523, %v3532
  %v3536 = vmul.f32 %v1525, %v3532
  %v3537 = vadd.f32 %v3524, %v3533
  %v3538 = vadd.f32 %v3525, %v3534
  %v3539 = vadd.f32 %v3526, %v3535
  %v3540 = vadd.f32 %v3527, %v3536
  %v3541 = vld [vmem:[%s6 + $0xa6] sm:$0x1]
  %v3542 = vlaneseq
  %v3543 = vshrl.u32 %v3542, 7
  %v3544 = vsub.s32 0, %v3543
  %v3545 = vrot.slane %v3541, %v3544
  %v3546 = vmul.f32 %v1540, %v3545
  %v3547 = vmul.f32 %v1542, %v3545
  %v3548 = vmul.f32 %v1544, %v3545
  %v3549 = vmul.f32 %v1546, %v3545
  %v3550 = vadd.f32 %v3537, %v3546
  %v3551 = vadd.f32 %v3538, %v3547
  %v3552 = vadd.f32 %v3539, %v3548
  %v3553 = vadd.f32 %v3540, %v3549
  %v3554 = vld [vmem:[%s6 + $0xa7] sm:$0x1]
  %v3555 = vlaneseq
  %v3556 = vshrl.u32 %v3555, 7
  %v3557 = vsub.s32 0, %v3556
  %v3558 = vrot.slane %v3554, %v3557
  %v3559 = vmul.f32 %v1514, %v3558
  %v3560 = vmul.f32 %v1515, %v3558
  %v3561 = vmul.f32 %v1516, %v3558
  %v3562 = vmul.f32 %v1517, %v3558
  %v3563 = vadd.f32 %v3550, %v3559
  %v3564 = vadd.f32 %v3551, %v3560
  %v3565 = vadd.f32 %v3552, %v3561
  %v3566 = vadd.f32 %v3553, %v3562
  %v3567 = vld [vmem:[%s6 + $0xa8] sm:$0x1]
  %v3568 = vlaneseq
  %v3569 = vshrl.u32 %v3568, 7
  %v3570 = vsub.s32 0, %v3569
  %v3571 = vrot.slane %v3567, %v3570
  %v3572 = vmul.f32 %v1574, %v3571
  %v3573 = vmul.f32 %v1576, %v3571
  %v3574 = vmul.f32 %v1578, %v3571
  %v3575 = vmul.f32 %v1580, %v3571
  %v3576 = vadd.f32 %v3563, %v3572
  %v3577 = vadd.f32 %v3564, %v3573
  %v3578 = vadd.f32 %v3565, %v3574
  %v3579 = vadd.f32 %v3566, %v3575
  %v3580 = vld [vmem:[%s6 + $0xa9] sm:$0x1]
  %v3581 = vlaneseq
  %v3582 = vshrl.u32 %v3581, 7
  %v3583 = vsub.s32 0, %v3582
  %v3584 = vrot.slane %v3580, %v3583
  %v3585 = vmul.f32 %v1595, %v3584
  %v3586 = vmul.f32 %v1597, %v3584
  %v3587 = vmul.f32 %v1599, %v3584
  %v3588 = vmul.f32 %v1601, %v3584
  %v3589 = vadd.f32 %v3576, %v3585
  %v3590 = vadd.f32 %v3577, %v3586
  %v3591 = vadd.f32 %v3578, %v3587
  %v3592 = vadd.f32 %v3579, %v3588
  %v3593 = vld [vmem:[%s6 + $0xaa] sm:$0x1]
  %v3594 = vlaneseq
  %v3595 = vshrl.u32 %v3594, 7
  %v3596 = vsub.s32 0, %v3595
  %v3597 = vrot.slane %v3593, %v3596
  %v3598 = vmul.f32 %v1654, %v3597
  %v3599 = vmul.f32 %v1656, %v3597
  %v3600 = vmul.f32 %v1658, %v3597
  %v3601 = vmul.f32 %v1660, %v3597
  %v3602 = vadd.f32 %v3589, %v3598
  %v3603 = vadd.f32 %v3590, %v3599
  %v3604 = vadd.f32 %v3591, %v3600
  %v3605 = vadd.f32 %v3592, %v3601
  %v3606 = vld [vmem:[%s6 + $0xab] sm:$0x1]
  %v3607 = vlaneseq
  %v3608 = vshrl.u32 %v3607, 7
  %v3609 = vsub.s32 0, %v3608
  %v3610 = vrot.slane %v3606, %v3609
  %v3611 = vmul.f32 %v1675, %v3610
  %v3612 = vmul.f32 %v1677, %v3610
  %v3613 = vmul.f32 %v1679, %v3610
  %v3614 = vmul.f32 %v1681, %v3610
  %v3615 = vadd.f32 %v3602, %v3611
  %v3616 = vadd.f32 %v3603, %v3612
  %v3617 = vadd.f32 %v3604, %v3613
  %v3618 = vadd.f32 %v3605, %v3614
  %v3619 = vld [vmem:[%s6 + $0xac] sm:$0x1]
  %v3620 = vlaneseq
  %v3621 = vshrl.u32 %v3620, 7
  %v3622 = vsub.s32 0, %v3621
  %v3623 = vrot.slane %v3619, %v3622
  %v3624 = vmul.f32 %v1649, %v3623
  %v3625 = vmul.f32 %v1650, %v3623
  %v3626 = vmul.f32 %v1651, %v3623
  %v3627 = vmul.f32 %v1652, %v3623
  %v3628 = vadd.f32 %v3615, %v3624
  %v3629 = vadd.f32 %v3616, %v3625
  %v3630 = vadd.f32 %v3617, %v3626
  %v3631 = vadd.f32 %v3618, %v3627
  %v3632 = vld [vmem:[%s6 + $0xad] sm:$0x1]
  %v3633 = vlaneseq
  %v3634 = vshrl.u32 %v3633, 7
  %v3635 = vsub.s32 0, %v3634
  %v3636 = vrot.slane %v3632, %v3635
  %v3637 = vmul.f32 %v1709, %v3636
  %v3638 = vmul.f32 %v1711, %v3636
  %v3639 = vmul.f32 %v1713, %v3636
  %v3640 = vmul.f32 %v1715, %v3636
  %v3641 = vadd.f32 %v3628, %v3637
  %v3642 = vadd.f32 %v3629, %v3638
  %v3643 = vadd.f32 %v3630, %v3639
  %v3644 = vadd.f32 %v3631, %v3640
  %v3645 = vld [vmem:[%s6 + $0xae] sm:$0x1]
  %v3646 = vlaneseq
  %v3647 = vshrl.u32 %v3646, 7
  %v3648 = vsub.s32 0, %v3647
  %v3649 = vrot.slane %v3645, %v3648
  %v3650 = vmul.f32 %v1730, %v3649
  %v3651 = vmul.f32 %v1732, %v3649
  %v3652 = vmul.f32 %v1734, %v3649
  %v3653 = vmul.f32 %v1736, %v3649
  %v3654 = vadd.f32 %v3641, %v3650
  %v3655 = vadd.f32 %v3642, %v3651
  %v3656 = vadd.f32 %v3643, %v3652
  %v3657 = vadd.f32 %v3644, %v3653
  %v3658 = vpack.c.bf16 %v3655, %v3654
  %v3659 = vpack.c.bf16 %v3657, %v3656
  %s3660 = scalar_lea.vmem %s5, 384
  %v3661 = vld [vmem:[%s3660] sm:$0xf]
  %v3662 = vld [vmem:[%s3660 + $0x4] sm:$0xf]
  %v3663 = vld [vmem:[%s3660 + $0x8] sm:$0xf]
  %v3664 = vld [vmem:[%s3660 + $0xc] sm:$0xf]
  %v3665 = vld [vmem:[%s3660 + $0x10] sm:$0xf]
  %v3666 = vld [vmem:[%s3660 + $0x14] sm:$0xf]
  %v3667 = vld [vmem:[%s3660 + $0x18] sm:$0xf]
  %v3668 = vld [vmem:[%s3660 + $0x1c] sm:$0xf]
  %v3669 = vld [vmem:[%s3660 + $0x20] sm:$0xf]
  %v3670 = vld [vmem:[%s3660 + $0x24] sm:$0xf]
  %v3671 = vld [vmem:[%s3660 + $0x28] sm:$0xf]
  %v3672 = vld [vmem:[%s3660 + $0x2c] sm:$0xf]
  %v3673 = vld [vmem:[%s3660 + $0x30] sm:$0xf]
  %v3674 = vld [vmem:[%s3660 + $0x34] sm:$0xf]
  %v3675 = vld [vmem:[%s3660 + $0x38] sm:$0xf]
  %v3676 = vld [vmem:[%s3660 + $0x3c] sm:$0xf]
  %v3693 = vunpack.c.l.b16 %v3661
  %v3694 = vunpack.c.l.b16 %v3662
  %v3695 = vunpack.c.l.b16 %v3663
  %v3696 = vunpack.c.l.b16 %v3664
  %v3697 = vunpack.c.l.b16 %v3665
  %v3698 = vunpack.c.l.b16 %v3666
  %v3699 = vunpack.c.l.b16 %v3667
  %v3700 = vunpack.c.l.b16 %v3668
  %v3701 = vunpack.c.l.b16 %v3669
  %v3702 = vunpack.c.l.b16 %v3670
  %v3703 = vunpack.c.l.b16 %v3671
  %v3704 = vunpack.c.l.b16 %v3672
  %v3705 = vunpack.c.l.b16 %v3673
  %v3706 = vunpack.c.l.b16 %v3674
  %v3707 = vunpack.c.l.b16 %v3675
  %v3708 = vunpack.c.l.b16 %v3676
  %v3709 = vpack.c.b16 %v3694, %v3693
  %v3710 = vpack.c.b16 %v3696, %v3695
  %v3711 = vpack.c.b16 %v3698, %v3697
  %v3712 = vpack.c.b16 %v3700, %v3699
  %v3713 = vpack.c.b16 %v3702, %v3701
  %v3714 = vpack.c.b16 %v3704, %v3703
  %v3715 = vpack.c.b16 %v3706, %v3705
  %v3716 = vpack.c.b16 %v3708, %v3707
  %3725 = vmatprep.subr.bf16.mxu0 0
  %3726 = vmatpush1.bf16.msra.mxu0 %v3709
  %3727 = vmatprep.subr.bf16.mxu0 0
  %3728 = vmatpush1.bf16.msra.mxu0 %v3710
  %3729 = vmatprep.subr.bf16.mxu0 0
  %3730 = vmatpush1.bf16.msra.mxu0 %v3711
  %3731 = vmatprep.subr.bf16.mxu0 0
  %3732 = vmatpush1.bf16.msra.mxu0 %v3712
  %3733 = vmatprep.subr.bf16.mxu0 0
  %3734 = vmatpush1.bf16.msra.mxu0 %v3713
  %3735 = vmatprep.subr.bf16.mxu0 0
  %3736 = vmatpush1.bf16.msra.mxu0 %v3714
  %3737 = vmatprep.subr.bf16.mxu0 0
  %3738 = vmatpush1.bf16.msra.mxu0 %v3715
  %3739 = vmatprep.subr.bf16.mxu0 0
  %3740 = vmatpush1.bf16.msra.mxu0 %v3716
  %3741 = vmatprep.subr.bf16.mxu0 0
  %3742 = vmatpush1.bf16.msra.mxu0 0
  %3743 = vmatprep.subr.bf16.mxu0 0
  %3744 = vmatpush1.bf16.msra.mxu0 0
  %3745 = vmatprep.subr.bf16.mxu0 0
  %3746 = vmatpush1.bf16.msra.mxu0 0
  %3747 = vmatprep.subr.bf16.mxu0 0
  %3748 = vmatpush1.bf16.msra.mxu0 0
  %3749 = vmatprep.subr.bf16.mxu0 0
  %3750 = vmatpush1.bf16.msra.mxu0 0
  %3751 = vmatprep.subr.bf16.mxu0 0
  %3752 = vmatpush1.bf16.msra.mxu0 0
  %3753 = vmatprep.subr.bf16.mxu0 0
  %3754 = vmatpush1.bf16.msra.mxu0 0
  %3755 = vmatprep.subr.bf16.mxu0 0
  %3756 = vmatpush1.bf16.msra.mxu0 0
  %3757 = vmatprep.mubr.bf16.mxu0 0
  %3758 = vmatmul.mubr.bf16.gmra.mrb[0].mxu0 %v3658
  %v3759 = vpop.f32.mrb[0].mxu0
  %v3760 = vadd.f32 0.0, %v3759
  %v3761 = vpop.f32.mrb[0].mxu0
  %v3762 = vpop.f32.mrb[0].mxu0
  %v3763 = vadd.f32 0.0, %v3762
  %v3764 = vpop.f32.mrb[0].mxu0
  %3765 = vmatprep.mubr.bf16.mxu0 0
  %3766 = vmatmul.mubr.bf16.gmra.mrb[0].mxu0 %v3659
  %v3767 = vpop.f32.mrb[0].mxu0
  %v3768 = vadd.f32 0.0, %v3767
  %v3769 = vpop.f32.mrb[0].mxu0
  %v3770 = vpop.f32.mrb[0].mxu0
  %v3771 = vadd.f32 0.0, %v3770
  %v3772 = vpop.f32.mrb[0].mxu0
  %3773 = vdwg.mxu0
  %v3774 = vadd.f32 %v3760, %v3763
  %v3775 = vadd.f32 %v3774, %v3768
  %v3776 = vadd.f32 %v3775, %v3771
  %v3777 = vrot.slane %v3776, 4
  %v3778 = vadd.f32 %v3776, %v3777
  %v3779 = vrot.slane %v3778, 2
  %v3780 = vadd.f32 %v3778, %v3779
  %v3781 = vrot.slane %v3780, 1
  %v3782 = vadd.f32 %v3780, %v3781
  %3783 = vrot.lane.b32.xlu0 %v3782, 8
  %v3784 = vpop.permute.xlu0 %3783
  %v3785 = vadd.f32 %v3782, %v3784
  %3786 = vrot.lane.b32.xlu0 %v3785, 16
  %v3787 = vpop.permute.xlu0 %3786
  %v3788 = vadd.f32 %v3785, %v3787
  %3789 = vrot.lane.b32.xlu0 %v3788, 32
  %v3790 = vpop.permute.xlu0 %3789
  %v3791 = vadd.f32 %v3788, %v3790
  %3792 = vrot.lane.b32.xlu0 %v3791, 64
  %v3793 = vpop.permute.xlu0 %3792
  %v3794 = vadd.f32 %v3791, %v3793
  %v3795 = vmul.f32 %v3794, %v146
  %v3796 = vlaneseq
  %v3797 = vshrl.u32 %v3796, 7
  %v3798 = vsub.s32 0, %v3797
  %v3799 = vrot.slane %v3795, %v3798
  %v3800 = vsub.f32 %v3760, %v3799
  %v3801 = vsub.f32 %v3763, %v3799
  %v3802 = vsub.f32 %v3768, %v3799
  %v3803 = vsub.f32 %v3771, %v3799
  %v3804 = vmul.f32 %v3800, %v3800
  %v3805 = vmul.f32 %v3801, %v3801
  %v3806 = vmul.f32 %v3802, %v3802
  %v3807 = vmul.f32 %v3803, %v3803
  %v3808 = vadd.f32 %v3804, %v3805
  %v3809 = vadd.f32 %v3808, %v3806
  %v3810 = vadd.f32 %v3809, %v3807
  %v3811 = vrot.slane %v3810, 4
  %v3812 = vadd.f32 %v3810, %v3811
  %v3813 = vrot.slane %v3812, 2
  %v3814 = vadd.f32 %v3812, %v3813
  %v3815 = vrot.slane %v3814, 1
  %v3816 = vadd.f32 %v3814, %v3815
  %3817 = vrot.lane.b32.xlu0 %v3816, 8
  %v3818 = vpop.permute.xlu0 %3817
  %v3819 = vadd.f32 %v3816, %v3818
  %3820 = vrot.lane.b32.xlu0 %v3819, 16
  %v3821 = vpop.permute.xlu0 %3820
  %v3822 = vadd.f32 %v3819, %v3821
  %3823 = vrot.lane.b32.xlu0 %v3822, 32
  %v3824 = vpop.permute.xlu0 %3823
  %v3825 = vadd.f32 %v3822, %v3824
  %3826 = vrot.lane.b32.xlu0 %v3825, 64
  %v3827 = vpop.permute.xlu0 %3826
  %v3828 = vadd.f32 %v3825, %v3827
  %v3829 = vmul.f32 %v3828, %v146
  %v3830 = vadd.f32 %v3829, 1e-05
  %v3831 = vrsqrt.pop %v3830
  %v3832 = vlaneseq
  %v3833 = vshrl.u32 %v3832, 7
  %v3834 = vsub.s32 0, %v3833
  %v3835 = vrot.slane %v3831, %v3834
  %v3836 = vmul.f32 %v3800, %v3835
  %v3837 = vmul.f32 %v3801, %v3835
  %v3838 = vmul.f32 %v3802, %v3835
  %v3839 = vmul.f32 %v3803, %v3835
  %v3840 = vmax.f32 %v3836, 0.0
  %v3841 = vmax.f32 %v3837, 0.0
  %v3842 = vmax.f32 %v3838, 0.0
  %v3843 = vmax.f32 %v3839, 0.0
  %v3844 = vrot.slane %v3840, 6
  %v3845 = vrot.slane %v3841, 6
  %v3846 = vrot.slane %v3842, 6
  %v3847 = vrot.slane %v3843, 6
  %v3848 = vsel %vm1170, %v3846, %v3847
  %v3849 = vsel %vm1170, %v3845, %v3846
  %v3850 = vsel %vm1170, %v3844, %v3845
  %v3851 = vsel %vm1170, %v3847, %v3844
  %v3852 = vmul.f32 %v3851, %v1182
  %v3853 = vmul.f32 %v3850, %v1187
  %v3854 = vmul.f32 %v3849, %v1192
  %v3855 = vmul.f32 %v3848, %v1197
  %3856 = vrot.lane.b32.xlu0 %v3852, 16
  %v3857 = vpop.permute.xlu0 %3856
  %3858 = vrot.lane.b32.xlu0 %v3853, 16
  %v3859 = vpop.permute.xlu0 %3858
  %3860 = vrot.lane.b32.xlu0 %v3854, 16
  %v3861 = vpop.permute.xlu0 %3860
  %3862 = vrot.lane.b32.xlu0 %v3855, 16
  %v3863 = vpop.permute.xlu0 %3862
  %v3864 = vld [vmem:[%s6 + $0xaf] sm:$0x1]
  %v3865 = vlaneseq
  %v3866 = vshrl.u32 %v3865, 7
  %v3867 = vsub.s32 0, %v3866
  %v3868 = vrot.slane %v3864, %v3867
  %v3869 = vmul.f32 %v3857, %v3868
  %v3870 = vmul.f32 %v3859, %v3868
  %v3871 = vmul.f32 %v3861, %v3868
  %v3872 = vmul.f32 %v3863, %v3868
  %v3873 = vadd.f32 %v3869, 0.0
  %v3874 = vadd.f32 %v3870, 0.0
  %v3875 = vadd.f32 %v3871, 0.0
  %v3876 = vadd.f32 %v3872, 0.0
  %3877 = vrot.lane.b32.xlu0 %v3852, 8
  %v3878 = vpop.permute.xlu0 %3877
  %3879 = vrot.lane.b32.xlu0 %v3853, 8
  %v3880 = vpop.permute.xlu0 %3879
  %3881 = vrot.lane.b32.xlu0 %v3854, 8
  %v3882 = vpop.permute.xlu0 %3881
  %3883 = vrot.lane.b32.xlu0 %v3855, 8
  %v3884 = vpop.permute.xlu0 %3883
  %v3885 = vld [vmem:[%s6 + $0xb0] sm:$0x1]
  %v3886 = vlaneseq
  %v3887 = vshrl.u32 %v3886, 7
  %v3888 = vsub.s32 0, %v3887
  %v3889 = vrot.slane %v3885, %v3888
  %v3890 = vmul.f32 %v3878, %v3889
  %v3891 = vmul.f32 %v3880, %v3889
  %v3892 = vmul.f32 %v3882, %v3889
  %v3893 = vmul.f32 %v3884, %v3889
  %v3894 = vadd.f32 %v3873, %v3890
  %v3895 = vadd.f32 %v3874, %v3891
  %v3896 = vadd.f32 %v3875, %v3892
  %v3897 = vadd.f32 %v3876, %v3893
  %v3898 = vld [vmem:[%s6 + $0xb1] sm:$0x1]
  %v3899 = vlaneseq
  %v3900 = vshrl.u32 %v3899, 7
  %v3901 = vsub.s32 0, %v3900
  %v3902 = vrot.slane %v3898, %v3901
  %v3903 = vmul.f32 %v3852, %v3902
  %v3904 = vmul.f32 %v3853, %v3902
  %v3905 = vmul.f32 %v3854, %v3902
  %v3906 = vmul.f32 %v3855, %v3902
  %v3907 = vadd.f32 %v3894, %v3903
  %v3908 = vadd.f32 %v3895, %v3904
  %v3909 = vadd.f32 %v3896, %v3905
  %v3910 = vadd.f32 %v3897, %v3906
  %3911 = vrot.lane.b32.xlu0 %v3852, 120
  %v3912 = vpop.permute.xlu0 %3911
  %3913 = vrot.lane.b32.xlu0 %v3853, 120
  %v3914 = vpop.permute.xlu0 %3913
  %3915 = vrot.lane.b32.xlu0 %v3854, 120
  %v3916 = vpop.permute.xlu0 %3915
  %3917 = vrot.lane.b32.xlu0 %v3855, 120
  %v3918 = vpop.permute.xlu0 %3917
  %v3919 = vld [vmem:[%s6 + $0xb2] sm:$0x1]
  %v3920 = vlaneseq
  %v3921 = vshrl.u32 %v3920, 7
  %v3922 = vsub.s32 0, %v3921
  %v3923 = vrot.slane %v3919, %v3922
  %v3924 = vmul.f32 %v3912, %v3923
  %v3925 = vmul.f32 %v3914, %v3923
  %v3926 = vmul.f32 %v3916, %v3923
  %v3927 = vmul.f32 %v3918, %v3923
  %v3928 = vadd.f32 %v3907, %v3924
  %v3929 = vadd.f32 %v3908, %v3925
  %v3930 = vadd.f32 %v3909, %v3926
  %v3931 = vadd.f32 %v3910, %v3927
  %3932 = vrot.lane.b32.xlu0 %v3852, 112
  %v3933 = vpop.permute.xlu0 %3932
  %3934 = vrot.lane.b32.xlu0 %v3853, 112
  %v3935 = vpop.permute.xlu0 %3934
  %3936 = vrot.lane.b32.xlu0 %v3854, 112
  %v3937 = vpop.permute.xlu0 %3936
  %3938 = vrot.lane.b32.xlu0 %v3855, 112
  %v3939 = vpop.permute.xlu0 %3938
  %v3940 = vld [vmem:[%s6 + $0xb3] sm:$0x1]
  %v3941 = vlaneseq
  %v3942 = vshrl.u32 %v3941, 7
  %v3943 = vsub.s32 0, %v3942
  %v3944 = vrot.slane %v3940, %v3943
  %v3945 = vmul.f32 %v3933, %v3944
  %v3946 = vmul.f32 %v3935, %v3944
  %v3947 = vmul.f32 %v3937, %v3944
  %v3948 = vmul.f32 %v3939, %v3944
  %v3949 = vadd.f32 %v3928, %v3945
  %v3950 = vadd.f32 %v3929, %v3946
  %v3951 = vadd.f32 %v3930, %v3947
  %v3952 = vadd.f32 %v3931, %v3948
  %v3953 = vrot.slane %v3840, 7
  %v3954 = vrot.slane %v3841, 7
  %v3955 = vrot.slane %v3842, 7
  %v3956 = vrot.slane %v3843, 7
  %v3957 = vsel %vm365, %v3955, %v3956
  %v3958 = vsel %vm365, %v3954, %v3955
  %v3959 = vsel %vm365, %v3953, %v3954
  %v3960 = vsel %vm365, %v3956, %v3953
  %v3961 = vmul.f32 %v3960, %v378
  %v3962 = vmul.f32 %v3959, %v383
  %v3963 = vmul.f32 %v3958, %v388
  %v3964 = vmul.f32 %v3957, %v393
  %3965 = vrot.lane.b32.xlu0 %v3961, 16
  %v3966 = vpop.permute.xlu0 %3965
  %3967 = vrot.lane.b32.xlu0 %v3962, 16
  %v3968 = vpop.permute.xlu0 %3967
  %3969 = vrot.lane.b32.xlu0 %v3963, 16
  %v3970 = vpop.permute.xlu0 %3969
  %3971 = vrot.lane.b32.xlu0 %v3964, 16
  %v3972 = vpop.permute.xlu0 %3971
  %v3973 = vld [vmem:[%s6 + $0xb4] sm:$0x1]
  %v3974 = vlaneseq
  %v3975 = vshrl.u32 %v3974, 7
  %v3976 = vsub.s32 0, %v3975
  %v3977 = vrot.slane %v3973, %v3976
  %v3978 = vmul.f32 %v3966, %v3977
  %v3979 = vmul.f32 %v3968, %v3977
  %v3980 = vmul.f32 %v3970, %v3977
  %v3981 = vmul.f32 %v3972, %v3977
  %v3982 = vadd.f32 %v3949, %v3978
  %v3983 = vadd.f32 %v3950, %v3979
  %v3984 = vadd.f32 %v3951, %v3980
  %v3985 = vadd.f32 %v3952, %v3981
  %3986 = vrot.lane.b32.xlu0 %v3961, 8
  %v3987 = vpop.permute.xlu0 %3986
  %3988 = vrot.lane.b32.xlu0 %v3962, 8
  %v3989 = vpop.permute.xlu0 %3988
  %3990 = vrot.lane.b32.xlu0 %v3963, 8
  %v3991 = vpop.permute.xlu0 %3990
  %3992 = vrot.lane.b32.xlu0 %v3964, 8
  %v3993 = vpop.permute.xlu0 %3992
  %v3994 = vld [vmem:[%s6 + $0xb5] sm:$0x1]
  %v3995 = vlaneseq
  %v3996 = vshrl.u32 %v3995, 7
  %v3997 = vsub.s32 0, %v3996
  %v3998 = vrot.slane %v3994, %v3997
  %v3999 = vmul.f32 %v3987, %v3998
  %v4000 = vmul.f32 %v3989, %v3998
  %v4001 = vmul.f32 %v3991, %v3998
  %v4002 = vmul.f32 %v3993, %v3998
  %v4003 = vadd.f32 %v3982, %v3999
  %v4004 = vadd.f32 %v3983, %v4000
  %v4005 = vadd.f32 %v3984, %v4001
  %v4006 = vadd.f32 %v3985, %v4002
  %v4007 = vld [vmem:[%s6 + $0xb6] sm:$0x1]
  %v4008 = vlaneseq
  %v4009 = vshrl.u32 %v4008, 7
  %v4010 = vsub.s32 0, %v4009
  %v4011 = vrot.slane %v4007, %v4010
  %v4012 = vmul.f32 %v3961, %v4011
  %v4013 = vmul.f32 %v3962, %v4011
  %v4014 = vmul.f32 %v3963, %v4011
  %v4015 = vmul.f32 %v3964, %v4011
  %v4016 = vadd.f32 %v4003, %v4012
  %v4017 = vadd.f32 %v4004, %v4013
  %v4018 = vadd.f32 %v4005, %v4014
  %v4019 = vadd.f32 %v4006, %v4015
  %4020 = vrot.lane.b32.xlu0 %v3961, 120
  %v4021 = vpop.permute.xlu0 %4020
  %4022 = vrot.lane.b32.xlu0 %v3962, 120
  %v4023 = vpop.permute.xlu0 %4022
  %4024 = vrot.lane.b32.xlu0 %v3963, 120
  %v4025 = vpop.permute.xlu0 %4024
  %4026 = vrot.lane.b32.xlu0 %v3964, 120
  %v4027 = vpop.permute.xlu0 %4026
  %v4028 = vld [vmem:[%s6 + $0xb7] sm:$0x1]
  %v4029 = vlaneseq
  %v4030 = vshrl.u32 %v4029, 7
  %v4031 = vsub.s32 0, %v4030
  %v4032 = vrot.slane %v4028, %v4031
  %v4033 = vmul.f32 %v4021, %v4032
  %v4034 = vmul.f32 %v4023, %v4032
  %v4035 = vmul.f32 %v4025, %v4032
  %v4036 = vmul.f32 %v4027, %v4032
  %v4037 = vadd.f32 %v4016, %v4033
  %v4038 = vadd.f32 %v4017, %v4034
  %v4039 = vadd.f32 %v4018, %v4035
  %v4040 = vadd.f32 %v4019, %v4036
  %4041 = vrot.lane.b32.xlu0 %v3961, 112
  %v4042 = vpop.permute.xlu0 %4041
  %4043 = vrot.lane.b32.xlu0 %v3962, 112
  %v4044 = vpop.permute.xlu0 %4043
  %4045 = vrot.lane.b32.xlu0 %v3963, 112
  %v4046 = vpop.permute.xlu0 %4045
  %4047 = vrot.lane.b32.xlu0 %v3964, 112
  %v4048 = vpop.permute.xlu0 %4047
  %v4049 = vld [vmem:[%s6 + $0xb8] sm:$0x1]
  %v4050 = vlaneseq
  %v4051 = vshrl.u32 %v4050, 7
  %v4052 = vsub.s32 0, %v4051
  %v4053 = vrot.slane %v4049, %v4052
  %v4054 = vmul.f32 %v4042, %v4053
  %v4055 = vmul.f32 %v4044, %v4053
  %v4056 = vmul.f32 %v4046, %v4053
  %v4057 = vmul.f32 %v4048, %v4053
  %v4058 = vadd.f32 %v4037, %v4054
  %v4059 = vadd.f32 %v4038, %v4055
  %v4060 = vadd.f32 %v4039, %v4056
  %v4061 = vadd.f32 %v4040, %v4057
  %4062 = vrot.lane.b32.xlu0 %v3840, 16
  %v4063 = vpop.permute.xlu0 %4062
  %4064 = vrot.lane.b32.xlu0 %v3841, 16
  %v4065 = vpop.permute.xlu0 %4064
  %4066 = vrot.lane.b32.xlu0 %v3842, 16
  %v4067 = vpop.permute.xlu0 %4066
  %4068 = vrot.lane.b32.xlu0 %v3843, 16
  %v4069 = vpop.permute.xlu0 %4068
  %v4070 = vld [vmem:[%s6 + $0xb9] sm:$0x1]
  %v4071 = vlaneseq
  %v4072 = vshrl.u32 %v4071, 7
  %v4073 = vsub.s32 0, %v4072
  %v4074 = vrot.slane %v4070, %v4073
  %v4075 = vmul.f32 %v4063, %v4074
  %v4076 = vmul.f32 %v4065, %v4074
  %v4077 = vmul.f32 %v4067, %v4074
  %v4078 = vmul.f32 %v4069, %v4074
  %v4079 = vadd.f32 %v4058, %v4075
  %v4080 = vadd.f32 %v4059, %v4076
  %v4081 = vadd.f32 %v4060, %v4077
  %v4082 = vadd.f32 %v4061, %v4078
  %4083 = vrot.lane.b32.xlu0 %v3840, 8
  %v4084 = vpop.permute.xlu0 %4083
  %4085 = vrot.lane.b32.xlu0 %v3841, 8
  %v4086 = vpop.permute.xlu0 %4085
  %4087 = vrot.lane.b32.xlu0 %v3842, 8
  %v4088 = vpop.permute.xlu0 %4087
  %4089 = vrot.lane.b32.xlu0 %v3843, 8
  %v4090 = vpop.permute.xlu0 %4089
  %v4091 = vld [vmem:[%s6 + $0xba] sm:$0x1]
  %v4092 = vlaneseq
  %v4093 = vshrl.u32 %v4092, 7
  %v4094 = vsub.s32 0, %v4093
  %v4095 = vrot.slane %v4091, %v4094
  %v4096 = vmul.f32 %v4084, %v4095
  %v4097 = vmul.f32 %v4086, %v4095
  %v4098 = vmul.f32 %v4088, %v4095
  %v4099 = vmul.f32 %v4090, %v4095
  %v4100 = vadd.f32 %v4079, %v4096
  %v4101 = vadd.f32 %v4080, %v4097
  %v4102 = vadd.f32 %v4081, %v4098
  %v4103 = vadd.f32 %v4082, %v4099
  %v4104 = vld [vmem:[%s6 + $0xbb] sm:$0x1]
  %v4105 = vlaneseq
  %v4106 = vshrl.u32 %v4105, 7
  %v4107 = vsub.s32 0, %v4106
  %v4108 = vrot.slane %v4104, %v4107
  %v4109 = vmul.f32 %v3840, %v4108
  %v4110 = vmul.f32 %v3841, %v4108
  %v4111 = vmul.f32 %v3842, %v4108
  %v4112 = vmul.f32 %v3843, %v4108
  %v4113 = vadd.f32 %v4100, %v4109
  %v4114 = vadd.f32 %v4101, %v4110
  %v4115 = vadd.f32 %v4102, %v4111
  %v4116 = vadd.f32 %v4103, %v4112
  %4117 = vrot.lane.b32.xlu0 %v3840, 120
  %v4118 = vpop.permute.xlu0 %4117
  %4119 = vrot.lane.b32.xlu0 %v3841, 120
  %v4120 = vpop.permute.xlu0 %4119
  %4121 = vrot.lane.b32.xlu0 %v3842, 120
  %v4122 = vpop.permute.xlu0 %4121
  %4123 = vrot.lane.b32.xlu0 %v3843, 120
  %v4124 = vpop.permute.xlu0 %4123
  %v4125 = vld [vmem:[%s6 + $0xbc] sm:$0x1]
  %v4126 = vlaneseq
  %v4127 = vshrl.u32 %v4126, 7
  %v4128 = vsub.s32 0, %v4127
  %v4129 = vrot.slane %v4125, %v4128
  %v4130 = vmul.f32 %v4118, %v4129
  %v4131 = vmul.f32 %v4120, %v4129
  %v4132 = vmul.f32 %v4122, %v4129
  %v4133 = vmul.f32 %v4124, %v4129
  %v4134 = vadd.f32 %v4113, %v4130
  %v4135 = vadd.f32 %v4114, %v4131
  %v4136 = vadd.f32 %v4115, %v4132
  %v4137 = vadd.f32 %v4116, %v4133
  %4138 = vrot.lane.b32.xlu0 %v3840, 112
  %v4139 = vpop.permute.xlu0 %4138
  %4140 = vrot.lane.b32.xlu0 %v3841, 112
  %v4141 = vpop.permute.xlu0 %4140
  %4142 = vrot.lane.b32.xlu0 %v3842, 112
  %v4143 = vpop.permute.xlu0 %4142
  %4144 = vrot.lane.b32.xlu0 %v3843, 112
  %v4145 = vpop.permute.xlu0 %4144
  %v4146 = vld [vmem:[%s6 + $0xbd] sm:$0x1]
  %v4147 = vlaneseq
  %v4148 = vshrl.u32 %v4147, 7
  %v4149 = vsub.s32 0, %v4148
  %v4150 = vrot.slane %v4146, %v4149
  %v4151 = vmul.f32 %v4139, %v4150
  %v4152 = vmul.f32 %v4141, %v4150
  %v4153 = vmul.f32 %v4143, %v4150
  %v4154 = vmul.f32 %v4145, %v4150
  %v4155 = vadd.f32 %v4134, %v4151
  %v4156 = vadd.f32 %v4135, %v4152
  %v4157 = vadd.f32 %v4136, %v4153
  %v4158 = vadd.f32 %v4137, %v4154
  %v4159 = vrot.slane %v3840, 1
  %v4160 = vrot.slane %v3841, 1
  %v4161 = vrot.slane %v3842, 1
  %v4162 = vrot.slane %v3843, 1
  %v4163 = vsel %vm513, %v4161, %v4162
  %v4164 = vsel %vm513, %v4160, %v4161
  %v4165 = vsel %vm513, %v4159, %v4160
  %v4166 = vsel %vm513, %v4162, %v4159
  %v4167 = vmul.f32 %v4165, %v526
  %v4168 = vmul.f32 %v4164, %v531
  %v4169 = vmul.f32 %v4163, %v536
  %v4170 = vmul.f32 %v4166, %v541
  %4171 = vrot.lane.b32.xlu0 %v4167, 16
  %v4172 = vpop.permute.xlu0 %4171
  %4173 = vrot.lane.b32.xlu0 %v4168, 16
  %v4174 = vpop.permute.xlu0 %4173
  %4175 = vrot.lane.b32.xlu0 %v4169, 16
  %v4176 = vpop.permute.xlu0 %4175
  %4177 = vrot.lane.b32.xlu0 %v4170, 16
  %v4178 = vpop.permute.xlu0 %4177
  %v4179 = vld [vmem:[%s6 + $0xbe] sm:$0x1]
  %v4180 = vlaneseq
  %v4181 = vshrl.u32 %v4180, 7
  %v4182 = vsub.s32 0, %v4181
  %v4183 = vrot.slane %v4179, %v4182
  %v4184 = vmul.f32 %v4172, %v4183
  %v4185 = vmul.f32 %v4174, %v4183
  %v4186 = vmul.f32 %v4176, %v4183
  %v4187 = vmul.f32 %v4178, %v4183
  %v4188 = vadd.f32 %v4155, %v4184
  %v4189 = vadd.f32 %v4156, %v4185
  %v4190 = vadd.f32 %v4157, %v4186
  %v4191 = vadd.f32 %v4158, %v4187
  %4192 = vrot.lane.b32.xlu0 %v4167, 8
  %v4193 = vpop.permute.xlu0 %4192
  %4194 = vrot.lane.b32.xlu0 %v4168, 8
  %v4195 = vpop.permute.xlu0 %4194
  %4196 = vrot.lane.b32.xlu0 %v4169, 8
  %v4197 = vpop.permute.xlu0 %4196
  %4198 = vrot.lane.b32.xlu0 %v4170, 8
  %v4199 = vpop.permute.xlu0 %4198
  %v4200 = vld [vmem:[%s6 + $0xbf] sm:$0x1]
  %v4201 = vlaneseq
  %v4202 = vshrl.u32 %v4201, 7
  %v4203 = vsub.s32 0, %v4202
  %v4204 = vrot.slane %v4200, %v4203
  %v4205 = vmul.f32 %v4193, %v4204
  %v4206 = vmul.f32 %v4195, %v4204
  %v4207 = vmul.f32 %v4197, %v4204
  %v4208 = vmul.f32 %v4199, %v4204
  %v4209 = vadd.f32 %v4188, %v4205
  %v4210 = vadd.f32 %v4189, %v4206
  %v4211 = vadd.f32 %v4190, %v4207
  %v4212 = vadd.f32 %v4191, %v4208
  %v4213 = vld [vmem:[%s6 + $0xc0] sm:$0x1]
  %v4214 = vlaneseq
  %v4215 = vshrl.u32 %v4214, 7
  %v4216 = vsub.s32 0, %v4215
  %v4217 = vrot.slane %v4213, %v4216
  %v4218 = vmul.f32 %v4167, %v4217
  %v4219 = vmul.f32 %v4168, %v4217
  %v4220 = vmul.f32 %v4169, %v4217
  %v4221 = vmul.f32 %v4170, %v4217
  %v4222 = vadd.f32 %v4209, %v4218
  %v4223 = vadd.f32 %v4210, %v4219
  %v4224 = vadd.f32 %v4211, %v4220
  %v4225 = vadd.f32 %v4212, %v4221
  %4226 = vrot.lane.b32.xlu0 %v4167, 120
  %v4227 = vpop.permute.xlu0 %4226
  %4228 = vrot.lane.b32.xlu0 %v4168, 120
  %v4229 = vpop.permute.xlu0 %4228
  %4230 = vrot.lane.b32.xlu0 %v4169, 120
  %v4231 = vpop.permute.xlu0 %4230
  %4232 = vrot.lane.b32.xlu0 %v4170, 120
  %v4233 = vpop.permute.xlu0 %4232
  %v4234 = vld [vmem:[%s6 + $0xc1] sm:$0x1]
  %v4235 = vlaneseq
  %v4236 = vshrl.u32 %v4235, 7
  %v4237 = vsub.s32 0, %v4236
  %v4238 = vrot.slane %v4234, %v4237
  %v4239 = vmul.f32 %v4227, %v4238
  %v4240 = vmul.f32 %v4229, %v4238
  %v4241 = vmul.f32 %v4231, %v4238
  %v4242 = vmul.f32 %v4233, %v4238
  %v4243 = vadd.f32 %v4222, %v4239
  %v4244 = vadd.f32 %v4223, %v4240
  %v4245 = vadd.f32 %v4224, %v4241
  %v4246 = vadd.f32 %v4225, %v4242
  %4247 = vrot.lane.b32.xlu0 %v4167, 112
  %v4248 = vpop.permute.xlu0 %4247
  %4249 = vrot.lane.b32.xlu0 %v4168, 112
  %v4250 = vpop.permute.xlu0 %4249
  %4251 = vrot.lane.b32.xlu0 %v4169, 112
  %v4252 = vpop.permute.xlu0 %4251
  %4253 = vrot.lane.b32.xlu0 %v4170, 112
  %v4254 = vpop.permute.xlu0 %4253
  %v4255 = vld [vmem:[%s6 + $0xc2] sm:$0x1]
  %v4256 = vlaneseq
  %v4257 = vshrl.u32 %v4256, 7
  %v4258 = vsub.s32 0, %v4257
  %v4259 = vrot.slane %v4255, %v4258
  %v4260 = vmul.f32 %v4248, %v4259
  %v4261 = vmul.f32 %v4250, %v4259
  %v4262 = vmul.f32 %v4252, %v4259
  %v4263 = vmul.f32 %v4254, %v4259
  %v4264 = vadd.f32 %v4243, %v4260
  %v4265 = vadd.f32 %v4244, %v4261
  %v4266 = vadd.f32 %v4245, %v4262
  %v4267 = vadd.f32 %v4246, %v4263
  %v4268 = vrot.slane %v3840, 2
  %v4269 = vrot.slane %v3841, 2
  %v4270 = vrot.slane %v3842, 2
  %v4271 = vrot.slane %v3843, 2
  %v4272 = vsel %vm1619, %v4270, %v4271
  %v4273 = vsel %vm1619, %v4269, %v4270
  %v4274 = vsel %vm1619, %v4268, %v4269
  %v4275 = vsel %vm1619, %v4271, %v4268
  %v4276 = vmul.f32 %v4274, %v1632
  %v4277 = vmul.f32 %v4273, %v1637
  %v4278 = vmul.f32 %v4272, %v1642
  %v4279 = vmul.f32 %v4275, %v1647
  %4280 = vrot.lane.b32.xlu0 %v4276, 16
  %v4281 = vpop.permute.xlu0 %4280
  %4282 = vrot.lane.b32.xlu0 %v4277, 16
  %v4283 = vpop.permute.xlu0 %4282
  %4284 = vrot.lane.b32.xlu0 %v4278, 16
  %v4285 = vpop.permute.xlu0 %4284
  %4286 = vrot.lane.b32.xlu0 %v4279, 16
  %v4287 = vpop.permute.xlu0 %4286
  %v4288 = vld [vmem:[%s6 + $0xc3] sm:$0x1]
  %v4289 = vlaneseq
  %v4290 = vshrl.u32 %v4289, 7
  %v4291 = vsub.s32 0, %v4290
  %v4292 = vrot.slane %v4288, %v4291
  %v4293 = vmul.f32 %v4281, %v4292
  %v4294 = vmul.f32 %v4283, %v4292
  %v4295 = vmul.f32 %v4285, %v4292
  %v4296 = vmul.f32 %v4287, %v4292
  %v4297 = vadd.f32 %v4264, %v4293
  %v4298 = vadd.f32 %v4265, %v4294
  %v4299 = vadd.f32 %v4266, %v4295
  %v4300 = vadd.f32 %v4267, %v4296
  %4301 = vrot.lane.b32.xlu0 %v4276, 8
  %v4302 = vpop.permute.xlu0 %4301
  %4303 = vrot.lane.b32.xlu0 %v4277, 8
  %v4304 = vpop.permute.xlu0 %4303
  %4305 = vrot.lane.b32.xlu0 %v4278, 8
  %v4306 = vpop.permute.xlu0 %4305
  %4307 = vrot.lane.b32.xlu0 %v4279, 8
  %v4308 = vpop.permute.xlu0 %4307
  %v4309 = vld [vmem:[%s6 + $0xc4] sm:$0x1]
  %v4310 = vlaneseq
  %v4311 = vshrl.u32 %v4310, 7
  %v4312 = vsub.s32 0, %v4311
  %v4313 = vrot.slane %v4309, %v4312
  %v4314 = vmul.f32 %v4302, %v4313
  %v4315 = vmul.f32 %v4304, %v4313
  %v4316 = vmul.f32 %v4306, %v4313
  %v4317 = vmul.f32 %v4308, %v4313
  %v4318 = vadd.f32 %v4297, %v4314
  %v4319 = vadd.f32 %v4298, %v4315
  %v4320 = vadd.f32 %v4299, %v4316
  %v4321 = vadd.f32 %v4300, %v4317
  %v4322 = vld [vmem:[%s6 + $0xc5] sm:$0x1]
  %v4323 = vlaneseq
  %v4324 = vshrl.u32 %v4323, 7
  %v4325 = vsub.s32 0, %v4324
  %v4326 = vrot.slane %v4322, %v4325
  %v4327 = vmul.f32 %v4276, %v4326
  %v4328 = vmul.f32 %v4277, %v4326
  %v4329 = vmul.f32 %v4278, %v4326
  %v4330 = vmul.f32 %v4279, %v4326
  %v4331 = vadd.f32 %v4318, %v4327
  %v4332 = vadd.f32 %v4319, %v4328
  %v4333 = vadd.f32 %v4320, %v4329
  %v4334 = vadd.f32 %v4321, %v4330
  %4335 = vrot.lane.b32.xlu0 %v4276, 120
  %v4336 = vpop.permute.xlu0 %4335
  %4337 = vrot.lane.b32.xlu0 %v4277, 120
  %v4338 = vpop.permute.xlu0 %4337
  %4339 = vrot.lane.b32.xlu0 %v4278, 120
  %v4340 = vpop.permute.xlu0 %4339
  %4341 = vrot.lane.b32.xlu0 %v4279, 120
  %v4342 = vpop.permute.xlu0 %4341
  %v4343 = vld [vmem:[%s6 + $0xc6] sm:$0x1]
  %v4344 = vlaneseq
  %v4345 = vshrl.u32 %v4344, 7
  %v4346 = vsub.s32 0, %v4345
  %v4347 = vrot.slane %v4343, %v4346
  %v4348 = vmul.f32 %v4336, %v4347
  %v4349 = vmul.f32 %v4338, %v4347
  %v4350 = vmul.f32 %v4340, %v4347
  %v4351 = vmul.f32 %v4342, %v4347
  %v4352 = vadd.f32 %v4331, %v4348
  %v4353 = vadd.f32 %v4332, %v4349
  %v4354 = vadd.f32 %v4333, %v4350
  %v4355 = vadd.f32 %v4334, %v4351
  %4356 = vrot.lane.b32.xlu0 %v4276, 112
  %v4357 = vpop.permute.xlu0 %4356
  %4358 = vrot.lane.b32.xlu0 %v4277, 112
  %v4359 = vpop.permute.xlu0 %4358
  %4360 = vrot.lane.b32.xlu0 %v4278, 112
  %v4361 = vpop.permute.xlu0 %4360
  %4362 = vrot.lane.b32.xlu0 %v4279, 112
  %v4363 = vpop.permute.xlu0 %4362
  %v4364 = vld [vmem:[%s6 + $0xc7] sm:$0x1]
  %v4365 = vlaneseq
  %v4366 = vshrl.u32 %v4365, 7
  %v4367 = vsub.s32 0, %v4366
  %v4368 = vrot.slane %v4364, %v4367
  %v4369 = vmul.f32 %v4357, %v4368
  %v4370 = vmul.f32 %v4359, %v4368
  %v4371 = vmul.f32 %v4361, %v4368
  %v4372 = vmul.f32 %v4363, %v4368
  %v4373 = vadd.f32 %v4352, %v4369
  %v4374 = vadd.f32 %v4353, %v4370
  %v4375 = vadd.f32 %v4354, %v4371
  %v4376 = vadd.f32 %v4355, %v4372
  %v4377 = vpack.c.bf16 %v4374, %v4373
  %v4378 = vpack.c.bf16 %v4376, %v4375
  %s4379 = scalar_lea.vmem %s5, 448
  %v4380 = vld [vmem:[%s4379] sm:$0xf]
  %v4381 = vld [vmem:[%s4379 + $0x4] sm:$0xf]
  %v4382 = vld [vmem:[%s4379 + $0x8] sm:$0xf]
  %v4383 = vld [vmem:[%s4379 + $0xc] sm:$0xf]
  %v4384 = vld [vmem:[%s4379 + $0x10] sm:$0xf]
  %v4385 = vld [vmem:[%s4379 + $0x14] sm:$0xf]
  %v4386 = vld [vmem:[%s4379 + $0x18] sm:$0xf]
  %v4387 = vld [vmem:[%s4379 + $0x1c] sm:$0xf]
  %v4388 = vld [vmem:[%s4379 + $0x20] sm:$0xf]
  %v4389 = vld [vmem:[%s4379 + $0x24] sm:$0xf]
  %v4390 = vld [vmem:[%s4379 + $0x28] sm:$0xf]
  %v4391 = vld [vmem:[%s4379 + $0x2c] sm:$0xf]
  %v4392 = vld [vmem:[%s4379 + $0x30] sm:$0xf]
  %v4393 = vld [vmem:[%s4379 + $0x34] sm:$0xf]
  %v4394 = vld [vmem:[%s4379 + $0x38] sm:$0xf]
  %v4395 = vld [vmem:[%s4379 + $0x3c] sm:$0xf]
  %v4412 = vunpack.c.l.b16 %v4380
  %v4413 = vunpack.c.l.b16 %v4381
  %v4414 = vunpack.c.l.b16 %v4382
  %v4415 = vunpack.c.l.b16 %v4383
  %v4416 = vunpack.c.l.b16 %v4384
  %v4417 = vunpack.c.l.b16 %v4385
  %v4418 = vunpack.c.l.b16 %v4386
  %v4419 = vunpack.c.l.b16 %v4387
  %v4420 = vunpack.c.l.b16 %v4388
  %v4421 = vunpack.c.l.b16 %v4389
  %v4422 = vunpack.c.l.b16 %v4390
  %v4423 = vunpack.c.l.b16 %v4391
  %v4424 = vunpack.c.l.b16 %v4392
  %v4425 = vunpack.c.l.b16 %v4393
  %v4426 = vunpack.c.l.b16 %v4394
  %v4427 = vunpack.c.l.b16 %v4395
  %v4428 = vpack.c.b16 %v4413, %v4412
  %v4429 = vpack.c.b16 %v4415, %v4414
  %v4430 = vpack.c.b16 %v4417, %v4416
  %v4431 = vpack.c.b16 %v4419, %v4418
  %v4432 = vpack.c.b16 %v4421, %v4420
  %v4433 = vpack.c.b16 %v4423, %v4422
  %v4434 = vpack.c.b16 %v4425, %v4424
  %v4435 = vpack.c.b16 %v4427, %v4426
  %4444 = vmatprep.subr.bf16.mxu0 0
  %4445 = vmatpush1.bf16.msra.mxu0 %v4428
  %4446 = vmatprep.subr.bf16.mxu0 0
  %4447 = vmatpush1.bf16.msra.mxu0 %v4429
  %4448 = vmatprep.subr.bf16.mxu0 0
  %4449 = vmatpush1.bf16.msra.mxu0 %v4430
  %4450 = vmatprep.subr.bf16.mxu0 0
  %4451 = vmatpush1.bf16.msra.mxu0 %v4431
  %4452 = vmatprep.subr.bf16.mxu0 0
  %4453 = vmatpush1.bf16.msra.mxu0 %v4432
  %4454 = vmatprep.subr.bf16.mxu0 0
  %4455 = vmatpush1.bf16.msra.mxu0 %v4433
  %4456 = vmatprep.subr.bf16.mxu0 0
  %4457 = vmatpush1.bf16.msra.mxu0 %v4434
  %4458 = vmatprep.subr.bf16.mxu0 0
  %4459 = vmatpush1.bf16.msra.mxu0 %v4435
  %4460 = vmatprep.subr.bf16.mxu0 0
  %4461 = vmatpush1.bf16.msra.mxu0 0
  %4462 = vmatprep.subr.bf16.mxu0 0
  %4463 = vmatpush1.bf16.msra.mxu0 0
  %4464 = vmatprep.subr.bf16.mxu0 0
  %4465 = vmatpush1.bf16.msra.mxu0 0
  %4466 = vmatprep.subr.bf16.mxu0 0
  %4467 = vmatpush1.bf16.msra.mxu0 0
  %4468 = vmatprep.subr.bf16.mxu0 0
  %4469 = vmatpush1.bf16.msra.mxu0 0
  %4470 = vmatprep.subr.bf16.mxu0 0
  %4471 = vmatpush1.bf16.msra.mxu0 0
  %4472 = vmatprep.subr.bf16.mxu0 0
  %4473 = vmatpush1.bf16.msra.mxu0 0
  %4474 = vmatprep.subr.bf16.mxu0 0
  %4475 = vmatpush1.bf16.msra.mxu0 0
  %4476 = vmatprep.mubr.bf16.mxu0 0
  %4477 = vmatmul.mubr.bf16.gmra.mrb[0].mxu0 %v4377
  %v4478 = vpop.f32.mrb[0].mxu0
  %v4479 = vadd.f32 0.0, %v4478
  %v4480 = vpop.f32.mrb[0].mxu0
  %v4481 = vpop.f32.mrb[0].mxu0
  %v4482 = vadd.f32 0.0, %v4481
  %v4483 = vpop.f32.mrb[0].mxu0
  %4484 = vmatprep.mubr.bf16.mxu0 0
  %4485 = vmatmul.mubr.bf16.gmra.mrb[0].mxu0 %v4378
  %v4486 = vpop.f32.mrb[0].mxu0
  %v4487 = vadd.f32 0.0, %v4486
  %v4488 = vpop.f32.mrb[0].mxu0
  %v4489 = vpop.f32.mrb[0].mxu0
  %v4490 = vadd.f32 0.0, %v4489
  %v4491 = vpop.f32.mrb[0].mxu0
  %4492 = vdwg.mxu0
  %v4493 = vadd.f32 %v4479, %v4482
  %v4494 = vadd.f32 %v4493, %v4487
  %v4495 = vadd.f32 %v4494, %v4490
  %v4496 = vrot.slane %v4495, 4
  %v4497 = vadd.f32 %v4495, %v4496
  %v4498 = vrot.slane %v4497, 2
  %v4499 = vadd.f32 %v4497, %v4498
  %v4500 = vrot.slane %v4499, 1
  %v4501 = vadd.f32 %v4499, %v4500
  %4502 = vrot.lane.b32.xlu0 %v4501, 8
  %v4503 = vpop.permute.xlu0 %4502
  %v4504 = vadd.f32 %v4501, %v4503
  %4505 = vrot.lane.b32.xlu0 %v4504, 16
  %v4506 = vpop.permute.xlu0 %4505
  %v4507 = vadd.f32 %v4504, %v4506
  %4508 = vrot.lane.b32.xlu0 %v4507, 32
  %v4509 = vpop.permute.xlu0 %4508
  %v4510 = vadd.f32 %v4507, %v4509
  %4511 = vrot.lane.b32.xlu0 %v4510, 64
  %v4512 = vpop.permute.xlu0 %4511
  %v4513 = vadd.f32 %v4510, %v4512
  %v4514 = vmul.f32 %v4513, %v146
  %v4515 = vlaneseq
  %v4516 = vshrl.u32 %v4515, 7
  %v4517 = vsub.s32 0, %v4516
  %v4518 = vrot.slane %v4514, %v4517
  %v4519 = vsub.f32 %v4479, %v4518
  %v4520 = vsub.f32 %v4482, %v4518
  %v4521 = vsub.f32 %v4487, %v4518
  %v4522 = vsub.f32 %v4490, %v4518
  %v4523 = vmul.f32 %v4519, %v4519
  %v4524 = vmul.f32 %v4520, %v4520
  %v4525 = vmul.f32 %v4521, %v4521
  %v4526 = vmul.f32 %v4522, %v4522
  %v4527 = vadd.f32 %v4523, %v4524
  %v4528 = vadd.f32 %v4527, %v4525
  %v4529 = vadd.f32 %v4528, %v4526
  %v4530 = vrot.slane %v4529, 4
  %v4531 = vadd.f32 %v4529, %v4530
  %v4532 = vrot.slane %v4531, 2
  %v4533 = vadd.f32 %v4531, %v4532
  %v4534 = vrot.slane %v4533, 1
  %v4535 = vadd.f32 %v4533, %v4534
  %4536 = vrot.lane.b32.xlu0 %v4535, 8
  %v4537 = vpop.permute.xlu0 %4536
  %v4538 = vadd.f32 %v4535, %v4537
  %4539 = vrot.lane.b32.xlu0 %v4538, 16
  %v4540 = vpop.permute.xlu0 %4539
  %v4541 = vadd.f32 %v4538, %v4540
  %4542 = vrot.lane.b32.xlu0 %v4541, 32
  %v4543 = vpop.permute.xlu0 %4542
  %v4544 = vadd.f32 %v4541, %v4543
  %4545 = vrot.lane.b32.xlu0 %v4544, 64
  %v4546 = vpop.permute.xlu0 %4545
  %v4547 = vadd.f32 %v4544, %v4546
  %v4548 = vmul.f32 %v4547, %v146
  %v4549 = vadd.f32 %v4548, 1e-05
  %v4550 = vrsqrt.pop %v4549
  %v4551 = vlaneseq
  %v4552 = vshrl.u32 %v4551, 7
  %v4553 = vsub.s32 0, %v4552
  %v4554 = vrot.slane %v4550, %v4553
  %v4555 = vmul.f32 %v4519, %v4554
  %v4556 = vmul.f32 %v4520, %v4554
  %v4557 = vmul.f32 %v4521, %v4554
  %v4558 = vmul.f32 %v4522, %v4554
  %v4559 = vadd.f32 %v3329, %v4555
  %v4560 = vadd.f32 %v3330, %v4556
  %v4561 = vadd.f32 %v3331, %v4557
  %v4562 = vadd.f32 %v3332, %v4558
  %v4563 = vmax.f32 %v2651, 0.0
  %v4564 = vmax.f32 %v2652, 0.0
  %v4565 = vmax.f32 %v2653, 0.0
  %v4566 = vmax.f32 %v2654, 0.0
  %v4567 = vrot.slane %v4563, 7
  %v4568 = vrot.slane %v4564, 7
  %v4569 = vrot.slane %v4565, 7
  %v4570 = vrot.slane %v4566, 7
  %v4571 = vsel %vm365, %v4569, %v4570
  %v4572 = vsel %vm365, %v4568, %v4569
  %v4573 = vsel %vm365, %v4567, %v4568
  %v4574 = vsel %vm365, %v4570, %v4567
  %v4575 = vmul.f32 %v4574, %v378
  %v4576 = vmul.f32 %v4573, %v383
  %v4577 = vmul.f32 %v4572, %v388
  %v4578 = vmul.f32 %v4571, %v393
  %4579 = vrot.lane.b32.xlu0 %v4575, 8
  %v4580 = vpop.permute.xlu0 %4579
  %4581 = vrot.lane.b32.xlu0 %v4576, 8
  %v4582 = vpop.permute.xlu0 %4581
  %4583 = vrot.lane.b32.xlu0 %v4577, 8
  %v4584 = vpop.permute.xlu0 %4583
  %4585 = vrot.lane.b32.xlu0 %v4578, 8
  %v4586 = vpop.permute.xlu0 %4585
  %v4587 = vld [vmem:[%s6 + $0xc8] sm:$0x1]
  %v4588 = vlaneseq
  %v4589 = vshrl.u32 %v4588, 7
  %v4590 = vsub.s32 0, %v4589
  %v4591 = vrot.slane %v4587, %v4590
  %v4592 = vmul.f32 %v4580, %v4591
  %v4593 = vmul.f32 %v4582, %v4591
  %v4594 = vmul.f32 %v4584, %v4591
  %v4595 = vmul.f32 %v4586, %v4591
  %v4596 = vadd.f32 %v4592, 0.0
  %v4597 = vadd.f32 %v4593, 0.0
  %v4598 = vadd.f32 %v4594, 0.0
  %v4599 = vadd.f32 %v4595, 0.0
  %v4600 = vld [vmem:[%s6 + $0xc9] sm:$0x1]
  %v4601 = vlaneseq
  %v4602 = vshrl.u32 %v4601, 7
  %v4603 = vsub.s32 0, %v4602
  %v4604 = vrot.slane %v4600, %v4603
  %v4605 = vmul.f32 %v4575, %v4604
  %v4606 = vmul.f32 %v4576, %v4604
  %v4607 = vmul.f32 %v4577, %v4604
  %v4608 = vmul.f32 %v4578, %v4604
  %v4609 = vadd.f32 %v4596, %v4605
  %v4610 = vadd.f32 %v4597, %v4606
  %v4611 = vadd.f32 %v4598, %v4607
  %v4612 = vadd.f32 %v4599, %v4608
  %4613 = vrot.lane.b32.xlu0 %v4575, 120
  %v4614 = vpop.permute.xlu0 %4613
  %4615 = vrot.lane.b32.xlu0 %v4576, 120
  %v4616 = vpop.permute.xlu0 %4615
  %4617 = vrot.lane.b32.xlu0 %v4577, 120
  %v4618 = vpop.permute.xlu0 %4617
  %4619 = vrot.lane.b32.xlu0 %v4578, 120
  %v4620 = vpop.permute.xlu0 %4619
  %v4621 = vld [vmem:[%s6 + $0xca] sm:$0x1]
  %v4622 = vlaneseq
  %v4623 = vshrl.u32 %v4622, 7
  %v4624 = vsub.s32 0, %v4623
  %v4625 = vrot.slane %v4621, %v4624
  %v4626 = vmul.f32 %v4614, %v4625
  %v4627 = vmul.f32 %v4616, %v4625
  %v4628 = vmul.f32 %v4618, %v4625
  %v4629 = vmul.f32 %v4620, %v4625
  %v4630 = vadd.f32 %v4609, %v4626
  %v4631 = vadd.f32 %v4610, %v4627
  %v4632 = vadd.f32 %v4611, %v4628
  %v4633 = vadd.f32 %v4612, %v4629
  %4634 = vrot.lane.b32.xlu0 %v4563, 8
  %v4635 = vpop.permute.xlu0 %4634
  %4636 = vrot.lane.b32.xlu0 %v4564, 8
  %v4637 = vpop.permute.xlu0 %4636
  %4638 = vrot.lane.b32.xlu0 %v4565, 8
  %v4639 = vpop.permute.xlu0 %4638
  %4640 = vrot.lane.b32.xlu0 %v4566, 8
  %v4641 = vpop.permute.xlu0 %4640
  %v4642 = vld [vmem:[%s6 + $0xcd] sm:$0x1]
  %v4643 = vlaneseq
  %v4644 = vshrl.u32 %v4643, 7
  %v4645 = vsub.s32 0, %v4644
  %v4646 = vrot.slane %v4642, %v4645
  %v4647 = vmul.f32 %v4635, %v4646
  %v4648 = vmul.f32 %v4637, %v4646
  %v4649 = vmul.f32 %v4639, %v4646
  %v4650 = vmul.f32 %v4641, %v4646
  %v4651 = vadd.f32 %v4630, %v4647
  %v4652 = vadd.f32 %v4631, %v4648
  %v4653 = vadd.f32 %v4632, %v4649
  %v4654 = vadd.f32 %v4633, %v4650
  %v4655 = vld [vmem:[%s6 + $0xce] sm:$0x1]
  %v4656 = vlaneseq
  %v4657 = vshrl.u32 %v4656, 7
  %v4658 = vsub.s32 0, %v4657
  %v4659 = vrot.slane %v4655, %v4658
  %v4660 = vmul.f32 %v4563, %v4659
  %v4661 = vmul.f32 %v4564, %v4659
  %v4662 = vmul.f32 %v4565, %v4659
  %v4663 = vmul.f32 %v4566, %v4659
  %v4664 = vadd.f32 %v4651, %v4660
  %v4665 = vadd.f32 %v4652, %v4661
  %v4666 = vadd.f32 %v4653, %v4662
  %v4667 = vadd.f32 %v4654, %v4663
  %4668 = vrot.lane.b32.xlu0 %v4563, 120
  %v4669 = vpop.permute.xlu0 %4668
  %4670 = vrot.lane.b32.xlu0 %v4564, 120
  %v4671 = vpop.permute.xlu0 %4670
  %4672 = vrot.lane.b32.xlu0 %v4565, 120
  %v4673 = vpop.permute.xlu0 %4672
  %4674 = vrot.lane.b32.xlu0 %v4566, 120
  %v4675 = vpop.permute.xlu0 %4674
  %v4676 = vld [vmem:[%s6 + $0xcf] sm:$0x1]
  %v4677 = vlaneseq
  %v4678 = vshrl.u32 %v4677, 7
  %v4679 = vsub.s32 0, %v4678
  %v4680 = vrot.slane %v4676, %v4679
  %v4681 = vmul.f32 %v4669, %v4680
  %v4682 = vmul.f32 %v4671, %v4680
  %v4683 = vmul.f32 %v4673, %v4680
  %v4684 = vmul.f32 %v4675, %v4680
  %v4685 = vadd.f32 %v4664, %v4681
  %v4686 = vadd.f32 %v4665, %v4682
  %v4687 = vadd.f32 %v4666, %v4683
  %v4688 = vadd.f32 %v4667, %v4684
  %v4689 = vrot.slane %v4563, 1
  %v4690 = vrot.slane %v4564, 1
  %v4691 = vrot.slane %v4565, 1
  %v4692 = vrot.slane %v4566, 1
  %v4693 = vsel %vm513, %v4691, %v4692
  %v4694 = vsel %vm513, %v4690, %v4691
  %v4695 = vsel %vm513, %v4689, %v4690
  %v4696 = vsel %vm513, %v4692, %v4689
  %v4697 = vmul.f32 %v4695, %v526
  %v4698 = vmul.f32 %v4694, %v531
  %v4699 = vmul.f32 %v4693, %v536
  %v4700 = vmul.f32 %v4696, %v541
  %4701 = vrot.lane.b32.xlu0 %v4697, 8
  %v4702 = vpop.permute.xlu0 %4701
  %4703 = vrot.lane.b32.xlu0 %v4698, 8
  %v4704 = vpop.permute.xlu0 %4703
  %4705 = vrot.lane.b32.xlu0 %v4699, 8
  %v4706 = vpop.permute.xlu0 %4705
  %4707 = vrot.lane.b32.xlu0 %v4700, 8
  %v4708 = vpop.permute.xlu0 %4707
  %v4709 = vld [vmem:[%s6 + $0xd2] sm:$0x1]
  %v4710 = vlaneseq
  %v4711 = vshrl.u32 %v4710, 7
  %v4712 = vsub.s32 0, %v4711
  %v4713 = vrot.slane %v4709, %v4712
  %v4714 = vmul.f32 %v4702, %v4713
  %v4715 = vmul.f32 %v4704, %v4713
  %v4716 = vmul.f32 %v4706, %v4713
  %v4717 = vmul.f32 %v4708, %v4713
  %v4718 = vadd.f32 %v4685, %v4714
  %v4719 = vadd.f32 %v4686, %v4715
  %v4720 = vadd.f32 %v4687, %v4716
  %v4721 = vadd.f32 %v4688, %v4717
  %v4722 = vld [vmem:[%s6 + $0xd3] sm:$0x1]
  %v4723 = vlaneseq
  %v4724 = vshrl.u32 %v4723, 7
  %v4725 = vsub.s32 0, %v4724
  %v4726 = vrot.slane %v4722, %v4725
  %v4727 = vmul.f32 %v4697, %v4726
  %v4728 = vmul.f32 %v4698, %v4726
  %v4729 = vmul.f32 %v4699, %v4726
  %v4730 = vmul.f32 %v4700, %v4726
  %v4731 = vadd.f32 %v4718, %v4727
  %v4732 = vadd.f32 %v4719, %v4728
  %v4733 = vadd.f32 %v4720, %v4729
  %v4734 = vadd.f32 %v4721, %v4730
  %4735 = vrot.lane.b32.xlu0 %v4697, 120
  %v4736 = vpop.permute.xlu0 %4735
  %4737 = vrot.lane.b32.xlu0 %v4698, 120
  %v4738 = vpop.permute.xlu0 %4737
  %4739 = vrot.lane.b32.xlu0 %v4699, 120
  %v4740 = vpop.permute.xlu0 %4739
  %4741 = vrot.lane.b32.xlu0 %v4700, 120
  %v4742 = vpop.permute.xlu0 %4741
  %v4743 = vld [vmem:[%s6 + $0xd4] sm:$0x1]
  %v4744 = vlaneseq
  %v4745 = vshrl.u32 %v4744, 7
  %v4746 = vsub.s32 0, %v4745
  %v4747 = vrot.slane %v4743, %v4746
  %v4748 = vmul.f32 %v4736, %v4747
  %v4749 = vmul.f32 %v4738, %v4747
  %v4750 = vmul.f32 %v4740, %v4747
  %v4751 = vmul.f32 %v4742, %v4747
  %v4752 = vadd.f32 %v4731, %v4748
  %v4753 = vadd.f32 %v4732, %v4749
  %v4754 = vadd.f32 %v4733, %v4750
  %v4755 = vadd.f32 %v4734, %v4751
  %v4756 = vpack.c.bf16 %v4753, %v4752
  %v4757 = vpack.c.bf16 %v4755, %v4754
  %s4758 = scalar_lea.vmem %s5, 512
  %v4759 = vld [vmem:[%s4758] sm:$0xf]
  %v4760 = vld [vmem:[%s4758 + $0x4] sm:$0xf]
  %v4761 = vld [vmem:[%s4758 + $0x8] sm:$0xf]
  %v4762 = vld [vmem:[%s4758 + $0xc] sm:$0xf]
  %v4763 = vld [vmem:[%s4758 + $0x10] sm:$0xf]
  %v4764 = vld [vmem:[%s4758 + $0x14] sm:$0xf]
  %v4765 = vld [vmem:[%s4758 + $0x18] sm:$0xf]
  %v4766 = vld [vmem:[%s4758 + $0x1c] sm:$0xf]
  %v4767 = vld [vmem:[%s4758 + $0x20] sm:$0xf]
  %v4768 = vld [vmem:[%s4758 + $0x24] sm:$0xf]
  %v4769 = vld [vmem:[%s4758 + $0x28] sm:$0xf]
  %v4770 = vld [vmem:[%s4758 + $0x2c] sm:$0xf]
  %v4771 = vld [vmem:[%s4758 + $0x30] sm:$0xf]
  %v4772 = vld [vmem:[%s4758 + $0x34] sm:$0xf]
  %v4773 = vld [vmem:[%s4758 + $0x38] sm:$0xf]
  %v4774 = vld [vmem:[%s4758 + $0x3c] sm:$0xf]
  %v4791 = vunpack.c.l.b16 %v4759
  %v4792 = vunpack.c.l.b16 %v4760
  %v4793 = vunpack.c.l.b16 %v4761
  %v4794 = vunpack.c.l.b16 %v4762
  %v4795 = vunpack.c.l.b16 %v4763
  %v4796 = vunpack.c.l.b16 %v4764
  %v4797 = vunpack.c.l.b16 %v4765
  %v4798 = vunpack.c.l.b16 %v4766
  %v4799 = vunpack.c.l.b16 %v4767
  %v4800 = vunpack.c.l.b16 %v4768
  %v4801 = vunpack.c.l.b16 %v4769
  %v4802 = vunpack.c.l.b16 %v4770
  %v4803 = vunpack.c.l.b16 %v4771
  %v4804 = vunpack.c.l.b16 %v4772
  %v4805 = vunpack.c.l.b16 %v4773
  %v4806 = vunpack.c.l.b16 %v4774
  %v4807 = vpack.c.b16 %v4792, %v4791
  %v4808 = vpack.c.b16 %v4794, %v4793
  %v4809 = vpack.c.b16 %v4796, %v4795
  %v4810 = vpack.c.b16 %v4798, %v4797
  %v4811 = vpack.c.b16 %v4800, %v4799
  %v4812 = vpack.c.b16 %v4802, %v4801
  %v4813 = vpack.c.b16 %v4804, %v4803
  %v4814 = vpack.c.b16 %v4806, %v4805
  %4823 = vmatprep.subr.bf16.mxu0 0
  %4824 = vmatpush1.bf16.msra.mxu0 %v4807
  %4825 = vmatprep.subr.bf16.mxu0 0
  %4826 = vmatpush1.bf16.msra.mxu0 %v4808
  %4827 = vmatprep.subr.bf16.mxu0 0
  %4828 = vmatpush1.bf16.msra.mxu0 %v4809
  %4829 = vmatprep.subr.bf16.mxu0 0
  %4830 = vmatpush1.bf16.msra.mxu0 %v4810
  %4831 = vmatprep.subr.bf16.mxu0 0
  %4832 = vmatpush1.bf16.msra.mxu0 %v4811
  %4833 = vmatprep.subr.bf16.mxu0 0
  %4834 = vmatpush1.bf16.msra.mxu0 %v4812
  %4835 = vmatprep.subr.bf16.mxu0 0
  %4836 = vmatpush1.bf16.msra.mxu0 %v4813
  %4837 = vmatprep.subr.bf16.mxu0 0
  %4838 = vmatpush1.bf16.msra.mxu0 %v4814
  %4839 = vmatprep.subr.bf16.mxu0 0
  %4840 = vmatpush1.bf16.msra.mxu0 0
  %4841 = vmatprep.subr.bf16.mxu0 0
  %4842 = vmatpush1.bf16.msra.mxu0 0
  %4843 = vmatprep.subr.bf16.mxu0 0
  %4844 = vmatpush1.bf16.msra.mxu0 0
  %4845 = vmatprep.subr.bf16.mxu0 0
  %4846 = vmatpush1.bf16.msra.mxu0 0
  %4847 = vmatprep.subr.bf16.mxu0 0
  %4848 = vmatpush1.bf16.msra.mxu0 0
  %4849 = vmatprep.subr.bf16.mxu0 0
  %4850 = vmatpush1.bf16.msra.mxu0 0
  %4851 = vmatprep.subr.bf16.mxu0 0
  %4852 = vmatpush1.bf16.msra.mxu0 0
  %4853 = vmatprep.subr.bf16.mxu0 0
  %4854 = vmatpush1.bf16.msra.mxu0 0
  %4855 = vmatprep.mubr.bf16.mxu0 0
  %4856 = vmatmul.mubr.bf16.gmra.mrb[0].mxu0 %v4756
  %v4857 = vpop.f32.mrb[0].mxu0
  %v4858 = vadd.f32 0.0, %v4857
  %v4859 = vpop.f32.mrb[0].mxu0
  %v4860 = vpop.f32.mrb[0].mxu0
  %v4861 = vadd.f32 0.0, %v4860
  %v4862 = vpop.f32.mrb[0].mxu0
  %4863 = vmatprep.mubr.bf16.mxu0 0
  %4864 = vmatmul.mubr.bf16.gmra.mrb[0].mxu0 %v4757
  %v4865 = vpop.f32.mrb[0].mxu0
  %v4866 = vadd.f32 0.0, %v4865
  %v4867 = vpop.f32.mrb[0].mxu0
  %v4868 = vpop.f32.mrb[0].mxu0
  %v4869 = vadd.f32 0.0, %v4868
  %v4870 = vpop.f32.mrb[0].mxu0
  %4871 = vdwg.mxu0
  %v4872 = vadd.f32 %v4858, %v4861
  %v4873 = vadd.f32 %v4872, %v4866
  %v4874 = vadd.f32 %v4873, %v4869
  %v4875 = vrot.slane %v4874, 4
  %v4876 = vadd.f32 %v4874, %v4875
  %v4877 = vrot.slane %v4876, 2
  %v4878 = vadd.f32 %v4876, %v4877
  %v4879 = vrot.slane %v4878, 1
  %v4880 = vadd.f32 %v4878, %v4879
  %4881 = vrot.lane.b32.xlu0 %v4880, 8
  %v4882 = vpop.permute.xlu0 %4881
  %v4883 = vadd.f32 %v4880, %v4882
  %4884 = vrot.lane.b32.xlu0 %v4883, 16
  %v4885 = vpop.permute.xlu0 %4884
  %v4886 = vadd.f32 %v4883, %v4885
  %4887 = vrot.lane.b32.xlu0 %v4886, 32
  %v4888 = vpop.permute.xlu0 %4887
  %v4889 = vadd.f32 %v4886, %v4888
  %4890 = vrot.lane.b32.xlu0 %v4889, 64
  %v4891 = vpop.permute.xlu0 %4890
  %v4892 = vadd.f32 %v4889, %v4891
  %v4893 = vmul.f32 %v4892, %v146
  %v4894 = vlaneseq
  %v4895 = vshrl.u32 %v4894, 7
  %v4896 = vsub.s32 0, %v4895
  %v4897 = vrot.slane %v4893, %v4896
  %v4898 = vsub.f32 %v4858, %v4897
  %v4899 = vsub.f32 %v4861, %v4897
  %v4900 = vsub.f32 %v4866, %v4897
  %v4901 = vsub.f32 %v4869, %v4897
  %v4902 = vmul.f32 %v4898, %v4898
  %v4903 = vmul.f32 %v4899, %v4899
  %v4904 = vmul.f32 %v4900, %v4900
  %v4905 = vmul.f32 %v4901, %v4901
  %v4906 = vadd.f32 %v4902, %v4903
  %v4907 = vadd.f32 %v4906, %v4904
  %v4908 = vadd.f32 %v4907, %v4905
  %v4909 = vrot.slane %v4908, 4
  %v4910 = vadd.f32 %v4908, %v4909
  %v4911 = vrot.slane %v4910, 2
  %v4912 = vadd.f32 %v4910, %v4911
  %v4913 = vrot.slane %v4912, 1
  %v4914 = vadd.f32 %v4912, %v4913
  %4915 = vrot.lane.b32.xlu0 %v4914, 8
  %v4916 = vpop.permute.xlu0 %4915
  %v4917 = vadd.f32 %v4914, %v4916
  %4918 = vrot.lane.b32.xlu0 %v4917, 16
  %v4919 = vpop.permute.xlu0 %4918
  %v4920 = vadd.f32 %v4917, %v4919
  %4921 = vrot.lane.b32.xlu0 %v4920, 32
  %v4922 = vpop.permute.xlu0 %4921
  %v4923 = vadd.f32 %v4920, %v4922
  %4924 = vrot.lane.b32.xlu0 %v4923, 64
  %v4925 = vpop.permute.xlu0 %4924
  %v4926 = vadd.f32 %v4923, %v4925
  %v4927 = vmul.f32 %v4926, %v146
  %v4928 = vadd.f32 %v4927, 1e-05
  %v4929 = vrsqrt.pop %v4928
  %v4930 = vlaneseq
  %v4931 = vshrl.u32 %v4930, 7
  %v4932 = vsub.s32 0, %v4931
  %v4933 = vrot.slane %v4929, %v4932
  %v4934 = vmul.f32 %v4898, %v4933
  %v4935 = vmul.f32 %v4899, %v4933
  %v4936 = vmul.f32 %v4900, %v4933
  %v4937 = vmul.f32 %v4901, %v4933
  %v4938 = vmax.f32 %v4934, 0.0
  %v4939 = vmax.f32 %v4935, 0.0
  %v4940 = vmax.f32 %v4936, 0.0
  %v4941 = vmax.f32 %v4937, 0.0
  %v4942 = vrot.slane %v4938, 7
  %v4943 = vrot.slane %v4939, 7
  %v4944 = vrot.slane %v4940, 7
  %v4945 = vrot.slane %v4941, 7
  %v4946 = vsel %vm365, %v4944, %v4945
  %v4947 = vsel %vm365, %v4943, %v4944
  %v4948 = vsel %vm365, %v4942, %v4943
  %v4949 = vsel %vm365, %v4945, %v4942
  %v4950 = vmul.f32 %v4949, %v378
  %v4951 = vmul.f32 %v4948, %v383
  %v4952 = vmul.f32 %v4947, %v388
  %v4953 = vmul.f32 %v4946, %v393
  %4954 = vrot.lane.b32.xlu0 %v4950, 8
  %v4955 = vpop.permute.xlu0 %4954
  %4956 = vrot.lane.b32.xlu0 %v4951, 8
  %v4957 = vpop.permute.xlu0 %4956
  %4958 = vrot.lane.b32.xlu0 %v4952, 8
  %v4959 = vpop.permute.xlu0 %4958
  %4960 = vrot.lane.b32.xlu0 %v4953, 8
  %v4961 = vpop.permute.xlu0 %4960
  %v4962 = vld [vmem:[%s6 + $0xe1] sm:$0x1]
  %v4963 = vlaneseq
  %v4964 = vshrl.u32 %v4963, 7
  %v4965 = vsub.s32 0, %v4964
  %v4966 = vrot.slane %v4962, %v4965
  %v4967 = vmul.f32 %v4955, %v4966
  %v4968 = vmul.f32 %v4957, %v4966
  %v4969 = vmul.f32 %v4959, %v4966
  %v4970 = vmul.f32 %v4961, %v4966
  %v4971 = vadd.f32 %v4967, 0.0
  %v4972 = vadd.f32 %v4968, 0.0
  %v4973 = vadd.f32 %v4969, 0.0
  %v4974 = vadd.f32 %v4970, 0.0
  %v4975 = vld [vmem:[%s6 + $0xe2] sm:$0x1]
  %v4976 = vlaneseq
  %v4977 = vshrl.u32 %v4976, 7
  %v4978 = vsub.s32 0, %v4977
  %v4979 = vrot.slane %v4975, %v4978
  %v4980 = vmul.f32 %v4950, %v4979
  %v4981 = vmul.f32 %v4951, %v4979
  %v4982 = vmul.f32 %v4952, %v4979
  %v4983 = vmul.f32 %v4953, %v4979
  %v4984 = vadd.f32 %v4971, %v4980
  %v4985 = vadd.f32 %v4972, %v4981
  %v4986 = vadd.f32 %v4973, %v4982
  %v4987 = vadd.f32 %v4974, %v4983
  %4988 = vrot.lane.b32.xlu0 %v4950, 120
  %v4989 = vpop.permute.xlu0 %4988
  %4990 = vrot.lane.b32.xlu0 %v4951, 120
  %v4991 = vpop.permute.xlu0 %4990
  %4992 = vrot.lane.b32.xlu0 %v4952, 120
  %v4993 = vpop.permute.xlu0 %4992
  %4994 = vrot.lane.b32.xlu0 %v4953, 120
  %v4995 = vpop.permute.xlu0 %4994
  %v4996 = vld [vmem:[%s6 + $0xe3] sm:$0x1]
  %v4997 = vlaneseq
  %v4998 = vshrl.u32 %v4997, 7
  %v4999 = vsub.s32 0, %v4998
  %v5000 = vrot.slane %v4996, %v4999
  %v5001 = vmul.f32 %v4989, %v5000
  %v5002 = vmul.f32 %v4991, %v5000
  %v5003 = vmul.f32 %v4993, %v5000
  %v5004 = vmul.f32 %v4995, %v5000
  %v5005 = vadd.f32 %v4984, %v5001
  %v5006 = vadd.f32 %v4985, %v5002
  %v5007 = vadd.f32 %v4986, %v5003
  %v5008 = vadd.f32 %v4987, %v5004
  %5009 = vrot.lane.b32.xlu0 %v4938, 8
  %v5010 = vpop.permute.xlu0 %5009
  %5011 = vrot.lane.b32.xlu0 %v4939, 8
  %v5012 = vpop.permute.xlu0 %5011
  %5013 = vrot.lane.b32.xlu0 %v4940, 8
  %v5014 = vpop.permute.xlu0 %5013
  %5015 = vrot.lane.b32.xlu0 %v4941, 8
  %v5016 = vpop.permute.xlu0 %5015
  %v5017 = vld [vmem:[%s6 + $0xe6] sm:$0x1]
  %v5018 = vlaneseq
  %v5019 = vshrl.u32 %v5018, 7
  %v5020 = vsub.s32 0, %v5019
  %v5021 = vrot.slane %v5017, %v5020
  %v5022 = vmul.f32 %v5010, %v5021
  %v5023 = vmul.f32 %v5012, %v5021
  %v5024 = vmul.f32 %v5014, %v5021
  %v5025 = vmul.f32 %v5016, %v5021
  %v5026 = vadd.f32 %v5005, %v5022
  %v5027 = vadd.f32 %v5006, %v5023
  %v5028 = vadd.f32 %v5007, %v5024
  %v5029 = vadd.f32 %v5008, %v5025
  %v5030 = vld [vmem:[%s6 + $0xe7] sm:$0x1]
  %v5031 = vlaneseq
  %v5032 = vshrl.u32 %v5031, 7
  %v5033 = vsub.s32 0, %v5032
  %v5034 = vrot.slane %v5030, %v5033
  %v5035 = vmul.f32 %v4938, %v5034
  %v5036 = vmul.f32 %v4939, %v5034
  %v5037 = vmul.f32 %v4940, %v5034
  %v5038 = vmul.f32 %v4941, %v5034
  %v5039 = vadd.f32 %v5026, %v5035
  %v5040 = vadd.f32 %v5027, %v5036
  %v5041 = vadd.f32 %v5028, %v5037
  %v5042 = vadd.f32 %v5029, %v5038
  %5043 = vrot.lane.b32.xlu0 %v4938, 120
  %v5044 = vpop.permute.xlu0 %5043
  %5045 = vrot.lane.b32.xlu0 %v4939, 120
  %v5046 = vpop.permute.xlu0 %5045
  %5047 = vrot.lane.b32.xlu0 %v4940, 120
  %v5048 = vpop.permute.xlu0 %5047
  %5049 = vrot.lane.b32.xlu0 %v4941, 120
  %v5050 = vpop.permute.xlu0 %5049
  %v5051 = vld [vmem:[%s6 + $0xe8] sm:$0x1]
  %v5052 = vlaneseq
  %v5053 = vshrl.u32 %v5052, 7
  %v5054 = vsub.s32 0, %v5053
  %v5055 = vrot.slane %v5051, %v5054
  %v5056 = vmul.f32 %v5044, %v5055
  %v5057 = vmul.f32 %v5046, %v5055
  %v5058 = vmul.f32 %v5048, %v5055
  %v5059 = vmul.f32 %v5050, %v5055
  %v5060 = vadd.f32 %v5039, %v5056
  %v5061 = vadd.f32 %v5040, %v5057
  %v5062 = vadd.f32 %v5041, %v5058
  %v5063 = vadd.f32 %v5042, %v5059
  %v5064 = vrot.slane %v4938, 1
  %v5065 = vrot.slane %v4939, 1
  %v5066 = vrot.slane %v4940, 1
  %v5067 = vrot.slane %v4941, 1
  %v5068 = vsel %vm513, %v5066, %v5067
  %v5069 = vsel %vm513, %v5065, %v5066
  %v5070 = vsel %vm513, %v5064, %v5065
  %v5071 = vsel %vm513, %v5067, %v5064
  %v5072 = vmul.f32 %v5070, %v526
  %v5073 = vmul.f32 %v5069, %v531
  %v5074 = vmul.f32 %v5068, %v536
  %v5075 = vmul.f32 %v5071, %v541
  %5076 = vrot.lane.b32.xlu0 %v5072, 8
  %v5077 = vpop.permute.xlu0 %5076
  %5078 = vrot.lane.b32.xlu0 %v5073, 8
  %v5079 = vpop.permute.xlu0 %5078
  %5080 = vrot.lane.b32.xlu0 %v5074, 8
  %v5081 = vpop.permute.xlu0 %5080
  %5082 = vrot.lane.b32.xlu0 %v5075, 8
  %v5083 = vpop.permute.xlu0 %5082
  %v5084 = vld [vmem:[%s6 + $0xeb] sm:$0x1]
  %v5085 = vlaneseq
  %v5086 = vshrl.u32 %v5085, 7
  %v5087 = vsub.s32 0, %v5086
  %v5088 = vrot.slane %v5084, %v5087
  %v5089 = vmul.f32 %v5077, %v5088
  %v5090 = vmul.f32 %v5079, %v5088
  %v5091 = vmul.f32 %v5081, %v5088
  %v5092 = vmul.f32 %v5083, %v5088
  %v5093 = vadd.f32 %v5060, %v5089
  %v5094 = vadd.f32 %v5061, %v5090
  %v5095 = vadd.f32 %v5062, %v5091
  %v5096 = vadd.f32 %v5063, %v5092
  %v5097 = vld [vmem:[%s6 + $0xec] sm:$0x1]
  %v5098 = vlaneseq
  %v5099 = vshrl.u32 %v5098, 7
  %v5100 = vsub.s32 0, %v5099
  %v5101 = vrot.slane %v5097, %v5100
  %v5102 = vmul.f32 %v5072, %v5101
  %v5103 = vmul.f32 %v5073, %v5101
  %v5104 = vmul.f32 %v5074, %v5101
  %v5105 = vmul.f32 %v5075, %v5101
  %v5106 = vadd.f32 %v5093, %v5102
  %v5107 = vadd.f32 %v5094, %v5103
  %v5108 = vadd.f32 %v5095, %v5104
  %v5109 = vadd.f32 %v5096, %v5105
  %5110 = vrot.lane.b32.xlu0 %v5072, 120
  %v5111 = vpop.permute.xlu0 %5110
  %5112 = vrot.lane.b32.xlu0 %v5073, 120
  %v5113 = vpop.permute.xlu0 %5112
  %5114 = vrot.lane.b32.xlu0 %v5074, 120
  %v5115 = vpop.permute.xlu0 %5114
  %5116 = vrot.lane.b32.xlu0 %v5075, 120
  %v5117 = vpop.permute.xlu0 %5116
  %v5118 = vld [vmem:[%s6 + $0xed] sm:$0x1]
  %v5119 = vlaneseq
  %v5120 = vshrl.u32 %v5119, 7
  %v5121 = vsub.s32 0, %v5120
  %v5122 = vrot.slane %v5118, %v5121
  %v5123 = vmul.f32 %v5111, %v5122
  %v5124 = vmul.f32 %v5113, %v5122
  %v5125 = vmul.f32 %v5115, %v5122
  %v5126 = vmul.f32 %v5117, %v5122
  %v5127 = vadd.f32 %v5106, %v5123
  %v5128 = vadd.f32 %v5107, %v5124
  %v5129 = vadd.f32 %v5108, %v5125
  %v5130 = vadd.f32 %v5109, %v5126
  %v5131 = vpack.c.bf16 %v5128, %v5127
  %v5132 = vpack.c.bf16 %v5130, %v5129
  %s5133 = scalar_lea.vmem %s5, 576
  %v5134 = vld [vmem:[%s5133] sm:$0xf]
  %v5135 = vld [vmem:[%s5133 + $0x4] sm:$0xf]
  %v5136 = vld [vmem:[%s5133 + $0x8] sm:$0xf]
  %v5137 = vld [vmem:[%s5133 + $0xc] sm:$0xf]
  %v5138 = vld [vmem:[%s5133 + $0x10] sm:$0xf]
  %v5139 = vld [vmem:[%s5133 + $0x14] sm:$0xf]
  %v5140 = vld [vmem:[%s5133 + $0x18] sm:$0xf]
  %v5141 = vld [vmem:[%s5133 + $0x1c] sm:$0xf]
  %v5142 = vld [vmem:[%s5133 + $0x20] sm:$0xf]
  %v5143 = vld [vmem:[%s5133 + $0x24] sm:$0xf]
  %v5144 = vld [vmem:[%s5133 + $0x28] sm:$0xf]
  %v5145 = vld [vmem:[%s5133 + $0x2c] sm:$0xf]
  %v5146 = vld [vmem:[%s5133 + $0x30] sm:$0xf]
  %v5147 = vld [vmem:[%s5133 + $0x34] sm:$0xf]
  %v5148 = vld [vmem:[%s5133 + $0x38] sm:$0xf]
  %v5149 = vld [vmem:[%s5133 + $0x3c] sm:$0xf]
  %v5166 = vunpack.c.l.b16 %v5134
  %v5167 = vunpack.c.l.b16 %v5135
  %v5168 = vunpack.c.l.b16 %v5136
  %v5169 = vunpack.c.l.b16 %v5137
  %v5170 = vunpack.c.l.b16 %v5138
  %v5171 = vunpack.c.l.b16 %v5139
  %v5172 = vunpack.c.l.b16 %v5140
  %v5173 = vunpack.c.l.b16 %v5141
  %v5174 = vunpack.c.l.b16 %v5142
  %v5175 = vunpack.c.l.b16 %v5143
  %v5176 = vunpack.c.l.b16 %v5144
  %v5177 = vunpack.c.l.b16 %v5145
  %v5178 = vunpack.c.l.b16 %v5146
  %v5179 = vunpack.c.l.b16 %v5147
  %v5180 = vunpack.c.l.b16 %v5148
  %v5181 = vunpack.c.l.b16 %v5149
  %v5182 = vpack.c.b16 %v5167, %v5166
  %v5183 = vpack.c.b16 %v5169, %v5168
  %v5184 = vpack.c.b16 %v5171, %v5170
  %v5185 = vpack.c.b16 %v5173, %v5172
  %v5186 = vpack.c.b16 %v5175, %v5174
  %v5187 = vpack.c.b16 %v5177, %v5176
  %v5188 = vpack.c.b16 %v5179, %v5178
  %v5189 = vpack.c.b16 %v5181, %v5180
  %5198 = vmatprep.subr.bf16.mxu0 0
  %5199 = vmatpush1.bf16.msra.mxu0 %v5182
  %5200 = vmatprep.subr.bf16.mxu0 0
  %5201 = vmatpush1.bf16.msra.mxu0 %v5183
  %5202 = vmatprep.subr.bf16.mxu0 0
  %5203 = vmatpush1.bf16.msra.mxu0 %v5184
  %5204 = vmatprep.subr.bf16.mxu0 0
  %5205 = vmatpush1.bf16.msra.mxu0 %v5185
  %5206 = vmatprep.subr.bf16.mxu0 0
  %5207 = vmatpush1.bf16.msra.mxu0 %v5186
  %5208 = vmatprep.subr.bf16.mxu0 0
  %5209 = vmatpush1.bf16.msra.mxu0 %v5187
  %5210 = vmatprep.subr.bf16.mxu0 0
  %5211 = vmatpush1.bf16.msra.mxu0 %v5188
  %5212 = vmatprep.subr.bf16.mxu0 0
  %5213 = vmatpush1.bf16.msra.mxu0 %v5189
  %5214 = vmatprep.subr.bf16.mxu0 0
  %5215 = vmatpush1.bf16.msra.mxu0 0
  %5216 = vmatprep.subr.bf16.mxu0 0
  %5217 = vmatpush1.bf16.msra.mxu0 0
  %5218 = vmatprep.subr.bf16.mxu0 0
  %5219 = vmatpush1.bf16.msra.mxu0 0
  %5220 = vmatprep.subr.bf16.mxu0 0
  %5221 = vmatpush1.bf16.msra.mxu0 0
  %5222 = vmatprep.subr.bf16.mxu0 0
  %5223 = vmatpush1.bf16.msra.mxu0 0
  %5224 = vmatprep.subr.bf16.mxu0 0
  %5225 = vmatpush1.bf16.msra.mxu0 0
  %5226 = vmatprep.subr.bf16.mxu0 0
  %5227 = vmatpush1.bf16.msra.mxu0 0
  %5228 = vmatprep.subr.bf16.mxu0 0
  %5229 = vmatpush1.bf16.msra.mxu0 0
  %5230 = vmatprep.mubr.bf16.mxu0 0
  %5231 = vmatmul.mubr.bf16.gmra.mrb[0].mxu0 %v5131
  %v5232 = vpop.f32.mrb[0].mxu0
  %v5233 = vadd.f32 0.0, %v5232
  %v5234 = vpop.f32.mrb[0].mxu0
  %v5235 = vpop.f32.mrb[0].mxu0
  %v5236 = vadd.f32 0.0, %v5235
  %v5237 = vpop.f32.mrb[0].mxu0
  %5238 = vmatprep.mubr.bf16.mxu0 0
  %5239 = vmatmul.mubr.bf16.gmra.mrb[0].mxu0 %v5132
  %v5240 = vpop.f32.mrb[0].mxu0
  %v5241 = vadd.f32 0.0, %v5240
  %v5242 = vpop.f32.mrb[0].mxu0
  %v5243 = vpop.f32.mrb[0].mxu0
  %v5244 = vadd.f32 0.0, %v5243
  %v5245 = vpop.f32.mrb[0].mxu0
  %5246 = vdwg.mxu0
  %v5247 = vadd.f32 %v5233, %v5236
  %v5248 = vadd.f32 %v5247, %v5241
  %v5249 = vadd.f32 %v5248, %v5244
  %v5250 = vrot.slane %v5249, 4
  %v5251 = vadd.f32 %v5249, %v5250
  %v5252 = vrot.slane %v5251, 2
  %v5253 = vadd.f32 %v5251, %v5252
  %v5254 = vrot.slane %v5253, 1
  %v5255 = vadd.f32 %v5253, %v5254
  %5256 = vrot.lane.b32.xlu0 %v5255, 8
  %v5257 = vpop.permute.xlu0 %5256
  %v5258 = vadd.f32 %v5255, %v5257
  %5259 = vrot.lane.b32.xlu0 %v5258, 16
  %v5260 = vpop.permute.xlu0 %5259
  %v5261 = vadd.f32 %v5258, %v5260
  %5262 = vrot.lane.b32.xlu0 %v5261, 32
  %v5263 = vpop.permute.xlu0 %5262
  %v5264 = vadd.f32 %v5261, %v5263
  %5265 = vrot.lane.b32.xlu0 %v5264, 64
  %v5266 = vpop.permute.xlu0 %5265
  %v5267 = vadd.f32 %v5264, %v5266
  %v5268 = vmul.f32 %v5267, %v146
  %v5269 = vlaneseq
  %v5270 = vshrl.u32 %v5269, 7
  %v5271 = vsub.s32 0, %v5270
  %v5272 = vrot.slane %v5268, %v5271
  %v5273 = vsub.f32 %v5233, %v5272
  %v5274 = vsub.f32 %v5236, %v5272
  %v5275 = vsub.f32 %v5241, %v5272
  %v5276 = vsub.f32 %v5244, %v5272
  %v5277 = vmul.f32 %v5273, %v5273
  %v5278 = vmul.f32 %v5274, %v5274
  %v5279 = vmul.f32 %v5275, %v5275
  %v5280 = vmul.f32 %v5276, %v5276
  %v5281 = vadd.f32 %v5277, %v5278
  %v5282 = vadd.f32 %v5281, %v5279
  %v5283 = vadd.f32 %v5282, %v5280
  %v5284 = vrot.slane %v5283, 4
  %v5285 = vadd.f32 %v5283, %v5284
  %v5286 = vrot.slane %v5285, 2
  %v5287 = vadd.f32 %v5285, %v5286
  %v5288 = vrot.slane %v5287, 1
  %v5289 = vadd.f32 %v5287, %v5288
  %5290 = vrot.lane.b32.xlu0 %v5289, 8
  %v5291 = vpop.permute.xlu0 %5290
  %v5292 = vadd.f32 %v5289, %v5291
  %5293 = vrot.lane.b32.xlu0 %v5292, 16
  %v5294 = vpop.permute.xlu0 %5293
  %v5295 = vadd.f32 %v5292, %v5294
  %5296 = vrot.lane.b32.xlu0 %v5295, 32
  %v5297 = vpop.permute.xlu0 %5296
  %v5298 = vadd.f32 %v5295, %v5297
  %5299 = vrot.lane.b32.xlu0 %v5298, 64
  %v5300 = vpop.permute.xlu0 %5299
  %v5301 = vadd.f32 %v5298, %v5300
  %v5302 = vmul.f32 %v5301, %v146
  %v5303 = vadd.f32 %v5302, 1e-05
  %v5304 = vrsqrt.pop %v5303
  %v5305 = vlaneseq
  %v5306 = vshrl.u32 %v5305, 7
  %v5307 = vsub.s32 0, %v5306
  %v5308 = vrot.slane %v5304, %v5307
  %v5309 = vmul.f32 %v5273, %v5308
  %v5310 = vmul.f32 %v5274, %v5308
  %v5311 = vmul.f32 %v5275, %v5308
  %v5312 = vmul.f32 %v5276, %v5308
  %v5313 = vadd.f32 %v4559, %v5309
  %v5314 = vadd.f32 %v4560, %v5310
  %v5315 = vadd.f32 %v4561, %v5311
  %v5316 = vadd.f32 %v4562, %v5312
  %5317 = vst [vmem:[%s7] sm:$0xff] %v2651
  %5318 = vst [vmem:[%s7 + $0x8] sm:$0xff] %v2652
  %5319 = vst [vmem:[%s7 + $0x10] sm:$0xff] %v2653
  %5320 = vst [vmem:[%s7 + $0x18] sm:$0xff] %v2654
  %s5321 = scalar_lea.vmem %s7, 32
  %5322 = vst [vmem:[%s5321] sm:$0xff] %v5313
  %5323 = vst [vmem:[%s5321 + $0x8] sm:$0xff] %v5314
  %5324 = vst [vmem:[%s5321 + $0x10] sm:$0xff] %v5315
  %5325 = vst [vmem:[%s5321 + $0x18] sm:$0xff] %v5316
  // Predicated region
  $region30: #{fixed_cell_forward.1} parent=0 // pred_check
    _
  $region31: #{fixed_cell_forward.1} parent=0 // pred_check_branch
    %5327 = sbr.rel (0) target = $region33
  $region32: #{fixed_cell_forward.1} parent=0 // pred_region
    _
  $region33: #{fixed_cell_forward.1} parent=0 // pred_fallthru
    _
  // Predicated region
  $region34: #{fixed_cell_forward.1} parent=0 // pred_check
    _
  $region35: #{fixed_cell_forward.1} parent=0 // pred_check_branch
    %5329 = sbr.rel (0) target = $region37
  $region36: #{fixed_cell_forward.1} parent=0 // pred_region
    _
  $region37: #{fixed_cell_forward.1} parent=0 // pred_fallthru
    _

</llo_original>
